<compile_context>
chip_gen: v6e
topology: v6e:2x2x1
jax: 0.10.0
libtpu: 0.0.40
codegen_flags: <defaults>
</compile_context>

<pallas_src>
import functools

import jax
import jax.numpy as jnp
import numpy as np
from jax.experimental import pallas as pl
from jax.experimental.pallas import tpu as pltpu

EPS = 1e-5                                   # nn.BatchNorm2d default
F32_HIGHEST = jax.lax.Precision.HIGHEST


# ----------------------------------------------------------------------------
# Fused kernel: [Conv2d(same) + BN(train stats) + ReLU] * n_convs
#               (+ optional ConvTranspose2d(kernel=2, stride=2))
# ----------------------------------------------------------------------------
def _fused_block_kernel(*refs, n_convs, add_transpose, batch_norm, K, N, H, W,
                        chans, co):
    """All arrays are lane-dense 2-D slabs: rows = (n, h), lanes = (w, c).

    refs = ( x_ref (N*H, W*Cin),
             [P (W*co, W*co)]                               iff batch_norm,
             [wband (K, W*Ci, W*co), scale (1, W*co), shift (1, W*co)] * n_convs,
             [WT (W*co, 4*W*co), bt (1, 4*W*co)]            iff add_transpose,
             o_ref (N*H, W*co | 4*W*co),
             pad_0 .. pad_{n_convs-1}  (N, base+H+p, W*Ci)  VMEM scratch )
    """
    p = K // 2
    base = ((p + 7) // 8) * 8 if p > 0 else 0      # sublane-aligned interior row
    R = N * H
    inv_cnt = 1.0 / float(N * H * W)

    n_in = 1 + (1 if batch_norm else 0) + 3 * n_convs + (2 if add_transpose else 0)
    in_refs = refs[:n_in]
    o_ref = refs[n_in]
    pad_refs = refs[n_in + 1:]

    idx = 1
    if batch_norm:
        P = in_refs[idx][...]                      # 0/1 channel-selector matrix
        idx += 1
    conv_refs = in_refs[idx: idx + 3 * n_convs]
    idx += 3 * n_convs

    act = in_refs[0][...]                          # (R, W*Cin), f32

    for l in range(n_convs):
        wb_ref, sc_ref, sh_ref = conv_refs[3 * l: 3 * l + 3]
        ci = chans[l]
        wc = W * ci
        pad_ref = pad_refs[l]                      # (N, base + H + p, W*ci)

        # Vertical 'same' padding: zero ONLY the 2p halo rows, write interior
        # once at a sublane-aligned row offset.
        if p > 0:
            pad_ref[:, base - p:base, :] = jnp.zeros((N, p, wc), jnp.float32)
            pad_ref[:, base + H:base + H + p, :] = jnp.zeros((N, p, wc), jnp.float32)
        pad_ref[:, base:base + H, :] = act.reshape(N, H, wc)

        # Conv as K row-shifted banded matmuls.  Horizontal taps + horizontal
        # zero padding live inside the (W*Ci, W*co) band matrix wband[dy].
        acc = jnp.zeros((R, W * co), jnp.float32)
        for dy in range(K):
            r0 = base - p + dy
            slab = pad_ref[:, r0:r0 + H, :].reshape(R, wc)
            acc = acc + jnp.dot(slab, wb_ref[dy],
                                preferred_element_type=jnp.float32,
                                precision=F32_HIGHEST)

        if batch_norm:
            # Training-mode BatchNorm2d (biased variance over N*H*W).  Row sums
            # are a cheap 32-row sublane reduce; the per-channel reduction over
            # the W groups packed into lanes (and the broadcast back across
            # lanes) is one matmul with the selector matrix P, so everything
            # stays in the native (w, c) lane layout.  The conv bias cancels
            # exactly under the mean subtraction and is skipped.
            # TODO(synk): running_mean / running_var buffer updates (training
            # side-effect state) are not materialized; forward output is exact.
            rowsum = jnp.sum(acc, axis=0, keepdims=True)            # (1, W*co)
            mean = jnp.dot(rowsum, P, preferred_element_type=jnp.float32,
                           precision=F32_HIGHEST) * inv_cnt
            xc = acc - mean
            sqsum = jnp.sum(xc * xc, axis=0, keepdims=True)
            var = jnp.dot(sqsum, P, preferred_element_type=jnp.float32,
                          precision=F32_HIGHEST) * inv_cnt
            acc = xc * jax.lax.rsqrt(var + EPS) * sc_ref[...] + sh_ref[...]
        else:
            acc = acc * sc_ref[...] + sh_ref[...]  # scale == 1, shift == conv bias

        act = jnp.maximum(acc, 0.0)                # ReLU at full lane width

    if add_transpose:
        # ConvTranspose2d(k=2, s=2): one lane-dense matmul emits all 4
        # sub-pixels -> (R, 2*W*2*co) = 512 dense output lanes; the sub-pixel
        # interleave rides the single output transpose in the wrapper.
        wt_ref, bt_ref = in_refs[idx], in_refs[idx + 1]
        y = jnp.dot(act, wt_ref[...], preferred_element_type=jnp.float32,
                    precision=F32_HIGHEST) + bt_ref[...]
        o_ref[...] = y.astype(o_ref.dtype)
    else:
        o_ref[...] = act.astype(o_ref.dtype)


def _full_block(shape):
    nd = len(shape)
    return pl.BlockSpec(shape, lambda i: (0,) * nd)


# ----------------------------------------------------------------------------
# Module wrapper (NCHW in / NCHW out, like the PyTorch module)
# ----------------------------------------------------------------------------
def encoder_decoder_block(x_nchw, params, *, add_transpose, batch_norm):
    N, Cin, H, W = x_nchw.shape
    convs = params["convs"]
    n_convs = len(convs)
    K = convs[0][0].shape[0]
    co = convs[0][0].shape[-1]
    p = K // 2
    base = ((p + 7) // 8) * 8 if p > 0 else 0
    pad_rows = base + H + p

    # NCHW -> lane-dense (N*H, W*Cin): the single input-side transpose.
    x2d = jnp.transpose(x_nchw, (0, 2, 3, 1)).astype(jnp.float32)
    x2d = x2d.reshape(N * H, W * Cin)

    # Band selector: M[w_in, w_out, kx] = 1 iff w_in == w_out + kx - p.
    wi = np.arange(W)[:, None, None]
    wo = np.arange(W)[None, :, None]
    kx = np.arange(K)[None, None, :]
    M = jnp.asarray((wi - wo + p == kx).astype(np.float32))          # (W, W, K)

    inputs = [x2d]
    if batch_norm:
        # P[(w,c), (w',c')] = 1 iff c == c'  (channel sum + lane broadcast).
        P = jnp.asarray(np.tile(np.eye(co, dtype=np.float32), (W, W)))
        inputs.append(P)

    chans = []
    for (w4, b, g, be) in convs:                 # w4: (K, K, Ci, co)
        ci = w4.shape[2]
        chans.append(ci)
        # Banded weights (K(ky), W*Ci, W*co): horizontal taps + horizontal
        # 'same' zero-padding baked in (off-band entries are zero).
        wband = jnp.einsum('uvk,dkic->duivc', M, w4,
                           precision=F32_HIGHEST).reshape(K, W * ci, W * co)
        if batch_norm:
            scale = jnp.tile(g, (1, W))          # gamma in (w, c) lane layout
            shift = jnp.tile(be, (1, W))         # beta
        else:
            scale = jnp.ones((1, W * co), jnp.float32)
            shift = jnp.tile(b, (1, W))          # conv bias
        inputs += [wband, scale, shift]

    if add_transpose:
        wt4, bt = params["transpose"]            # (2, 2, co, co) [a,b,ci,c], (1, co)
        eye_w = jnp.asarray(np.eye(W, dtype=np.float32))
        # Block-diagonal (W*co, 2*W*2*co): out lane = a*(2W*co) + w*(2co) + b*co + c
        WT = jnp.einsum('wv,abic->wiavbc', eye_w, wt4).reshape(W * co, 4 * W * co)
        bt_lane = jnp.tile(bt, (1, 4 * W))
        inputs += [WT, bt_lane]

    out_lanes = 4 * W * co if add_transpose else W * co

    flops = sum(2 * K * (N * H) * (W * c) * (W * co) for c in chans)
    if add_transpose:
        flops += 2 * (N * H) * (W * co) * (4 * W * co)
    bytes_accessed = sum(int(np.prod(a.shape)) * 4 for a in inputs)
    bytes_accessed += (N * H) * out_lanes * 4

    kern = functools.partial(
        _fused_block_kernel, n_convs=n_convs, add_transpose=add_transpose,
        batch_norm=batch_norm, K=K, N=N, H=H, W=W, chans=tuple(chans), co=co)

    out2d = pl.pallas_call(
        kern,
        out_shape=jax.ShapeDtypeStruct((N * H, out_lanes), jnp.float32),
        grid=(1,),   # full-batch BN stats; whole problem is one 32x128 slab
        in_specs=[_full_block(a.shape) for a in inputs],
        out_specs=pl.BlockSpec((N * H, out_lanes), lambda i: (0, 0)),
        scratch_shapes=[pltpu.VMEM((N, pad_rows, W * c), jnp.float32)
                        for c in chans],
        cost_estimate=pl.CostEstimate(flops=int(flops), transcendentals=0,
                                      bytes_accessed=int(bytes_accessed)),
    )(*inputs)

    if add_transpose:
        # rows=(n,h), lanes=(a,w,b,c) -> NCHW, with the 2x sub-pixel interleave
        # folded into the single output transpose.
        y = out2d.reshape(N, H, 2, W, 2, co)
        y = jnp.transpose(y, (0, 5, 1, 2, 3, 4)).reshape(N, co, 2 * H, 2 * W)
    else:
        y = jnp.transpose(out2d.reshape(N, H, W, co), (0, 3, 1, 2))
    return y


def init_params(key, in_filters, out_filters, kernel_size, cnn_per_level,
                add_transpose):
    """Deterministic synthetic parameters (shapes match the PyTorch module)."""
    params = {"convs": []}
    ci = in_filters
    for _ in range(cnn_per_level):
        key, k1, k2 = jax.random.split(key, 3)
        fan_in = ci * kernel_size * kernel_size
        bound = 1.0 / float(np.sqrt(fan_in))
        # stored as (kh, kw, Ci, Co) — channels-last friendly layout
        w = jax.random.uniform(k1, (kernel_size, kernel_size, ci, out_filters),
                               jnp.float32, -bound, bound)
        b = jax.random.uniform(k2, (1, out_filters), jnp.float32, -bound, bound)
        gamma = jnp.ones((1, out_filters), jnp.float32)   # BN default affine
        beta = jnp.zeros((1, out_filters), jnp.float32)
        params["convs"].append((w, b, gamma, beta))
        ci = out_filters
    if add_transpose:
        key, k1, k2 = jax.random.split(key, 3)
        bound = 1.0 / float(np.sqrt(out_filters * 2 * 2))
        wt = jax.random.uniform(k1, (2, 2, out_filters, out_filters),
                                jnp.float32, -bound, bound)
        bt = jax.random.uniform(k2, (1, out_filters), jnp.float32, -bound, bound)
        params["transpose"] = (wt, bt)
    return params


# ----------------------------------------------------------------------------
# Pure-JAX reference (same math, no Pallas) for a correctness check
# ----------------------------------------------------------------------------
def reference_block(x_nchw, params, *, add_transpose, batch_norm):
    x = jnp.transpose(x_nchw, (0, 2, 3, 1))
    for (w, b, gamma, beta) in params["convs"]:
        K = w.shape[0]
        p = K // 2
        N, H, W, Ci = x.shape
        Co = w.shape[-1]
        xpad = jnp.pad(x, ((0, 0), (p, p), (p, p), (0, 0)))
        acc = jnp.zeros((N, H, W, Co), jnp.float32)
        for dy in range(K):
            for dx in range(K):
                acc += jnp.einsum("nhwc,cd->nhwd",
                                  xpad[:, dy:dy + H, dx:dx + W, :], w[dy, dx],
                                  precision=F32_HIGHEST)
        acc += b[0]
        if batch_norm:
            mean = jnp.mean(acc, axis=(0, 1, 2), keepdims=True)
            var = jnp.mean((acc - mean) ** 2, axis=(0, 1, 2), keepdims=True)
            acc = (acc - mean) / jnp.sqrt(var + EPS) * gamma[0] + beta[0]
        x = jnp.maximum(acc, 0.0)
    if add_transpose:
        wt, bt = params["transpose"]
        N, H, W, Ci = x.shape
        Co = wt.shape[-1]
        out = jnp.zeros((N, 2 * H, 2 * W, Co), jnp.float32)
        for a in range(2):
            for bb in range(2):
                y = jnp.einsum("nhwc,cd->nhwd", x, wt[a, bb],
                               precision=F32_HIGHEST) + bt[0]
                out = out.at[:, a::2, bb::2, :].set(y)
        x = out
    return jnp.transpose(x, (0, 3, 1, 2))


if __name__ == "__main__":
    key = jax.random.PRNGKey(0)
    k_x, k_p = jax.random.split(key)

    N, Cin, H, W = 2, 4, 16, 16
    Cout = 8
    x = jax.random.normal(k_x, (N, Cin, H, W), jnp.float32)

    # Config 1: decoder-style — 2x (conv+BN+ReLU) then 2x2/stride-2 transpose.
    params = init_params(k_p, Cin, Cout, kernel_size=3, cnn_per_level=2,
                         add_transpose=True)
    fwd = jax.jit(functools.partial(encoder_decoder_block,
                                    add_transpose=True, batch_norm=True))
    out = jax.block_until_ready(fwd(x, params))
    ref = reference_block(x, params, add_transpose=True, batch_norm=True)
    assert out.shape == (N, Cout, 2 * H, 2 * W), out.shape
    np.testing.assert_allclose(np.asarray(out), np.asarray(ref),
                               rtol=1e-4, atol=1e-4)

    # Config 2: no BN, no transpose (exercises the conv-bias path).
    params2 = init_params(k_p, Cin, Cout, kernel_size=3, cnn_per_level=2,
                          add_transpose=False)
    fwd2 = jax.jit(functools.partial(encoder_decoder_block,
                                     add_transpose=False, batch_norm=False))
    out2 = jax.block_until_ready(fwd2(x, params2))
    ref2 = reference_block(x, params2, add_transpose=False, batch_norm=False)
    assert out2.shape == (N, Cout, H, W), out2.shape
    np.testing.assert_allclose(np.asarray(out2), np.asarray(ref2),
                               rtol=1e-4, atol=1e-4)

    print("KERNEL_OK")
</pallas_src>

<mosaic_0001>
module attributes {stable_mosaic.version = 11 : i64} {
  func.func @_fused_block_kernel(%arg0: i32, %arg1: memref<32x64xf32, #tpu.memory_space<vmem>>, %arg2: memref<128x128xf32, #tpu.memory_space<vmem>>, %arg3: memref<3x64x128xf32, #tpu.memory_space<vmem>>, %arg4: memref<1x128xf32, #tpu.memory_space<vmem>>, %arg5: memref<1x128xf32, #tpu.memory_space<vmem>>, %arg6: memref<3x128x128xf32, #tpu.memory_space<vmem>>, %arg7: memref<1x128xf32, #tpu.memory_space<vmem>>, %arg8: memref<1x128xf32, #tpu.memory_space<vmem>>, %arg9: memref<128x512xf32, #tpu.memory_space<vmem>>, %arg10: memref<1x512xf32, #tpu.memory_space<vmem>>, %arg11: memref<32x512xf32, #tpu.memory_space<vmem>>, %arg12: memref<2x25x64xf32, #tpu.memory_space<vmem>>, %arg13: memref<2x25x128xf32, #tpu.memory_space<vmem>>) attributes {dimension_semantics = [#tpu.dimension_semantics<arbitrary>], iteration_bounds = array<i64: 1>, scalar_prefetch = 0 : i64, scratch_operands = 2 : i64, tpu.core_type = #tpu.core_type<tc>, window_params = [{pipeline_mode = #tpu.pipeline_mode<synchronous>, transform_indices = @transform_0, window_bounds = array<i64: 32, 64>}, {pipeline_mode = #tpu.pipeline_mode<synchronous>, transform_indices = @transform_1, window_bounds = array<i64: 128, 128>}, {pipeline_mode = #tpu.pipeline_mode<synchronous>, transform_indices = @transform_2, window_bounds = array<i64: 3, 64, 128>}, {pipeline_mode = #tpu.pipeline_mode<synchronous>, transform_indices = @transform_3, window_bounds = array<i64: 1, 128>}, {pipeline_mode = #tpu.pipeline_mode<synchronous>, transform_indices = @transform_4, window_bounds = array<i64: 1, 128>}, {pipeline_mode = #tpu.pipeline_mode<synchronous>, transform_indices = @transform_5, window_bounds = array<i64: 3, 128, 128>}, {pipeline_mode = #tpu.pipeline_mode<synchronous>, transform_indices = @transform_6, window_bounds = array<i64: 1, 128>}, {pipeline_mode = #tpu.pipeline_mode<synchronous>, transform_indices = @transform_7, window_bounds = array<i64: 1, 128>}, {pipeline_mode = #tpu.pipeline_mode<synchronous>, transform_indices = @transform_8, window_bounds = array<i64: 128, 512>}, {pipeline_mode = #tpu.pipeline_mode<synchronous>, transform_indices = @transform_9, window_bounds = array<i64: 1, 512>}, {pipeline_mode = #tpu.pipeline_mode<synchronous>, transform_indices = @transform_10, window_bounds = array<i64: 32, 512>}]} {
    %c0 = arith.constant 0 : index
    %c0_0 = arith.constant 0 : index
    %0 = vector.load %arg2[%c0, %c0_0] : memref<128x128xf32, #tpu.memory_space<vmem>>, vector<128x128xf32>
    %c0_1 = arith.constant 0 : index
    %c0_2 = arith.constant 0 : index
    %1 = vector.load %arg1[%c0_1, %c0_2] : memref<32x64xf32, #tpu.memory_space<vmem>>, vector<32x64xf32>
    %cst = arith.constant 0.000000e+00 : f32
    %2 = vector.broadcast %cst : f32 to vector<2x1x64xf32>
    %c0_3 = arith.constant 0 : index
    %c7 = arith.constant 7 : index
    %c0_4 = arith.constant 0 : index
    %3 = vector.load %arg12[%c0_3, %c7, %c0_4] : memref<2x25x64xf32, #tpu.memory_space<vmem>>, vector<2x1x64xf32>
    tpu.vector_store %arg12[%c0_3, %c7, %c0_4], %2 {strides = array<i32>} : memref<2x25x64xf32, #tpu.memory_space<vmem>>, vector<2x1x64xf32>,
    %cst_5 = arith.constant 0.000000e+00 : f32
    %4 = vector.broadcast %cst_5 : f32 to vector<2x1x64xf32>
    %c0_6 = arith.constant 0 : index
    %c24 = arith.constant 24 : index
    %c0_7 = arith.constant 0 : index
    %5 = vector.load %arg12[%c0_6, %c24, %c0_7] : memref<2x25x64xf32, #tpu.memory_space<vmem>>, vector<2x1x64xf32>
    tpu.vector_store %arg12[%c0_6, %c24, %c0_7], %4 {strides = array<i32>} : memref<2x25x64xf32, #tpu.memory_space<vmem>>, vector<2x1x64xf32>,
    %6 = vector.shape_cast %1 : vector<32x64xf32> to vector<2x16x64xf32>
    %c0_8 = arith.constant 0 : index
    %c8 = arith.constant 8 : index
    %c0_9 = arith.constant 0 : index
    %7 = vector.load %arg12[%c0_8, %c8, %c0_9] : memref<2x25x64xf32, #tpu.memory_space<vmem>>, vector<2x16x64xf32>
    tpu.vector_store %arg12[%c0_8, %c8, %c0_9], %6 {strides = array<i32>} : memref<2x25x64xf32, #tpu.memory_space<vmem>>, vector<2x16x64xf32>,
    %cst_10 = arith.constant 0.000000e+00 : f32
    %8 = vector.broadcast %cst_10 : f32 to vector<32x128xf32>
    %c0_11 = arith.constant 0 : index
    %c7_12 = arith.constant 7 : index
    %c0_13 = arith.constant 0 : index
    %9 = vector.load %arg12[%c0_11, %c7_12, %c0_13] : memref<2x25x64xf32, #tpu.memory_space<vmem>>, vector<2x16x64xf32>
    %10 = vector.shape_cast %9 : vector<2x16x64xf32> to vector<32x64xf32>
    %c0_14 = arith.constant 0 : index
    %c0_15 = arith.constant 0 : index
    %c0_16 = arith.constant 0 : index
    %11 = vector.load %arg3[%c0_14, %c0_15, %c0_16] : memref<3x64x128xf32, #tpu.memory_space<vmem>>, vector<1x64x128xf32>
    %12 = vector.shape_cast %11 : vector<1x64x128xf32> to vector<64x128xf32>
    %cst_17 = arith.constant dense<0.000000e+00> : vector<32x128xf32>
    %13 = tpu.matmul %10, %12, %cst_17 {dimension_numbers = #tpu.dot_dimension_numbers<[1], [0], [0], [1], [0, 0, 1, 1], [], []>, precision = #tpu.contract_precision<fp32>} : vector<32x64xf32>, vector<64x128xf32>, vector<32x128xf32> -> vector<32x128xf32>
    %14 = arith.addf %8, %13 : vector<32x128xf32>
    %c0_18 = arith.constant 0 : index
    %c8_19 = arith.constant 8 : index
    %c0_20 = arith.constant 0 : index
    %15 = vector.load %arg12[%c0_18, %c8_19, %c0_20] : memref<2x25x64xf32, #tpu.memory_space<vmem>>, vector<2x16x64xf32>
    %16 = vector.shape_cast %15 : vector<2x16x64xf32> to vector<32x64xf32>
    %c1 = arith.constant 1 : index
    %c0_21 = arith.constant 0 : index
    %c0_22 = arith.constant 0 : index
    %17 = vector.load %arg3[%c1, %c0_21, %c0_22] : memref<3x64x128xf32, #tpu.memory_space<vmem>>, vector<1x64x128xf32>
    %18 = vector.shape_cast %17 : vector<1x64x128xf32> to vector<64x128xf32>
    %cst_23 = arith.constant dense<0.000000e+00> : vector<32x128xf32>
    %19 = tpu.matmul %16, %18, %cst_23 {dimension_numbers = #tpu.dot_dimension_numbers<[1], [0], [0], [1], [0, 0, 1, 1], [], []>, precision = #tpu.contract_precision<fp32>} : vector<32x64xf32>, vector<64x128xf32>, vector<32x128xf32> -> vector<32x128xf32>
    %20 = arith.addf %14, %19 : vector<32x128xf32>
    %c0_24 = arith.constant 0 : index
    %c9 = arith.constant 9 : index
    %c0_25 = arith.constant 0 : index
    %21 = vector.load %arg12[%c0_24, %c9, %c0_25] : memref<2x25x64xf32, #tpu.memory_space<vmem>>, vector<2x16x64xf32>
    %22 = vector.shape_cast %21 : vector<2x16x64xf32> to vector<32x64xf32>
    %c2 = arith.constant 2 : index
    %c0_26 = arith.constant 0 : index
    %c0_27 = arith.constant 0 : index
    %23 = vector.load %arg3[%c2, %c0_26, %c0_27] : memref<3x64x128xf32, #tpu.memory_space<vmem>>, vector<1x64x128xf32>
    %24 = vector.shape_cast %23 : vector<1x64x128xf32> to vector<64x128xf32>
    %cst_28 = arith.constant dense<0.000000e+00> : vector<32x128xf32>
    %25 = tpu.matmul %22, %24, %cst_28 {dimension_numbers = #tpu.dot_dimension_numbers<[1], [0], [0], [1], [0, 0, 1, 1], [], []>, precision = #tpu.contract_precision<fp32>} : vector<32x64xf32>, vector<64x128xf32>, vector<32x128xf32> -> vector<32x128xf32>
    %26 = arith.addf %20, %25 : vector<32x128xf32>
    %cst_29 = arith.constant dense<0.000000e+00> : vector<128xf32>
    %27 = vector.multi_reduction <add>, %26, %cst_29 [0] : vector<32x128xf32> to vector<128xf32>
    %28 = vector.shape_cast %27 : vector<128xf32> to vector<1x128xf32>
    %cst_30 = arith.constant dense<0.000000e+00> : vector<1x128xf32>
    %29 = tpu.matmul %28, %0, %cst_30 {dimension_numbers = #tpu.dot_dimension_numbers<[1], [0], [0], [1], [0, 0, 1, 1], [], []>, precision = #tpu.contract_precision<fp32>} : vector<1x128xf32>, vector<128x128xf32>, vector<1x128xf32> -> vector<1x128xf32>
    %cst_31 = arith.constant 0.001953125 : f32
    %30 = vector.broadcast %cst_31 : f32 to vector<1x128xf32>
    %31 = arith.mulf %29, %30 : vector<1x128xf32>
    %32 = vector.broadcast %31 : vector<1x128xf32> to vector<32x128xf32>
    %33 = arith.subf %26, %32 : vector<32x128xf32>
    %34 = arith.mulf %33, %33 : vector<32x128xf32>
    %cst_32 = arith.constant dense<0.000000e+00> : vector<128xf32>
    %35 = vector.multi_reduction <add>, %34, %cst_32 [0] : vector<32x128xf32> to vector<128xf32>
    %36 = vector.shape_cast %35 : vector<128xf32> to vector<1x128xf32>
    %cst_33 = arith.constant dense<0.000000e+00> : vector<1x128xf32>
    %37 = tpu.matmul %36, %0, %cst_33 {dimension_numbers = #tpu.dot_dimension_numbers<[1], [0], [0], [1], [0, 0, 1, 1], [], []>, precision = #tpu.contract_precision<fp32>} : vector<1x128xf32>, vector<128x128xf32>, vector<1x128xf32> -> vector<1x128xf32>
    %cst_34 = arith.constant 0.001953125 : f32
    %38 = vector.broadcast %cst_34 : f32 to vector<1x128xf32>
    %39 = arith.mulf %37, %38 : vector<1x128xf32>
    %cst_35 = arith.constant 9.99999974E-6 : f32
    %40 = vector.broadcast %cst_35 : f32 to vector<1x128xf32>
    %41 = arith.addf %39, %40 : vector<1x128xf32>
    %42 = math.rsqrt %41 : vector<1x128xf32>
    %43 = vector.broadcast %42 : vector<1x128xf32> to vector<32x128xf32>
    %44 = arith.mulf %33, %43 : vector<32x128xf32>
    %c0_36 = arith.constant 0 : index
    %c0_37 = arith.constant 0 : index
    %45 = vector.load %arg4[%c0_36, %c0_37] : memref<1x128xf32, #tpu.memory_space<vmem>>, vector<1x128xf32>
    %46 = vector.broadcast %45 : vector<1x128xf32> to vector<32x128xf32>
    %47 = arith.mulf %44, %46 : vector<32x128xf32>
    %c0_38 = arith.constant 0 : index
    %c0_39 = arith.constant 0 : index
    %48 = vector.load %arg5[%c0_38, %c0_39] : memref<1x128xf32, #tpu.memory_space<vmem>>, vector<1x128xf32>
    %49 = vector.broadcast %48 : vector<1x128xf32> to vector<32x128xf32>
    %50 = arith.addf %47, %49 : vector<32x128xf32>
    %cst_40 = arith.constant 0.000000e+00 : f32
    %51 = vector.broadcast %cst_40 : f32 to vector<32x128xf32>
    %52 = arith.maximumf %50, %51 : vector<32x128xf32>
    %cst_41 = arith.constant 0.000000e+00 : f32
    %53 = vector.broadcast %cst_41 : f32 to vector<2x1x128xf32>
    %c0_42 = arith.constant 0 : index
    %c7_43 = arith.constant 7 : index
    %c0_44 = arith.constant 0 : index
    %54 = vector.load %arg13[%c0_42, %c7_43, %c0_44] : memref<2x25x128xf32, #tpu.memory_space<vmem>>, vector<2x1x128xf32>
    tpu.vector_store %arg13[%c0_42, %c7_43, %c0_44], %53 {strides = array<i32>} : memref<2x25x128xf32, #tpu.memory_space<vmem>>, vector<2x1x128xf32>,
    %cst_45 = arith.constant 0.000000e+00 : f32
    %55 = vector.broadcast %cst_45 : f32 to vector<2x1x128xf32>
    %c0_46 = arith.constant 0 : index
    %c24_47 = arith.constant 24 : index
    %c0_48 = arith.constant 0 : index
    %56 = vector.load %arg13[%c0_46, %c24_47, %c0_48] : memref<2x25x128xf32, #tpu.memory_space<vmem>>, vector<2x1x128xf32>
    tpu.vector_store %arg13[%c0_46, %c24_47, %c0_48], %55 {strides = array<i32>} : memref<2x25x128xf32, #tpu.memory_space<vmem>>, vector<2x1x128xf32>,
    %57 = vector.shape_cast %52 : vector<32x128xf32> to vector<2x16x128xf32>
    %c0_49 = arith.constant 0 : index
    %c8_50 = arith.constant 8 : index
    %c0_51 = arith.constant 0 : index
    %58 = vector.load %arg13[%c0_49, %c8_50, %c0_51] : memref<2x25x128xf32, #tpu.memory_space<vmem>>, vector<2x16x128xf32>
    tpu.vector_store %arg13[%c0_49, %c8_50, %c0_51], %57 {strides = array<i32>} : memref<2x25x128xf32, #tpu.memory_space<vmem>>, vector<2x16x128xf32>,
    %cst_52 = arith.constant 0.000000e+00 : f32
    %59 = vector.broadcast %cst_52 : f32 to vector<32x128xf32>
    %c0_53 = arith.constant 0 : index
    %c7_54 = arith.constant 7 : index
    %c0_55 = arith.constant 0 : index
    %60 = vector.load %arg13[%c0_53, %c7_54, %c0_55] : memref<2x25x128xf32, #tpu.memory_space<vmem>>, vector<2x16x128xf32>
    %61 = vector.shape_cast %60 : vector<2x16x128xf32> to vector<32x128xf32>
    %c0_56 = arith.constant 0 : index
    %c0_57 = arith.constant 0 : index
    %c0_58 = arith.constant 0 : index
    %62 = vector.load %arg6[%c0_56, %c0_57, %c0_58] : memref<3x128x128xf32, #tpu.memory_space<vmem>>, vector<1x128x128xf32>
    %63 = vector.shape_cast %62 : vector<1x128x128xf32> to vector<128x128xf32>
    %cst_59 = arith.constant dense<0.000000e+00> : vector<32x128xf32>
    %64 = tpu.matmul %61, %63, %cst_59 {dimension_numbers = #tpu.dot_dimension_numbers<[1], [0], [0], [1], [0, 0, 1, 1], [], []>, precision = #tpu.contract_precision<fp32>} : vector<32x128xf32>, vector<128x128xf32>, vector<32x128xf32> -> vector<32x128xf32>
    %65 = arith.addf %59, %64 : vector<32x128xf32>
    %c0_60 = arith.constant 0 : index
    %c8_61 = arith.constant 8 : index
    %c0_62 = arith.constant 0 : index
    %66 = vector.load %arg13[%c0_60, %c8_61, %c0_62] : memref<2x25x128xf32, #tpu.memory_space<vmem>>, vector<2x16x128xf32>
    %67 = vector.shape_cast %66 : vector<2x16x128xf32> to vector<32x128xf32>
    %c1_63 = arith.constant 1 : index
    %c0_64 = arith.constant 0 : index
    %c0_65 = arith.constant 0 : index
    %68 = vector.load %arg6[%c1_63, %c0_64, %c0_65] : memref<3x128x128xf32, #tpu.memory_space<vmem>>, vector<1x128x128xf32>
    %69 = vector.shape_cast %68 : vector<1x128x128xf32> to vector<128x128xf32>
    %cst_66 = arith.constant dense<0.000000e+00> : vector<32x128xf32>
    %70 = tpu.matmul %67, %69, %cst_66 {dimension_numbers = #tpu.dot_dimension_numbers<[1], [0], [0], [1], [0, 0, 1, 1], [], []>, precision = #tpu.contract_precision<fp32>} : vector<32x128xf32>, vector<128x128xf32>, vector<32x128xf32> -> vector<32x128xf32>
    %71 = arith.addf %65, %70 : vector<32x128xf32>
    %c0_67 = arith.constant 0 : index
    %c9_68 = arith.constant 9 : index
    %c0_69 = arith.constant 0 : index
    %72 = vector.load %arg13[%c0_67, %c9_68, %c0_69] : memref<2x25x128xf32, #tpu.memory_space<vmem>>, vector<2x16x128xf32>
    %73 = vector.shape_cast %72 : vector<2x16x128xf32> to vector<32x128xf32>
    %c2_70 = arith.constant 2 : index
    %c0_71 = arith.constant 0 : index
    %c0_72 = arith.constant 0 : index
    %74 = vector.load %arg6[%c2_70, %c0_71, %c0_72] : memref<3x128x128xf32, #tpu.memory_space<vmem>>, vector<1x128x128xf32>
    %75 = vector.shape_cast %74 : vector<1x128x128xf32> to vector<128x128xf32>
    %cst_73 = arith.constant dense<0.000000e+00> : vector<32x128xf32>
    %76 = tpu.matmul %73, %75, %cst_73 {dimension_numbers = #tpu.dot_dimension_numbers<[1], [0], [0], [1], [0, 0, 1, 1], [], []>, precision = #tpu.contract_precision<fp32>} : vector<32x128xf32>, vector<128x128xf32>, vector<32x128xf32> -> vector<32x128xf32>
    %77 = arith.addf %71, %76 : vector<32x128xf32>
    %cst_74 = arith.constant dense<0.000000e+00> : vector<128xf32>
    %78 = vector.multi_reduction <add>, %77, %cst_74 [0] : vector<32x128xf32> to vector<128xf32>
    %79 = vector.shape_cast %78 : vector<128xf32> to vector<1x128xf32>
    %cst_75 = arith.constant dense<0.000000e+00> : vector<1x128xf32>
    %80 = tpu.matmul %79, %0, %cst_75 {dimension_numbers = #tpu.dot_dimension_numbers<[1], [0], [0], [1], [0, 0, 1, 1], [], []>, precision = #tpu.contract_precision<fp32>} : vector<1x128xf32>, vector<128x128xf32>, vector<1x128xf32> -> vector<1x128xf32>
    %cst_76 = arith.constant 0.001953125 : f32
    %81 = vector.broadcast %cst_76 : f32 to vector<1x128xf32>
    %82 = arith.mulf %80, %81 : vector<1x128xf32>
    %83 = vector.broadcast %82 : vector<1x128xf32> to vector<32x128xf32>
    %84 = arith.subf %77, %83 : vector<32x128xf32>
    %85 = arith.mulf %84, %84 : vector<32x128xf32>
    %cst_77 = arith.constant dense<0.000000e+00> : vector<128xf32>
    %86 = vector.multi_reduction <add>, %85, %cst_77 [0] : vector<32x128xf32> to vector<128xf32>
    %87 = vector.shape_cast %86 : vector<128xf32> to vector<1x128xf32>
    %cst_78 = arith.constant dense<0.000000e+00> : vector<1x128xf32>
    %88 = tpu.matmul %87, %0, %cst_78 {dimension_numbers = #tpu.dot_dimension_numbers<[1], [0], [0], [1], [0, 0, 1, 1], [], []>, precision = #tpu.contract_precision<fp32>} : vector<1x128xf32>, vector<128x128xf32>, vector<1x128xf32> -> vector<1x128xf32>
    %cst_79 = arith.constant 0.001953125 : f32
    %89 = vector.broadcast %cst_79 : f32 to vector<1x128xf32>
    %90 = arith.mulf %88, %89 : vector<1x128xf32>
    %cst_80 = arith.constant 9.99999974E-6 : f32
    %91 = vector.broadcast %cst_80 : f32 to vector<1x128xf32>
    %92 = arith.addf %90, %91 : vector<1x128xf32>
    %93 = math.rsqrt %92 : vector<1x128xf32>
    %94 = vector.broadcast %93 : vector<1x128xf32> to vector<32x128xf32>
    %95 = arith.mulf %84, %94 : vector<32x128xf32>
    %c0_81 = arith.constant 0 : index
    %c0_82 = arith.constant 0 : index
    %96 = vector.load %arg7[%c0_81, %c0_82] : memref<1x128xf32, #tpu.memory_space<vmem>>, vector<1x128xf32>
    %97 = vector.broadcast %96 : vector<1x128xf32> to vector<32x128xf32>
    %98 = arith.mulf %95, %97 : vector<32x128xf32>
    %c0_83 = arith.constant 0 : index
    %c0_84 = arith.constant 0 : index
    %99 = vector.load %arg8[%c0_83, %c0_84] : memref<1x128xf32, #tpu.memory_space<vmem>>, vector<1x128xf32>
    %100 = vector.broadcast %99 : vector<1x128xf32> to vector<32x128xf32>
    %101 = arith.addf %98, %100 : vector<32x128xf32>
    %cst_85 = arith.constant 0.000000e+00 : f32
    %102 = vector.broadcast %cst_85 : f32 to vector<32x128xf32>
    %103 = arith.maximumf %101, %102 : vector<32x128xf32>
    %c0_86 = arith.constant 0 : index
    %c0_87 = arith.constant 0 : index
    %104 = vector.load %arg9[%c0_86, %c0_87] : memref<128x512xf32, #tpu.memory_space<vmem>>, vector<128x512xf32>
    %cst_88 = arith.constant dense<0.000000e+00> : vector<32x512xf32>
    %105 = tpu.matmul %103, %104, %cst_88 {dimension_numbers = #tpu.dot_dimension_numbers<[1], [0], [0], [1], [0, 0, 1, 1], [], []>, precision = #tpu.contract_precision<fp32>} : vector<32x128xf32>, vector<128x512xf32>, vector<32x512xf32> -> vector<32x512xf32>
    %c0_89 = arith.constant 0 : index
    %c0_90 = arith.constant 0 : index
    %106 = vector.load %arg10[%c0_89, %c0_90] : memref<1x512xf32, #tpu.memory_space<vmem>>, vector<1x512xf32>
    %107 = vector.broadcast %106 : vector<1x512xf32> to vector<32x512xf32>
    %108 = arith.addf %105, %107 : vector<32x512xf32>
    %c0_91 = arith.constant 0 : index
    %c0_92 = arith.constant 0 : index
    %109 = vector.load %arg11[%c0_91, %c0_92] : memref<32x512xf32, #tpu.memory_space<vmem>>, vector<32x512xf32>
    tpu.vector_store %arg11[%c0_91, %c0_92], %108 {strides = array<i32>} : memref<32x512xf32, #tpu.memory_space<vmem>>, vector<32x512xf32>,
    return
  }
  func.func @transform_0(%arg0: i32) -> (i32, i32) {
    %c0_i32 = arith.constant 0 : i32
    %c0_i32_0 = arith.constant 0 : i32
    %c0_i32_1 = arith.constant 0 : i32
    return %c0_i32, %c0_i32_0 : i32, i32
  }
  func.func @transform_1(%arg0: i32) -> (i32, i32) {
    %c0_i32 = arith.constant 0 : i32
    %c0_i32_0 = arith.constant 0 : i32
    %c0_i32_1 = arith.constant 0 : i32
    return %c0_i32, %c0_i32_0 : i32, i32
  }
  func.func @transform_2(%arg0: i32) -> (i32, i32, i32) {
    %c0_i32 = arith.constant 0 : i32
    %c0_i32_0 = arith.constant 0 : i32
    %c0_i32_1 = arith.constant 0 : i32
    %c0_i32_2 = arith.constant 0 : i32
    return %c0_i32, %c0_i32_0, %c0_i32_1 : i32, i32, i32
  }
  func.func @transform_3(%arg0: i32) -> (i32, i32) {
    %c0_i32 = arith.constant 0 : i32
    %c0_i32_0 = arith.constant 0 : i32
    %c0_i32_1 = arith.constant 0 : i32
    return %c0_i32, %c0_i32_0 : i32, i32
  }
  func.func @transform_4(%arg0: i32) -> (i32, i32) {
    %c0_i32 = arith.constant 0 : i32
    %c0_i32_0 = arith.constant 0 : i32
    %c0_i32_1 = arith.constant 0 : i32
    return %c0_i32, %c0_i32_0 : i32, i32
  }
  func.func @transform_5(%arg0: i32) -> (i32, i32, i32) {
    %c0_i32 = arith.constant 0 : i32
    %c0_i32_0 = arith.constant 0 : i32
    %c0_i32_1 = arith.constant 0 : i32
    %c0_i32_2 = arith.constant 0 : i32
    return %c0_i32, %c0_i32_0, %c0_i32_1 : i32, i32, i32
  }
  func.func @transform_6(%arg0: i32) -> (i32, i32) {
    %c0_i32 = arith.constant 0 : i32
    %c0_i32_0 = arith.constant 0 : i32
    %c0_i32_1 = arith.constant 0 : i32
    return %c0_i32, %c0_i32_0 : i32, i32
  }
  func.func @transform_7(%arg0: i32) -> (i32, i32) {
    %c0_i32 = arith.constant 0 : i32
    %c0_i32_0 = arith.constant 0 : i32
    %c0_i32_1 = arith.constant 0 : i32
    return %c0_i32, %c0_i32_0 : i32, i32
  }
  func.func @transform_8(%arg0: i32) -> (i32, i32) {
    %c0_i32 = arith.constant 0 : i32
    %c0_i32_0 = arith.constant 0 : i32
    %c0_i32_1 = arith.constant 0 : i32
    return %c0_i32, %c0_i32_0 : i32, i32
  }
  func.func @transform_9(%arg0: i32) -> (i32, i32) {
    %c0_i32 = arith.constant 0 : i32
    %c0_i32_0 = arith.constant 0 : i32
    %c0_i32_1 = arith.constant 0 : i32
    return %c0_i32, %c0_i32_0 : i32, i32
  }
  func.func @transform_10(%arg0: i32) -> (i32, i32) {
    %c0_i32 = arith.constant 0 : i32
    %c0_i32_0 = arith.constant 0 : i32
    %c0_i32_1 = arith.constant 0 : i32
    return %c0_i32, %c0_i32_0 : i32, i32
  }
}

</mosaic_0001>

<llo_original>
// kernel: encoder_decoder_block.1
$region0: #{encoder_decoder_block.1}
  #allocation0 [shape = 'u32[]', space=smem, size = 0x4, offset = 0x4, fixed_abs, tag = 'smem constant byte address 0x4 - core index']
  #allocation1 [shape = 'u32[144,128]{1,0:T(1,128)}', space=vmem, size = 0x12000, scoped, tag = 'internal scratch']
  #allocation2 [shape = 'f32[2,25,64]{2,1,0:T(8,128)}', space=vmem, size = 0x8000, scoped, tag = 'scratch operand']
  #allocation3 [shape = 'f32[2,25,128]{2,1,0:T(8,128)}', space=vmem, size = 0x8000, scoped, tag = 'scratch operand']
  %s0 = inlined_call_operand.vmem [shape: f32[32,64], index: 0, kind: input, shape index: {}]
  %s1 = inlined_call_operand.vmem [shape: f32[128,128], index: 1, kind: input, shape index: {}]
  %s2 = inlined_call_operand.vmem [shape: f32[3,64,128], index: 2, kind: input, shape index: {}]
  %s3 = inlined_call_operand.vmem [shape: f32[1,128], index: 3, kind: input, shape index: {}]
  %s4 = inlined_call_operand.vmem [shape: f32[1,128], index: 4, kind: input, shape index: {}]
  %s5 = inlined_call_operand.vmem [shape: f32[3,128,128], index: 5, kind: input, shape index: {}]
  %s6 = inlined_call_operand.vmem [shape: f32[1,128], index: 6, kind: input, shape index: {}]
  %s7 = inlined_call_operand.vmem [shape: f32[1,128], index: 7, kind: input, shape index: {}]
  %s8 = inlined_call_operand.vmem [shape: f32[128,512], index: 8, kind: input, shape index: {}]
  %s9 = inlined_call_operand.vmem [shape: f32[1,512], index: 9, kind: input, shape index: {}]
  %s10 = inlined_call_operand.vmem [shape: f32[32,512], index: 10, kind: output, shape index: {}]
  %s11 = sld [smem:[#allocation0]]
  $region50: #{encoder_decoder_block.1} parent=0
    _
  %s13 = ssub.s32 1, %s11
  %s14 = scalar_select 0, %s13, %s11
  // Predicated region
  $region2: #{encoder_decoder_block.1} parent=0 // pred_check
    _
  $region3: #{encoder_decoder_block.1} parent=0 // pred_check_branch
    %16 = sbr.rel (0) target = $region5
  $region4: #{encoder_decoder_block.1} parent=0 // pred_region
    _
  $region5: #{encoder_decoder_block.1} parent=0 // pred_fallthru
    _
  // Predicated region
  $region6: #{encoder_decoder_block.1} parent=0 // pred_check
    _
  $region7: #{encoder_decoder_block.1} parent=0 // pred_check_branch
    %18 = sbr.rel (0) target = $region9
  $region8: #{encoder_decoder_block.1} parent=0 // pred_region
    _
  $region9: #{encoder_decoder_block.1} parent=0 // pred_fallthru
    _
  // Predicated region
  $region10: #{encoder_decoder_block.1} parent=0 // pred_check
    _
  $region11: #{encoder_decoder_block.1} parent=0 // pred_check_branch
    %20 = sbr.rel (0) target = $region13
  $region12: #{encoder_decoder_block.1} parent=0 // pred_region
    _
  $region13: #{encoder_decoder_block.1} parent=0 // pred_fallthru
    _
  // Predicated region
  $region14: #{encoder_decoder_block.1} parent=0 // pred_check
    _
  $region15: #{encoder_decoder_block.1} parent=0 // pred_check_branch
    %22 = sbr.rel (0) target = $region17
  $region16: #{encoder_decoder_block.1} parent=0 // pred_region
    _
  $region17: #{encoder_decoder_block.1} parent=0 // pred_fallthru
    _
  // Predicated region
  $region18: #{encoder_decoder_block.1} parent=0 // pred_check
    _
  $region19: #{encoder_decoder_block.1} parent=0 // pred_check_branch
    %24 = sbr.rel (0) target = $region21
  $region20: #{encoder_decoder_block.1} parent=0 // pred_region
    _
  $region21: #{encoder_decoder_block.1} parent=0 // pred_fallthru
    _
  // Predicated region
  $region22: #{encoder_decoder_block.1} parent=0 // pred_check
    _
  $region23: #{encoder_decoder_block.1} parent=0 // pred_check_branch
    %26 = sbr.rel (0) target = $region25
  $region24: #{encoder_decoder_block.1} parent=0 // pred_region
    _
  $region25: #{encoder_decoder_block.1} parent=0 // pred_fallthru
    _
  // Predicated region
  $region26: #{encoder_decoder_block.1} parent=0 // pred_check
    _
  $region27: #{encoder_decoder_block.1} parent=0 // pred_check_branch
    %28 = sbr.rel (0) target = $region29
  $region28: #{encoder_decoder_block.1} parent=0 // pred_region
    _
  $region29: #{encoder_decoder_block.1} parent=0 // pred_fallthru
    _
  // Predicated region
  $region30: #{encoder_decoder_block.1} parent=0 // pred_check
    _
  $region31: #{encoder_decoder_block.1} parent=0 // pred_check_branch
    %30 = sbr.rel (0) target = $region33
  $region32: #{encoder_decoder_block.1} parent=0 // pred_region
    _
  $region33: #{encoder_decoder_block.1} parent=0 // pred_fallthru
    _
  // Predicated region
  $region34: #{encoder_decoder_block.1} parent=0 // pred_check
    _
  $region35: #{encoder_decoder_block.1} parent=0 // pred_check_branch
    %32 = sbr.rel (0) target = $region37
  $region36: #{encoder_decoder_block.1} parent=0 // pred_region
    _
  $region37: #{encoder_decoder_block.1} parent=0 // pred_fallthru
    _
  // Predicated region
  $region38: #{encoder_decoder_block.1} parent=0 // pred_check
    _
  $region39: #{encoder_decoder_block.1} parent=0 // pred_check_branch
    %34 = sbr.rel (0) target = $region41
  $region40: #{encoder_decoder_block.1} parent=0 // pred_region
    _
  $region41: #{encoder_decoder_block.1} parent=0 // pred_fallthru
    _
  %v35 = vld [vmem:[%s1] sm:$0xff]
  %v36 = vld [vmem:[%s1 + $0x8] sm:$0xff]
  %v37 = vld [vmem:[%s1 + $0x10] sm:$0xff]
  %v38 = vld [vmem:[%s1 + $0x18] sm:$0xff]
  %v39 = vld [vmem:[%s1 + $0x20] sm:$0xff]
  %v40 = vld [vmem:[%s1 + $0x28] sm:$0xff]
  %v41 = vld [vmem:[%s1 + $0x30] sm:$0xff]
  %v42 = vld [vmem:[%s1 + $0x38] sm:$0xff]
  %v43 = vld [vmem:[%s1 + $0x40] sm:$0xff]
  %v44 = vld [vmem:[%s1 + $0x48] sm:$0xff]
  %v45 = vld [vmem:[%s1 + $0x50] sm:$0xff]
  %v46 = vld [vmem:[%s1 + $0x58] sm:$0xff]
  %v47 = vld [vmem:[%s1 + $0x60] sm:$0xff]
  %v48 = vld [vmem:[%s1 + $0x68] sm:$0xff]
  %v49 = vld [vmem:[%s1 + $0x70] sm:$0xff]
  %v50 = vld [vmem:[%s1 + $0x78] sm:$0xff]
  %v51 = vld [vmem:[%s0] sm:$0xff]
  %v52 = vld [vmem:[%s0 + $0x8] sm:$0xff]
  %v53 = vld [vmem:[%s0 + $0x10] sm:$0xff]
  %v54 = vld [vmem:[%s0 + $0x18] sm:$0xff]
  %vm55 = vcmask 516096
  %56 = vst.msk [vmem:[#allocation2 + $0x7] sm:$0x1] %vm55, 0.0
  %57 = vst.msk [vmem:[#allocation2 + $0x27] sm:$0x1] %vm55, 0.0
  %58 = vst.msk [vmem:[#allocation2 + $0x18] sm:$0x1] %vm55, 0.0
  %59 = vst.msk [vmem:[#allocation2 + $0x38] sm:$0x1] %vm55, 0.0
  %vm60 = vcmask 523264
  %61 = vst.msk [vmem:[#allocation2 + $0x8] sm:$0xff] %vm60, %v51
  %62 = vst.msk [vmem:[#allocation2 + $0x10] sm:$0xff] %vm60, %v52
  %63 = vst.msk [vmem:[#allocation2 + $0x28] sm:$0xff] %vm60, %v53
  %64 = vst.msk [vmem:[#allocation2 + $0x30] sm:$0xff] %vm60, %v54
  %v65 = vld [vmem:[#allocation2 + $0x7] sm:$0xff]
  %v66 = vld [vmem:[#allocation2 + $0xf] sm:$0xff]
  %v67 = vld [vmem:[#allocation2 + $0x27] sm:$0xff]
  %v68 = vld [vmem:[#allocation2 + $0x2f] sm:$0xff]
  %v69 = vld [vmem:[%s2] sm:$0xff]
  %v70 = vld [vmem:[%s2 + $0x8] sm:$0xff]
  %v71 = vld [vmem:[%s2 + $0x10] sm:$0xff]
  %v72 = vld [vmem:[%s2 + $0x18] sm:$0xff]
  %v73 = vld [vmem:[%s2 + $0x20] sm:$0xff]
  %v74 = vld [vmem:[%s2 + $0x28] sm:$0xff]
  %v75 = vld [vmem:[%s2 + $0x30] sm:$0xff]
  %v76 = vld [vmem:[%s2 + $0x38] sm:$0xff]
  %v77 = vld [vmem:[#allocation2 + $0x8] sm:$0xff]
  %v78 = vld [vmem:[#allocation2 + $0x10] sm:$0xff]
  %v79 = vld [vmem:[#allocation2 + $0x28] sm:$0xff]
  %v80 = vld [vmem:[#allocation2 + $0x30] sm:$0xff]
  %s81 = scalar_lea.vmem %s2, 64
  %v82 = vld [vmem:[%s81] sm:$0xff]
  %v83 = vld [vmem:[%s81 + $0x8] sm:$0xff]
  %v84 = vld [vmem:[%s81 + $0x10] sm:$0xff]
  %v85 = vld [vmem:[%s81 + $0x18] sm:$0xff]
  %v86 = vld [vmem:[%s81 + $0x20] sm:$0xff]
  %v87 = vld [vmem:[%s81 + $0x28] sm:$0xff]
  %v88 = vld [vmem:[%s81 + $0x30] sm:$0xff]
  %v89 = vld [vmem:[%s81 + $0x38] sm:$0xff]
  %v91 = vsel %vm60, %v77, 0
  %v94 = vsel %vm60, %v78, 0
  %v97 = vsel %vm60, %v79, 0
  %v100 = vsel %vm60, %v80, 0
  %102 = vmatprep.subr.mxu0 0.0
  %103 = vmatpush1.msra.mxu0 0.0
  %104 = vmatprep.subr.mxu0 0.0
  %105 = vmatpush1.msra.mxu0 0.0
  %106 = vmatprep.subr.mxu0 0.0
  %107 = vmatpush1.msra.mxu0 0.0
  %108 = vmatprep.subr.mxu0 0.0
  %109 = vmatpush1.msra.mxu0 0.0
  %110 = vmatprep.subr.mxu0 0.0
  %111 = vmatpush1.msra.mxu0 0.0
  %112 = vmatprep.subr.mxu0 0.0
  %113 = vmatpush1.msra.mxu0 0.0
  %114 = vmatprep.subr.mxu0 0.0
  %115 = vmatpush1.msra.mxu0 0.0
  %116 = vmatprep.subr.mxu0 0.0
  %117 = vmatpush1.msra.mxu0 0.0
  %118 = vmatprep.subr.mxu0 0.0
  %v119 = vand.u32 %v89, 4294901760
  %120 = vmatpush1.msra.mxu0 %v119
  %121 = vmatprep.subr.mxu0 0.0
  %v122 = vand.u32 %v88, 4294901760
  %123 = vmatpush1.msra.mxu0 %v122
  %124 = vmatprep.subr.mxu0 0.0
  %v125 = vand.u32 %v87, 4294901760
  %126 = vmatpush1.msra.mxu0 %v125
  %127 = vmatprep.subr.mxu0 0.0
  %v128 = vand.u32 %v86, 4294901760
  %129 = vmatpush1.msra.mxu0 %v128
  %130 = vmatprep.subr.mxu0 0.0
  %v131 = vand.u32 %v85, 4294901760
  %132 = vmatpush1.msra.mxu0 %v131
  %133 = vmatprep.subr.mxu0 0.0
  %v134 = vand.u32 %v84, 4294901760
  %135 = vmatpush1.msra.mxu0 %v134
  %136 = vmatprep.subr.mxu0 0.0
  %v137 = vand.u32 %v83, 4294901760
  %138 = vmatpush1.msra.mxu0 %v137
  %139 = vmatprep.subr.mxu0 0.0
  %v140 = vand.u32 %v82, 4294901760
  %141 = vmatpush1.msra.mxu0 %v140
  %142 = vmatprep.subr.mxu0 0.0
  %143 = vmatpush2.msra.mxu0 0.0
  %144 = vmatprep.subr.mxu0 0.0
  %145 = vmatpush2.msra.mxu0 0.0
  %146 = vmatprep.subr.mxu0 0.0
  %147 = vmatpush2.msra.mxu0 0.0
  %148 = vmatprep.subr.mxu0 0.0
  %149 = vmatpush2.msra.mxu0 0.0
  %150 = vmatprep.subr.mxu0 0.0
  %151 = vmatpush2.msra.mxu0 0.0
  %152 = vmatprep.subr.mxu0 0.0
  %153 = vmatpush2.msra.mxu0 0.0
  %154 = vmatprep.subr.mxu0 0.0
  %155 = vmatpush2.msra.mxu0 0.0
  %156 = vmatprep.subr.mxu0 0.0
  %157 = vmatpush2.msra.mxu0 0.0
  %158 = vmatprep.subr.mxu0 0.0
  %159 = vmatpush2.msra.mxu0 0.0
  %160 = vmatprep.subr.mxu0 0.0
  %161 = vmatpush2.msra.mxu0 0.0
  %162 = vmatprep.subr.mxu0 0.0
  %163 = vmatpush2.msra.mxu0 0.0
  %164 = vmatprep.subr.mxu0 0.0
  %165 = vmatpush2.msra.mxu0 0.0
  %166 = vmatprep.subr.mxu0 0.0
  %167 = vmatpush2.msra.mxu0 0.0
  %168 = vmatprep.subr.mxu0 0.0
  %169 = vmatpush2.msra.mxu0 0.0
  %170 = vmatprep.subr.mxu0 0.0
  %171 = vmatpush2.msra.mxu0 0.0
  %172 = vmatprep.subr.mxu0 0.0
  %173 = vmatpush2.msra.mxu0 0.0
  %174 = vmatprep.mubr.f32.mxu0 0.0
  %v175 = vand.u32 %v91, 4294901760
  %v176 = vsub.f32 %v91, %v175
  %v177 = vand.u32 %v176, 4294901760
  %v178 = vsub.f32 %v176, %v177
  %v179 = vand.u32 %v178, 4294901760
  %180 = vmatmul.mubr.f32.gmra.mxu0 %v179
  %v181 = vpop.f32.mrf.mxu0
  %v182 = vadd.f32 0.0, %v181
  %v183 = vpop.f32.mrf.mxu0
  %184 = vmatprep.mubr.f32.mxu0 0.0
  %v185 = vand.u32 %v94, 4294901760
  %v186 = vsub.f32 %v94, %v185
  %v187 = vand.u32 %v186, 4294901760
  %v188 = vsub.f32 %v186, %v187
  %v189 = vand.u32 %v188, 4294901760
  %190 = vmatmul.mubr.f32.gmra.mxu0 %v189
  %v191 = vpop.f32.mrf.mxu0
  %v192 = vadd.f32 0.0, %v191
  %v193 = vpop.f32.mrf.mxu0
  %194 = vmatprep.mubr.f32.mxu0 0.0
  %v195 = vand.u32 %v97, 4294901760
  %v196 = vsub.f32 %v97, %v195
  %v197 = vand.u32 %v196, 4294901760
  %v198 = vsub.f32 %v196, %v197
  %v199 = vand.u32 %v198, 4294901760
  %200 = vmatmul.mubr.f32.gmra.mxu0 %v199
  %v201 = vpop.f32.mrf.mxu0
  %v202 = vadd.f32 0.0, %v201
  %v203 = vpop.f32.mrf.mxu0
  %204 = vmatprep.mubr.f32.mxu0 0.0
  %v205 = vand.u32 %v100, 4294901760
  %v206 = vsub.f32 %v100, %v205
  %v207 = vand.u32 %v206, 4294901760
  %v208 = vsub.f32 %v206, %v207
  %v209 = vand.u32 %v208, 4294901760
  %210 = vmatmul.mubr.f32.gmra.mxu0 %v209
  %v211 = vpop.f32.mrf.mxu0
  %v212 = vadd.f32 0.0, %v211
  %v213 = vpop.f32.mrf.mxu0
  %214 = vdwg.mxu0
  %215 = vmatprep.subr.mxu0 0.0
  %216 = vmatpush1.msra.mxu0 0.0
  %217 = vmatprep.subr.mxu0 0.0
  %218 = vmatpush1.msra.mxu0 0.0
  %219 = vmatprep.subr.mxu0 0.0
  %220 = vmatpush1.msra.mxu0 0.0
  %221 = vmatprep.subr.mxu0 0.0
  %222 = vmatpush1.msra.mxu0 0.0
  %223 = vmatprep.subr.mxu0 0.0
  %224 = vmatpush1.msra.mxu0 0.0
  %225 = vmatprep.subr.mxu0 0.0
  %226 = vmatpush1.msra.mxu0 0.0
  %227 = vmatprep.subr.mxu0 0.0
  %228 = vmatpush1.msra.mxu0 0.0
  %229 = vmatprep.subr.mxu0 0.0
  %230 = vmatpush1.msra.mxu0 0.0
  %231 = vmatprep.subr.mxu0 0.0
  %v232 = vand.u32 %v89, 4294901760
  %v233 = vsub.f32 %v89, %v232
  %v234 = vand.u32 %v233, 4294901760
  %v235 = vsub.f32 %v233, %v234
  %v236 = vand.u32 %v235, 4294901760
  %237 = vmatpush1.msra.mxu0 %v236
  %238 = vmatprep.subr.mxu0 0.0
  %v239 = vand.u32 %v88, 4294901760
  %v240 = vsub.f32 %v88, %v239
  %v241 = vand.u32 %v240, 4294901760
  %v242 = vsub.f32 %v240, %v241
  %v243 = vand.u32 %v242, 4294901760
  %244 = vmatpush1.msra.mxu0 %v243
  %245 = vmatprep.subr.mxu0 0.0
  %v246 = vand.u32 %v87, 4294901760
  %v247 = vsub.f32 %v87, %v246
  %v248 = vand.u32 %v247, 4294901760
  %v249 = vsub.f32 %v247, %v248
  %v250 = vand.u32 %v249, 4294901760
  %251 = vmatpush1.msra.mxu0 %v250
  %252 = vmatprep.subr.mxu0 0.0
  %v253 = vand.u32 %v86, 4294901760
  %v254 = vsub.f32 %v86, %v253
  %v255 = vand.u32 %v254, 4294901760
  %v256 = vsub.f32 %v254, %v255
  %v257 = vand.u32 %v256, 4294901760
  %258 = vmatpush1.msra.mxu0 %v257
  %259 = vmatprep.subr.mxu0 0.0
  %v260 = vand.u32 %v85, 4294901760
  %v261 = vsub.f32 %v85, %v260
  %v262 = vand.u32 %v261, 4294901760
  %v263 = vsub.f32 %v261, %v262
  %v264 = vand.u32 %v263, 4294901760
  %265 = vmatpush1.msra.mxu0 %v264
  %266 = vmatprep.subr.mxu0 0.0
  %v267 = vand.u32 %v84, 4294901760
  %v268 = vsub.f32 %v84, %v267
  %v269 = vand.u32 %v268, 4294901760
  %v270 = vsub.f32 %v268, %v269
  %v271 = vand.u32 %v270, 4294901760
  %272 = vmatpush1.msra.mxu0 %v271
  %273 = vmatprep.subr.mxu0 0.0
  %v274 = vand.u32 %v83, 4294901760
  %v275 = vsub.f32 %v83, %v274
  %v276 = vand.u32 %v275, 4294901760
  %v277 = vsub.f32 %v275, %v276
  %v278 = vand.u32 %v277, 4294901760
  %279 = vmatpush1.msra.mxu0 %v278
  %280 = vmatprep.subr.mxu0 0.0
  %v281 = vand.u32 %v82, 4294901760
  %v282 = vsub.f32 %v82, %v281
  %v283 = vand.u32 %v282, 4294901760
  %v284 = vsub.f32 %v282, %v283
  %v285 = vand.u32 %v284, 4294901760
  %286 = vmatpush1.msra.mxu0 %v285
  %287 = vmatprep.subr.mxu0 0.0
  %288 = vmatpush2.msra.mxu0 0.0
  %289 = vmatprep.subr.mxu0 0.0
  %290 = vmatpush2.msra.mxu0 0.0
  %291 = vmatprep.subr.mxu0 0.0
  %292 = vmatpush2.msra.mxu0 0.0
  %293 = vmatprep.subr.mxu0 0.0
  %294 = vmatpush2.msra.mxu0 0.0
  %295 = vmatprep.subr.mxu0 0.0
  %296 = vmatpush2.msra.mxu0 0.0
  %297 = vmatprep.subr.mxu0 0.0
  %298 = vmatpush2.msra.mxu0 0.0
  %299 = vmatprep.subr.mxu0 0.0
  %300 = vmatpush2.msra.mxu0 0.0
  %301 = vmatprep.subr.mxu0 0.0
  %302 = vmatpush2.msra.mxu0 0.0
  %303 = vmatprep.subr.mxu0 0.0
  %304 = vmatpush2.msra.mxu0 0.0
  %305 = vmatprep.subr.mxu0 0.0
  %306 = vmatpush2.msra.mxu0 0.0
  %307 = vmatprep.subr.mxu0 0.0
  %308 = vmatpush2.msra.mxu0 0.0
  %309 = vmatprep.subr.mxu0 0.0
  %310 = vmatpush2.msra.mxu0 0.0
  %311 = vmatprep.subr.mxu0 0.0
  %312 = vmatpush2.msra.mxu0 0.0
  %313 = vmatprep.subr.mxu0 0.0
  %314 = vmatpush2.msra.mxu0 0.0
  %315 = vmatprep.subr.mxu0 0.0
  %316 = vmatpush2.msra.mxu0 0.0
  %317 = vmatprep.subr.mxu0 0.0
  %318 = vmatpush2.msra.mxu0 0.0
  %319 = vmatprep.mubr.f32.mxu0 0.0
  %v320 = vand.u32 %v91, 4294901760
  %321 = vmatmul.mubr.f32.gmra.mxu0 %v320
  %v322 = vpop.f32.mrf.mxu0
  %v323 = vadd.f32 %v182, %v322
  %v324 = vpop.f32.mrf.mxu0
  %325 = vmatprep.mubr.f32.mxu0 0.0
  %v326 = vand.u32 %v94, 4294901760
  %327 = vmatmul.mubr.f32.gmra.mxu0 %v326
  %v328 = vpop.f32.mrf.mxu0
  %v329 = vadd.f32 %v192, %v328
  %v330 = vpop.f32.mrf.mxu0
  %331 = vmatprep.mubr.f32.mxu0 0.0
  %v332 = vand.u32 %v97, 4294901760
  %333 = vmatmul.mubr.f32.gmra.mxu0 %v332
  %v334 = vpop.f32.mrf.mxu0
  %v335 = vadd.f32 %v202, %v334
  %v336 = vpop.f32.mrf.mxu0
  %337 = vmatprep.mubr.f32.mxu0 0.0
  %v338 = vand.u32 %v100, 4294901760
  %339 = vmatmul.mubr.f32.gmra.mxu0 %v338
  %v340 = vpop.f32.mrf.mxu0
  %v341 = vadd.f32 %v212, %v340
  %v342 = vpop.f32.mrf.mxu0
  %343 = vdwg.mxu0
  %344 = vmatprep.subr.mxu0 0.0
  %345 = vmatpush1.msra.mxu0 0.0
  %346 = vmatprep.subr.mxu0 0.0
  %347 = vmatpush1.msra.mxu0 0.0
  %348 = vmatprep.subr.mxu0 0.0
  %349 = vmatpush1.msra.mxu0 0.0
  %350 = vmatprep.subr.mxu0 0.0
  %351 = vmatpush1.msra.mxu0 0.0
  %352 = vmatprep.subr.mxu0 0.0
  %353 = vmatpush1.msra.mxu0 0.0
  %354 = vmatprep.subr.mxu0 0.0
  %355 = vmatpush1.msra.mxu0 0.0
  %356 = vmatprep.subr.mxu0 0.0
  %357 = vmatpush1.msra.mxu0 0.0
  %358 = vmatprep.subr.mxu0 0.0
  %359 = vmatpush1.msra.mxu0 0.0
  %360 = vmatprep.subr.mxu0 0.0
  %v361 = vand.u32 %v89, 4294901760
  %v362 = vsub.f32 %v89, %v361
  %363 = vmatpush1.msra.mxu0 %v362
  %364 = vmatprep.subr.mxu0 0.0
  %v365 = vand.u32 %v88, 4294901760
  %v366 = vsub.f32 %v88, %v365
  %367 = vmatpush1.msra.mxu0 %v366
  %368 = vmatprep.subr.mxu0 0.0
  %v369 = vand.u32 %v87, 4294901760
  %v370 = vsub.f32 %v87, %v369
  %371 = vmatpush1.msra.mxu0 %v370
  %372 = vmatprep.subr.mxu0 0.0
  %v373 = vand.u32 %v86, 4294901760
  %v374 = vsub.f32 %v86, %v373
  %375 = vmatpush1.msra.mxu0 %v374
  %376 = vmatprep.subr.mxu0 0.0
  %v377 = vand.u32 %v85, 4294901760
  %v378 = vsub.f32 %v85, %v377
  %379 = vmatpush1.msra.mxu0 %v378
  %380 = vmatprep.subr.mxu0 0.0
  %v381 = vand.u32 %v84, 4294901760
  %v382 = vsub.f32 %v84, %v381
  %383 = vmatpush1.msra.mxu0 %v382
  %384 = vmatprep.subr.mxu0 0.0
  %v385 = vand.u32 %v83, 4294901760
  %v386 = vsub.f32 %v83, %v385
  %387 = vmatpush1.msra.mxu0 %v386
  %388 = vmatprep.subr.mxu0 0.0
  %v389 = vand.u32 %v82, 4294901760
  %v390 = vsub.f32 %v82, %v389
  %391 = vmatpush1.msra.mxu0 %v390
  %392 = vmatprep.subr.mxu0 0.0
  %393 = vmatpush2.msra.mxu0 0.0
  %394 = vmatprep.subr.mxu0 0.0
  %395 = vmatpush2.msra.mxu0 0.0
  %396 = vmatprep.subr.mxu0 0.0
  %397 = vmatpush2.msra.mxu0 0.0
  %398 = vmatprep.subr.mxu0 0.0
  %399 = vmatpush2.msra.mxu0 0.0
  %400 = vmatprep.subr.mxu0 0.0
  %401 = vmatpush2.msra.mxu0 0.0
  %402 = vmatprep.subr.mxu0 0.0
  %403 = vmatpush2.msra.mxu0 0.0
  %404 = vmatprep.subr.mxu0 0.0
  %405 = vmatpush2.msra.mxu0 0.0
  %406 = vmatprep.subr.mxu0 0.0
  %407 = vmatpush2.msra.mxu0 0.0
  %408 = vmatprep.subr.mxu0 0.0
  %409 = vmatpush2.msra.mxu0 0.0
  %410 = vmatprep.subr.mxu0 0.0
  %411 = vmatpush2.msra.mxu0 0.0
  %412 = vmatprep.subr.mxu0 0.0
  %413 = vmatpush2.msra.mxu0 0.0
  %414 = vmatprep.subr.mxu0 0.0
  %415 = vmatpush2.msra.mxu0 0.0
  %416 = vmatprep.subr.mxu0 0.0
  %417 = vmatpush2.msra.mxu0 0.0
  %418 = vmatprep.subr.mxu0 0.0
  %419 = vmatpush2.msra.mxu0 0.0
  %420 = vmatprep.subr.mxu0 0.0
  %421 = vmatpush2.msra.mxu0 0.0
  %422 = vmatprep.subr.mxu0 0.0
  %423 = vmatpush2.msra.mxu0 0.0
  %424 = vmatprep.mubr.f32.mxu0 0.0
  %v425 = vand.u32 %v91, 4294901760
  %v426 = vsub.f32 %v91, %v425
  %427 = vmatmul.mubr.f32.gmra.mxu0 %v426
  %v428 = vpop.f32.mrf.mxu0
  %v429 = vadd.f32 %v323, %v428
  %v430 = vpop.f32.mrf.mxu0
  %431 = vmatprep.mubr.f32.mxu0 0.0
  %v432 = vand.u32 %v94, 4294901760
  %v433 = vsub.f32 %v94, %v432
  %434 = vmatmul.mubr.f32.gmra.mxu0 %v433
  %v435 = vpop.f32.mrf.mxu0
  %v436 = vadd.f32 %v329, %v435
  %v437 = vpop.f32.mrf.mxu0
  %438 = vmatprep.mubr.f32.mxu0 0.0
  %v439 = vand.u32 %v97, 4294901760
  %v440 = vsub.f32 %v97, %v439
  %441 = vmatmul.mubr.f32.gmra.mxu0 %v440
  %v442 = vpop.f32.mrf.mxu0
  %v443 = vadd.f32 %v335, %v442
  %v444 = vpop.f32.mrf.mxu0
  %445 = vmatprep.mubr.f32.mxu0 0.0
  %v446 = vand.u32 %v100, 4294901760
  %v447 = vsub.f32 %v100, %v446
  %448 = vmatmul.mubr.f32.gmra.mxu0 %v447
  %v449 = vpop.f32.mrf.mxu0
  %v450 = vadd.f32 %v341, %v449
  %v451 = vpop.f32.mrf.mxu0
  %452 = vdwg.mxu0
  %453 = vmatprep.subr.mxu0 0.0
  %454 = vmatpush1.msra.mxu0 0.0
  %455 = vmatprep.subr.mxu0 0.0
  %456 = vmatpush1.msra.mxu0 0.0
  %457 = vmatprep.subr.mxu0 0.0
  %458 = vmatpush1.msra.mxu0 0.0
  %459 = vmatprep.subr.mxu0 0.0
  %460 = vmatpush1.msra.mxu0 0.0
  %461 = vmatprep.subr.mxu0 0.0
  %462 = vmatpush1.msra.mxu0 0.0
  %463 = vmatprep.subr.mxu0 0.0
  %464 = vmatpush1.msra.mxu0 0.0
  %465 = vmatprep.subr.mxu0 0.0
  %466 = vmatpush1.msra.mxu0 0.0
  %467 = vmatprep.subr.mxu0 0.0
  %468 = vmatpush1.msra.mxu0 0.0
  %469 = vmatprep.subr.mxu0 0.0
  %v470 = vand.u32 %v89, 4294901760
  %471 = vmatpush1.msra.mxu0 %v470
  %472 = vmatprep.subr.mxu0 0.0
  %v473 = vand.u32 %v88, 4294901760
  %474 = vmatpush1.msra.mxu0 %v473
  %475 = vmatprep.subr.mxu0 0.0
  %v476 = vand.u32 %v87, 4294901760
  %477 = vmatpush1.msra.mxu0 %v476
  %478 = vmatprep.subr.mxu0 0.0
  %v479 = vand.u32 %v86, 4294901760
  %480 = vmatpush1.msra.mxu0 %v479
  %481 = vmatprep.subr.mxu0 0.0
  %v482 = vand.u32 %v85, 4294901760
  %483 = vmatpush1.msra.mxu0 %v482
  %484 = vmatprep.subr.mxu0 0.0
  %v485 = vand.u32 %v84, 4294901760
  %486 = vmatpush1.msra.mxu0 %v485
  %487 = vmatprep.subr.mxu0 0.0
  %v488 = vand.u32 %v83, 4294901760
  %489 = vmatpush1.msra.mxu0 %v488
  %490 = vmatprep.subr.mxu0 0.0
  %v491 = vand.u32 %v82, 4294901760
  %492 = vmatpush1.msra.mxu0 %v491
  %493 = vmatprep.subr.mxu0 0.0
  %494 = vmatpush2.msra.mxu0 0.0
  %495 = vmatprep.subr.mxu0 0.0
  %496 = vmatpush2.msra.mxu0 0.0
  %497 = vmatprep.subr.mxu0 0.0
  %498 = vmatpush2.msra.mxu0 0.0
  %499 = vmatprep.subr.mxu0 0.0
  %500 = vmatpush2.msra.mxu0 0.0
  %501 = vmatprep.subr.mxu0 0.0
  %502 = vmatpush2.msra.mxu0 0.0
  %503 = vmatprep.subr.mxu0 0.0
  %504 = vmatpush2.msra.mxu0 0.0
  %505 = vmatprep.subr.mxu0 0.0
  %506 = vmatpush2.msra.mxu0 0.0
  %507 = vmatprep.subr.mxu0 0.0
  %508 = vmatpush2.msra.mxu0 0.0
  %509 = vmatprep.subr.mxu0 0.0
  %510 = vmatpush2.msra.mxu0 0.0
  %511 = vmatprep.subr.mxu0 0.0
  %512 = vmatpush2.msra.mxu0 0.0
  %513 = vmatprep.subr.mxu0 0.0
  %514 = vmatpush2.msra.mxu0 0.0
  %515 = vmatprep.subr.mxu0 0.0
  %516 = vmatpush2.msra.mxu0 0.0
  %517 = vmatprep.subr.mxu0 0.0
  %518 = vmatpush2.msra.mxu0 0.0
  %519 = vmatprep.subr.mxu0 0.0
  %520 = vmatpush2.msra.mxu0 0.0
  %521 = vmatprep.subr.mxu0 0.0
  %522 = vmatpush2.msra.mxu0 0.0
  %523 = vmatprep.subr.mxu0 0.0
  %524 = vmatpush2.msra.mxu0 0.0
  %525 = vmatprep.mubr.f32.mxu0 0.0
  %v526 = vand.u32 %v91, 4294901760
  %v527 = vsub.f32 %v91, %v526
  %v528 = vand.u32 %v527, 4294901760
  %529 = vmatmul.mubr.f32.gmra.mxu0 %v528
  %v530 = vpop.f32.mrf.mxu0
  %v531 = vadd.f32 %v429, %v530
  %v532 = vpop.f32.mrf.mxu0
  %533 = vmatprep.mubr.f32.mxu0 0.0
  %v534 = vand.u32 %v94, 4294901760
  %v535 = vsub.f32 %v94, %v534
  %v536 = vand.u32 %v535, 4294901760
  %537 = vmatmul.mubr.f32.gmra.mxu0 %v536
  %v538 = vpop.f32.mrf.mxu0
  %v539 = vadd.f32 %v436, %v538
  %v540 = vpop.f32.mrf.mxu0
  %541 = vmatprep.mubr.f32.mxu0 0.0
  %v542 = vand.u32 %v97, 4294901760
  %v543 = vsub.f32 %v97, %v542
  %v544 = vand.u32 %v543, 4294901760
  %545 = vmatmul.mubr.f32.gmra.mxu0 %v544
  %v546 = vpop.f32.mrf.mxu0
  %v547 = vadd.f32 %v443, %v546
  %v548 = vpop.f32.mrf.mxu0
  %549 = vmatprep.mubr.f32.mxu0 0.0
  %v550 = vand.u32 %v100, 4294901760
  %v551 = vsub.f32 %v100, %v550
  %v552 = vand.u32 %v551, 4294901760
  %553 = vmatmul.mubr.f32.gmra.mxu0 %v552
  %v554 = vpop.f32.mrf.mxu0
  %v555 = vadd.f32 %v450, %v554
  %v556 = vpop.f32.mrf.mxu0
  %557 = vdwg.mxu0
  %558 = vmatprep.subr.mxu0 0.0
  %559 = vmatpush1.msra.mxu0 0.0
  %560 = vmatprep.subr.mxu0 0.0
  %561 = vmatpush1.msra.mxu0 0.0
  %562 = vmatprep.subr.mxu0 0.0
  %563 = vmatpush1.msra.mxu0 0.0
  %564 = vmatprep.subr.mxu0 0.0
  %565 = vmatpush1.msra.mxu0 0.0
  %566 = vmatprep.subr.mxu0 0.0
  %567 = vmatpush1.msra.mxu0 0.0
  %568 = vmatprep.subr.mxu0 0.0
  %569 = vmatpush1.msra.mxu0 0.0
  %570 = vmatprep.subr.mxu0 0.0
  %571 = vmatpush1.msra.mxu0 0.0
  %572 = vmatprep.subr.mxu0 0.0
  %573 = vmatpush1.msra.mxu0 0.0
  %574 = vmatprep.subr.mxu0 0.0
  %v575 = vand.u32 %v89, 4294901760
  %v576 = vsub.f32 %v89, %v575
  %v577 = vand.u32 %v576, 4294901760
  %578 = vmatpush1.msra.mxu0 %v577
  %579 = vmatprep.subr.mxu0 0.0
  %v580 = vand.u32 %v88, 4294901760
  %v581 = vsub.f32 %v88, %v580
  %v582 = vand.u32 %v581, 4294901760
  %583 = vmatpush1.msra.mxu0 %v582
  %584 = vmatprep.subr.mxu0 0.0
  %v585 = vand.u32 %v87, 4294901760
  %v586 = vsub.f32 %v87, %v585
  %v587 = vand.u32 %v586, 4294901760
  %588 = vmatpush1.msra.mxu0 %v587
  %589 = vmatprep.subr.mxu0 0.0
  %v590 = vand.u32 %v86, 4294901760
  %v591 = vsub.f32 %v86, %v590
  %v592 = vand.u32 %v591, 4294901760
  %593 = vmatpush1.msra.mxu0 %v592
  %594 = vmatprep.subr.mxu0 0.0
  %v595 = vand.u32 %v85, 4294901760
  %v596 = vsub.f32 %v85, %v595
  %v597 = vand.u32 %v596, 4294901760
  %598 = vmatpush1.msra.mxu0 %v597
  %599 = vmatprep.subr.mxu0 0.0
  %v600 = vand.u32 %v84, 4294901760
  %v601 = vsub.f32 %v84, %v600
  %v602 = vand.u32 %v601, 4294901760
  %603 = vmatpush1.msra.mxu0 %v602
  %604 = vmatprep.subr.mxu0 0.0
  %v605 = vand.u32 %v83, 4294901760
  %v606 = vsub.f32 %v83, %v605
  %v607 = vand.u32 %v606, 4294901760
  %608 = vmatpush1.msra.mxu0 %v607
  %609 = vmatprep.subr.mxu0 0.0
  %v610 = vand.u32 %v82, 4294901760
  %v611 = vsub.f32 %v82, %v610
  %v612 = vand.u32 %v611, 4294901760
  %613 = vmatpush1.msra.mxu0 %v612
  %614 = vmatprep.subr.mxu0 0.0
  %615 = vmatpush2.msra.mxu0 0.0
  %616 = vmatprep.subr.mxu0 0.0
  %617 = vmatpush2.msra.mxu0 0.0
  %618 = vmatprep.subr.mxu0 0.0
  %619 = vmatpush2.msra.mxu0 0.0
  %620 = vmatprep.subr.mxu0 0.0
  %621 = vmatpush2.msra.mxu0 0.0
  %622 = vmatprep.subr.mxu0 0.0
  %623 = vmatpush2.msra.mxu0 0.0
  %624 = vmatprep.subr.mxu0 0.0
  %625 = vmatpush2.msra.mxu0 0.0
  %626 = vmatprep.subr.mxu0 0.0
  %627 = vmatpush2.msra.mxu0 0.0
  %628 = vmatprep.subr.mxu0 0.0
  %629 = vmatpush2.msra.mxu0 0.0
  %630 = vmatprep.subr.mxu0 0.0
  %631 = vmatpush2.msra.mxu0 0.0
  %632 = vmatprep.subr.mxu0 0.0
  %633 = vmatpush2.msra.mxu0 0.0
  %634 = vmatprep.subr.mxu0 0.0
  %635 = vmatpush2.msra.mxu0 0.0
  %636 = vmatprep.subr.mxu0 0.0
  %637 = vmatpush2.msra.mxu0 0.0
  %638 = vmatprep.subr.mxu0 0.0
  %639 = vmatpush2.msra.mxu0 0.0
  %640 = vmatprep.subr.mxu0 0.0
  %641 = vmatpush2.msra.mxu0 0.0
  %642 = vmatprep.subr.mxu0 0.0
  %643 = vmatpush2.msra.mxu0 0.0
  %644 = vmatprep.subr.mxu0 0.0
  %645 = vmatpush2.msra.mxu0 0.0
  %646 = vmatprep.mubr.f32.mxu0 0.0
  %v647 = vand.u32 %v91, 4294901760
  %648 = vmatmul.mubr.f32.gmra.mxu0 %v647
  %v649 = vpop.f32.mrf.mxu0
  %v650 = vadd.f32 %v531, %v649
  %v651 = vpop.f32.mrf.mxu0
  %652 = vmatprep.mubr.f32.mxu0 0.0
  %v653 = vand.u32 %v94, 4294901760
  %654 = vmatmul.mubr.f32.gmra.mxu0 %v653
  %v655 = vpop.f32.mrf.mxu0
  %v656 = vadd.f32 %v539, %v655
  %v657 = vpop.f32.mrf.mxu0
  %658 = vmatprep.mubr.f32.mxu0 0.0
  %v659 = vand.u32 %v97, 4294901760
  %660 = vmatmul.mubr.f32.gmra.mxu0 %v659
  %v661 = vpop.f32.mrf.mxu0
  %v662 = vadd.f32 %v547, %v661
  %v663 = vpop.f32.mrf.mxu0
  %664 = vmatprep.mubr.f32.mxu0 0.0
  %v665 = vand.u32 %v100, 4294901760
  %666 = vmatmul.mubr.f32.gmra.mxu0 %v665
  %v667 = vpop.f32.mrf.mxu0
  %v668 = vadd.f32 %v555, %v667
  %v669 = vpop.f32.mrf.mxu0
  %670 = vdwg.mxu0
  %671 = vmatprep.subr.mxu0 0.0
  %672 = vmatpush1.msra.mxu0 0.0
  %673 = vmatprep.subr.mxu0 0.0
  %674 = vmatpush1.msra.mxu0 0.0
  %675 = vmatprep.subr.mxu0 0.0
  %676 = vmatpush1.msra.mxu0 0.0
  %677 = vmatprep.subr.mxu0 0.0
  %678 = vmatpush1.msra.mxu0 0.0
  %679 = vmatprep.subr.mxu0 0.0
  %680 = vmatpush1.msra.mxu0 0.0
  %681 = vmatprep.subr.mxu0 0.0
  %682 = vmatpush1.msra.mxu0 0.0
  %683 = vmatprep.subr.mxu0 0.0
  %684 = vmatpush1.msra.mxu0 0.0
  %685 = vmatprep.subr.mxu0 0.0
  %686 = vmatpush1.msra.mxu0 0.0
  %687 = vmatprep.subr.mxu0 0.0
  %v688 = vand.u32 %v89, 4294901760
  %689 = vmatpush1.msra.mxu0 %v688
  %690 = vmatprep.subr.mxu0 0.0
  %v691 = vand.u32 %v88, 4294901760
  %692 = vmatpush1.msra.mxu0 %v691
  %693 = vmatprep.subr.mxu0 0.0
  %v694 = vand.u32 %v87, 4294901760
  %695 = vmatpush1.msra.mxu0 %v694
  %696 = vmatprep.subr.mxu0 0.0
  %v697 = vand.u32 %v86, 4294901760
  %698 = vmatpush1.msra.mxu0 %v697
  %699 = vmatprep.subr.mxu0 0.0
  %v700 = vand.u32 %v85, 4294901760
  %701 = vmatpush1.msra.mxu0 %v700
  %702 = vmatprep.subr.mxu0 0.0
  %v703 = vand.u32 %v84, 4294901760
  %704 = vmatpush1.msra.mxu0 %v703
  %705 = vmatprep.subr.mxu0 0.0
  %v706 = vand.u32 %v83, 4294901760
  %707 = vmatpush1.msra.mxu0 %v706
  %708 = vmatprep.subr.mxu0 0.0
  %v709 = vand.u32 %v82, 4294901760
  %710 = vmatpush1.msra.mxu0 %v709
  %711 = vmatprep.subr.mxu0 0.0
  %712 = vmatpush2.msra.mxu0 0.0
  %713 = vmatprep.subr.mxu0 0.0
  %714 = vmatpush2.msra.mxu0 0.0
  %715 = vmatprep.subr.mxu0 0.0
  %716 = vmatpush2.msra.mxu0 0.0
  %717 = vmatprep.subr.mxu0 0.0
  %718 = vmatpush2.msra.mxu0 0.0
  %719 = vmatprep.subr.mxu0 0.0
  %720 = vmatpush2.msra.mxu0 0.0
  %721 = vmatprep.subr.mxu0 0.0
  %722 = vmatpush2.msra.mxu0 0.0
  %723 = vmatprep.subr.mxu0 0.0
  %724 = vmatpush2.msra.mxu0 0.0
  %725 = vmatprep.subr.mxu0 0.0
  %726 = vmatpush2.msra.mxu0 0.0
  %727 = vmatprep.subr.mxu0 0.0
  %728 = vmatpush2.msra.mxu0 0.0
  %729 = vmatprep.subr.mxu0 0.0
  %730 = vmatpush2.msra.mxu0 0.0
  %731 = vmatprep.subr.mxu0 0.0
  %732 = vmatpush2.msra.mxu0 0.0
  %733 = vmatprep.subr.mxu0 0.0
  %734 = vmatpush2.msra.mxu0 0.0
  %735 = vmatprep.subr.mxu0 0.0
  %736 = vmatpush2.msra.mxu0 0.0
  %737 = vmatprep.subr.mxu0 0.0
  %738 = vmatpush2.msra.mxu0 0.0
  %739 = vmatprep.subr.mxu0 0.0
  %740 = vmatpush2.msra.mxu0 0.0
  %741 = vmatprep.subr.mxu0 0.0
  %742 = vmatpush2.msra.mxu0 0.0
  %743 = vmatprep.mubr.f32.mxu0 0.0
  %v744 = vand.u32 %v91, 4294901760
  %745 = vmatmul.mubr.f32.gmra.mxu0 %v744
  %v746 = vpop.f32.mrf.mxu0
  %v747 = vadd.f32 %v650, %v746
  %v748 = vpop.f32.mrf.mxu0
  %749 = vmatprep.mubr.f32.mxu0 0.0
  %v750 = vand.u32 %v94, 4294901760
  %751 = vmatmul.mubr.f32.gmra.mxu0 %v750
  %v752 = vpop.f32.mrf.mxu0
  %v753 = vadd.f32 %v656, %v752
  %v754 = vpop.f32.mrf.mxu0
  %755 = vmatprep.mubr.f32.mxu0 0.0
  %v756 = vand.u32 %v97, 4294901760
  %757 = vmatmul.mubr.f32.gmra.mxu0 %v756
  %v758 = vpop.f32.mrf.mxu0
  %v759 = vadd.f32 %v662, %v758
  %v760 = vpop.f32.mrf.mxu0
  %761 = vmatprep.mubr.f32.mxu0 0.0
  %v762 = vand.u32 %v100, 4294901760
  %763 = vmatmul.mubr.f32.gmra.mxu0 %v762
  %v764 = vpop.f32.mrf.mxu0
  %v765 = vadd.f32 %v668, %v764
  %v766 = vpop.f32.mrf.mxu0
  %767 = vdwg.mxu0
  %v769 = vsel %vm60, %v65, 0
  %v772 = vsel %vm60, %v66, 0
  %v775 = vsel %vm60, %v67, 0
  %v778 = vsel %vm60, %v68, 0
  %780 = vmatprep.subr.mxu0 0.0
  %781 = vmatpush1.msra.mxu0 0.0
  %782 = vmatprep.subr.mxu0 0.0
  %783 = vmatpush1.msra.mxu0 0.0
  %784 = vmatprep.subr.mxu0 0.0
  %785 = vmatpush1.msra.mxu0 0.0
  %786 = vmatprep.subr.mxu0 0.0
  %787 = vmatpush1.msra.mxu0 0.0
  %788 = vmatprep.subr.mxu0 0.0
  %789 = vmatpush1.msra.mxu0 0.0
  %790 = vmatprep.subr.mxu0 0.0
  %791 = vmatpush1.msra.mxu0 0.0
  %792 = vmatprep.subr.mxu0 0.0
  %793 = vmatpush1.msra.mxu0 0.0
  %794 = vmatprep.subr.mxu0 0.0
  %795 = vmatpush1.msra.mxu0 0.0
  %796 = vmatprep.subr.mxu0 0.0
  %v797 = vand.u32 %v76, 4294901760
  %798 = vmatpush1.msra.mxu0 %v797
  %799 = vmatprep.subr.mxu0 0.0
  %v800 = vand.u32 %v75, 4294901760
  %801 = vmatpush1.msra.mxu0 %v800
  %802 = vmatprep.subr.mxu0 0.0
  %v803 = vand.u32 %v74, 4294901760
  %804 = vmatpush1.msra.mxu0 %v803
  %805 = vmatprep.subr.mxu0 0.0
  %v806 = vand.u32 %v73, 4294901760
  %807 = vmatpush1.msra.mxu0 %v806
  %808 = vmatprep.subr.mxu0 0.0
  %v809 = vand.u32 %v72, 4294901760
  %810 = vmatpush1.msra.mxu0 %v809
  %811 = vmatprep.subr.mxu0 0.0
  %v812 = vand.u32 %v71, 4294901760
  %813 = vmatpush1.msra.mxu0 %v812
  %814 = vmatprep.subr.mxu0 0.0
  %v815 = vand.u32 %v70, 4294901760
  %816 = vmatpush1.msra.mxu0 %v815
  %817 = vmatprep.subr.mxu0 0.0
  %v818 = vand.u32 %v69, 4294901760
  %819 = vmatpush1.msra.mxu0 %v818
  %820 = vmatprep.subr.mxu0 0.0
  %821 = vmatpush2.msra.mxu0 0.0
  %822 = vmatprep.subr.mxu0 0.0
  %823 = vmatpush2.msra.mxu0 0.0
  %824 = vmatprep.subr.mxu0 0.0
  %825 = vmatpush2.msra.mxu0 0.0
  %826 = vmatprep.subr.mxu0 0.0
  %827 = vmatpush2.msra.mxu0 0.0
  %828 = vmatprep.subr.mxu0 0.0
  %829 = vmatpush2.msra.mxu0 0.0
  %830 = vmatprep.subr.mxu0 0.0
  %831 = vmatpush2.msra.mxu0 0.0
  %832 = vmatprep.subr.mxu0 0.0
  %833 = vmatpush2.msra.mxu0 0.0
  %834 = vmatprep.subr.mxu0 0.0
  %835 = vmatpush2.msra.mxu0 0.0
  %836 = vmatprep.subr.mxu0 0.0
  %837 = vmatpush2.msra.mxu0 0.0
  %838 = vmatprep.subr.mxu0 0.0
  %839 = vmatpush2.msra.mxu0 0.0
  %840 = vmatprep.subr.mxu0 0.0
  %841 = vmatpush2.msra.mxu0 0.0
  %842 = vmatprep.subr.mxu0 0.0
  %843 = vmatpush2.msra.mxu0 0.0
  %844 = vmatprep.subr.mxu0 0.0
  %845 = vmatpush2.msra.mxu0 0.0
  %846 = vmatprep.subr.mxu0 0.0
  %847 = vmatpush2.msra.mxu0 0.0
  %848 = vmatprep.subr.mxu0 0.0
  %849 = vmatpush2.msra.mxu0 0.0
  %850 = vmatprep.subr.mxu0 0.0
  %851 = vmatpush2.msra.mxu0 0.0
  %852 = vmatprep.mubr.f32.mxu0 0.0
  %v853 = vand.u32 %v769, 4294901760
  %v854 = vsub.f32 %v769, %v853
  %v855 = vand.u32 %v854, 4294901760
  %v856 = vsub.f32 %v854, %v855
  %v857 = vand.u32 %v856, 4294901760
  %858 = vmatmul.mubr.f32.gmra.mxu0 %v857
  %v859 = vpop.f32.mrf.mxu0
  %v860 = vadd.f32 %v747, %v859
  %v861 = vpop.f32.mrf.mxu0
  %862 = vmatprep.mubr.f32.mxu0 0.0
  %v863 = vand.u32 %v772, 4294901760
  %v864 = vsub.f32 %v772, %v863
  %v865 = vand.u32 %v864, 4294901760
  %v866 = vsub.f32 %v864, %v865
  %v867 = vand.u32 %v866, 4294901760
  %868 = vmatmul.mubr.f32.gmra.mxu0 %v867
  %v869 = vpop.f32.mrf.mxu0
  %v870 = vadd.f32 %v753, %v869
  %v871 = vpop.f32.mrf.mxu0
  %872 = vmatprep.mubr.f32.mxu0 0.0
  %v873 = vand.u32 %v775, 4294901760
  %v874 = vsub.f32 %v775, %v873
  %v875 = vand.u32 %v874, 4294901760
  %v876 = vsub.f32 %v874, %v875
  %v877 = vand.u32 %v876, 4294901760
  %878 = vmatmul.mubr.f32.gmra.mxu0 %v877
  %v879 = vpop.f32.mrf.mxu0
  %v880 = vadd.f32 %v759, %v879
  %v881 = vpop.f32.mrf.mxu0
  %882 = vmatprep.mubr.f32.mxu0 0.0
  %v883 = vand.u32 %v778, 4294901760
  %v884 = vsub.f32 %v778, %v883
  %v885 = vand.u32 %v884, 4294901760
  %v886 = vsub.f32 %v884, %v885
  %v887 = vand.u32 %v886, 4294901760
  %888 = vmatmul.mubr.f32.gmra.mxu0 %v887
  %v889 = vpop.f32.mrf.mxu0
  %v890 = vadd.f32 %v765, %v889
  %v891 = vpop.f32.mrf.mxu0
  %892 = vdwg.mxu0
  %893 = vmatprep.subr.mxu0 0.0
  %894 = vmatpush1.msra.mxu0 0.0
  %895 = vmatprep.subr.mxu0 0.0
  %896 = vmatpush1.msra.mxu0 0.0
  %897 = vmatprep.subr.mxu0 0.0
  %898 = vmatpush1.msra.mxu0 0.0
  %899 = vmatprep.subr.mxu0 0.0
  %900 = vmatpush1.msra.mxu0 0.0
  %901 = vmatprep.subr.mxu0 0.0
  %902 = vmatpush1.msra.mxu0 0.0
  %903 = vmatprep.subr.mxu0 0.0
  %904 = vmatpush1.msra.mxu0 0.0
  %905 = vmatprep.subr.mxu0 0.0
  %906 = vmatpush1.msra.mxu0 0.0
  %907 = vmatprep.subr.mxu0 0.0
  %908 = vmatpush1.msra.mxu0 0.0
  %909 = vmatprep.subr.mxu0 0.0
  %v910 = vand.u32 %v76, 4294901760
  %v911 = vsub.f32 %v76, %v910
  %v912 = vand.u32 %v911, 4294901760
  %v913 = vsub.f32 %v911, %v912
  %v914 = vand.u32 %v913, 4294901760
  %915 = vmatpush1.msra.mxu0 %v914
  %916 = vmatprep.subr.mxu0 0.0
  %v917 = vand.u32 %v75, 4294901760
  %v918 = vsub.f32 %v75, %v917
  %v919 = vand.u32 %v918, 4294901760
  %v920 = vsub.f32 %v918, %v919
  %v921 = vand.u32 %v920, 4294901760
  %922 = vmatpush1.msra.mxu0 %v921
  %923 = vmatprep.subr.mxu0 0.0
  %v924 = vand.u32 %v74, 4294901760
  %v925 = vsub.f32 %v74, %v924
  %v926 = vand.u32 %v925, 4294901760
  %v927 = vsub.f32 %v925, %v926
  %v928 = vand.u32 %v927, 4294901760
  %929 = vmatpush1.msra.mxu0 %v928
  %930 = vmatprep.subr.mxu0 0.0
  %v931 = vand.u32 %v73, 4294901760
  %v932 = vsub.f32 %v73, %v931
  %v933 = vand.u32 %v932, 4294901760
  %v934 = vsub.f32 %v932, %v933
  %v935 = vand.u32 %v934, 4294901760
  %936 = vmatpush1.msra.mxu0 %v935
  %937 = vmatprep.subr.mxu0 0.0
  %v938 = vand.u32 %v72, 4294901760
  %v939 = vsub.f32 %v72, %v938
  %v940 = vand.u32 %v939, 4294901760
  %v941 = vsub.f32 %v939, %v940
  %v942 = vand.u32 %v941, 4294901760
  %943 = vmatpush1.msra.mxu0 %v942
  %944 = vmatprep.subr.mxu0 0.0
  %v945 = vand.u32 %v71, 4294901760
  %v946 = vsub.f32 %v71, %v945
  %v947 = vand.u32 %v946, 4294901760
  %v948 = vsub.f32 %v946, %v947
  %v949 = vand.u32 %v948, 4294901760
  %950 = vmatpush1.msra.mxu0 %v949
  %951 = vmatprep.subr.mxu0 0.0
  %v952 = vand.u32 %v70, 4294901760
  %v953 = vsub.f32 %v70, %v952
  %v954 = vand.u32 %v953, 4294901760
  %v955 = vsub.f32 %v953, %v954
  %v956 = vand.u32 %v955, 4294901760
  %957 = vmatpush1.msra.mxu0 %v956
  %958 = vmatprep.subr.mxu0 0.0
  %v959 = vand.u32 %v69, 4294901760
  %v960 = vsub.f32 %v69, %v959
  %v961 = vand.u32 %v960, 4294901760
  %v962 = vsub.f32 %v960, %v961
  %v963 = vand.u32 %v962, 4294901760
  %964 = vmatpush1.msra.mxu0 %v963
  %965 = vmatprep.subr.mxu0 0.0
  %966 = vmatpush2.msra.mxu0 0.0
  %967 = vmatprep.subr.mxu0 0.0
  %968 = vmatpush2.msra.mxu0 0.0
  %969 = vmatprep.subr.mxu0 0.0
  %970 = vmatpush2.msra.mxu0 0.0
  %971 = vmatprep.subr.mxu0 0.0
  %972 = vmatpush2.msra.mxu0 0.0
  %973 = vmatprep.subr.mxu0 0.0
  %974 = vmatpush2.msra.mxu0 0.0
  %975 = vmatprep.subr.mxu0 0.0
  %976 = vmatpush2.msra.mxu0 0.0
  %977 = vmatprep.subr.mxu0 0.0
  %978 = vmatpush2.msra.mxu0 0.0
  %979 = vmatprep.subr.mxu0 0.0
  %980 = vmatpush2.msra.mxu0 0.0
  %981 = vmatprep.subr.mxu0 0.0
  %982 = vmatpush2.msra.mxu0 0.0
  %983 = vmatprep.subr.mxu0 0.0
  %984 = vmatpush2.msra.mxu0 0.0
  %985 = vmatprep.subr.mxu0 0.0
  %986 = vmatpush2.msra.mxu0 0.0
  %987 = vmatprep.subr.mxu0 0.0
  %988 = vmatpush2.msra.mxu0 0.0
  %989 = vmatprep.subr.mxu0 0.0
  %990 = vmatpush2.msra.mxu0 0.0
  %991 = vmatprep.subr.mxu0 0.0
  %992 = vmatpush2.msra.mxu0 0.0
  %993 = vmatprep.subr.mxu0 0.0
  %994 = vmatpush2.msra.mxu0 0.0
  %995 = vmatprep.subr.mxu0 0.0
  %996 = vmatpush2.msra.mxu0 0.0
  %997 = vmatprep.mubr.f32.mxu0 0.0
  %v998 = vand.u32 %v769, 4294901760
  %999 = vmatmul.mubr.f32.gmra.mxu0 %v998
  %v1000 = vpop.f32.mrf.mxu0
  %v1001 = vadd.f32 %v860, %v1000
  %v1002 = vpop.f32.mrf.mxu0
  %1003 = vmatprep.mubr.f32.mxu0 0.0
  %v1004 = vand.u32 %v772, 4294901760
  %1005 = vmatmul.mubr.f32.gmra.mxu0 %v1004
  %v1006 = vpop.f32.mrf.mxu0
  %v1007 = vadd.f32 %v870, %v1006
  %v1008 = vpop.f32.mrf.mxu0
  %1009 = vmatprep.mubr.f32.mxu0 0.0
  %v1010 = vand.u32 %v775, 4294901760
  %1011 = vmatmul.mubr.f32.gmra.mxu0 %v1010
  %v1012 = vpop.f32.mrf.mxu0
  %v1013 = vadd.f32 %v880, %v1012
  %v1014 = vpop.f32.mrf.mxu0
  %1015 = vmatprep.mubr.f32.mxu0 0.0
  %v1016 = vand.u32 %v778, 4294901760
  %1017 = vmatmul.mubr.f32.gmra.mxu0 %v1016
  %v1018 = vpop.f32.mrf.mxu0
  %v1019 = vadd.f32 %v890, %v1018
  %v1020 = vpop.f32.mrf.mxu0
  %1021 = vdwg.mxu0
  %1022 = vmatprep.subr.mxu0 0.0
  %1023 = vmatpush1.msra.mxu0 0.0
  %1024 = vmatprep.subr.mxu0 0.0
  %1025 = vmatpush1.msra.mxu0 0.0
  %1026 = vmatprep.subr.mxu0 0.0
  %1027 = vmatpush1.msra.mxu0 0.0
  %1028 = vmatprep.subr.mxu0 0.0
  %1029 = vmatpush1.msra.mxu0 0.0
  %1030 = vmatprep.subr.mxu0 0.0
  %1031 = vmatpush1.msra.mxu0 0.0
  %1032 = vmatprep.subr.mxu0 0.0
  %1033 = vmatpush1.msra.mxu0 0.0
  %1034 = vmatprep.subr.mxu0 0.0
  %1035 = vmatpush1.msra.mxu0 0.0
  %1036 = vmatprep.subr.mxu0 0.0
  %1037 = vmatpush1.msra.mxu0 0.0
  %1038 = vmatprep.subr.mxu0 0.0
  %v1039 = vand.u32 %v76, 4294901760
  %v1040 = vsub.f32 %v76, %v1039
  %1041 = vmatpush1.msra.mxu0 %v1040
  %1042 = vmatprep.subr.mxu0 0.0
  %v1043 = vand.u32 %v75, 4294901760
  %v1044 = vsub.f32 %v75, %v1043
  %1045 = vmatpush1.msra.mxu0 %v1044
  %1046 = vmatprep.subr.mxu0 0.0
  %v1047 = vand.u32 %v74, 4294901760
  %v1048 = vsub.f32 %v74, %v1047
  %1049 = vmatpush1.msra.mxu0 %v1048
  %1050 = vmatprep.subr.mxu0 0.0
  %v1051 = vand.u32 %v73, 4294901760
  %v1052 = vsub.f32 %v73, %v1051
  %1053 = vmatpush1.msra.mxu0 %v1052
  %1054 = vmatprep.subr.mxu0 0.0
  %v1055 = vand.u32 %v72, 4294901760
  %v1056 = vsub.f32 %v72, %v1055
  %1057 = vmatpush1.msra.mxu0 %v1056
  %1058 = vmatprep.subr.mxu0 0.0
  %v1059 = vand.u32 %v71, 4294901760
  %v1060 = vsub.f32 %v71, %v1059
  %1061 = vmatpush1.msra.mxu0 %v1060
  %1062 = vmatprep.subr.mxu0 0.0
  %v1063 = vand.u32 %v70, 4294901760
  %v1064 = vsub.f32 %v70, %v1063
  %1065 = vmatpush1.msra.mxu0 %v1064
  %1066 = vmatprep.subr.mxu0 0.0
  %v1067 = vand.u32 %v69, 4294901760
  %v1068 = vsub.f32 %v69, %v1067
  %1069 = vmatpush1.msra.mxu0 %v1068
  %1070 = vmatprep.subr.mxu0 0.0
  %1071 = vmatpush2.msra.mxu0 0.0
  %1072 = vmatprep.subr.mxu0 0.0
  %1073 = vmatpush2.msra.mxu0 0.0
  %1074 = vmatprep.subr.mxu0 0.0
  %1075 = vmatpush2.msra.mxu0 0.0
  %1076 = vmatprep.subr.mxu0 0.0
  %1077 = vmatpush2.msra.mxu0 0.0
  %1078 = vmatprep.subr.mxu0 0.0
  %1079 = vmatpush2.msra.mxu0 0.0
  %1080 = vmatprep.subr.mxu0 0.0
  %1081 = vmatpush2.msra.mxu0 0.0
  %1082 = vmatprep.subr.mxu0 0.0
  %1083 = vmatpush2.msra.mxu0 0.0
  %1084 = vmatprep.subr.mxu0 0.0
  %1085 = vmatpush2.msra.mxu0 0.0
  %1086 = vmatprep.subr.mxu0 0.0
  %1087 = vmatpush2.msra.mxu0 0.0
  %1088 = vmatprep.subr.mxu0 0.0
  %1089 = vmatpush2.msra.mxu0 0.0
  %1090 = vmatprep.subr.mxu0 0.0
  %1091 = vmatpush2.msra.mxu0 0.0
  %1092 = vmatprep.subr.mxu0 0.0
  %1093 = vmatpush2.msra.mxu0 0.0
  %1094 = vmatprep.subr.mxu0 0.0
  %1095 = vmatpush2.msra.mxu0 0.0
  %1096 = vmatprep.subr.mxu0 0.0
  %1097 = vmatpush2.msra.mxu0 0.0
  %1098 = vmatprep.subr.mxu0 0.0
  %1099 = vmatpush2.msra.mxu0 0.0
  %1100 = vmatprep.subr.mxu0 0.0
  %1101 = vmatpush2.msra.mxu0 0.0
  %1102 = vmatprep.mubr.f32.mxu0 0.0
  %v1103 = vand.u32 %v769, 4294901760
  %v1104 = vsub.f32 %v769, %v1103
  %1105 = vmatmul.mubr.f32.gmra.mxu0 %v1104
  %v1106 = vpop.f32.mrf.mxu0
  %v1107 = vadd.f32 %v1001, %v1106
  %v1108 = vpop.f32.mrf.mxu0
  %1109 = vmatprep.mubr.f32.mxu0 0.0
  %v1110 = vand.u32 %v772, 4294901760
  %v1111 = vsub.f32 %v772, %v1110
  %1112 = vmatmul.mubr.f32.gmra.mxu0 %v1111
  %v1113 = vpop.f32.mrf.mxu0
  %v1114 = vadd.f32 %v1007, %v1113
  %v1115 = vpop.f32.mrf.mxu0
  %1116 = vmatprep.mubr.f32.mxu0 0.0
  %v1117 = vand.u32 %v775, 4294901760
  %v1118 = vsub.f32 %v775, %v1117
  %1119 = vmatmul.mubr.f32.gmra.mxu0 %v1118
  %v1120 = vpop.f32.mrf.mxu0
  %v1121 = vadd.f32 %v1013, %v1120
  %v1122 = vpop.f32.mrf.mxu0
  %1123 = vmatprep.mubr.f32.mxu0 0.0
  %v1124 = vand.u32 %v778, 4294901760
  %v1125 = vsub.f32 %v778, %v1124
  %1126 = vmatmul.mubr.f32.gmra.mxu0 %v1125
  %v1127 = vpop.f32.mrf.mxu0
  %v1128 = vadd.f32 %v1019, %v1127
  %v1129 = vpop.f32.mrf.mxu0
  %1130 = vdwg.mxu0
  %1131 = vmatprep.subr.mxu0 0.0
  %1132 = vmatpush1.msra.mxu0 0.0
  %1133 = vmatprep.subr.mxu0 0.0
  %1134 = vmatpush1.msra.mxu0 0.0
  %1135 = vmatprep.subr.mxu0 0.0
  %1136 = vmatpush1.msra.mxu0 0.0
  %1137 = vmatprep.subr.mxu0 0.0
  %1138 = vmatpush1.msra.mxu0 0.0
  %1139 = vmatprep.subr.mxu0 0.0
  %1140 = vmatpush1.msra.mxu0 0.0
  %1141 = vmatprep.subr.mxu0 0.0
  %1142 = vmatpush1.msra.mxu0 0.0
  %1143 = vmatprep.subr.mxu0 0.0
  %1144 = vmatpush1.msra.mxu0 0.0
  %1145 = vmatprep.subr.mxu0 0.0
  %1146 = vmatpush1.msra.mxu0 0.0
  %1147 = vmatprep.subr.mxu0 0.0
  %v1148 = vand.u32 %v76, 4294901760
  %1149 = vmatpush1.msra.mxu0 %v1148
  %1150 = vmatprep.subr.mxu0 0.0
  %v1151 = vand.u32 %v75, 4294901760
  %1152 = vmatpush1.msra.mxu0 %v1151
  %1153 = vmatprep.subr.mxu0 0.0
  %v1154 = vand.u32 %v74, 4294901760
  %1155 = vmatpush1.msra.mxu0 %v1154
  %1156 = vmatprep.subr.mxu0 0.0
  %v1157 = vand.u32 %v73, 4294901760
  %1158 = vmatpush1.msra.mxu0 %v1157
  %1159 = vmatprep.subr.mxu0 0.0
  %v1160 = vand.u32 %v72, 4294901760
  %1161 = vmatpush1.msra.mxu0 %v1160
  %1162 = vmatprep.subr.mxu0 0.0
  %v1163 = vand.u32 %v71, 4294901760
  %1164 = vmatpush1.msra.mxu0 %v1163
  %1165 = vmatprep.subr.mxu0 0.0
  %v1166 = vand.u32 %v70, 4294901760
  %1167 = vmatpush1.msra.mxu0 %v1166
  %1168 = vmatprep.subr.mxu0 0.0
  %v1169 = vand.u32 %v69, 4294901760
  %1170 = vmatpush1.msra.mxu0 %v1169
  %1171 = vmatprep.subr.mxu0 0.0
  %1172 = vmatpush2.msra.mxu0 0.0
  %1173 = vmatprep.subr.mxu0 0.0
  %1174 = vmatpush2.msra.mxu0 0.0
  %1175 = vmatprep.subr.mxu0 0.0
  %1176 = vmatpush2.msra.mxu0 0.0
  %1177 = vmatprep.subr.mxu0 0.0
  %1178 = vmatpush2.msra.mxu0 0.0
  %1179 = vmatprep.subr.mxu0 0.0
  %1180 = vmatpush2.msra.mxu0 0.0
  %1181 = vmatprep.subr.mxu0 0.0
  %1182 = vmatpush2.msra.mxu0 0.0
  %1183 = vmatprep.subr.mxu0 0.0
  %1184 = vmatpush2.msra.mxu0 0.0
  %1185 = vmatprep.subr.mxu0 0.0
  %1186 = vmatpush2.msra.mxu0 0.0
  %1187 = vmatprep.subr.mxu0 0.0
  %1188 = vmatpush2.msra.mxu0 0.0
  %1189 = vmatprep.subr.mxu0 0.0
  %1190 = vmatpush2.msra.mxu0 0.0
  %1191 = vmatprep.subr.mxu0 0.0
  %1192 = vmatpush2.msra.mxu0 0.0
  %1193 = vmatprep.subr.mxu0 0.0
  %1194 = vmatpush2.msra.mxu0 0.0
  %1195 = vmatprep.subr.mxu0 0.0
  %1196 = vmatpush2.msra.mxu0 0.0
  %1197 = vmatprep.subr.mxu0 0.0
  %1198 = vmatpush2.msra.mxu0 0.0
  %1199 = vmatprep.subr.mxu0 0.0
  %1200 = vmatpush2.msra.mxu0 0.0
  %1201 = vmatprep.subr.mxu0 0.0
  %1202 = vmatpush2.msra.mxu0 0.0
  %1203 = vmatprep.mubr.f32.mxu0 0.0
  %v1204 = vand.u32 %v769, 4294901760
  %v1205 = vsub.f32 %v769, %v1204
  %v1206 = vand.u32 %v1205, 4294901760
  %1207 = vmatmul.mubr.f32.gmra.mxu0 %v1206
  %v1208 = vpop.f32.mrf.mxu0
  %v1209 = vadd.f32 %v1107, %v1208
  %v1210 = vpop.f32.mrf.mxu0
  %1211 = vmatprep.mubr.f32.mxu0 0.0
  %v1212 = vand.u32 %v772, 4294901760
  %v1213 = vsub.f32 %v772, %v1212
  %v1214 = vand.u32 %v1213, 4294901760
  %1215 = vmatmul.mubr.f32.gmra.mxu0 %v1214
  %v1216 = vpop.f32.mrf.mxu0
  %v1217 = vadd.f32 %v1114, %v1216
  %v1218 = vpop.f32.mrf.mxu0
  %1219 = vmatprep.mubr.f32.mxu0 0.0
  %v1220 = vand.u32 %v775, 4294901760
  %v1221 = vsub.f32 %v775, %v1220
  %v1222 = vand.u32 %v1221, 4294901760
  %1223 = vmatmul.mubr.f32.gmra.mxu0 %v1222
  %v1224 = vpop.f32.mrf.mxu0
  %v1225 = vadd.f32 %v1121, %v1224
  %v1226 = vpop.f32.mrf.mxu0
  %1227 = vmatprep.mubr.f32.mxu0 0.0
  %v1228 = vand.u32 %v778, 4294901760
  %v1229 = vsub.f32 %v778, %v1228
  %v1230 = vand.u32 %v1229, 4294901760
  %1231 = vmatmul.mubr.f32.gmra.mxu0 %v1230
  %v1232 = vpop.f32.mrf.mxu0
  %v1233 = vadd.f32 %v1128, %v1232
  %v1234 = vpop.f32.mrf.mxu0
  %1235 = vdwg.mxu0
  %1236 = vmatprep.subr.mxu0 0.0
  %1237 = vmatpush1.msra.mxu0 0.0
  %1238 = vmatprep.subr.mxu0 0.0
  %1239 = vmatpush1.msra.mxu0 0.0
  %1240 = vmatprep.subr.mxu0 0.0
  %1241 = vmatpush1.msra.mxu0 0.0
  %1242 = vmatprep.subr.mxu0 0.0
  %1243 = vmatpush1.msra.mxu0 0.0
  %1244 = vmatprep.subr.mxu0 0.0
  %1245 = vmatpush1.msra.mxu0 0.0
  %1246 = vmatprep.subr.mxu0 0.0
  %1247 = vmatpush1.msra.mxu0 0.0
  %1248 = vmatprep.subr.mxu0 0.0
  %1249 = vmatpush1.msra.mxu0 0.0
  %1250 = vmatprep.subr.mxu0 0.0
  %1251 = vmatpush1.msra.mxu0 0.0
  %1252 = vmatprep.subr.mxu0 0.0
  %v1253 = vand.u32 %v76, 4294901760
  %v1254 = vsub.f32 %v76, %v1253
  %v1255 = vand.u32 %v1254, 4294901760
  %1256 = vmatpush1.msra.mxu0 %v1255
  %1257 = vmatprep.subr.mxu0 0.0
  %v1258 = vand.u32 %v75, 4294901760
  %v1259 = vsub.f32 %v75, %v1258
  %v1260 = vand.u32 %v1259, 4294901760
  %1261 = vmatpush1.msra.mxu0 %v1260
  %1262 = vmatprep.subr.mxu0 0.0
  %v1263 = vand.u32 %v74, 4294901760
  %v1264 = vsub.f32 %v74, %v1263
  %v1265 = vand.u32 %v1264, 4294901760
  %1266 = vmatpush1.msra.mxu0 %v1265
  %1267 = vmatprep.subr.mxu0 0.0
  %v1268 = vand.u32 %v73, 4294901760
  %v1269 = vsub.f32 %v73, %v1268
  %v1270 = vand.u32 %v1269, 4294901760
  %1271 = vmatpush1.msra.mxu0 %v1270
  %1272 = vmatprep.subr.mxu0 0.0
  %v1273 = vand.u32 %v72, 4294901760
  %v1274 = vsub.f32 %v72, %v1273
  %v1275 = vand.u32 %v1274, 4294901760
  %1276 = vmatpush1.msra.mxu0 %v1275
  %1277 = vmatprep.subr.mxu0 0.0
  %v1278 = vand.u32 %v71, 4294901760
  %v1279 = vsub.f32 %v71, %v1278
  %v1280 = vand.u32 %v1279, 4294901760
  %1281 = vmatpush1.msra.mxu0 %v1280
  %1282 = vmatprep.subr.mxu0 0.0
  %v1283 = vand.u32 %v70, 4294901760
  %v1284 = vsub.f32 %v70, %v1283
  %v1285 = vand.u32 %v1284, 4294901760
  %1286 = vmatpush1.msra.mxu0 %v1285
  %1287 = vmatprep.subr.mxu0 0.0
  %v1288 = vand.u32 %v69, 4294901760
  %v1289 = vsub.f32 %v69, %v1288
  %v1290 = vand.u32 %v1289, 4294901760
  %1291 = vmatpush1.msra.mxu0 %v1290
  %1292 = vmatprep.subr.mxu0 0.0
  %1293 = vmatpush2.msra.mxu0 0.0
  %1294 = vmatprep.subr.mxu0 0.0
  %1295 = vmatpush2.msra.mxu0 0.0
  %1296 = vmatprep.subr.mxu0 0.0
  %1297 = vmatpush2.msra.mxu0 0.0
  %1298 = vmatprep.subr.mxu0 0.0
  %1299 = vmatpush2.msra.mxu0 0.0
  %1300 = vmatprep.subr.mxu0 0.0
  %1301 = vmatpush2.msra.mxu0 0.0
  %1302 = vmatprep.subr.mxu0 0.0
  %1303 = vmatpush2.msra.mxu0 0.0
  %1304 = vmatprep.subr.mxu0 0.0
  %1305 = vmatpush2.msra.mxu0 0.0
  %1306 = vmatprep.subr.mxu0 0.0
  %1307 = vmatpush2.msra.mxu0 0.0
  %1308 = vmatprep.subr.mxu0 0.0
  %1309 = vmatpush2.msra.mxu0 0.0
  %1310 = vmatprep.subr.mxu0 0.0
  %1311 = vmatpush2.msra.mxu0 0.0
  %1312 = vmatprep.subr.mxu0 0.0
  %1313 = vmatpush2.msra.mxu0 0.0
  %1314 = vmatprep.subr.mxu0 0.0
  %1315 = vmatpush2.msra.mxu0 0.0
  %1316 = vmatprep.subr.mxu0 0.0
  %1317 = vmatpush2.msra.mxu0 0.0
  %1318 = vmatprep.subr.mxu0 0.0
  %1319 = vmatpush2.msra.mxu0 0.0
  %1320 = vmatprep.subr.mxu0 0.0
  %1321 = vmatpush2.msra.mxu0 0.0
  %1322 = vmatprep.subr.mxu0 0.0
  %1323 = vmatpush2.msra.mxu0 0.0
  %1324 = vmatprep.mubr.f32.mxu0 0.0
  %v1325 = vand.u32 %v769, 4294901760
  %1326 = vmatmul.mubr.f32.gmra.mxu0 %v1325
  %v1327 = vpop.f32.mrf.mxu0
  %v1328 = vadd.f32 %v1209, %v1327
  %v1329 = vpop.f32.mrf.mxu0
  %1330 = vmatprep.mubr.f32.mxu0 0.0
  %v1331 = vand.u32 %v772, 4294901760
  %1332 = vmatmul.mubr.f32.gmra.mxu0 %v1331
  %v1333 = vpop.f32.mrf.mxu0
  %v1334 = vadd.f32 %v1217, %v1333
  %v1335 = vpop.f32.mrf.mxu0
  %1336 = vmatprep.mubr.f32.mxu0 0.0
  %v1337 = vand.u32 %v775, 4294901760
  %1338 = vmatmul.mubr.f32.gmra.mxu0 %v1337
  %v1339 = vpop.f32.mrf.mxu0
  %v1340 = vadd.f32 %v1225, %v1339
  %v1341 = vpop.f32.mrf.mxu0
  %1342 = vmatprep.mubr.f32.mxu0 0.0
  %v1343 = vand.u32 %v778, 4294901760
  %1344 = vmatmul.mubr.f32.gmra.mxu0 %v1343
  %v1345 = vpop.f32.mrf.mxu0
  %v1346 = vadd.f32 %v1233, %v1345
  %v1347 = vpop.f32.mrf.mxu0
  %1348 = vdwg.mxu0
  %1349 = vmatprep.subr.mxu0 0.0
  %1350 = vmatpush1.msra.mxu0 0.0
  %1351 = vmatprep.subr.mxu0 0.0
  %1352 = vmatpush1.msra.mxu0 0.0
  %1353 = vmatprep.subr.mxu0 0.0
  %1354 = vmatpush1.msra.mxu0 0.0
  %1355 = vmatprep.subr.mxu0 0.0
  %1356 = vmatpush1.msra.mxu0 0.0
  %1357 = vmatprep.subr.mxu0 0.0
  %1358 = vmatpush1.msra.mxu0 0.0
  %1359 = vmatprep.subr.mxu0 0.0
  %1360 = vmatpush1.msra.mxu0 0.0
  %1361 = vmatprep.subr.mxu0 0.0
  %1362 = vmatpush1.msra.mxu0 0.0
  %1363 = vmatprep.subr.mxu0 0.0
  %1364 = vmatpush1.msra.mxu0 0.0
  %1365 = vmatprep.subr.mxu0 0.0
  %v1366 = vand.u32 %v76, 4294901760
  %1367 = vmatpush1.msra.mxu0 %v1366
  %1368 = vmatprep.subr.mxu0 0.0
  %v1369 = vand.u32 %v75, 4294901760
  %1370 = vmatpush1.msra.mxu0 %v1369
  %1371 = vmatprep.subr.mxu0 0.0
  %v1372 = vand.u32 %v74, 4294901760
  %1373 = vmatpush1.msra.mxu0 %v1372
  %1374 = vmatprep.subr.mxu0 0.0
  %v1375 = vand.u32 %v73, 4294901760
  %1376 = vmatpush1.msra.mxu0 %v1375
  %1377 = vmatprep.subr.mxu0 0.0
  %v1378 = vand.u32 %v72, 4294901760
  %1379 = vmatpush1.msra.mxu0 %v1378
  %1380 = vmatprep.subr.mxu0 0.0
  %v1381 = vand.u32 %v71, 4294901760
  %1382 = vmatpush1.msra.mxu0 %v1381
  %1383 = vmatprep.subr.mxu0 0.0
  %v1384 = vand.u32 %v70, 4294901760
  %1385 = vmatpush1.msra.mxu0 %v1384
  %1386 = vmatprep.subr.mxu0 0.0
  %v1387 = vand.u32 %v69, 4294901760
  %1388 = vmatpush1.msra.mxu0 %v1387
  %1389 = vmatprep.subr.mxu0 0.0
  %1390 = vmatpush2.msra.mxu0 0.0
  %1391 = vmatprep.subr.mxu0 0.0
  %1392 = vmatpush2.msra.mxu0 0.0
  %1393 = vmatprep.subr.mxu0 0.0
  %1394 = vmatpush2.msra.mxu0 0.0
  %1395 = vmatprep.subr.mxu0 0.0
  %1396 = vmatpush2.msra.mxu0 0.0
  %1397 = vmatprep.subr.mxu0 0.0
  %1398 = vmatpush2.msra.mxu0 0.0
  %1399 = vmatprep.subr.mxu0 0.0
  %1400 = vmatpush2.msra.mxu0 0.0
  %1401 = vmatprep.subr.mxu0 0.0
  %1402 = vmatpush2.msra.mxu0 0.0
  %1403 = vmatprep.subr.mxu0 0.0
  %1404 = vmatpush2.msra.mxu0 0.0
  %1405 = vmatprep.subr.mxu0 0.0
  %1406 = vmatpush2.msra.mxu0 0.0
  %1407 = vmatprep.subr.mxu0 0.0
  %1408 = vmatpush2.msra.mxu0 0.0
  %1409 = vmatprep.subr.mxu0 0.0
  %1410 = vmatpush2.msra.mxu0 0.0
  %1411 = vmatprep.subr.mxu0 0.0
  %1412 = vmatpush2.msra.mxu0 0.0
  %1413 = vmatprep.subr.mxu0 0.0
  %1414 = vmatpush2.msra.mxu0 0.0
  %1415 = vmatprep.subr.mxu0 0.0
  %1416 = vmatpush2.msra.mxu0 0.0
  %1417 = vmatprep.subr.mxu0 0.0
  %1418 = vmatpush2.msra.mxu0 0.0
  %1419 = vmatprep.subr.mxu0 0.0
  %1420 = vmatpush2.msra.mxu0 0.0
  %1421 = vmatprep.mubr.f32.mxu0 0.0
  %v1422 = vand.u32 %v769, 4294901760
  %1423 = vmatmul.mubr.f32.gmra.mxu0 %v1422
  %v1424 = vpop.f32.mrf.mxu0
  %v1425 = vadd.f32 %v1328, %v1424
  %v1426 = vpop.f32.mrf.mxu0
  %1427 = vmatprep.mubr.f32.mxu0 0.0
  %v1428 = vand.u32 %v772, 4294901760
  %1429 = vmatmul.mubr.f32.gmra.mxu0 %v1428
  %v1430 = vpop.f32.mrf.mxu0
  %v1431 = vadd.f32 %v1334, %v1430
  %v1432 = vpop.f32.mrf.mxu0
  %1433 = vmatprep.mubr.f32.mxu0 0.0
  %v1434 = vand.u32 %v775, 4294901760
  %1435 = vmatmul.mubr.f32.gmra.mxu0 %v1434
  %v1436 = vpop.f32.mrf.mxu0
  %v1437 = vadd.f32 %v1340, %v1436
  %v1438 = vpop.f32.mrf.mxu0
  %1439 = vmatprep.mubr.f32.mxu0 0.0
  %v1440 = vand.u32 %v778, 4294901760
  %1441 = vmatmul.mubr.f32.gmra.mxu0 %v1440
  %v1442 = vpop.f32.mrf.mxu0
  %v1443 = vadd.f32 %v1346, %v1442
  %v1444 = vpop.f32.mrf.mxu0
  %1445 = vdwg.mxu0
  %v1446 = vld [vmem:[#allocation2 + $0x9] sm:$0xff]
  %v1447 = vld [vmem:[#allocation2 + $0x11] sm:$0xff]
  %v1448 = vld [vmem:[#allocation2 + $0x29] sm:$0xff]
  %v1449 = vld [vmem:[#allocation2 + $0x31] sm:$0xff]
  %s1450 = scalar_lea.vmem %s2, 128
  %v1451 = vld [vmem:[%s1450] sm:$0xff]
  %v1452 = vld [vmem:[%s1450 + $0x8] sm:$0xff]
  %v1453 = vld [vmem:[%s1450 + $0x10] sm:$0xff]
  %v1454 = vld [vmem:[%s1450 + $0x18] sm:$0xff]
  %v1455 = vld [vmem:[%s1450 + $0x20] sm:$0xff]
  %v1456 = vld [vmem:[%s1450 + $0x28] sm:$0xff]
  %v1457 = vld [vmem:[%s1450 + $0x30] sm:$0xff]
  %v1458 = vld [vmem:[%s1450 + $0x38] sm:$0xff]
  %v1460 = vsel %vm60, %v1446, 0
  %v1463 = vsel %vm60, %v1447, 0
  %v1466 = vsel %vm60, %v1448, 0
  %v1469 = vsel %vm60, %v1449, 0
  %1471 = vmatprep.subr.mxu0 0.0
  %1472 = vmatpush1.msra.mxu0 0.0
  %1473 = vmatprep.subr.mxu0 0.0
  %1474 = vmatpush1.msra.mxu0 0.0
  %1475 = vmatprep.subr.mxu0 0.0
  %1476 = vmatpush1.msra.mxu0 0.0
  %1477 = vmatprep.subr.mxu0 0.0
  %1478 = vmatpush1.msra.mxu0 0.0
  %1479 = vmatprep.subr.mxu0 0.0
  %1480 = vmatpush1.msra.mxu0 0.0
  %1481 = vmatprep.subr.mxu0 0.0
  %1482 = vmatpush1.msra.mxu0 0.0
  %1483 = vmatprep.subr.mxu0 0.0
  %1484 = vmatpush1.msra.mxu0 0.0
  %1485 = vmatprep.subr.mxu0 0.0
  %1486 = vmatpush1.msra.mxu0 0.0
  %1487 = vmatprep.subr.mxu0 0.0
  %v1488 = vand.u32 %v1458, 4294901760
  %1489 = vmatpush1.msra.mxu0 %v1488
  %1490 = vmatprep.subr.mxu0 0.0
  %v1491 = vand.u32 %v1457, 4294901760
  %1492 = vmatpush1.msra.mxu0 %v1491
  %1493 = vmatprep.subr.mxu0 0.0
  %v1494 = vand.u32 %v1456, 4294901760
  %1495 = vmatpush1.msra.mxu0 %v1494
  %1496 = vmatprep.subr.mxu0 0.0
  %v1497 = vand.u32 %v1455, 4294901760
  %1498 = vmatpush1.msra.mxu0 %v1497
  %1499 = vmatprep.subr.mxu0 0.0
  %v1500 = vand.u32 %v1454, 4294901760
  %1501 = vmatpush1.msra.mxu0 %v1500
  %1502 = vmatprep.subr.mxu0 0.0
  %v1503 = vand.u32 %v1453, 4294901760
  %1504 = vmatpush1.msra.mxu0 %v1503
  %1505 = vmatprep.subr.mxu0 0.0
  %v1506 = vand.u32 %v1452, 4294901760
  %1507 = vmatpush1.msra.mxu0 %v1506
  %1508 = vmatprep.subr.mxu0 0.0
  %v1509 = vand.u32 %v1451, 4294901760
  %1510 = vmatpush1.msra.mxu0 %v1509
  %1511 = vmatprep.subr.mxu0 0.0
  %1512 = vmatpush2.msra.mxu0 0.0
  %1513 = vmatprep.subr.mxu0 0.0
  %1514 = vmatpush2.msra.mxu0 0.0
  %1515 = vmatprep.subr.mxu0 0.0
  %1516 = vmatpush2.msra.mxu0 0.0
  %1517 = vmatprep.subr.mxu0 0.0
  %1518 = vmatpush2.msra.mxu0 0.0
  %1519 = vmatprep.subr.mxu0 0.0
  %1520 = vmatpush2.msra.mxu0 0.0
  %1521 = vmatprep.subr.mxu0 0.0
  %1522 = vmatpush2.msra.mxu0 0.0
  %1523 = vmatprep.subr.mxu0 0.0
  %1524 = vmatpush2.msra.mxu0 0.0
  %1525 = vmatprep.subr.mxu0 0.0
  %1526 = vmatpush2.msra.mxu0 0.0
  %1527 = vmatprep.subr.mxu0 0.0
  %1528 = vmatpush2.msra.mxu0 0.0
  %1529 = vmatprep.subr.mxu0 0.0
  %1530 = vmatpush2.msra.mxu0 0.0
  %1531 = vmatprep.subr.mxu0 0.0
  %1532 = vmatpush2.msra.mxu0 0.0
  %1533 = vmatprep.subr.mxu0 0.0
  %1534 = vmatpush2.msra.mxu0 0.0
  %1535 = vmatprep.subr.mxu0 0.0
  %1536 = vmatpush2.msra.mxu0 0.0
  %1537 = vmatprep.subr.mxu0 0.0
  %1538 = vmatpush2.msra.mxu0 0.0
  %1539 = vmatprep.subr.mxu0 0.0
  %1540 = vmatpush2.msra.mxu0 0.0
  %1541 = vmatprep.subr.mxu0 0.0
  %1542 = vmatpush2.msra.mxu0 0.0
  %1543 = vmatprep.mubr.f32.mxu0 0.0
  %v1544 = vand.u32 %v1460, 4294901760
  %v1545 = vsub.f32 %v1460, %v1544
  %v1546 = vand.u32 %v1545, 4294901760
  %v1547 = vsub.f32 %v1545, %v1546
  %v1548 = vand.u32 %v1547, 4294901760
  %1549 = vmatmul.mubr.f32.gmra.mxu0 %v1548
  %v1550 = vpop.f32.mrf.mxu0
  %v1551 = vadd.f32 0.0, %v1550
  %v1552 = vpop.f32.mrf.mxu0
  %1553 = vmatprep.mubr.f32.mxu0 0.0
  %v1554 = vand.u32 %v1463, 4294901760
  %v1555 = vsub.f32 %v1463, %v1554
  %v1556 = vand.u32 %v1555, 4294901760
  %v1557 = vsub.f32 %v1555, %v1556
  %v1558 = vand.u32 %v1557, 4294901760
  %1559 = vmatmul.mubr.f32.gmra.mxu0 %v1558
  %v1560 = vpop.f32.mrf.mxu0
  %v1561 = vadd.f32 0.0, %v1560
  %v1562 = vpop.f32.mrf.mxu0
  %1563 = vmatprep.mubr.f32.mxu0 0.0
  %v1564 = vand.u32 %v1466, 4294901760
  %v1565 = vsub.f32 %v1466, %v1564
  %v1566 = vand.u32 %v1565, 4294901760
  %v1567 = vsub.f32 %v1565, %v1566
  %v1568 = vand.u32 %v1567, 4294901760
  %1569 = vmatmul.mubr.f32.gmra.mxu0 %v1568
  %v1570 = vpop.f32.mrf.mxu0
  %v1571 = vadd.f32 0.0, %v1570
  %v1572 = vpop.f32.mrf.mxu0
  %1573 = vmatprep.mubr.f32.mxu0 0.0
  %v1574 = vand.u32 %v1469, 4294901760
  %v1575 = vsub.f32 %v1469, %v1574
  %v1576 = vand.u32 %v1575, 4294901760
  %v1577 = vsub.f32 %v1575, %v1576
  %v1578 = vand.u32 %v1577, 4294901760
  %1579 = vmatmul.mubr.f32.gmra.mxu0 %v1578
  %v1580 = vpop.f32.mrf.mxu0
  %v1581 = vadd.f32 0.0, %v1580
  %v1582 = vpop.f32.mrf.mxu0
  %1583 = vdwg.mxu0
  %1584 = vmatprep.subr.mxu0 0.0
  %1585 = vmatpush1.msra.mxu0 0.0
  %1586 = vmatprep.subr.mxu0 0.0
  %1587 = vmatpush1.msra.mxu0 0.0
  %1588 = vmatprep.subr.mxu0 0.0
  %1589 = vmatpush1.msra.mxu0 0.0
  %1590 = vmatprep.subr.mxu0 0.0
  %1591 = vmatpush1.msra.mxu0 0.0
  %1592 = vmatprep.subr.mxu0 0.0
  %1593 = vmatpush1.msra.mxu0 0.0
  %1594 = vmatprep.subr.mxu0 0.0
  %1595 = vmatpush1.msra.mxu0 0.0
  %1596 = vmatprep.subr.mxu0 0.0
  %1597 = vmatpush1.msra.mxu0 0.0
  %1598 = vmatprep.subr.mxu0 0.0
  %1599 = vmatpush1.msra.mxu0 0.0
  %1600 = vmatprep.subr.mxu0 0.0
  %v1601 = vand.u32 %v1458, 4294901760
  %v1602 = vsub.f32 %v1458, %v1601
  %v1603 = vand.u32 %v1602, 4294901760
  %v1604 = vsub.f32 %v1602, %v1603
  %v1605 = vand.u32 %v1604, 4294901760
  %1606 = vmatpush1.msra.mxu0 %v1605
  %1607 = vmatprep.subr.mxu0 0.0
  %v1608 = vand.u32 %v1457, 4294901760
  %v1609 = vsub.f32 %v1457, %v1608
  %v1610 = vand.u32 %v1609, 4294901760
  %v1611 = vsub.f32 %v1609, %v1610
  %v1612 = vand.u32 %v1611, 4294901760
  %1613 = vmatpush1.msra.mxu0 %v1612
  %1614 = vmatprep.subr.mxu0 0.0
  %v1615 = vand.u32 %v1456, 4294901760
  %v1616 = vsub.f32 %v1456, %v1615
  %v1617 = vand.u32 %v1616, 4294901760
  %v1618 = vsub.f32 %v1616, %v1617
  %v1619 = vand.u32 %v1618, 4294901760
  %1620 = vmatpush1.msra.mxu0 %v1619
  %1621 = vmatprep.subr.mxu0 0.0
  %v1622 = vand.u32 %v1455, 4294901760
  %v1623 = vsub.f32 %v1455, %v1622
  %v1624 = vand.u32 %v1623, 4294901760
  %v1625 = vsub.f32 %v1623, %v1624
  %v1626 = vand.u32 %v1625, 4294901760
  %1627 = vmatpush1.msra.mxu0 %v1626
  %1628 = vmatprep.subr.mxu0 0.0
  %v1629 = vand.u32 %v1454, 4294901760
  %v1630 = vsub.f32 %v1454, %v1629
  %v1631 = vand.u32 %v1630, 4294901760
  %v1632 = vsub.f32 %v1630, %v1631
  %v1633 = vand.u32 %v1632, 4294901760
  %1634 = vmatpush1.msra.mxu0 %v1633
  %1635 = vmatprep.subr.mxu0 0.0
  %v1636 = vand.u32 %v1453, 4294901760
  %v1637 = vsub.f32 %v1453, %v1636
  %v1638 = vand.u32 %v1637, 4294901760
  %v1639 = vsub.f32 %v1637, %v1638
  %v1640 = vand.u32 %v1639, 4294901760
  %1641 = vmatpush1.msra.mxu0 %v1640
  %1642 = vmatprep.subr.mxu0 0.0
  %v1643 = vand.u32 %v1452, 4294901760
  %v1644 = vsub.f32 %v1452, %v1643
  %v1645 = vand.u32 %v1644, 4294901760
  %v1646 = vsub.f32 %v1644, %v1645
  %v1647 = vand.u32 %v1646, 4294901760
  %1648 = vmatpush1.msra.mxu0 %v1647
  %1649 = vmatprep.subr.mxu0 0.0
  %v1650 = vand.u32 %v1451, 4294901760
  %v1651 = vsub.f32 %v1451, %v1650
  %v1652 = vand.u32 %v1651, 4294901760
  %v1653 = vsub.f32 %v1651, %v1652
  %v1654 = vand.u32 %v1653, 4294901760
  %1655 = vmatpush1.msra.mxu0 %v1654
  %1656 = vmatprep.subr.mxu0 0.0
  %1657 = vmatpush2.msra.mxu0 0.0
  %1658 = vmatprep.subr.mxu0 0.0
  %1659 = vmatpush2.msra.mxu0 0.0
  %1660 = vmatprep.subr.mxu0 0.0
  %1661 = vmatpush2.msra.mxu0 0.0
  %1662 = vmatprep.subr.mxu0 0.0
  %1663 = vmatpush2.msra.mxu0 0.0
  %1664 = vmatprep.subr.mxu0 0.0
  %1665 = vmatpush2.msra.mxu0 0.0
  %1666 = vmatprep.subr.mxu0 0.0
  %1667 = vmatpush2.msra.mxu0 0.0
  %1668 = vmatprep.subr.mxu0 0.0
  %1669 = vmatpush2.msra.mxu0 0.0
  %1670 = vmatprep.subr.mxu0 0.0
  %1671 = vmatpush2.msra.mxu0 0.0
  %1672 = vmatprep.subr.mxu0 0.0
  %1673 = vmatpush2.msra.mxu0 0.0
  %1674 = vmatprep.subr.mxu0 0.0
  %1675 = vmatpush2.msra.mxu0 0.0
  %1676 = vmatprep.subr.mxu0 0.0
  %1677 = vmatpush2.msra.mxu0 0.0
  %1678 = vmatprep.subr.mxu0 0.0
  %1679 = vmatpush2.msra.mxu0 0.0
  %1680 = vmatprep.subr.mxu0 0.0
  %1681 = vmatpush2.msra.mxu0 0.0
  %1682 = vmatprep.subr.mxu0 0.0
  %1683 = vmatpush2.msra.mxu0 0.0
  %1684 = vmatprep.subr.mxu0 0.0
  %1685 = vmatpush2.msra.mxu0 0.0
  %1686 = vmatprep.subr.mxu0 0.0
  %1687 = vmatpush2.msra.mxu0 0.0
  %1688 = vmatprep.mubr.f32.mxu0 0.0
  %v1689 = vand.u32 %v1460, 4294901760
  %1690 = vmatmul.mubr.f32.gmra.mxu0 %v1689
  %v1691 = vpop.f32.mrf.mxu0
  %v1692 = vadd.f32 %v1551, %v1691
  %v1693 = vpop.f32.mrf.mxu0
  %1694 = vmatprep.mubr.f32.mxu0 0.0
  %v1695 = vand.u32 %v1463, 4294901760
  %1696 = vmatmul.mubr.f32.gmra.mxu0 %v1695
  %v1697 = vpop.f32.mrf.mxu0
  %v1698 = vadd.f32 %v1561, %v1697
  %v1699 = vpop.f32.mrf.mxu0
  %1700 = vmatprep.mubr.f32.mxu0 0.0
  %v1701 = vand.u32 %v1466, 4294901760
  %1702 = vmatmul.mubr.f32.gmra.mxu0 %v1701
  %v1703 = vpop.f32.mrf.mxu0
  %v1704 = vadd.f32 %v1571, %v1703
  %v1705 = vpop.f32.mrf.mxu0
  %1706 = vmatprep.mubr.f32.mxu0 0.0
  %v1707 = vand.u32 %v1469, 4294901760
  %1708 = vmatmul.mubr.f32.gmra.mxu0 %v1707
  %v1709 = vpop.f32.mrf.mxu0
  %v1710 = vadd.f32 %v1581, %v1709
  %v1711 = vpop.f32.mrf.mxu0
  %1712 = vdwg.mxu0
  %1713 = vmatprep.subr.mxu0 0.0
  %1714 = vmatpush1.msra.mxu0 0.0
  %1715 = vmatprep.subr.mxu0 0.0
  %1716 = vmatpush1.msra.mxu0 0.0
  %1717 = vmatprep.subr.mxu0 0.0
  %1718 = vmatpush1.msra.mxu0 0.0
  %1719 = vmatprep.subr.mxu0 0.0
  %1720 = vmatpush1.msra.mxu0 0.0
  %1721 = vmatprep.subr.mxu0 0.0
  %1722 = vmatpush1.msra.mxu0 0.0
  %1723 = vmatprep.subr.mxu0 0.0
  %1724 = vmatpush1.msra.mxu0 0.0
  %1725 = vmatprep.subr.mxu0 0.0
  %1726 = vmatpush1.msra.mxu0 0.0
  %1727 = vmatprep.subr.mxu0 0.0
  %1728 = vmatpush1.msra.mxu0 0.0
  %1729 = vmatprep.subr.mxu0 0.0
  %v1730 = vand.u32 %v1458, 4294901760
  %v1731 = vsub.f32 %v1458, %v1730
  %1732 = vmatpush1.msra.mxu0 %v1731
  %1733 = vmatprep.subr.mxu0 0.0
  %v1734 = vand.u32 %v1457, 4294901760
  %v1735 = vsub.f32 %v1457, %v1734
  %1736 = vmatpush1.msra.mxu0 %v1735
  %1737 = vmatprep.subr.mxu0 0.0
  %v1738 = vand.u32 %v1456, 4294901760
  %v1739 = vsub.f32 %v1456, %v1738
  %1740 = vmatpush1.msra.mxu0 %v1739
  %1741 = vmatprep.subr.mxu0 0.0
  %v1742 = vand.u32 %v1455, 4294901760
  %v1743 = vsub.f32 %v1455, %v1742
  %1744 = vmatpush1.msra.mxu0 %v1743
  %1745 = vmatprep.subr.mxu0 0.0
  %v1746 = vand.u32 %v1454, 4294901760
  %v1747 = vsub.f32 %v1454, %v1746
  %1748 = vmatpush1.msra.mxu0 %v1747
  %1749 = vmatprep.subr.mxu0 0.0
  %v1750 = vand.u32 %v1453, 4294901760
  %v1751 = vsub.f32 %v1453, %v1750
  %1752 = vmatpush1.msra.mxu0 %v1751
  %1753 = vmatprep.subr.mxu0 0.0
  %v1754 = vand.u32 %v1452, 4294901760
  %v1755 = vsub.f32 %v1452, %v1754
  %1756 = vmatpush1.msra.mxu0 %v1755
  %1757 = vmatprep.subr.mxu0 0.0
  %v1758 = vand.u32 %v1451, 4294901760
  %v1759 = vsub.f32 %v1451, %v1758
  %1760 = vmatpush1.msra.mxu0 %v1759
  %1761 = vmatprep.subr.mxu0 0.0
  %1762 = vmatpush2.msra.mxu0 0.0
  %1763 = vmatprep.subr.mxu0 0.0
  %1764 = vmatpush2.msra.mxu0 0.0
  %1765 = vmatprep.subr.mxu0 0.0
  %1766 = vmatpush2.msra.mxu0 0.0
  %1767 = vmatprep.subr.mxu0 0.0
  %1768 = vmatpush2.msra.mxu0 0.0
  %1769 = vmatprep.subr.mxu0 0.0
  %1770 = vmatpush2.msra.mxu0 0.0
  %1771 = vmatprep.subr.mxu0 0.0
  %1772 = vmatpush2.msra.mxu0 0.0
  %1773 = vmatprep.subr.mxu0 0.0
  %1774 = vmatpush2.msra.mxu0 0.0
  %1775 = vmatprep.subr.mxu0 0.0
  %1776 = vmatpush2.msra.mxu0 0.0
  %1777 = vmatprep.subr.mxu0 0.0
  %1778 = vmatpush2.msra.mxu0 0.0
  %1779 = vmatprep.subr.mxu0 0.0
  %1780 = vmatpush2.msra.mxu0 0.0
  %1781 = vmatprep.subr.mxu0 0.0
  %1782 = vmatpush2.msra.mxu0 0.0
  %1783 = vmatprep.subr.mxu0 0.0
  %1784 = vmatpush2.msra.mxu0 0.0
  %1785 = vmatprep.subr.mxu0 0.0
  %1786 = vmatpush2.msra.mxu0 0.0
  %1787 = vmatprep.subr.mxu0 0.0
  %1788 = vmatpush2.msra.mxu0 0.0
  %1789 = vmatprep.subr.mxu0 0.0
  %1790 = vmatpush2.msra.mxu0 0.0
  %1791 = vmatprep.subr.mxu0 0.0
  %1792 = vmatpush2.msra.mxu0 0.0
  %1793 = vmatprep.mubr.f32.mxu0 0.0
  %v1794 = vand.u32 %v1460, 4294901760
  %v1795 = vsub.f32 %v1460, %v1794
  %1796 = vmatmul.mubr.f32.gmra.mxu0 %v1795
  %v1797 = vpop.f32.mrf.mxu0
  %v1798 = vadd.f32 %v1692, %v1797
  %v1799 = vpop.f32.mrf.mxu0
  %1800 = vmatprep.mubr.f32.mxu0 0.0
  %v1801 = vand.u32 %v1463, 4294901760
  %v1802 = vsub.f32 %v1463, %v1801
  %1803 = vmatmul.mubr.f32.gmra.mxu0 %v1802
  %v1804 = vpop.f32.mrf.mxu0
  %v1805 = vadd.f32 %v1698, %v1804
  %v1806 = vpop.f32.mrf.mxu0
  %1807 = vmatprep.mubr.f32.mxu0 0.0
  %v1808 = vand.u32 %v1466, 4294901760
  %v1809 = vsub.f32 %v1466, %v1808
  %1810 = vmatmul.mubr.f32.gmra.mxu0 %v1809
  %v1811 = vpop.f32.mrf.mxu0
  %v1812 = vadd.f32 %v1704, %v1811
  %v1813 = vpop.f32.mrf.mxu0
  %1814 = vmatprep.mubr.f32.mxu0 0.0
  %v1815 = vand.u32 %v1469, 4294901760
  %v1816 = vsub.f32 %v1469, %v1815
  %1817 = vmatmul.mubr.f32.gmra.mxu0 %v1816
  %v1818 = vpop.f32.mrf.mxu0
  %v1819 = vadd.f32 %v1710, %v1818
  %v1820 = vpop.f32.mrf.mxu0
  %1821 = vdwg.mxu0
  %1822 = vmatprep.subr.mxu0 0.0
  %1823 = vmatpush1.msra.mxu0 0.0
  %1824 = vmatprep.subr.mxu0 0.0
  %1825 = vmatpush1.msra.mxu0 0.0
  %1826 = vmatprep.subr.mxu0 0.0
  %1827 = vmatpush1.msra.mxu0 0.0
  %1828 = vmatprep.subr.mxu0 0.0
  %1829 = vmatpush1.msra.mxu0 0.0
  %1830 = vmatprep.subr.mxu0 0.0
  %1831 = vmatpush1.msra.mxu0 0.0
  %1832 = vmatprep.subr.mxu0 0.0
  %1833 = vmatpush1.msra.mxu0 0.0
  %1834 = vmatprep.subr.mxu0 0.0
  %1835 = vmatpush1.msra.mxu0 0.0
  %1836 = vmatprep.subr.mxu0 0.0
  %1837 = vmatpush1.msra.mxu0 0.0
  %1838 = vmatprep.subr.mxu0 0.0
  %v1839 = vand.u32 %v1458, 4294901760
  %1840 = vmatpush1.msra.mxu0 %v1839
  %1841 = vmatprep.subr.mxu0 0.0
  %v1842 = vand.u32 %v1457, 4294901760
  %1843 = vmatpush1.msra.mxu0 %v1842
  %1844 = vmatprep.subr.mxu0 0.0
  %v1845 = vand.u32 %v1456, 4294901760
  %1846 = vmatpush1.msra.mxu0 %v1845
  %1847 = vmatprep.subr.mxu0 0.0
  %v1848 = vand.u32 %v1455, 4294901760
  %1849 = vmatpush1.msra.mxu0 %v1848
  %1850 = vmatprep.subr.mxu0 0.0
  %v1851 = vand.u32 %v1454, 4294901760
  %1852 = vmatpush1.msra.mxu0 %v1851
  %1853 = vmatprep.subr.mxu0 0.0
  %v1854 = vand.u32 %v1453, 4294901760
  %1855 = vmatpush1.msra.mxu0 %v1854
  %1856 = vmatprep.subr.mxu0 0.0
  %v1857 = vand.u32 %v1452, 4294901760
  %1858 = vmatpush1.msra.mxu0 %v1857
  %1859 = vmatprep.subr.mxu0 0.0
  %v1860 = vand.u32 %v1451, 4294901760
  %1861 = vmatpush1.msra.mxu0 %v1860
  %1862 = vmatprep.subr.mxu0 0.0
  %1863 = vmatpush2.msra.mxu0 0.0
  %1864 = vmatprep.subr.mxu0 0.0
  %1865 = vmatpush2.msra.mxu0 0.0
  %1866 = vmatprep.subr.mxu0 0.0
  %1867 = vmatpush2.msra.mxu0 0.0
  %1868 = vmatprep.subr.mxu0 0.0
  %1869 = vmatpush2.msra.mxu0 0.0
  %1870 = vmatprep.subr.mxu0 0.0
  %1871 = vmatpush2.msra.mxu0 0.0
  %1872 = vmatprep.subr.mxu0 0.0
  %1873 = vmatpush2.msra.mxu0 0.0
  %1874 = vmatprep.subr.mxu0 0.0
  %1875 = vmatpush2.msra.mxu0 0.0
  %1876 = vmatprep.subr.mxu0 0.0
  %1877 = vmatpush2.msra.mxu0 0.0
  %1878 = vmatprep.subr.mxu0 0.0
  %1879 = vmatpush2.msra.mxu0 0.0
  %1880 = vmatprep.subr.mxu0 0.0
  %1881 = vmatpush2.msra.mxu0 0.0
  %1882 = vmatprep.subr.mxu0 0.0
  %1883 = vmatpush2.msra.mxu0 0.0
  %1884 = vmatprep.subr.mxu0 0.0
  %1885 = vmatpush2.msra.mxu0 0.0
  %1886 = vmatprep.subr.mxu0 0.0
  %1887 = vmatpush2.msra.mxu0 0.0
  %1888 = vmatprep.subr.mxu0 0.0
  %1889 = vmatpush2.msra.mxu0 0.0
  %1890 = vmatprep.subr.mxu0 0.0
  %1891 = vmatpush2.msra.mxu0 0.0
  %1892 = vmatprep.subr.mxu0 0.0
  %1893 = vmatpush2.msra.mxu0 0.0
  %1894 = vmatprep.mubr.f32.mxu0 0.0
  %v1895 = vand.u32 %v1460, 4294901760
  %v1896 = vsub.f32 %v1460, %v1895
  %v1897 = vand.u32 %v1896, 4294901760
  %1898 = vmatmul.mubr.f32.gmra.mxu0 %v1897
  %v1899 = vpop.f32.mrf.mxu0
  %v1900 = vadd.f32 %v1798, %v1899
  %v1901 = vpop.f32.mrf.mxu0
  %1902 = vmatprep.mubr.f32.mxu0 0.0
  %v1903 = vand.u32 %v1463, 4294901760
  %v1904 = vsub.f32 %v1463, %v1903
  %v1905 = vand.u32 %v1904, 4294901760
  %1906 = vmatmul.mubr.f32.gmra.mxu0 %v1905
  %v1907 = vpop.f32.mrf.mxu0
  %v1908 = vadd.f32 %v1805, %v1907
  %v1909 = vpop.f32.mrf.mxu0
  %1910 = vmatprep.mubr.f32.mxu0 0.0
  %v1911 = vand.u32 %v1466, 4294901760
  %v1912 = vsub.f32 %v1466, %v1911
  %v1913 = vand.u32 %v1912, 4294901760
  %1914 = vmatmul.mubr.f32.gmra.mxu0 %v1913
  %v1915 = vpop.f32.mrf.mxu0
  %v1916 = vadd.f32 %v1812, %v1915
  %v1917 = vpop.f32.mrf.mxu0
  %1918 = vmatprep.mubr.f32.mxu0 0.0
  %v1919 = vand.u32 %v1469, 4294901760
  %v1920 = vsub.f32 %v1469, %v1919
  %v1921 = vand.u32 %v1920, 4294901760
  %1922 = vmatmul.mubr.f32.gmra.mxu0 %v1921
  %v1923 = vpop.f32.mrf.mxu0
  %v1924 = vadd.f32 %v1819, %v1923
  %v1925 = vpop.f32.mrf.mxu0
  %1926 = vdwg.mxu0
  %1927 = vmatprep.subr.mxu0 0.0
  %1928 = vmatpush1.msra.mxu0 0.0
  %1929 = vmatprep.subr.mxu0 0.0
  %1930 = vmatpush1.msra.mxu0 0.0
  %1931 = vmatprep.subr.mxu0 0.0
  %1932 = vmatpush1.msra.mxu0 0.0
  %1933 = vmatprep.subr.mxu0 0.0
  %1934 = vmatpush1.msra.mxu0 0.0
  %1935 = vmatprep.subr.mxu0 0.0
  %1936 = vmatpush1.msra.mxu0 0.0
  %1937 = vmatprep.subr.mxu0 0.0
  %1938 = vmatpush1.msra.mxu0 0.0
  %1939 = vmatprep.subr.mxu0 0.0
  %1940 = vmatpush1.msra.mxu0 0.0
  %1941 = vmatprep.subr.mxu0 0.0
  %1942 = vmatpush1.msra.mxu0 0.0
  %1943 = vmatprep.subr.mxu0 0.0
  %v1944 = vand.u32 %v1458, 4294901760
  %v1945 = vsub.f32 %v1458, %v1944
  %v1946 = vand.u32 %v1945, 4294901760
  %1947 = vmatpush1.msra.mxu0 %v1946
  %1948 = vmatprep.subr.mxu0 0.0
  %v1949 = vand.u32 %v1457, 4294901760
  %v1950 = vsub.f32 %v1457, %v1949
  %v1951 = vand.u32 %v1950, 4294901760
  %1952 = vmatpush1.msra.mxu0 %v1951
  %1953 = vmatprep.subr.mxu0 0.0
  %v1954 = vand.u32 %v1456, 4294901760
  %v1955 = vsub.f32 %v1456, %v1954
  %v1956 = vand.u32 %v1955, 4294901760
  %1957 = vmatpush1.msra.mxu0 %v1956
  %1958 = vmatprep.subr.mxu0 0.0
  %v1959 = vand.u32 %v1455, 4294901760
  %v1960 = vsub.f32 %v1455, %v1959
  %v1961 = vand.u32 %v1960, 4294901760
  %1962 = vmatpush1.msra.mxu0 %v1961
  %1963 = vmatprep.subr.mxu0 0.0
  %v1964 = vand.u32 %v1454, 4294901760
  %v1965 = vsub.f32 %v1454, %v1964
  %v1966 = vand.u32 %v1965, 4294901760
  %1967 = vmatpush1.msra.mxu0 %v1966
  %1968 = vmatprep.subr.mxu0 0.0
  %v1969 = vand.u32 %v1453, 4294901760
  %v1970 = vsub.f32 %v1453, %v1969
  %v1971 = vand.u32 %v1970, 4294901760
  %1972 = vmatpush1.msra.mxu0 %v1971
  %1973 = vmatprep.subr.mxu0 0.0
  %v1974 = vand.u32 %v1452, 4294901760
  %v1975 = vsub.f32 %v1452, %v1974
  %v1976 = vand.u32 %v1975, 4294901760
  %1977 = vmatpush1.msra.mxu0 %v1976
  %1978 = vmatprep.subr.mxu0 0.0
  %v1979 = vand.u32 %v1451, 4294901760
  %v1980 = vsub.f32 %v1451, %v1979
  %v1981 = vand.u32 %v1980, 4294901760
  %1982 = vmatpush1.msra.mxu0 %v1981
  %1983 = vmatprep.subr.mxu0 0.0
  %1984 = vmatpush2.msra.mxu0 0.0
  %1985 = vmatprep.subr.mxu0 0.0
  %1986 = vmatpush2.msra.mxu0 0.0
  %1987 = vmatprep.subr.mxu0 0.0
  %1988 = vmatpush2.msra.mxu0 0.0
  %1989 = vmatprep.subr.mxu0 0.0
  %1990 = vmatpush2.msra.mxu0 0.0
  %1991 = vmatprep.subr.mxu0 0.0
  %1992 = vmatpush2.msra.mxu0 0.0
  %1993 = vmatprep.subr.mxu0 0.0
  %1994 = vmatpush2.msra.mxu0 0.0
  %1995 = vmatprep.subr.mxu0 0.0
  %1996 = vmatpush2.msra.mxu0 0.0
  %1997 = vmatprep.subr.mxu0 0.0
  %1998 = vmatpush2.msra.mxu0 0.0
  %1999 = vmatprep.subr.mxu0 0.0
  %2000 = vmatpush2.msra.mxu0 0.0
  %2001 = vmatprep.subr.mxu0 0.0
  %2002 = vmatpush2.msra.mxu0 0.0
  %2003 = vmatprep.subr.mxu0 0.0
  %2004 = vmatpush2.msra.mxu0 0.0
  %2005 = vmatprep.subr.mxu0 0.0
  %2006 = vmatpush2.msra.mxu0 0.0
  %2007 = vmatprep.subr.mxu0 0.0
  %2008 = vmatpush2.msra.mxu0 0.0
  %2009 = vmatprep.subr.mxu0 0.0
  %2010 = vmatpush2.msra.mxu0 0.0
  %2011 = vmatprep.subr.mxu0 0.0
  %2012 = vmatpush2.msra.mxu0 0.0
  %2013 = vmatprep.subr.mxu0 0.0
  %2014 = vmatpush2.msra.mxu0 0.0
  %2015 = vmatprep.mubr.f32.mxu0 0.0
  %v2016 = vand.u32 %v1460, 4294901760
  %2017 = vmatmul.mubr.f32.gmra.mxu0 %v2016
  %v2018 = vpop.f32.mrf.mxu0
  %v2019 = vadd.f32 %v1900, %v2018
  %v2020 = vpop.f32.mrf.mxu0
  %2021 = vmatprep.mubr.f32.mxu0 0.0
  %v2022 = vand.u32 %v1463, 4294901760
  %2023 = vmatmul.mubr.f32.gmra.mxu0 %v2022
  %v2024 = vpop.f32.mrf.mxu0
  %v2025 = vadd.f32 %v1908, %v2024
  %v2026 = vpop.f32.mrf.mxu0
  %2027 = vmatprep.mubr.f32.mxu0 0.0
  %v2028 = vand.u32 %v1466, 4294901760
  %2029 = vmatmul.mubr.f32.gmra.mxu0 %v2028
  %v2030 = vpop.f32.mrf.mxu0
  %v2031 = vadd.f32 %v1916, %v2030
  %v2032 = vpop.f32.mrf.mxu0
  %2033 = vmatprep.mubr.f32.mxu0 0.0
  %v2034 = vand.u32 %v1469, 4294901760
  %2035 = vmatmul.mubr.f32.gmra.mxu0 %v2034
  %v2036 = vpop.f32.mrf.mxu0
  %v2037 = vadd.f32 %v1924, %v2036
  %v2038 = vpop.f32.mrf.mxu0
  %2039 = vdwg.mxu0
  %2040 = vmatprep.subr.mxu0 0.0
  %2041 = vmatpush1.msra.mxu0 0.0
  %2042 = vmatprep.subr.mxu0 0.0
  %2043 = vmatpush1.msra.mxu0 0.0
  %2044 = vmatprep.subr.mxu0 0.0
  %2045 = vmatpush1.msra.mxu0 0.0
  %2046 = vmatprep.subr.mxu0 0.0
  %2047 = vmatpush1.msra.mxu0 0.0
  %2048 = vmatprep.subr.mxu0 0.0
  %2049 = vmatpush1.msra.mxu0 0.0
  %2050 = vmatprep.subr.mxu0 0.0
  %2051 = vmatpush1.msra.mxu0 0.0
  %2052 = vmatprep.subr.mxu0 0.0
  %2053 = vmatpush1.msra.mxu0 0.0
  %2054 = vmatprep.subr.mxu0 0.0
  %2055 = vmatpush1.msra.mxu0 0.0
  %2056 = vmatprep.subr.mxu0 0.0
  %v2057 = vand.u32 %v1458, 4294901760
  %2058 = vmatpush1.msra.mxu0 %v2057
  %2059 = vmatprep.subr.mxu0 0.0
  %v2060 = vand.u32 %v1457, 4294901760
  %2061 = vmatpush1.msra.mxu0 %v2060
  %2062 = vmatprep.subr.mxu0 0.0
  %v2063 = vand.u32 %v1456, 4294901760
  %2064 = vmatpush1.msra.mxu0 %v2063
  %2065 = vmatprep.subr.mxu0 0.0
  %v2066 = vand.u32 %v1455, 4294901760
  %2067 = vmatpush1.msra.mxu0 %v2066
  %2068 = vmatprep.subr.mxu0 0.0
  %v2069 = vand.u32 %v1454, 4294901760
  %2070 = vmatpush1.msra.mxu0 %v2069
  %2071 = vmatprep.subr.mxu0 0.0
  %v2072 = vand.u32 %v1453, 4294901760
  %2073 = vmatpush1.msra.mxu0 %v2072
  %2074 = vmatprep.subr.mxu0 0.0
  %v2075 = vand.u32 %v1452, 4294901760
  %2076 = vmatpush1.msra.mxu0 %v2075
  %2077 = vmatprep.subr.mxu0 0.0
  %v2078 = vand.u32 %v1451, 4294901760
  %2079 = vmatpush1.msra.mxu0 %v2078
  %2080 = vmatprep.subr.mxu0 0.0
  %2081 = vmatpush2.msra.mxu0 0.0
  %2082 = vmatprep.subr.mxu0 0.0
  %2083 = vmatpush2.msra.mxu0 0.0
  %2084 = vmatprep.subr.mxu0 0.0
  %2085 = vmatpush2.msra.mxu0 0.0
  %2086 = vmatprep.subr.mxu0 0.0
  %2087 = vmatpush2.msra.mxu0 0.0
  %2088 = vmatprep.subr.mxu0 0.0
  %2089 = vmatpush2.msra.mxu0 0.0
  %2090 = vmatprep.subr.mxu0 0.0
  %2091 = vmatpush2.msra.mxu0 0.0
  %2092 = vmatprep.subr.mxu0 0.0
  %2093 = vmatpush2.msra.mxu0 0.0
  %2094 = vmatprep.subr.mxu0 0.0
  %2095 = vmatpush2.msra.mxu0 0.0
  %2096 = vmatprep.subr.mxu0 0.0
  %2097 = vmatpush2.msra.mxu0 0.0
  %2098 = vmatprep.subr.mxu0 0.0
  %2099 = vmatpush2.msra.mxu0 0.0
  %2100 = vmatprep.subr.mxu0 0.0
  %2101 = vmatpush2.msra.mxu0 0.0
  %2102 = vmatprep.subr.mxu0 0.0
  %2103 = vmatpush2.msra.mxu0 0.0
  %2104 = vmatprep.subr.mxu0 0.0
  %2105 = vmatpush2.msra.mxu0 0.0
  %2106 = vmatprep.subr.mxu0 0.0
  %2107 = vmatpush2.msra.mxu0 0.0
  %2108 = vmatprep.subr.mxu0 0.0
  %2109 = vmatpush2.msra.mxu0 0.0
  %2110 = vmatprep.subr.mxu0 0.0
  %2111 = vmatpush2.msra.mxu0 0.0
  %2112 = vmatprep.mubr.f32.mxu0 0.0
  %v2113 = vand.u32 %v1460, 4294901760
  %2114 = vmatmul.mubr.f32.gmra.mxu0 %v2113
  %v2115 = vpop.f32.mrf.mxu0
  %v2116 = vadd.f32 %v2019, %v2115
  %v2117 = vpop.f32.mrf.mxu0
  %2118 = vmatprep.mubr.f32.mxu0 0.0
  %v2119 = vand.u32 %v1463, 4294901760
  %2120 = vmatmul.mubr.f32.gmra.mxu0 %v2119
  %v2121 = vpop.f32.mrf.mxu0
  %v2122 = vadd.f32 %v2025, %v2121
  %v2123 = vpop.f32.mrf.mxu0
  %2124 = vmatprep.mubr.f32.mxu0 0.0
  %v2125 = vand.u32 %v1466, 4294901760
  %2126 = vmatmul.mubr.f32.gmra.mxu0 %v2125
  %v2127 = vpop.f32.mrf.mxu0
  %v2128 = vadd.f32 %v2031, %v2127
  %v2129 = vpop.f32.mrf.mxu0
  %2130 = vmatprep.mubr.f32.mxu0 0.0
  %v2131 = vand.u32 %v1469, 4294901760
  %2132 = vmatmul.mubr.f32.gmra.mxu0 %v2131
  %v2133 = vpop.f32.mrf.mxu0
  %v2134 = vadd.f32 %v2037, %v2133
  %v2135 = vpop.f32.mrf.mxu0
  %2136 = vdwg.mxu0
  %v2137 = vadd.f32 %v1425, %v2116
  %v2138 = vadd.f32 %v1431, %v2122
  %v2139 = vadd.f32 %v1437, %v2128
  %v2140 = vadd.f32 %v1443, %v2134
  %v2141 = vadd.f32 %v2137, %v2138
  %v2142 = vadd.f32 %v2141, %v2139
  %v2143 = vadd.f32 %v2142, %v2140
  %v2144 = vrot.slane %v2143, 4
  %v2145 = vadd.f32 %v2143, %v2144
  %v2146 = vrot.slane %v2145, 2
  %v2147 = vadd.f32 %v2145, %v2146
  %v2148 = vrot.slane %v2147, 1
  %v2149 = vadd.f32 %v2147, %v2148
  %2150 = vmatprep.subr.mxu0 0.0
  %v2151 = vand.u32 %v50, 4294901760
  %2152 = vmatpush1.msra.mxu0 %v2151
  %2153 = vmatprep.subr.mxu0 0.0
  %v2154 = vand.u32 %v49, 4294901760
  %2155 = vmatpush1.msra.mxu0 %v2154
  %2156 = vmatprep.subr.mxu0 0.0
  %v2157 = vand.u32 %v48, 4294901760
  %2158 = vmatpush1.msra.mxu0 %v2157
  %2159 = vmatprep.subr.mxu0 0.0
  %v2160 = vand.u32 %v47, 4294901760
  %2161 = vmatpush1.msra.mxu0 %v2160
  %2162 = vmatprep.subr.mxu0 0.0
  %v2163 = vand.u32 %v46, 4294901760
  %2164 = vmatpush1.msra.mxu0 %v2163
  %2165 = vmatprep.subr.mxu0 0.0
  %v2166 = vand.u32 %v45, 4294901760
  %2167 = vmatpush1.msra.mxu0 %v2166
  %2168 = vmatprep.subr.mxu0 0.0
  %v2169 = vand.u32 %v44, 4294901760
  %2170 = vmatpush1.msra.mxu0 %v2169
  %2171 = vmatprep.subr.mxu0 0.0
  %v2172 = vand.u32 %v43, 4294901760
  %2173 = vmatpush1.msra.mxu0 %v2172
  %2174 = vmatprep.subr.mxu0 0.0
  %v2175 = vand.u32 %v42, 4294901760
  %2176 = vmatpush1.msra.mxu0 %v2175
  %2177 = vmatprep.subr.mxu0 0.0
  %v2178 = vand.u32 %v41, 4294901760
  %2179 = vmatpush1.msra.mxu0 %v2178
  %2180 = vmatprep.subr.mxu0 0.0
  %v2181 = vand.u32 %v40, 4294901760
  %2182 = vmatpush1.msra.mxu0 %v2181
  %2183 = vmatprep.subr.mxu0 0.0
  %v2184 = vand.u32 %v39, 4294901760
  %2185 = vmatpush1.msra.mxu0 %v2184
  %2186 = vmatprep.subr.mxu0 0.0
  %v2187 = vand.u32 %v38, 4294901760
  %2188 = vmatpush1.msra.mxu0 %v2187
  %2189 = vmatprep.subr.mxu0 0.0
  %v2190 = vand.u32 %v37, 4294901760
  %2191 = vmatpush1.msra.mxu0 %v2190
  %2192 = vmatprep.subr.mxu0 0.0
  %v2193 = vand.u32 %v36, 4294901760
  %2194 = vmatpush1.msra.mxu0 %v2193
  %2195 = vmatprep.subr.mxu0 0.0
  %v2196 = vand.u32 %v35, 4294901760
  %2197 = vmatpush1.msra.mxu0 %v2196
  %2198 = vmatprep.subr.mxu0 0.0
  %2199 = vmatpush2.msra.mxu0 0.0
  %2200 = vmatprep.subr.mxu0 0.0
  %2201 = vmatpush2.msra.mxu0 0.0
  %2202 = vmatprep.subr.mxu0 0.0
  %2203 = vmatpush2.msra.mxu0 0.0
  %2204 = vmatprep.subr.mxu0 0.0
  %2205 = vmatpush2.msra.mxu0 0.0
  %2206 = vmatprep.subr.mxu0 0.0
  %2207 = vmatpush2.msra.mxu0 0.0
  %2208 = vmatprep.subr.mxu0 0.0
  %2209 = vmatpush2.msra.mxu0 0.0
  %2210 = vmatprep.subr.mxu0 0.0
  %2211 = vmatpush2.msra.mxu0 0.0
  %2212 = vmatprep.subr.mxu0 0.0
  %2213 = vmatpush2.msra.mxu0 0.0
  %2214 = vmatprep.subr.mxu0 0.0
  %2215 = vmatpush2.msra.mxu0 0.0
  %2216 = vmatprep.subr.mxu0 0.0
  %2217 = vmatpush2.msra.mxu0 0.0
  %2218 = vmatprep.subr.mxu0 0.0
  %2219 = vmatpush2.msra.mxu0 0.0
  %2220 = vmatprep.subr.mxu0 0.0
  %2221 = vmatpush2.msra.mxu0 0.0
  %2222 = vmatprep.subr.mxu0 0.0
  %2223 = vmatpush2.msra.mxu0 0.0
  %2224 = vmatprep.subr.mxu0 0.0
  %2225 = vmatpush2.msra.mxu0 0.0
  %2226 = vmatprep.subr.mxu0 0.0
  %2227 = vmatpush2.msra.mxu0 0.0
  %2228 = vmatprep.subr.mxu0 0.0
  %2229 = vmatpush2.msra.mxu0 0.0
  %2230 = vmatprep.mubr.f32.mxu0 0.0
  %v2231 = vand.u32 %v2149, 4294901760
  %v2232 = vsub.f32 %v2149, %v2231
  %v2233 = vand.u32 %v2232, 4294901760
  %v2234 = vsub.f32 %v2232, %v2233
  %v2235 = vand.u32 %v2234, 4294901760
  %2236 = vmatmul.mubr.f32.gmra.mxu0 %v2235
  %v2237 = vpop.f32.mrf.mxu0
  %v2238 = vadd.f32 0.0, %v2237
  %v2239 = vpop.f32.mrf.mxu0
  %2240 = vdwg.mxu0
  %2241 = vmatprep.subr.mxu0 0.0
  %v2242 = vand.u32 %v50, 4294901760
  %v2243 = vsub.f32 %v50, %v2242
  %v2244 = vand.u32 %v2243, 4294901760
  %v2245 = vsub.f32 %v2243, %v2244
  %v2246 = vand.u32 %v2245, 4294901760
  %2247 = vmatpush1.msra.mxu0 %v2246
  %2248 = vmatprep.subr.mxu0 0.0
  %v2249 = vand.u32 %v49, 4294901760
  %v2250 = vsub.f32 %v49, %v2249
  %v2251 = vand.u32 %v2250, 4294901760
  %v2252 = vsub.f32 %v2250, %v2251
  %v2253 = vand.u32 %v2252, 4294901760
  %2254 = vmatpush1.msra.mxu0 %v2253
  %2255 = vmatprep.subr.mxu0 0.0
  %v2256 = vand.u32 %v48, 4294901760
  %v2257 = vsub.f32 %v48, %v2256
  %v2258 = vand.u32 %v2257, 4294901760
  %v2259 = vsub.f32 %v2257, %v2258
  %v2260 = vand.u32 %v2259, 4294901760
  %2261 = vmatpush1.msra.mxu0 %v2260
  %2262 = vmatprep.subr.mxu0 0.0
  %v2263 = vand.u32 %v47, 4294901760
  %v2264 = vsub.f32 %v47, %v2263
  %v2265 = vand.u32 %v2264, 4294901760
  %v2266 = vsub.f32 %v2264, %v2265
  %v2267 = vand.u32 %v2266, 4294901760
  %2268 = vmatpush1.msra.mxu0 %v2267
  %2269 = vmatprep.subr.mxu0 0.0
  %v2270 = vand.u32 %v46, 4294901760
  %v2271 = vsub.f32 %v46, %v2270
  %v2272 = vand.u32 %v2271, 4294901760
  %v2273 = vsub.f32 %v2271, %v2272
  %v2274 = vand.u32 %v2273, 4294901760
  %2275 = vmatpush1.msra.mxu0 %v2274
  %2276 = vmatprep.subr.mxu0 0.0
  %v2277 = vand.u32 %v45, 4294901760
  %v2278 = vsub.f32 %v45, %v2277
  %v2279 = vand.u32 %v2278, 4294901760
  %v2280 = vsub.f32 %v2278, %v2279
  %v2281 = vand.u32 %v2280, 4294901760
  %2282 = vmatpush1.msra.mxu0 %v2281
  %2283 = vmatprep.subr.mxu0 0.0
  %v2284 = vand.u32 %v44, 4294901760
  %v2285 = vsub.f32 %v44, %v2284
  %v2286 = vand.u32 %v2285, 4294901760
  %v2287 = vsub.f32 %v2285, %v2286
  %v2288 = vand.u32 %v2287, 4294901760
  %2289 = vmatpush1.msra.mxu0 %v2288
  %2290 = vmatprep.subr.mxu0 0.0
  %v2291 = vand.u32 %v43, 4294901760
  %v2292 = vsub.f32 %v43, %v2291
  %v2293 = vand.u32 %v2292, 4294901760
  %v2294 = vsub.f32 %v2292, %v2293
  %v2295 = vand.u32 %v2294, 4294901760
  %2296 = vmatpush1.msra.mxu0 %v2295
  %2297 = vmatprep.subr.mxu0 0.0
  %v2298 = vand.u32 %v42, 4294901760
  %v2299 = vsub.f32 %v42, %v2298
  %v2300 = vand.u32 %v2299, 4294901760
  %v2301 = vsub.f32 %v2299, %v2300
  %v2302 = vand.u32 %v2301, 4294901760
  %2303 = vmatpush1.msra.mxu0 %v2302
  %2304 = vmatprep.subr.mxu0 0.0
  %v2305 = vand.u32 %v41, 4294901760
  %v2306 = vsub.f32 %v41, %v2305
  %v2307 = vand.u32 %v2306, 4294901760
  %v2308 = vsub.f32 %v2306, %v2307
  %v2309 = vand.u32 %v2308, 4294901760
  %2310 = vmatpush1.msra.mxu0 %v2309
  %2311 = vmatprep.subr.mxu0 0.0
  %v2312 = vand.u32 %v40, 4294901760
  %v2313 = vsub.f32 %v40, %v2312
  %v2314 = vand.u32 %v2313, 4294901760
  %v2315 = vsub.f32 %v2313, %v2314
  %v2316 = vand.u32 %v2315, 4294901760
  %2317 = vmatpush1.msra.mxu0 %v2316
  %2318 = vmatprep.subr.mxu0 0.0
  %v2319 = vand.u32 %v39, 4294901760
  %v2320 = vsub.f32 %v39, %v2319
  %v2321 = vand.u32 %v2320, 4294901760
  %v2322 = vsub.f32 %v2320, %v2321
  %v2323 = vand.u32 %v2322, 4294901760
  %2324 = vmatpush1.msra.mxu0 %v2323
  %2325 = vmatprep.subr.mxu0 0.0
  %v2326 = vand.u32 %v38, 4294901760
  %v2327 = vsub.f32 %v38, %v2326
  %v2328 = vand.u32 %v2327, 4294901760
  %v2329 = vsub.f32 %v2327, %v2328
  %v2330 = vand.u32 %v2329, 4294901760
  %2331 = vmatpush1.msra.mxu0 %v2330
  %2332 = vmatprep.subr.mxu0 0.0
  %v2333 = vand.u32 %v37, 4294901760
  %v2334 = vsub.f32 %v37, %v2333
  %v2335 = vand.u32 %v2334, 4294901760
  %v2336 = vsub.f32 %v2334, %v2335
  %v2337 = vand.u32 %v2336, 4294901760
  %2338 = vmatpush1.msra.mxu0 %v2337
  %2339 = vmatprep.subr.mxu0 0.0
  %v2340 = vand.u32 %v36, 4294901760
  %v2341 = vsub.f32 %v36, %v2340
  %v2342 = vand.u32 %v2341, 4294901760
  %v2343 = vsub.f32 %v2341, %v2342
  %v2344 = vand.u32 %v2343, 4294901760
  %2345 = vmatpush1.msra.mxu0 %v2344
  %2346 = vmatprep.subr.mxu0 0.0
  %v2347 = vand.u32 %v35, 4294901760
  %v2348 = vsub.f32 %v35, %v2347
  %v2349 = vand.u32 %v2348, 4294901760
  %v2350 = vsub.f32 %v2348, %v2349
  %v2351 = vand.u32 %v2350, 4294901760
  %2352 = vmatpush1.msra.mxu0 %v2351
  %2353 = vmatprep.subr.mxu0 0.0
  %2354 = vmatpush2.msra.mxu0 0.0
  %2355 = vmatprep.subr.mxu0 0.0
  %2356 = vmatpush2.msra.mxu0 0.0
  %2357 = vmatprep.subr.mxu0 0.0
  %2358 = vmatpush2.msra.mxu0 0.0
  %2359 = vmatprep.subr.mxu0 0.0
  %2360 = vmatpush2.msra.mxu0 0.0
  %2361 = vmatprep.subr.mxu0 0.0
  %2362 = vmatpush2.msra.mxu0 0.0
  %2363 = vmatprep.subr.mxu0 0.0
  %2364 = vmatpush2.msra.mxu0 0.0
  %2365 = vmatprep.subr.mxu0 0.0
  %2366 = vmatpush2.msra.mxu0 0.0
  %2367 = vmatprep.subr.mxu0 0.0
  %2368 = vmatpush2.msra.mxu0 0.0
  %2369 = vmatprep.subr.mxu0 0.0
  %2370 = vmatpush2.msra.mxu0 0.0
  %2371 = vmatprep.subr.mxu0 0.0
  %2372 = vmatpush2.msra.mxu0 0.0
  %2373 = vmatprep.subr.mxu0 0.0
  %2374 = vmatpush2.msra.mxu0 0.0
  %2375 = vmatprep.subr.mxu0 0.0
  %2376 = vmatpush2.msra.mxu0 0.0
  %2377 = vmatprep.subr.mxu0 0.0
  %2378 = vmatpush2.msra.mxu0 0.0
  %2379 = vmatprep.subr.mxu0 0.0
  %2380 = vmatpush2.msra.mxu0 0.0
  %2381 = vmatprep.subr.mxu0 0.0
  %2382 = vmatpush2.msra.mxu0 0.0
  %2383 = vmatprep.subr.mxu0 0.0
  %2384 = vmatpush2.msra.mxu0 0.0
  %2385 = vmatprep.mubr.f32.mxu0 0.0
  %v2386 = vand.u32 %v2149, 4294901760
  %2387 = vmatmul.mubr.f32.gmra.mxu0 %v2386
  %v2388 = vpop.f32.mrf.mxu0
  %v2389 = vadd.f32 %v2238, %v2388
  %v2390 = vpop.f32.mrf.mxu0
  %2391 = vdwg.mxu0
  %2392 = vmatprep.subr.mxu0 0.0
  %v2393 = vand.u32 %v50, 4294901760
  %v2394 = vsub.f32 %v50, %v2393
  %2395 = vmatpush1.msra.mxu0 %v2394
  %2396 = vmatprep.subr.mxu0 0.0
  %v2397 = vand.u32 %v49, 4294901760
  %v2398 = vsub.f32 %v49, %v2397
  %2399 = vmatpush1.msra.mxu0 %v2398
  %2400 = vmatprep.subr.mxu0 0.0
  %v2401 = vand.u32 %v48, 4294901760
  %v2402 = vsub.f32 %v48, %v2401
  %2403 = vmatpush1.msra.mxu0 %v2402
  %2404 = vmatprep.subr.mxu0 0.0
  %v2405 = vand.u32 %v47, 4294901760
  %v2406 = vsub.f32 %v47, %v2405
  %2407 = vmatpush1.msra.mxu0 %v2406
  %2408 = vmatprep.subr.mxu0 0.0
  %v2409 = vand.u32 %v46, 4294901760
  %v2410 = vsub.f32 %v46, %v2409
  %2411 = vmatpush1.msra.mxu0 %v2410
  %2412 = vmatprep.subr.mxu0 0.0
  %v2413 = vand.u32 %v45, 4294901760
  %v2414 = vsub.f32 %v45, %v2413
  %2415 = vmatpush1.msra.mxu0 %v2414
  %2416 = vmatprep.subr.mxu0 0.0
  %v2417 = vand.u32 %v44, 4294901760
  %v2418 = vsub.f32 %v44, %v2417
  %2419 = vmatpush1.msra.mxu0 %v2418
  %2420 = vmatprep.subr.mxu0 0.0
  %v2421 = vand.u32 %v43, 4294901760
  %v2422 = vsub.f32 %v43, %v2421
  %2423 = vmatpush1.msra.mxu0 %v2422
  %2424 = vmatprep.subr.mxu0 0.0
  %v2425 = vand.u32 %v42, 4294901760
  %v2426 = vsub.f32 %v42, %v2425
  %2427 = vmatpush1.msra.mxu0 %v2426
  %2428 = vmatprep.subr.mxu0 0.0
  %v2429 = vand.u32 %v41, 4294901760
  %v2430 = vsub.f32 %v41, %v2429
  %2431 = vmatpush1.msra.mxu0 %v2430
  %2432 = vmatprep.subr.mxu0 0.0
  %v2433 = vand.u32 %v40, 4294901760
  %v2434 = vsub.f32 %v40, %v2433
  %2435 = vmatpush1.msra.mxu0 %v2434
  %2436 = vmatprep.subr.mxu0 0.0
  %v2437 = vand.u32 %v39, 4294901760
  %v2438 = vsub.f32 %v39, %v2437
  %2439 = vmatpush1.msra.mxu0 %v2438
  %2440 = vmatprep.subr.mxu0 0.0
  %v2441 = vand.u32 %v38, 4294901760
  %v2442 = vsub.f32 %v38, %v2441
  %2443 = vmatpush1.msra.mxu0 %v2442
  %2444 = vmatprep.subr.mxu0 0.0
  %v2445 = vand.u32 %v37, 4294901760
  %v2446 = vsub.f32 %v37, %v2445
  %2447 = vmatpush1.msra.mxu0 %v2446
  %2448 = vmatprep.subr.mxu0 0.0
  %v2449 = vand.u32 %v36, 4294901760
  %v2450 = vsub.f32 %v36, %v2449
  %2451 = vmatpush1.msra.mxu0 %v2450
  %2452 = vmatprep.subr.mxu0 0.0
  %v2453 = vand.u32 %v35, 4294901760
  %v2454 = vsub.f32 %v35, %v2453
  %2455 = vmatpush1.msra.mxu0 %v2454
  %2456 = vmatprep.subr.mxu0 0.0
  %2457 = vmatpush2.msra.mxu0 0.0
  %2458 = vmatprep.subr.mxu0 0.0
  %2459 = vmatpush2.msra.mxu0 0.0
  %2460 = vmatprep.subr.mxu0 0.0
  %2461 = vmatpush2.msra.mxu0 0.0
  %2462 = vmatprep.subr.mxu0 0.0
  %2463 = vmatpush2.msra.mxu0 0.0
  %2464 = vmatprep.subr.mxu0 0.0
  %2465 = vmatpush2.msra.mxu0 0.0
  %2466 = vmatprep.subr.mxu0 0.0
  %2467 = vmatpush2.msra.mxu0 0.0
  %2468 = vmatprep.subr.mxu0 0.0
  %2469 = vmatpush2.msra.mxu0 0.0
  %2470 = vmatprep.subr.mxu0 0.0
  %2471 = vmatpush2.msra.mxu0 0.0
  %2472 = vmatprep.subr.mxu0 0.0
  %2473 = vmatpush2.msra.mxu0 0.0
  %2474 = vmatprep.subr.mxu0 0.0
  %2475 = vmatpush2.msra.mxu0 0.0
  %2476 = vmatprep.subr.mxu0 0.0
  %2477 = vmatpush2.msra.mxu0 0.0
  %2478 = vmatprep.subr.mxu0 0.0
  %2479 = vmatpush2.msra.mxu0 0.0
  %2480 = vmatprep.subr.mxu0 0.0
  %2481 = vmatpush2.msra.mxu0 0.0
  %2482 = vmatprep.subr.mxu0 0.0
  %2483 = vmatpush2.msra.mxu0 0.0
  %2484 = vmatprep.subr.mxu0 0.0
  %2485 = vmatpush2.msra.mxu0 0.0
  %2486 = vmatprep.subr.mxu0 0.0
  %2487 = vmatpush2.msra.mxu0 0.0
  %2488 = vmatprep.mubr.f32.mxu0 0.0
  %v2489 = vand.u32 %v2149, 4294901760
  %v2490 = vsub.f32 %v2149, %v2489
  %2491 = vmatmul.mubr.f32.gmra.mxu0 %v2490
  %v2492 = vpop.f32.mrf.mxu0
  %v2493 = vadd.f32 %v2389, %v2492
  %v2494 = vpop.f32.mrf.mxu0
  %2495 = vdwg.mxu0
  %2496 = vmatprep.subr.mxu0 0.0
  %v2497 = vand.u32 %v50, 4294901760
  %2498 = vmatpush1.msra.mxu0 %v2497
  %2499 = vmatprep.subr.mxu0 0.0
  %v2500 = vand.u32 %v49, 4294901760
  %2501 = vmatpush1.msra.mxu0 %v2500
  %2502 = vmatprep.subr.mxu0 0.0
  %v2503 = vand.u32 %v48, 4294901760
  %2504 = vmatpush1.msra.mxu0 %v2503
  %2505 = vmatprep.subr.mxu0 0.0
  %v2506 = vand.u32 %v47, 4294901760
  %2507 = vmatpush1.msra.mxu0 %v2506
  %2508 = vmatprep.subr.mxu0 0.0
  %v2509 = vand.u32 %v46, 4294901760
  %2510 = vmatpush1.msra.mxu0 %v2509
  %2511 = vmatprep.subr.mxu0 0.0
  %v2512 = vand.u32 %v45, 4294901760
  %2513 = vmatpush1.msra.mxu0 %v2512
  %2514 = vmatprep.subr.mxu0 0.0
  %v2515 = vand.u32 %v44, 4294901760
  %2516 = vmatpush1.msra.mxu0 %v2515
  %2517 = vmatprep.subr.mxu0 0.0
  %v2518 = vand.u32 %v43, 4294901760
  %2519 = vmatpush1.msra.mxu0 %v2518
  %2520 = vmatprep.subr.mxu0 0.0
  %v2521 = vand.u32 %v42, 4294901760
  %2522 = vmatpush1.msra.mxu0 %v2521
  %2523 = vmatprep.subr.mxu0 0.0
  %v2524 = vand.u32 %v41, 4294901760
  %2525 = vmatpush1.msra.mxu0 %v2524
  %2526 = vmatprep.subr.mxu0 0.0
  %v2527 = vand.u32 %v40, 4294901760
  %2528 = vmatpush1.msra.mxu0 %v2527
  %2529 = vmatprep.subr.mxu0 0.0
  %v2530 = vand.u32 %v39, 4294901760
  %2531 = vmatpush1.msra.mxu0 %v2530
  %2532 = vmatprep.subr.mxu0 0.0
  %v2533 = vand.u32 %v38, 4294901760
  %2534 = vmatpush1.msra.mxu0 %v2533
  %2535 = vmatprep.subr.mxu0 0.0
  %v2536 = vand.u32 %v37, 4294901760
  %2537 = vmatpush1.msra.mxu0 %v2536
  %2538 = vmatprep.subr.mxu0 0.0
  %v2539 = vand.u32 %v36, 4294901760
  %2540 = vmatpush1.msra.mxu0 %v2539
  %2541 = vmatprep.subr.mxu0 0.0
  %v2542 = vand.u32 %v35, 4294901760
  %2543 = vmatpush1.msra.mxu0 %v2542
  %2544 = vmatprep.subr.mxu0 0.0
  %2545 = vmatpush2.msra.mxu0 0.0
  %2546 = vmatprep.subr.mxu0 0.0
  %2547 = vmatpush2.msra.mxu0 0.0
  %2548 = vmatprep.subr.mxu0 0.0
  %2549 = vmatpush2.msra.mxu0 0.0
  %2550 = vmatprep.subr.mxu0 0.0
  %2551 = vmatpush2.msra.mxu0 0.0
  %2552 = vmatprep.subr.mxu0 0.0
  %2553 = vmatpush2.msra.mxu0 0.0
  %2554 = vmatprep.subr.mxu0 0.0
  %2555 = vmatpush2.msra.mxu0 0.0
  %2556 = vmatprep.subr.mxu0 0.0
  %2557 = vmatpush2.msra.mxu0 0.0
  %2558 = vmatprep.subr.mxu0 0.0
  %2559 = vmatpush2.msra.mxu0 0.0
  %2560 = vmatprep.subr.mxu0 0.0
  %2561 = vmatpush2.msra.mxu0 0.0
  %2562 = vmatprep.subr.mxu0 0.0
  %2563 = vmatpush2.msra.mxu0 0.0
  %2564 = vmatprep.subr.mxu0 0.0
  %2565 = vmatpush2.msra.mxu0 0.0
  %2566 = vmatprep.subr.mxu0 0.0
  %2567 = vmatpush2.msra.mxu0 0.0
  %2568 = vmatprep.subr.mxu0 0.0
  %2569 = vmatpush2.msra.mxu0 0.0
  %2570 = vmatprep.subr.mxu0 0.0
  %2571 = vmatpush2.msra.mxu0 0.0
  %2572 = vmatprep.subr.mxu0 0.0
  %2573 = vmatpush2.msra.mxu0 0.0
  %2574 = vmatprep.subr.mxu0 0.0
  %2575 = vmatpush2.msra.mxu0 0.0
  %2576 = vmatprep.mubr.f32.mxu0 0.0
  %v2577 = vand.u32 %v2149, 4294901760
  %v2578 = vsub.f32 %v2149, %v2577
  %v2579 = vand.u32 %v2578, 4294901760
  %2580 = vmatmul.mubr.f32.gmra.mxu0 %v2579
  %v2581 = vpop.f32.mrf.mxu0
  %v2582 = vadd.f32 %v2493, %v2581
  %v2583 = vpop.f32.mrf.mxu0
  %2584 = vdwg.mxu0
  %2585 = vmatprep.subr.mxu0 0.0
  %v2586 = vand.u32 %v50, 4294901760
  %v2587 = vsub.f32 %v50, %v2586
  %v2588 = vand.u32 %v2587, 4294901760
  %2589 = vmatpush1.msra.mxu0 %v2588
  %2590 = vmatprep.subr.mxu0 0.0
  %v2591 = vand.u32 %v49, 4294901760
  %v2592 = vsub.f32 %v49, %v2591
  %v2593 = vand.u32 %v2592, 4294901760
  %2594 = vmatpush1.msra.mxu0 %v2593
  %2595 = vmatprep.subr.mxu0 0.0
  %v2596 = vand.u32 %v48, 4294901760
  %v2597 = vsub.f32 %v48, %v2596
  %v2598 = vand.u32 %v2597, 4294901760
  %2599 = vmatpush1.msra.mxu0 %v2598
  %2600 = vmatprep.subr.mxu0 0.0
  %v2601 = vand.u32 %v47, 4294901760
  %v2602 = vsub.f32 %v47, %v2601
  %v2603 = vand.u32 %v2602, 4294901760
  %2604 = vmatpush1.msra.mxu0 %v2603
  %2605 = vmatprep.subr.mxu0 0.0
  %v2606 = vand.u32 %v46, 4294901760
  %v2607 = vsub.f32 %v46, %v2606
  %v2608 = vand.u32 %v2607, 4294901760
  %2609 = vmatpush1.msra.mxu0 %v2608
  %2610 = vmatprep.subr.mxu0 0.0
  %v2611 = vand.u32 %v45, 4294901760
  %v2612 = vsub.f32 %v45, %v2611
  %v2613 = vand.u32 %v2612, 4294901760
  %2614 = vmatpush1.msra.mxu0 %v2613
  %2615 = vmatprep.subr.mxu0 0.0
  %v2616 = vand.u32 %v44, 4294901760
  %v2617 = vsub.f32 %v44, %v2616
  %v2618 = vand.u32 %v2617, 4294901760
  %2619 = vmatpush1.msra.mxu0 %v2618
  %2620 = vmatprep.subr.mxu0 0.0
  %v2621 = vand.u32 %v43, 4294901760
  %v2622 = vsub.f32 %v43, %v2621
  %v2623 = vand.u32 %v2622, 4294901760
  %2624 = vmatpush1.msra.mxu0 %v2623
  %2625 = vmatprep.subr.mxu0 0.0
  %v2626 = vand.u32 %v42, 4294901760
  %v2627 = vsub.f32 %v42, %v2626
  %v2628 = vand.u32 %v2627, 4294901760
  %2629 = vmatpush1.msra.mxu0 %v2628
  %2630 = vmatprep.subr.mxu0 0.0
  %v2631 = vand.u32 %v41, 4294901760
  %v2632 = vsub.f32 %v41, %v2631
  %v2633 = vand.u32 %v2632, 4294901760
  %2634 = vmatpush1.msra.mxu0 %v2633
  %2635 = vmatprep.subr.mxu0 0.0
  %v2636 = vand.u32 %v40, 4294901760
  %v2637 = vsub.f32 %v40, %v2636
  %v2638 = vand.u32 %v2637, 4294901760
  %2639 = vmatpush1.msra.mxu0 %v2638
  %2640 = vmatprep.subr.mxu0 0.0
  %v2641 = vand.u32 %v39, 4294901760
  %v2642 = vsub.f32 %v39, %v2641
  %v2643 = vand.u32 %v2642, 4294901760
  %2644 = vmatpush1.msra.mxu0 %v2643
  %2645 = vmatprep.subr.mxu0 0.0
  %v2646 = vand.u32 %v38, 4294901760
  %v2647 = vsub.f32 %v38, %v2646
  %v2648 = vand.u32 %v2647, 4294901760
  %2649 = vmatpush1.msra.mxu0 %v2648
  %2650 = vmatprep.subr.mxu0 0.0
  %v2651 = vand.u32 %v37, 4294901760
  %v2652 = vsub.f32 %v37, %v2651
  %v2653 = vand.u32 %v2652, 4294901760
  %2654 = vmatpush1.msra.mxu0 %v2653
  %2655 = vmatprep.subr.mxu0 0.0
  %v2656 = vand.u32 %v36, 4294901760
  %v2657 = vsub.f32 %v36, %v2656
  %v2658 = vand.u32 %v2657, 4294901760
  %2659 = vmatpush1.msra.mxu0 %v2658
  %2660 = vmatprep.subr.mxu0 0.0
  %v2661 = vand.u32 %v35, 4294901760
  %v2662 = vsub.f32 %v35, %v2661
  %v2663 = vand.u32 %v2662, 4294901760
  %2664 = vmatpush1.msra.mxu0 %v2663
  %2665 = vmatprep.subr.mxu0 0.0
  %2666 = vmatpush2.msra.mxu0 0.0
  %2667 = vmatprep.subr.mxu0 0.0
  %2668 = vmatpush2.msra.mxu0 0.0
  %2669 = vmatprep.subr.mxu0 0.0
  %2670 = vmatpush2.msra.mxu0 0.0
  %2671 = vmatprep.subr.mxu0 0.0
  %2672 = vmatpush2.msra.mxu0 0.0
  %2673 = vmatprep.subr.mxu0 0.0
  %2674 = vmatpush2.msra.mxu0 0.0
  %2675 = vmatprep.subr.mxu0 0.0
  %2676 = vmatpush2.msra.mxu0 0.0
  %2677 = vmatprep.subr.mxu0 0.0
  %2678 = vmatpush2.msra.mxu0 0.0
  %2679 = vmatprep.subr.mxu0 0.0
  %2680 = vmatpush2.msra.mxu0 0.0
  %2681 = vmatprep.subr.mxu0 0.0
  %2682 = vmatpush2.msra.mxu0 0.0
  %2683 = vmatprep.subr.mxu0 0.0
  %2684 = vmatpush2.msra.mxu0 0.0
  %2685 = vmatprep.subr.mxu0 0.0
  %2686 = vmatpush2.msra.mxu0 0.0
  %2687 = vmatprep.subr.mxu0 0.0
  %2688 = vmatpush2.msra.mxu0 0.0
  %2689 = vmatprep.subr.mxu0 0.0
  %2690 = vmatpush2.msra.mxu0 0.0
  %2691 = vmatprep.subr.mxu0 0.0
  %2692 = vmatpush2.msra.mxu0 0.0
  %2693 = vmatprep.subr.mxu0 0.0
  %2694 = vmatpush2.msra.mxu0 0.0
  %2695 = vmatprep.subr.mxu0 0.0
  %2696 = vmatpush2.msra.mxu0 0.0
  %2697 = vmatprep.mubr.f32.mxu0 0.0
  %v2698 = vand.u32 %v2149, 4294901760
  %2699 = vmatmul.mubr.f32.gmra.mxu0 %v2698
  %v2700 = vpop.f32.mrf.mxu0
  %v2701 = vadd.f32 %v2582, %v2700
  %v2702 = vpop.f32.mrf.mxu0
  %2703 = vdwg.mxu0
  %2704 = vmatprep.subr.mxu0 0.0
  %v2705 = vand.u32 %v50, 4294901760
  %2706 = vmatpush1.msra.mxu0 %v2705
  %2707 = vmatprep.subr.mxu0 0.0
  %v2708 = vand.u32 %v49, 4294901760
  %2709 = vmatpush1.msra.mxu0 %v2708
  %2710 = vmatprep.subr.mxu0 0.0
  %v2711 = vand.u32 %v48, 4294901760
  %2712 = vmatpush1.msra.mxu0 %v2711
  %2713 = vmatprep.subr.mxu0 0.0
  %v2714 = vand.u32 %v47, 4294901760
  %2715 = vmatpush1.msra.mxu0 %v2714
  %2716 = vmatprep.subr.mxu0 0.0
  %v2717 = vand.u32 %v46, 4294901760
  %2718 = vmatpush1.msra.mxu0 %v2717
  %2719 = vmatprep.subr.mxu0 0.0
  %v2720 = vand.u32 %v45, 4294901760
  %2721 = vmatpush1.msra.mxu0 %v2720
  %2722 = vmatprep.subr.mxu0 0.0
  %v2723 = vand.u32 %v44, 4294901760
  %2724 = vmatpush1.msra.mxu0 %v2723
  %2725 = vmatprep.subr.mxu0 0.0
  %v2726 = vand.u32 %v43, 4294901760
  %2727 = vmatpush1.msra.mxu0 %v2726
  %2728 = vmatprep.subr.mxu0 0.0
  %v2729 = vand.u32 %v42, 4294901760
  %2730 = vmatpush1.msra.mxu0 %v2729
  %2731 = vmatprep.subr.mxu0 0.0
  %v2732 = vand.u32 %v41, 4294901760
  %2733 = vmatpush1.msra.mxu0 %v2732
  %2734 = vmatprep.subr.mxu0 0.0
  %v2735 = vand.u32 %v40, 4294901760
  %2736 = vmatpush1.msra.mxu0 %v2735
  %2737 = vmatprep.subr.mxu0 0.0
  %v2738 = vand.u32 %v39, 4294901760
  %2739 = vmatpush1.msra.mxu0 %v2738
  %2740 = vmatprep.subr.mxu0 0.0
  %v2741 = vand.u32 %v38, 4294901760
  %2742 = vmatpush1.msra.mxu0 %v2741
  %2743 = vmatprep.subr.mxu0 0.0
  %v2744 = vand.u32 %v37, 4294901760
  %2745 = vmatpush1.msra.mxu0 %v2744
  %2746 = vmatprep.subr.mxu0 0.0
  %v2747 = vand.u32 %v36, 4294901760
  %2748 = vmatpush1.msra.mxu0 %v2747
  %2749 = vmatprep.subr.mxu0 0.0
  %v2750 = vand.u32 %v35, 4294901760
  %2751 = vmatpush1.msra.mxu0 %v2750
  %2752 = vmatprep.subr.mxu0 0.0
  %2753 = vmatpush2.msra.mxu0 0.0
  %2754 = vmatprep.subr.mxu0 0.0
  %2755 = vmatpush2.msra.mxu0 0.0
  %2756 = vmatprep.subr.mxu0 0.0
  %2757 = vmatpush2.msra.mxu0 0.0
  %2758 = vmatprep.subr.mxu0 0.0
  %2759 = vmatpush2.msra.mxu0 0.0
  %2760 = vmatprep.subr.mxu0 0.0
  %2761 = vmatpush2.msra.mxu0 0.0
  %2762 = vmatprep.subr.mxu0 0.0
  %2763 = vmatpush2.msra.mxu0 0.0
  %2764 = vmatprep.subr.mxu0 0.0
  %2765 = vmatpush2.msra.mxu0 0.0
  %2766 = vmatprep.subr.mxu0 0.0
  %2767 = vmatpush2.msra.mxu0 0.0
  %2768 = vmatprep.subr.mxu0 0.0
  %2769 = vmatpush2.msra.mxu0 0.0
  %2770 = vmatprep.subr.mxu0 0.0
  %2771 = vmatpush2.msra.mxu0 0.0
  %2772 = vmatprep.subr.mxu0 0.0
  %2773 = vmatpush2.msra.mxu0 0.0
  %2774 = vmatprep.subr.mxu0 0.0
  %2775 = vmatpush2.msra.mxu0 0.0
  %2776 = vmatprep.subr.mxu0 0.0
  %2777 = vmatpush2.msra.mxu0 0.0
  %2778 = vmatprep.subr.mxu0 0.0
  %2779 = vmatpush2.msra.mxu0 0.0
  %2780 = vmatprep.subr.mxu0 0.0
  %2781 = vmatpush2.msra.mxu0 0.0
  %2782 = vmatprep.subr.mxu0 0.0
  %2783 = vmatpush2.msra.mxu0 0.0
  %2784 = vmatprep.mubr.f32.mxu0 0.0
  %v2785 = vand.u32 %v2149, 4294901760
  %2786 = vmatmul.mubr.f32.gmra.mxu0 %v2785
  %v2787 = vpop.f32.mrf.mxu0
  %v2788 = vadd.f32 %v2701, %v2787
  %v2789 = vpop.f32.mrf.mxu0
  %2790 = vdwg.mxu0
  %v2791 = vmul.f32 %v2788, 0.001953125
  %v2792 = vlaneseq
  %v2793 = vshrl.u32 %v2792, 7
  %v2794 = vsub.s32 0, %v2793
  %v2795 = vrot.slane %v2791, %v2794
  %v2796 = vsub.f32 %v2137, %v2795
  %v2797 = vsub.f32 %v2138, %v2795
  %v2798 = vsub.f32 %v2139, %v2795
  %v2799 = vsub.f32 %v2140, %v2795
  %v2800 = vmul.f32 %v2796, %v2796
  %v2801 = vmul.f32 %v2797, %v2797
  %v2802 = vmul.f32 %v2798, %v2798
  %v2803 = vmul.f32 %v2799, %v2799
  %v2804 = vadd.f32 %v2800, %v2801
  %v2805 = vadd.f32 %v2804, %v2802
  %v2806 = vadd.f32 %v2805, %v2803
  %v2807 = vrot.slane %v2806, 4
  %v2808 = vadd.f32 %v2806, %v2807
  %v2809 = vrot.slane %v2808, 2
  %v2810 = vadd.f32 %v2808, %v2809
  %v2811 = vrot.slane %v2810, 1
  %v2812 = vadd.f32 %v2810, %v2811
  %2813 = vmatprep.subr.mxu0 0.0
  %v2814 = vand.u32 %v50, 4294901760
  %2815 = vmatpush1.msra.mxu0 %v2814
  %2816 = vmatprep.subr.mxu0 0.0
  %v2817 = vand.u32 %v49, 4294901760
  %2818 = vmatpush1.msra.mxu0 %v2817
  %2819 = vmatprep.subr.mxu0 0.0
  %v2820 = vand.u32 %v48, 4294901760
  %2821 = vmatpush1.msra.mxu0 %v2820
  %2822 = vmatprep.subr.mxu0 0.0
  %v2823 = vand.u32 %v47, 4294901760
  %2824 = vmatpush1.msra.mxu0 %v2823
  %2825 = vmatprep.subr.mxu0 0.0
  %v2826 = vand.u32 %v46, 4294901760
  %2827 = vmatpush1.msra.mxu0 %v2826
  %2828 = vmatprep.subr.mxu0 0.0
  %v2829 = vand.u32 %v45, 4294901760
  %2830 = vmatpush1.msra.mxu0 %v2829
  %2831 = vmatprep.subr.mxu0 0.0
  %v2832 = vand.u32 %v44, 4294901760
  %2833 = vmatpush1.msra.mxu0 %v2832
  %2834 = vmatprep.subr.mxu0 0.0
  %v2835 = vand.u32 %v43, 4294901760
  %2836 = vmatpush1.msra.mxu0 %v2835
  %2837 = vmatprep.subr.mxu0 0.0
  %v2838 = vand.u32 %v42, 4294901760
  %2839 = vmatpush1.msra.mxu0 %v2838
  %2840 = vmatprep.subr.mxu0 0.0
  %v2841 = vand.u32 %v41, 4294901760
  %2842 = vmatpush1.msra.mxu0 %v2841
  %2843 = vmatprep.subr.mxu0 0.0
  %v2844 = vand.u32 %v40, 4294901760
  %2845 = vmatpush1.msra.mxu0 %v2844
  %2846 = vmatprep.subr.mxu0 0.0
  %v2847 = vand.u32 %v39, 4294901760
  %2848 = vmatpush1.msra.mxu0 %v2847
  %2849 = vmatprep.subr.mxu0 0.0
  %v2850 = vand.u32 %v38, 4294901760
  %2851 = vmatpush1.msra.mxu0 %v2850
  %2852 = vmatprep.subr.mxu0 0.0
  %v2853 = vand.u32 %v37, 4294901760
  %2854 = vmatpush1.msra.mxu0 %v2853
  %2855 = vmatprep.subr.mxu0 0.0
  %v2856 = vand.u32 %v36, 4294901760
  %2857 = vmatpush1.msra.mxu0 %v2856
  %2858 = vmatprep.subr.mxu0 0.0
  %v2859 = vand.u32 %v35, 4294901760
  %2860 = vmatpush1.msra.mxu0 %v2859
  %2861 = vmatprep.subr.mxu0 0.0
  %2862 = vmatpush2.msra.mxu0 0.0
  %2863 = vmatprep.subr.mxu0 0.0
  %2864 = vmatpush2.msra.mxu0 0.0
  %2865 = vmatprep.subr.mxu0 0.0
  %2866 = vmatpush2.msra.mxu0 0.0
  %2867 = vmatprep.subr.mxu0 0.0
  %2868 = vmatpush2.msra.mxu0 0.0
  %2869 = vmatprep.subr.mxu0 0.0
  %2870 = vmatpush2.msra.mxu0 0.0
  %2871 = vmatprep.subr.mxu0 0.0
  %2872 = vmatpush2.msra.mxu0 0.0
  %2873 = vmatprep.subr.mxu0 0.0
  %2874 = vmatpush2.msra.mxu0 0.0
  %2875 = vmatprep.subr.mxu0 0.0
  %2876 = vmatpush2.msra.mxu0 0.0
  %2877 = vmatprep.subr.mxu0 0.0
  %2878 = vmatpush2.msra.mxu0 0.0
  %2879 = vmatprep.subr.mxu0 0.0
  %2880 = vmatpush2.msra.mxu0 0.0
  %2881 = vmatprep.subr.mxu0 0.0
  %2882 = vmatpush2.msra.mxu0 0.0
  %2883 = vmatprep.subr.mxu0 0.0
  %2884 = vmatpush2.msra.mxu0 0.0
  %2885 = vmatprep.subr.mxu0 0.0
  %2886 = vmatpush2.msra.mxu0 0.0
  %2887 = vmatprep.subr.mxu0 0.0
  %2888 = vmatpush2.msra.mxu0 0.0
  %2889 = vmatprep.subr.mxu0 0.0
  %2890 = vmatpush2.msra.mxu0 0.0
  %2891 = vmatprep.subr.mxu0 0.0
  %2892 = vmatpush2.msra.mxu0 0.0
  %2893 = vmatprep.mubr.f32.mxu0 0.0
  %v2894 = vand.u32 %v2812, 4294901760
  %v2895 = vsub.f32 %v2812, %v2894
  %v2896 = vand.u32 %v2895, 4294901760
  %v2897 = vsub.f32 %v2895, %v2896
  %v2898 = vand.u32 %v2897, 4294901760
  %2899 = vmatmul.mubr.f32.gmra.mxu0 %v2898
  %v2900 = vpop.f32.mrf.mxu0
  %v2901 = vadd.f32 0.0, %v2900
  %v2902 = vpop.f32.mrf.mxu0
  %2903 = vdwg.mxu0
  %2904 = vmatprep.subr.mxu0 0.0
  %v2905 = vand.u32 %v50, 4294901760
  %v2906 = vsub.f32 %v50, %v2905
  %v2907 = vand.u32 %v2906, 4294901760
  %v2908 = vsub.f32 %v2906, %v2907
  %v2909 = vand.u32 %v2908, 4294901760
  %2910 = vmatpush1.msra.mxu0 %v2909
  %2911 = vmatprep.subr.mxu0 0.0
  %v2912 = vand.u32 %v49, 4294901760
  %v2913 = vsub.f32 %v49, %v2912
  %v2914 = vand.u32 %v2913, 4294901760
  %v2915 = vsub.f32 %v2913, %v2914
  %v2916 = vand.u32 %v2915, 4294901760
  %2917 = vmatpush1.msra.mxu0 %v2916
  %2918 = vmatprep.subr.mxu0 0.0
  %v2919 = vand.u32 %v48, 4294901760
  %v2920 = vsub.f32 %v48, %v2919
  %v2921 = vand.u32 %v2920, 4294901760
  %v2922 = vsub.f32 %v2920, %v2921
  %v2923 = vand.u32 %v2922, 4294901760
  %2924 = vmatpush1.msra.mxu0 %v2923
  %2925 = vmatprep.subr.mxu0 0.0
  %v2926 = vand.u32 %v47, 4294901760
  %v2927 = vsub.f32 %v47, %v2926
  %v2928 = vand.u32 %v2927, 4294901760
  %v2929 = vsub.f32 %v2927, %v2928
  %v2930 = vand.u32 %v2929, 4294901760
  %2931 = vmatpush1.msra.mxu0 %v2930
  %2932 = vmatprep.subr.mxu0 0.0
  %v2933 = vand.u32 %v46, 4294901760
  %v2934 = vsub.f32 %v46, %v2933
  %v2935 = vand.u32 %v2934, 4294901760
  %v2936 = vsub.f32 %v2934, %v2935
  %v2937 = vand.u32 %v2936, 4294901760
  %2938 = vmatpush1.msra.mxu0 %v2937
  %2939 = vmatprep.subr.mxu0 0.0
  %v2940 = vand.u32 %v45, 4294901760
  %v2941 = vsub.f32 %v45, %v2940
  %v2942 = vand.u32 %v2941, 4294901760
  %v2943 = vsub.f32 %v2941, %v2942
  %v2944 = vand.u32 %v2943, 4294901760
  %2945 = vmatpush1.msra.mxu0 %v2944
  %2946 = vmatprep.subr.mxu0 0.0
  %v2947 = vand.u32 %v44, 4294901760
  %v2948 = vsub.f32 %v44, %v2947
  %v2949 = vand.u32 %v2948, 4294901760
  %v2950 = vsub.f32 %v2948, %v2949
  %v2951 = vand.u32 %v2950, 4294901760
  %2952 = vmatpush1.msra.mxu0 %v2951
  %2953 = vmatprep.subr.mxu0 0.0
  %v2954 = vand.u32 %v43, 4294901760
  %v2955 = vsub.f32 %v43, %v2954
  %v2956 = vand.u32 %v2955, 4294901760
  %v2957 = vsub.f32 %v2955, %v2956
  %v2958 = vand.u32 %v2957, 4294901760
  %2959 = vmatpush1.msra.mxu0 %v2958
  %2960 = vmatprep.subr.mxu0 0.0
  %v2961 = vand.u32 %v42, 4294901760
  %v2962 = vsub.f32 %v42, %v2961
  %v2963 = vand.u32 %v2962, 4294901760
  %v2964 = vsub.f32 %v2962, %v2963
  %v2965 = vand.u32 %v2964, 4294901760
  %2966 = vmatpush1.msra.mxu0 %v2965
  %2967 = vmatprep.subr.mxu0 0.0
  %v2968 = vand.u32 %v41, 4294901760
  %v2969 = vsub.f32 %v41, %v2968
  %v2970 = vand.u32 %v2969, 4294901760
  %v2971 = vsub.f32 %v2969, %v2970
  %v2972 = vand.u32 %v2971, 4294901760
  %2973 = vmatpush1.msra.mxu0 %v2972
  %2974 = vmatprep.subr.mxu0 0.0
  %v2975 = vand.u32 %v40, 4294901760
  %v2976 = vsub.f32 %v40, %v2975
  %v2977 = vand.u32 %v2976, 4294901760
  %v2978 = vsub.f32 %v2976, %v2977
  %v2979 = vand.u32 %v2978, 4294901760
  %2980 = vmatpush1.msra.mxu0 %v2979
  %2981 = vmatprep.subr.mxu0 0.0
  %v2982 = vand.u32 %v39, 4294901760
  %v2983 = vsub.f32 %v39, %v2982
  %v2984 = vand.u32 %v2983, 4294901760
  %v2985 = vsub.f32 %v2983, %v2984
  %v2986 = vand.u32 %v2985, 4294901760
  %2987 = vmatpush1.msra.mxu0 %v2986
  %2988 = vmatprep.subr.mxu0 0.0
  %v2989 = vand.u32 %v38, 4294901760
  %v2990 = vsub.f32 %v38, %v2989
  %v2991 = vand.u32 %v2990, 4294901760
  %v2992 = vsub.f32 %v2990, %v2991
  %v2993 = vand.u32 %v2992, 4294901760
  %2994 = vmatpush1.msra.mxu0 %v2993
  %2995 = vmatprep.subr.mxu0 0.0
  %v2996 = vand.u32 %v37, 4294901760
  %v2997 = vsub.f32 %v37, %v2996
  %v2998 = vand.u32 %v2997, 4294901760
  %v2999 = vsub.f32 %v2997, %v2998
  %v3000 = vand.u32 %v2999, 4294901760
  %3001 = vmatpush1.msra.mxu0 %v3000
  %3002 = vmatprep.subr.mxu0 0.0
  %v3003 = vand.u32 %v36, 4294901760
  %v3004 = vsub.f32 %v36, %v3003
  %v3005 = vand.u32 %v3004, 4294901760
  %v3006 = vsub.f32 %v3004, %v3005
  %v3007 = vand.u32 %v3006, 4294901760
  %3008 = vmatpush1.msra.mxu0 %v3007
  %3009 = vmatprep.subr.mxu0 0.0
  %v3010 = vand.u32 %v35, 4294901760
  %v3011 = vsub.f32 %v35, %v3010
  %v3012 = vand.u32 %v3011, 4294901760
  %v3013 = vsub.f32 %v3011, %v3012
  %v3014 = vand.u32 %v3013, 4294901760
  %3015 = vmatpush1.msra.mxu0 %v3014
  %3016 = vmatprep.subr.mxu0 0.0
  %3017 = vmatpush2.msra.mxu0 0.0
  %3018 = vmatprep.subr.mxu0 0.0
  %3019 = vmatpush2.msra.mxu0 0.0
  %3020 = vmatprep.subr.mxu0 0.0
  %3021 = vmatpush2.msra.mxu0 0.0
  %3022 = vmatprep.subr.mxu0 0.0
  %3023 = vmatpush2.msra.mxu0 0.0
  %3024 = vmatprep.subr.mxu0 0.0
  %3025 = vmatpush2.msra.mxu0 0.0
  %3026 = vmatprep.subr.mxu0 0.0
  %3027 = vmatpush2.msra.mxu0 0.0
  %3028 = vmatprep.subr.mxu0 0.0
  %3029 = vmatpush2.msra.mxu0 0.0
  %3030 = vmatprep.subr.mxu0 0.0
  %3031 = vmatpush2.msra.mxu0 0.0
  %3032 = vmatprep.subr.mxu0 0.0
  %3033 = vmatpush2.msra.mxu0 0.0
  %3034 = vmatprep.subr.mxu0 0.0
  %3035 = vmatpush2.msra.mxu0 0.0
  %3036 = vmatprep.subr.mxu0 0.0
  %3037 = vmatpush2.msra.mxu0 0.0
  %3038 = vmatprep.subr.mxu0 0.0
  %3039 = vmatpush2.msra.mxu0 0.0
  %3040 = vmatprep.subr.mxu0 0.0
  %3041 = vmatpush2.msra.mxu0 0.0
  %3042 = vmatprep.subr.mxu0 0.0
  %3043 = vmatpush2.msra.mxu0 0.0
  %3044 = vmatprep.subr.mxu0 0.0
  %3045 = vmatpush2.msra.mxu0 0.0
  %3046 = vmatprep.subr.mxu0 0.0
  %3047 = vmatpush2.msra.mxu0 0.0
  %3048 = vmatprep.mubr.f32.mxu0 0.0
  %v3049 = vand.u32 %v2812, 4294901760
  %3050 = vmatmul.mubr.f32.gmra.mxu0 %v3049
  %v3051 = vpop.f32.mrf.mxu0
  %v3052 = vadd.f32 %v2901, %v3051
  %v3053 = vpop.f32.mrf.mxu0
  %3054 = vdwg.mxu0
  %3055 = vmatprep.subr.mxu0 0.0
  %v3056 = vand.u32 %v50, 4294901760
  %v3057 = vsub.f32 %v50, %v3056
  %3058 = vmatpush1.msra.mxu0 %v3057
  %3059 = vmatprep.subr.mxu0 0.0
  %v3060 = vand.u32 %v49, 4294901760
  %v3061 = vsub.f32 %v49, %v3060
  %3062 = vmatpush1.msra.mxu0 %v3061
  %3063 = vmatprep.subr.mxu0 0.0
  %v3064 = vand.u32 %v48, 4294901760
  %v3065 = vsub.f32 %v48, %v3064
  %3066 = vmatpush1.msra.mxu0 %v3065
  %3067 = vmatprep.subr.mxu0 0.0
  %v3068 = vand.u32 %v47, 4294901760
  %v3069 = vsub.f32 %v47, %v3068
  %3070 = vmatpush1.msra.mxu0 %v3069
  %3071 = vmatprep.subr.mxu0 0.0
  %v3072 = vand.u32 %v46, 4294901760
  %v3073 = vsub.f32 %v46, %v3072
  %3074 = vmatpush1.msra.mxu0 %v3073
  %3075 = vmatprep.subr.mxu0 0.0
  %v3076 = vand.u32 %v45, 4294901760
  %v3077 = vsub.f32 %v45, %v3076
  %3078 = vmatpush1.msra.mxu0 %v3077
  %3079 = vmatprep.subr.mxu0 0.0
  %v3080 = vand.u32 %v44, 4294901760
  %v3081 = vsub.f32 %v44, %v3080
  %3082 = vmatpush1.msra.mxu0 %v3081
  %3083 = vmatprep.subr.mxu0 0.0
  %v3084 = vand.u32 %v43, 4294901760
  %v3085 = vsub.f32 %v43, %v3084
  %3086 = vmatpush1.msra.mxu0 %v3085
  %3087 = vmatprep.subr.mxu0 0.0
  %v3088 = vand.u32 %v42, 4294901760
  %v3089 = vsub.f32 %v42, %v3088
  %3090 = vmatpush1.msra.mxu0 %v3089
  %3091 = vmatprep.subr.mxu0 0.0
  %v3092 = vand.u32 %v41, 4294901760
  %v3093 = vsub.f32 %v41, %v3092
  %3094 = vmatpush1.msra.mxu0 %v3093
  %3095 = vmatprep.subr.mxu0 0.0
  %v3096 = vand.u32 %v40, 4294901760
  %v3097 = vsub.f32 %v40, %v3096
  %3098 = vmatpush1.msra.mxu0 %v3097
  %3099 = vmatprep.subr.mxu0 0.0
  %v3100 = vand.u32 %v39, 4294901760
  %v3101 = vsub.f32 %v39, %v3100
  %3102 = vmatpush1.msra.mxu0 %v3101
  %3103 = vmatprep.subr.mxu0 0.0
  %v3104 = vand.u32 %v38, 4294901760
  %v3105 = vsub.f32 %v38, %v3104
  %3106 = vmatpush1.msra.mxu0 %v3105
  %3107 = vmatprep.subr.mxu0 0.0
  %v3108 = vand.u32 %v37, 4294901760
  %v3109 = vsub.f32 %v37, %v3108
  %3110 = vmatpush1.msra.mxu0 %v3109
  %3111 = vmatprep.subr.mxu0 0.0
  %v3112 = vand.u32 %v36, 4294901760
  %v3113 = vsub.f32 %v36, %v3112
  %3114 = vmatpush1.msra.mxu0 %v3113
  %3115 = vmatprep.subr.mxu0 0.0
  %v3116 = vand.u32 %v35, 4294901760
  %v3117 = vsub.f32 %v35, %v3116
  %3118 = vmatpush1.msra.mxu0 %v3117
  %3119 = vmatprep.subr.mxu0 0.0
  %3120 = vmatpush2.msra.mxu0 0.0
  %3121 = vmatprep.subr.mxu0 0.0
  %3122 = vmatpush2.msra.mxu0 0.0
  %3123 = vmatprep.subr.mxu0 0.0
  %3124 = vmatpush2.msra.mxu0 0.0
  %3125 = vmatprep.subr.mxu0 0.0
  %3126 = vmatpush2.msra.mxu0 0.0
  %3127 = vmatprep.subr.mxu0 0.0
  %3128 = vmatpush2.msra.mxu0 0.0
  %3129 = vmatprep.subr.mxu0 0.0
  %3130 = vmatpush2.msra.mxu0 0.0
  %3131 = vmatprep.subr.mxu0 0.0
  %3132 = vmatpush2.msra.mxu0 0.0
  %3133 = vmatprep.subr.mxu0 0.0
  %3134 = vmatpush2.msra.mxu0 0.0
  %3135 = vmatprep.subr.mxu0 0.0
  %3136 = vmatpush2.msra.mxu0 0.0
  %3137 = vmatprep.subr.mxu0 0.0
  %3138 = vmatpush2.msra.mxu0 0.0
  %3139 = vmatprep.subr.mxu0 0.0
  %3140 = vmatpush2.msra.mxu0 0.0
  %3141 = vmatprep.subr.mxu0 0.0
  %3142 = vmatpush2.msra.mxu0 0.0
  %3143 = vmatprep.subr.mxu0 0.0
  %3144 = vmatpush2.msra.mxu0 0.0
  %3145 = vmatprep.subr.mxu0 0.0
  %3146 = vmatpush2.msra.mxu0 0.0
  %3147 = vmatprep.subr.mxu0 0.0
  %3148 = vmatpush2.msra.mxu0 0.0
  %3149 = vmatprep.subr.mxu0 0.0
  %3150 = vmatpush2.msra.mxu0 0.0
  %3151 = vmatprep.mubr.f32.mxu0 0.0
  %v3152 = vand.u32 %v2812, 4294901760
  %v3153 = vsub.f32 %v2812, %v3152
  %3154 = vmatmul.mubr.f32.gmra.mxu0 %v3153
  %v3155 = vpop.f32.mrf.mxu0
  %v3156 = vadd.f32 %v3052, %v3155
  %v3157 = vpop.f32.mrf.mxu0
  %3158 = vdwg.mxu0
  %3159 = vmatprep.subr.mxu0 0.0
  %v3160 = vand.u32 %v50, 4294901760
  %3161 = vmatpush1.msra.mxu0 %v3160
  %3162 = vmatprep.subr.mxu0 0.0
  %v3163 = vand.u32 %v49, 4294901760
  %3164 = vmatpush1.msra.mxu0 %v3163
  %3165 = vmatprep.subr.mxu0 0.0
  %v3166 = vand.u32 %v48, 4294901760
  %3167 = vmatpush1.msra.mxu0 %v3166
  %3168 = vmatprep.subr.mxu0 0.0
  %v3169 = vand.u32 %v47, 4294901760
  %3170 = vmatpush1.msra.mxu0 %v3169
  %3171 = vmatprep.subr.mxu0 0.0
  %v3172 = vand.u32 %v46, 4294901760
  %3173 = vmatpush1.msra.mxu0 %v3172
  %3174 = vmatprep.subr.mxu0 0.0
  %v3175 = vand.u32 %v45, 4294901760
  %3176 = vmatpush1.msra.mxu0 %v3175
  %3177 = vmatprep.subr.mxu0 0.0
  %v3178 = vand.u32 %v44, 4294901760
  %3179 = vmatpush1.msra.mxu0 %v3178
  %3180 = vmatprep.subr.mxu0 0.0
  %v3181 = vand.u32 %v43, 4294901760
  %3182 = vmatpush1.msra.mxu0 %v3181
  %3183 = vmatprep.subr.mxu0 0.0
  %v3184 = vand.u32 %v42, 4294901760
  %3185 = vmatpush1.msra.mxu0 %v3184
  %3186 = vmatprep.subr.mxu0 0.0
  %v3187 = vand.u32 %v41, 4294901760
  %3188 = vmatpush1.msra.mxu0 %v3187
  %3189 = vmatprep.subr.mxu0 0.0
  %v3190 = vand.u32 %v40, 4294901760
  %3191 = vmatpush1.msra.mxu0 %v3190
  %3192 = vmatprep.subr.mxu0 0.0
  %v3193 = vand.u32 %v39, 4294901760
  %3194 = vmatpush1.msra.mxu0 %v3193
  %3195 = vmatprep.subr.mxu0 0.0
  %v3196 = vand.u32 %v38, 4294901760
  %3197 = vmatpush1.msra.mxu0 %v3196
  %3198 = vmatprep.subr.mxu0 0.0
  %v3199 = vand.u32 %v37, 4294901760
  %3200 = vmatpush1.msra.mxu0 %v3199
  %3201 = vmatprep.subr.mxu0 0.0
  %v3202 = vand.u32 %v36, 4294901760
  %3203 = vmatpush1.msra.mxu0 %v3202
  %3204 = vmatprep.subr.mxu0 0.0
  %v3205 = vand.u32 %v35, 4294901760
  %3206 = vmatpush1.msra.mxu0 %v3205
  %3207 = vmatprep.subr.mxu0 0.0
  %3208 = vmatpush2.msra.mxu0 0.0
  %3209 = vmatprep.subr.mxu0 0.0
  %3210 = vmatpush2.msra.mxu0 0.0
  %3211 = vmatprep.subr.mxu0 0.0
  %3212 = vmatpush2.msra.mxu0 0.0
  %3213 = vmatprep.subr.mxu0 0.0
  %3214 = vmatpush2.msra.mxu0 0.0
  %3215 = vmatprep.subr.mxu0 0.0
  %3216 = vmatpush2.msra.mxu0 0.0
  %3217 = vmatprep.subr.mxu0 0.0
  %3218 = vmatpush2.msra.mxu0 0.0
  %3219 = vmatprep.subr.mxu0 0.0
  %3220 = vmatpush2.msra.mxu0 0.0
  %3221 = vmatprep.subr.mxu0 0.0
  %3222 = vmatpush2.msra.mxu0 0.0
  %3223 = vmatprep.subr.mxu0 0.0
  %3224 = vmatpush2.msra.mxu0 0.0
  %3225 = vmatprep.subr.mxu0 0.0
  %3226 = vmatpush2.msra.mxu0 0.0
  %3227 = vmatprep.subr.mxu0 0.0
  %3228 = vmatpush2.msra.mxu0 0.0
  %3229 = vmatprep.subr.mxu0 0.0
  %3230 = vmatpush2.msra.mxu0 0.0
  %3231 = vmatprep.subr.mxu0 0.0
  %3232 = vmatpush2.msra.mxu0 0.0
  %3233 = vmatprep.subr.mxu0 0.0
  %3234 = vmatpush2.msra.mxu0 0.0
  %3235 = vmatprep.subr.mxu0 0.0
  %3236 = vmatpush2.msra.mxu0 0.0
  %3237 = vmatprep.subr.mxu0 0.0
  %3238 = vmatpush2.msra.mxu0 0.0
  %3239 = vmatprep.mubr.f32.mxu0 0.0
  %v3240 = vand.u32 %v2812, 4294901760
  %v3241 = vsub.f32 %v2812, %v3240
  %v3242 = vand.u32 %v3241, 4294901760
  %3243 = vmatmul.mubr.f32.gmra.mxu0 %v3242
  %v3244 = vpop.f32.mrf.mxu0
  %v3245 = vadd.f32 %v3156, %v3244
  %v3246 = vpop.f32.mrf.mxu0
  %3247 = vdwg.mxu0
  %3248 = vmatprep.subr.mxu0 0.0
  %v3249 = vand.u32 %v50, 4294901760
  %v3250 = vsub.f32 %v50, %v3249
  %v3251 = vand.u32 %v3250, 4294901760
  %3252 = vmatpush1.msra.mxu0 %v3251
  %3253 = vmatprep.subr.mxu0 0.0
  %v3254 = vand.u32 %v49, 4294901760
  %v3255 = vsub.f32 %v49, %v3254
  %v3256 = vand.u32 %v3255, 4294901760
  %3257 = vmatpush1.msra.mxu0 %v3256
  %3258 = vmatprep.subr.mxu0 0.0
  %v3259 = vand.u32 %v48, 4294901760
  %v3260 = vsub.f32 %v48, %v3259
  %v3261 = vand.u32 %v3260, 4294901760
  %3262 = vmatpush1.msra.mxu0 %v3261
  %3263 = vmatprep.subr.mxu0 0.0
  %v3264 = vand.u32 %v47, 4294901760
  %v3265 = vsub.f32 %v47, %v3264
  %v3266 = vand.u32 %v3265, 4294901760
  %3267 = vmatpush1.msra.mxu0 %v3266
  %3268 = vmatprep.subr.mxu0 0.0
  %v3269 = vand.u32 %v46, 4294901760
  %v3270 = vsub.f32 %v46, %v3269
  %v3271 = vand.u32 %v3270, 4294901760
  %3272 = vmatpush1.msra.mxu0 %v3271
  %3273 = vmatprep.subr.mxu0 0.0
  %v3274 = vand.u32 %v45, 4294901760
  %v3275 = vsub.f32 %v45, %v3274
  %v3276 = vand.u32 %v3275, 4294901760
  %3277 = vmatpush1.msra.mxu0 %v3276
  %3278 = vmatprep.subr.mxu0 0.0
  %v3279 = vand.u32 %v44, 4294901760
  %v3280 = vsub.f32 %v44, %v3279
  %v3281 = vand.u32 %v3280, 4294901760
  %3282 = vmatpush1.msra.mxu0 %v3281
  %3283 = vmatprep.subr.mxu0 0.0
  %v3284 = vand.u32 %v43, 4294901760
  %v3285 = vsub.f32 %v43, %v3284
  %v3286 = vand.u32 %v3285, 4294901760
  %3287 = vmatpush1.msra.mxu0 %v3286
  %3288 = vmatprep.subr.mxu0 0.0
  %v3289 = vand.u32 %v42, 4294901760
  %v3290 = vsub.f32 %v42, %v3289
  %v3291 = vand.u32 %v3290, 4294901760
  %3292 = vmatpush1.msra.mxu0 %v3291
  %3293 = vmatprep.subr.mxu0 0.0
  %v3294 = vand.u32 %v41, 4294901760
  %v3295 = vsub.f32 %v41, %v3294
  %v3296 = vand.u32 %v3295, 4294901760
  %3297 = vmatpush1.msra.mxu0 %v3296
  %3298 = vmatprep.subr.mxu0 0.0
  %v3299 = vand.u32 %v40, 4294901760
  %v3300 = vsub.f32 %v40, %v3299
  %v3301 = vand.u32 %v3300, 4294901760
  %3302 = vmatpush1.msra.mxu0 %v3301
  %3303 = vmatprep.subr.mxu0 0.0
  %v3304 = vand.u32 %v39, 4294901760
  %v3305 = vsub.f32 %v39, %v3304
  %v3306 = vand.u32 %v3305, 4294901760
  %3307 = vmatpush1.msra.mxu0 %v3306
  %3308 = vmatprep.subr.mxu0 0.0
  %v3309 = vand.u32 %v38, 4294901760
  %v3310 = vsub.f32 %v38, %v3309
  %v3311 = vand.u32 %v3310, 4294901760
  %3312 = vmatpush1.msra.mxu0 %v3311
  %3313 = vmatprep.subr.mxu0 0.0
  %v3314 = vand.u32 %v37, 4294901760
  %v3315 = vsub.f32 %v37, %v3314
  %v3316 = vand.u32 %v3315, 4294901760
  %3317 = vmatpush1.msra.mxu0 %v3316
  %3318 = vmatprep.subr.mxu0 0.0
  %v3319 = vand.u32 %v36, 4294901760
  %v3320 = vsub.f32 %v36, %v3319
  %v3321 = vand.u32 %v3320, 4294901760
  %3322 = vmatpush1.msra.mxu0 %v3321
  %3323 = vmatprep.subr.mxu0 0.0
  %v3324 = vand.u32 %v35, 4294901760
  %v3325 = vsub.f32 %v35, %v3324
  %v3326 = vand.u32 %v3325, 4294901760
  %3327 = vmatpush1.msra.mxu0 %v3326
  %3328 = vmatprep.subr.mxu0 0.0
  %3329 = vmatpush2.msra.mxu0 0.0
  %3330 = vmatprep.subr.mxu0 0.0
  %3331 = vmatpush2.msra.mxu0 0.0
  %3332 = vmatprep.subr.mxu0 0.0
  %3333 = vmatpush2.msra.mxu0 0.0
  %3334 = vmatprep.subr.mxu0 0.0
  %3335 = vmatpush2.msra.mxu0 0.0
  %3336 = vmatprep.subr.mxu0 0.0
  %3337 = vmatpush2.msra.mxu0 0.0
  %3338 = vmatprep.subr.mxu0 0.0
  %3339 = vmatpush2.msra.mxu0 0.0
  %3340 = vmatprep.subr.mxu0 0.0
  %3341 = vmatpush2.msra.mxu0 0.0
  %3342 = vmatprep.subr.mxu0 0.0
  %3343 = vmatpush2.msra.mxu0 0.0
  %3344 = vmatprep.subr.mxu0 0.0
  %3345 = vmatpush2.msra.mxu0 0.0
  %3346 = vmatprep.subr.mxu0 0.0
  %3347 = vmatpush2.msra.mxu0 0.0
  %3348 = vmatprep.subr.mxu0 0.0
  %3349 = vmatpush2.msra.mxu0 0.0
  %3350 = vmatprep.subr.mxu0 0.0
  %3351 = vmatpush2.msra.mxu0 0.0
  %3352 = vmatprep.subr.mxu0 0.0
  %3353 = vmatpush2.msra.mxu0 0.0
  %3354 = vmatprep.subr.mxu0 0.0
  %3355 = vmatpush2.msra.mxu0 0.0
  %3356 = vmatprep.subr.mxu0 0.0
  %3357 = vmatpush2.msra.mxu0 0.0
  %3358 = vmatprep.subr.mxu0 0.0
  %3359 = vmatpush2.msra.mxu0 0.0
  %3360 = vmatprep.mubr.f32.mxu0 0.0
  %v3361 = vand.u32 %v2812, 4294901760
  %3362 = vmatmul.mubr.f32.gmra.mxu0 %v3361
  %v3363 = vpop.f32.mrf.mxu0
  %v3364 = vadd.f32 %v3245, %v3363
  %v3365 = vpop.f32.mrf.mxu0
  %3366 = vdwg.mxu0
  %3367 = vmatprep.subr.mxu0 0.0
  %v3368 = vand.u32 %v50, 4294901760
  %3369 = vmatpush1.msra.mxu0 %v3368
  %3370 = vmatprep.subr.mxu0 0.0
  %v3371 = vand.u32 %v49, 4294901760
  %3372 = vmatpush1.msra.mxu0 %v3371
  %3373 = vmatprep.subr.mxu0 0.0
  %v3374 = vand.u32 %v48, 4294901760
  %3375 = vmatpush1.msra.mxu0 %v3374
  %3376 = vmatprep.subr.mxu0 0.0
  %v3377 = vand.u32 %v47, 4294901760
  %3378 = vmatpush1.msra.mxu0 %v3377
  %3379 = vmatprep.subr.mxu0 0.0
  %v3380 = vand.u32 %v46, 4294901760
  %3381 = vmatpush1.msra.mxu0 %v3380
  %3382 = vmatprep.subr.mxu0 0.0
  %v3383 = vand.u32 %v45, 4294901760
  %3384 = vmatpush1.msra.mxu0 %v3383
  %3385 = vmatprep.subr.mxu0 0.0
  %v3386 = vand.u32 %v44, 4294901760
  %3387 = vmatpush1.msra.mxu0 %v3386
  %3388 = vmatprep.subr.mxu0 0.0
  %v3389 = vand.u32 %v43, 4294901760
  %3390 = vmatpush1.msra.mxu0 %v3389
  %3391 = vmatprep.subr.mxu0 0.0
  %v3392 = vand.u32 %v42, 4294901760
  %3393 = vmatpush1.msra.mxu0 %v3392
  %3394 = vmatprep.subr.mxu0 0.0
  %v3395 = vand.u32 %v41, 4294901760
  %3396 = vmatpush1.msra.mxu0 %v3395
  %3397 = vmatprep.subr.mxu0 0.0
  %v3398 = vand.u32 %v40, 4294901760
  %3399 = vmatpush1.msra.mxu0 %v3398
  %3400 = vmatprep.subr.mxu0 0.0
  %v3401 = vand.u32 %v39, 4294901760
  %3402 = vmatpush1.msra.mxu0 %v3401
  %3403 = vmatprep.subr.mxu0 0.0
  %v3404 = vand.u32 %v38, 4294901760
  %3405 = vmatpush1.msra.mxu0 %v3404
  %3406 = vmatprep.subr.mxu0 0.0
  %v3407 = vand.u32 %v37, 4294901760
  %3408 = vmatpush1.msra.mxu0 %v3407
  %3409 = vmatprep.subr.mxu0 0.0
  %v3410 = vand.u32 %v36, 4294901760
  %3411 = vmatpush1.msra.mxu0 %v3410
  %3412 = vmatprep.subr.mxu0 0.0
  %v3413 = vand.u32 %v35, 4294901760
  %3414 = vmatpush1.msra.mxu0 %v3413
  %3415 = vmatprep.subr.mxu0 0.0
  %3416 = vmatpush2.msra.mxu0 0.0
  %3417 = vmatprep.subr.mxu0 0.0
  %3418 = vmatpush2.msra.mxu0 0.0
  %3419 = vmatprep.subr.mxu0 0.0
  %3420 = vmatpush2.msra.mxu0 0.0
  %3421 = vmatprep.subr.mxu0 0.0
  %3422 = vmatpush2.msra.mxu0 0.0
  %3423 = vmatprep.subr.mxu0 0.0
  %3424 = vmatpush2.msra.mxu0 0.0
  %3425 = vmatprep.subr.mxu0 0.0
  %3426 = vmatpush2.msra.mxu0 0.0
  %3427 = vmatprep.subr.mxu0 0.0
  %3428 = vmatpush2.msra.mxu0 0.0
  %3429 = vmatprep.subr.mxu0 0.0
  %3430 = vmatpush2.msra.mxu0 0.0
  %3431 = vmatprep.subr.mxu0 0.0
  %3432 = vmatpush2.msra.mxu0 0.0
  %3433 = vmatprep.subr.mxu0 0.0
  %3434 = vmatpush2.msra.mxu0 0.0
  %3435 = vmatprep.subr.mxu0 0.0
  %3436 = vmatpush2.msra.mxu0 0.0
  %3437 = vmatprep.subr.mxu0 0.0
  %3438 = vmatpush2.msra.mxu0 0.0
  %3439 = vmatprep.subr.mxu0 0.0
  %3440 = vmatpush2.msra.mxu0 0.0
  %3441 = vmatprep.subr.mxu0 0.0
  %3442 = vmatpush2.msra.mxu0 0.0
  %3443 = vmatprep.subr.mxu0 0.0
  %3444 = vmatpush2.msra.mxu0 0.0
  %3445 = vmatprep.subr.mxu0 0.0
  %3446 = vmatpush2.msra.mxu0 0.0
  %3447 = vmatprep.mubr.f32.mxu0 0.0
  %v3448 = vand.u32 %v2812, 4294901760
  %3449 = vmatmul.mubr.f32.gmra.mxu0 %v3448
  %v3450 = vpop.f32.mrf.mxu0
  %v3451 = vadd.f32 %v3364, %v3450
  %v3452 = vpop.f32.mrf.mxu0
  %3453 = vdwg.mxu0
  %v3454 = vmul.f32 %v3451, 0.001953125
  %v3455 = vadd.f32 %v3454, 1e-05
  %v3456 = vrsqrt.pop %v3455
  %v3457 = vlaneseq
  %v3458 = vshrl.u32 %v3457, 7
  %v3459 = vsub.s32 0, %v3458
  %v3460 = vrot.slane %v3456, %v3459
  %v3461 = vmul.f32 %v2796, %v3460
  %v3462 = vmul.f32 %v2797, %v3460
  %v3463 = vmul.f32 %v2798, %v3460
  %v3464 = vmul.f32 %v2799, %v3460
  %v3465 = vld [vmem:[%s3] sm:$0x1]
  %v3467 = vlaneseq
  %v3468 = vshrl.u32 %v3467, 7
  %v3469 = vsub.s32 0, %v3468
  %v3470 = vrot.slane %v3465, %v3469
  %v3472 = vmul.f32 %v3461, %v3470
  %v3473 = vmul.f32 %v3462, %v3470
  %v3474 = vmul.f32 %v3463, %v3470
  %v3475 = vmul.f32 %v3464, %v3470
  %v3476 = vld [vmem:[%s4] sm:$0x1]
  %v3478 = vlaneseq
  %v3479 = vshrl.u32 %v3478, 7
  %v3480 = vsub.s32 0, %v3479
  %v3481 = vrot.slane %v3476, %v3480
  %v3483 = vadd.f32 %v3472, %v3481
  %v3484 = vadd.f32 %v3473, %v3481
  %v3485 = vadd.f32 %v3474, %v3481
  %v3486 = vadd.f32 %v3475, %v3481
  %v3487 = vmax.f32 %v3483, 0.0
  %v3488 = vmax.f32 %v3484, 0.0
  %v3489 = vmax.f32 %v3485, 0.0
  %v3490 = vmax.f32 %v3486, 0.0
  %3491 = vst [vmem:[#allocation3 + $0x7] sm:$0x1] 0.0
  %3492 = vst [vmem:[#allocation3 + $0x27] sm:$0x1] 0.0
  %3493 = vst [vmem:[#allocation3 + $0x18] sm:$0x1] 0.0
  %3494 = vst [vmem:[#allocation3 + $0x38] sm:$0x1] 0.0
  %3495 = vst [vmem:[#allocation3 + $0x8] sm:$0xff] %v3487
  %3496 = vst [vmem:[#allocation3 + $0x10] sm:$0xff] %v3488
  %3497 = vst [vmem:[#allocation3 + $0x28] sm:$0xff] %v3489
  %3498 = vst [vmem:[#allocation3 + $0x30] sm:$0xff] %v3490
  %v3499 = vld [vmem:[#allocation3 + $0x7] sm:$0xff]
  %v3500 = vld [vmem:[#allocation3 + $0xf] sm:$0xff]
  %v3501 = vld [vmem:[#allocation3 + $0x27] sm:$0xff]
  %v3502 = vld [vmem:[#allocation3 + $0x2f] sm:$0xff]
  %v3503 = vld [vmem:[%s5] sm:$0xff]
  %v3504 = vld [vmem:[%s5 + $0x8] sm:$0xff]
  %v3505 = vld [vmem:[%s5 + $0x10] sm:$0xff]
  %v3506 = vld [vmem:[%s5 + $0x18] sm:$0xff]
  %v3507 = vld [vmem:[%s5 + $0x20] sm:$0xff]
  %v3508 = vld [vmem:[%s5 + $0x28] sm:$0xff]
  %v3509 = vld [vmem:[%s5 + $0x30] sm:$0xff]
  %v3510 = vld [vmem:[%s5 + $0x38] sm:$0xff]
  %v3511 = vld [vmem:[%s5 + $0x40] sm:$0xff]
  %v3512 = vld [vmem:[%s5 + $0x48] sm:$0xff]
  %v3513 = vld [vmem:[%s5 + $0x50] sm:$0xff]
  %v3514 = vld [vmem:[%s5 + $0x58] sm:$0xff]
  %v3515 = vld [vmem:[%s5 + $0x60] sm:$0xff]
  %v3516 = vld [vmem:[%s5 + $0x68] sm:$0xff]
  %v3517 = vld [vmem:[%s5 + $0x70] sm:$0xff]
  %v3518 = vld [vmem:[%s5 + $0x78] sm:$0xff]
  %v3519 = vld [vmem:[#allocation3 + $0x8] sm:$0xff]
  %v3520 = vld [vmem:[#allocation3 + $0x10] sm:$0xff]
  %v3521 = vld [vmem:[#allocation3 + $0x28] sm:$0xff]
  %v3522 = vld [vmem:[#allocation3 + $0x30] sm:$0xff]
  %s3523 = scalar_lea.vmem %s5, 128
  %v3524 = vld [vmem:[%s3523] sm:$0xff]
  %v3525 = vld [vmem:[%s3523 + $0x8] sm:$0xff]
  %v3526 = vld [vmem:[%s3523 + $0x10] sm:$0xff]
  %v3527 = vld [vmem:[%s3523 + $0x18] sm:$0xff]
  %v3528 = vld [vmem:[%s3523 + $0x20] sm:$0xff]
  %v3529 = vld [vmem:[%s3523 + $0x28] sm:$0xff]
  %v3530 = vld [vmem:[%s3523 + $0x30] sm:$0xff]
  %v3531 = vld [vmem:[%s3523 + $0x38] sm:$0xff]
  %v3532 = vld [vmem:[%s3523 + $0x40] sm:$0xff]
  %v3533 = vld [vmem:[%s3523 + $0x48] sm:$0xff]
  %v3534 = vld [vmem:[%s3523 + $0x50] sm:$0xff]
  %v3535 = vld [vmem:[%s3523 + $0x58] sm:$0xff]
  %v3536 = vld [vmem:[%s3523 + $0x60] sm:$0xff]
  %v3537 = vld [vmem:[%s3523 + $0x68] sm:$0xff]
  %v3538 = vld [vmem:[%s3523 + $0x70] sm:$0xff]
  %v3539 = vld [vmem:[%s3523 + $0x78] sm:$0xff]
  %3540 = vmatprep.subr.mxu0 0.0
  %v3541 = vand.u32 %v3539, 4294901760
  %3542 = vmatpush1.msra.mxu0 %v3541
  %3543 = vmatprep.subr.mxu0 0.0
  %v3544 = vand.u32 %v3538, 4294901760
  %3545 = vmatpush1.msra.mxu0 %v3544
  %3546 = vmatprep.subr.mxu0 0.0
  %v3547 = vand.u32 %v3537, 4294901760
  %3548 = vmatpush1.msra.mxu0 %v3547
  %3549 = vmatprep.subr.mxu0 0.0
  %v3550 = vand.u32 %v3536, 4294901760
  %3551 = vmatpush1.msra.mxu0 %v3550
  %3552 = vmatprep.subr.mxu0 0.0
  %v3553 = vand.u32 %v3535, 4294901760
  %3554 = vmatpush1.msra.mxu0 %v3553
  %3555 = vmatprep.subr.mxu0 0.0
  %v3556 = vand.u32 %v3534, 4294901760
  %3557 = vmatpush1.msra.mxu0 %v3556
  %3558 = vmatprep.subr.mxu0 0.0
  %v3559 = vand.u32 %v3533, 4294901760
  %3560 = vmatpush1.msra.mxu0 %v3559
  %3561 = vmatprep.subr.mxu0 0.0
  %v3562 = vand.u32 %v3532, 4294901760
  %3563 = vmatpush1.msra.mxu0 %v3562
  %3564 = vmatprep.subr.mxu0 0.0
  %v3565 = vand.u32 %v3531, 4294901760
  %3566 = vmatpush1.msra.mxu0 %v3565
  %3567 = vmatprep.subr.mxu0 0.0
  %v3568 = vand.u32 %v3530, 4294901760
  %3569 = vmatpush1.msra.mxu0 %v3568
  %3570 = vmatprep.subr.mxu0 0.0
  %v3571 = vand.u32 %v3529, 4294901760
  %3572 = vmatpush1.msra.mxu0 %v3571
  %3573 = vmatprep.subr.mxu0 0.0
  %v3574 = vand.u32 %v3528, 4294901760
  %3575 = vmatpush1.msra.mxu0 %v3574
  %3576 = vmatprep.subr.mxu0 0.0
  %v3577 = vand.u32 %v3527, 4294901760
  %3578 = vmatpush1.msra.mxu0 %v3577
  %3579 = vmatprep.subr.mxu0 0.0
  %v3580 = vand.u32 %v3526, 4294901760
  %3581 = vmatpush1.msra.mxu0 %v3580
  %3582 = vmatprep.subr.mxu0 0.0
  %v3583 = vand.u32 %v3525, 4294901760
  %3584 = vmatpush1.msra.mxu0 %v3583
  %3585 = vmatprep.subr.mxu0 0.0
  %v3586 = vand.u32 %v3524, 4294901760
  %3587 = vmatpush1.msra.mxu0 %v3586
  %3588 = vmatprep.subr.mxu0 0.0
  %3589 = vmatpush2.msra.mxu0 0.0
  %3590 = vmatprep.subr.mxu0 0.0
  %3591 = vmatpush2.msra.mxu0 0.0
  %3592 = vmatprep.subr.mxu0 0.0
  %3593 = vmatpush2.msra.mxu0 0.0
  %3594 = vmatprep.subr.mxu0 0.0
  %3595 = vmatpush2.msra.mxu0 0.0
  %3596 = vmatprep.subr.mxu0 0.0
  %3597 = vmatpush2.msra.mxu0 0.0
  %3598 = vmatprep.subr.mxu0 0.0
  %3599 = vmatpush2.msra.mxu0 0.0
  %3600 = vmatprep.subr.mxu0 0.0
  %3601 = vmatpush2.msra.mxu0 0.0
  %3602 = vmatprep.subr.mxu0 0.0
  %3603 = vmatpush2.msra.mxu0 0.0
  %3604 = vmatprep.subr.mxu0 0.0
  %3605 = vmatpush2.msra.mxu0 0.0
  %3606 = vmatprep.subr.mxu0 0.0
  %3607 = vmatpush2.msra.mxu0 0.0
  %3608 = vmatprep.subr.mxu0 0.0
  %3609 = vmatpush2.msra.mxu0 0.0
  %3610 = vmatprep.subr.mxu0 0.0
  %3611 = vmatpush2.msra.mxu0 0.0
  %3612 = vmatprep.subr.mxu0 0.0
  %3613 = vmatpush2.msra.mxu0 0.0
  %3614 = vmatprep.subr.mxu0 0.0
  %3615 = vmatpush2.msra.mxu0 0.0
  %3616 = vmatprep.subr.mxu0 0.0
  %3617 = vmatpush2.msra.mxu0 0.0
  %3618 = vmatprep.subr.mxu0 0.0
  %3619 = vmatpush2.msra.mxu0 0.0
  %3620 = vmatprep.mubr.f32.mxu0 0.0
  %v3621 = vand.u32 %v3519, 4294901760
  %v3622 = vsub.f32 %v3519, %v3621
  %v3623 = vand.u32 %v3622, 4294901760
  %v3624 = vsub.f32 %v3622, %v3623
  %v3625 = vand.u32 %v3624, 4294901760
  %3626 = vmatmul.mubr.f32.gmra.mxu0 %v3625
  %v3627 = vpop.f32.mrf.mxu0
  %v3628 = vadd.f32 0.0, %v3627
  %v3629 = vpop.f32.mrf.mxu0
  %3630 = vmatprep.mubr.f32.mxu0 0.0
  %v3631 = vand.u32 %v3520, 4294901760
  %v3632 = vsub.f32 %v3520, %v3631
  %v3633 = vand.u32 %v3632, 4294901760
  %v3634 = vsub.f32 %v3632, %v3633
  %v3635 = vand.u32 %v3634, 4294901760
  %3636 = vmatmul.mubr.f32.gmra.mxu0 %v3635
  %v3637 = vpop.f32.mrf.mxu0
  %v3638 = vadd.f32 0.0, %v3637
  %v3639 = vpop.f32.mrf.mxu0
  %3640 = vmatprep.mubr.f32.mxu0 0.0
  %v3641 = vand.u32 %v3521, 4294901760
  %v3642 = vsub.f32 %v3521, %v3641
  %v3643 = vand.u32 %v3642, 4294901760
  %v3644 = vsub.f32 %v3642, %v3643
  %v3645 = vand.u32 %v3644, 4294901760
  %3646 = vmatmul.mubr.f32.gmra.mxu0 %v3645
  %v3647 = vpop.f32.mrf.mxu0
  %v3648 = vadd.f32 0.0, %v3647
  %v3649 = vpop.f32.mrf.mxu0
  %3650 = vmatprep.mubr.f32.mxu0 0.0
  %v3651 = vand.u32 %v3522, 4294901760
  %v3652 = vsub.f32 %v3522, %v3651
  %v3653 = vand.u32 %v3652, 4294901760
  %v3654 = vsub.f32 %v3652, %v3653
  %v3655 = vand.u32 %v3654, 4294901760
  %3656 = vmatmul.mubr.f32.gmra.mxu0 %v3655
  %v3657 = vpop.f32.mrf.mxu0
  %v3658 = vadd.f32 0.0, %v3657
  %v3659 = vpop.f32.mrf.mxu0
  %3660 = vdwg.mxu0
  %3661 = vmatprep.subr.mxu0 0.0
  %v3662 = vand.u32 %v3539, 4294901760
  %v3663 = vsub.f32 %v3539, %v3662
  %v3664 = vand.u32 %v3663, 4294901760
  %v3665 = vsub.f32 %v3663, %v3664
  %v3666 = vand.u32 %v3665, 4294901760
  %3667 = vmatpush1.msra.mxu0 %v3666
  %3668 = vmatprep.subr.mxu0 0.0
  %v3669 = vand.u32 %v3538, 4294901760
  %v3670 = vsub.f32 %v3538, %v3669
  %v3671 = vand.u32 %v3670, 4294901760
  %v3672 = vsub.f32 %v3670, %v3671
  %v3673 = vand.u32 %v3672, 4294901760
  %3674 = vmatpush1.msra.mxu0 %v3673
  %3675 = vmatprep.subr.mxu0 0.0
  %v3676 = vand.u32 %v3537, 4294901760
  %v3677 = vsub.f32 %v3537, %v3676
  %v3678 = vand.u32 %v3677, 4294901760
  %v3679 = vsub.f32 %v3677, %v3678
  %v3680 = vand.u32 %v3679, 4294901760
  %3681 = vmatpush1.msra.mxu0 %v3680
  %3682 = vmatprep.subr.mxu0 0.0
  %v3683 = vand.u32 %v3536, 4294901760
  %v3684 = vsub.f32 %v3536, %v3683
  %v3685 = vand.u32 %v3684, 4294901760
  %v3686 = vsub.f32 %v3684, %v3685
  %v3687 = vand.u32 %v3686, 4294901760
  %3688 = vmatpush1.msra.mxu0 %v3687
  %3689 = vmatprep.subr.mxu0 0.0
  %v3690 = vand.u32 %v3535, 4294901760
  %v3691 = vsub.f32 %v3535, %v3690
  %v3692 = vand.u32 %v3691, 4294901760
  %v3693 = vsub.f32 %v3691, %v3692
  %v3694 = vand.u32 %v3693, 4294901760
  %3695 = vmatpush1.msra.mxu0 %v3694
  %3696 = vmatprep.subr.mxu0 0.0
  %v3697 = vand.u32 %v3534, 4294901760
  %v3698 = vsub.f32 %v3534, %v3697
  %v3699 = vand.u32 %v3698, 4294901760
  %v3700 = vsub.f32 %v3698, %v3699
  %v3701 = vand.u32 %v3700, 4294901760
  %3702 = vmatpush1.msra.mxu0 %v3701
  %3703 = vmatprep.subr.mxu0 0.0
  %v3704 = vand.u32 %v3533, 4294901760
  %v3705 = vsub.f32 %v3533, %v3704
  %v3706 = vand.u32 %v3705, 4294901760
  %v3707 = vsub.f32 %v3705, %v3706
  %v3708 = vand.u32 %v3707, 4294901760
  %3709 = vmatpush1.msra.mxu0 %v3708
  %3710 = vmatprep.subr.mxu0 0.0
  %v3711 = vand.u32 %v3532, 4294901760
  %v3712 = vsub.f32 %v3532, %v3711
  %v3713 = vand.u32 %v3712, 4294901760
  %v3714 = vsub.f32 %v3712, %v3713
  %v3715 = vand.u32 %v3714, 4294901760
  %3716 = vmatpush1.msra.mxu0 %v3715
  %3717 = vmatprep.subr.mxu0 0.0
  %v3718 = vand.u32 %v3531, 4294901760
  %v3719 = vsub.f32 %v3531, %v3718
  %v3720 = vand.u32 %v3719, 4294901760
  %v3721 = vsub.f32 %v3719, %v3720
  %v3722 = vand.u32 %v3721, 4294901760
  %3723 = vmatpush1.msra.mxu0 %v3722
  %3724 = vmatprep.subr.mxu0 0.0
  %v3725 = vand.u32 %v3530, 4294901760
  %v3726 = vsub.f32 %v3530, %v3725
  %v3727 = vand.u32 %v3726, 4294901760
  %v3728 = vsub.f32 %v3726, %v3727
  %v3729 = vand.u32 %v3728, 4294901760
  %3730 = vmatpush1.msra.mxu0 %v3729
  %3731 = vmatprep.subr.mxu0 0.0
  %v3732 = vand.u32 %v3529, 4294901760
  %v3733 = vsub.f32 %v3529, %v3732
  %v3734 = vand.u32 %v3733, 4294901760
  %v3735 = vsub.f32 %v3733, %v3734
  %v3736 = vand.u32 %v3735, 4294901760
  %3737 = vmatpush1.msra.mxu0 %v3736
  %3738 = vmatprep.subr.mxu0 0.0
  %v3739 = vand.u32 %v3528, 4294901760
  %v3740 = vsub.f32 %v3528, %v3739
  %v3741 = vand.u32 %v3740, 4294901760
  %v3742 = vsub.f32 %v3740, %v3741
  %v3743 = vand.u32 %v3742, 4294901760
  %3744 = vmatpush1.msra.mxu0 %v3743
  %3745 = vmatprep.subr.mxu0 0.0
  %v3746 = vand.u32 %v3527, 4294901760
  %v3747 = vsub.f32 %v3527, %v3746
  %v3748 = vand.u32 %v3747, 4294901760
  %v3749 = vsub.f32 %v3747, %v3748
  %v3750 = vand.u32 %v3749, 4294901760
  %3751 = vmatpush1.msra.mxu0 %v3750
  %3752 = vmatprep.subr.mxu0 0.0
  %v3753 = vand.u32 %v3526, 4294901760
  %v3754 = vsub.f32 %v3526, %v3753
  %v3755 = vand.u32 %v3754, 4294901760
  %v3756 = vsub.f32 %v3754, %v3755
  %v3757 = vand.u32 %v3756, 4294901760
  %3758 = vmatpush1.msra.mxu0 %v3757
  %3759 = vmatprep.subr.mxu0 0.0
  %v3760 = vand.u32 %v3525, 4294901760
  %v3761 = vsub.f32 %v3525, %v3760
  %v3762 = vand.u32 %v3761, 4294901760
  %v3763 = vsub.f32 %v3761, %v3762
  %v3764 = vand.u32 %v3763, 4294901760
  %3765 = vmatpush1.msra.mxu0 %v3764
  %3766 = vmatprep.subr.mxu0 0.0
  %v3767 = vand.u32 %v3524, 4294901760
  %v3768 = vsub.f32 %v3524, %v3767
  %v3769 = vand.u32 %v3768, 4294901760
  %v3770 = vsub.f32 %v3768, %v3769
  %v3771 = vand.u32 %v3770, 4294901760
  %3772 = vmatpush1.msra.mxu0 %v3771
  %3773 = vmatprep.subr.mxu0 0.0
  %3774 = vmatpush2.msra.mxu0 0.0
  %3775 = vmatprep.subr.mxu0 0.0
  %3776 = vmatpush2.msra.mxu0 0.0
  %3777 = vmatprep.subr.mxu0 0.0
  %3778 = vmatpush2.msra.mxu0 0.0
  %3779 = vmatprep.subr.mxu0 0.0
  %3780 = vmatpush2.msra.mxu0 0.0
  %3781 = vmatprep.subr.mxu0 0.0
  %3782 = vmatpush2.msra.mxu0 0.0
  %3783 = vmatprep.subr.mxu0 0.0
  %3784 = vmatpush2.msra.mxu0 0.0
  %3785 = vmatprep.subr.mxu0 0.0
  %3786 = vmatpush2.msra.mxu0 0.0
  %3787 = vmatprep.subr.mxu0 0.0
  %3788 = vmatpush2.msra.mxu0 0.0
  %3789 = vmatprep.subr.mxu0 0.0
  %3790 = vmatpush2.msra.mxu0 0.0
  %3791 = vmatprep.subr.mxu0 0.0
  %3792 = vmatpush2.msra.mxu0 0.0
  %3793 = vmatprep.subr.mxu0 0.0
  %3794 = vmatpush2.msra.mxu0 0.0
  %3795 = vmatprep.subr.mxu0 0.0
  %3796 = vmatpush2.msra.mxu0 0.0
  %3797 = vmatprep.subr.mxu0 0.0
  %3798 = vmatpush2.msra.mxu0 0.0
  %3799 = vmatprep.subr.mxu0 0.0
  %3800 = vmatpush2.msra.mxu0 0.0
  %3801 = vmatprep.subr.mxu0 0.0
  %3802 = vmatpush2.msra.mxu0 0.0
  %3803 = vmatprep.subr.mxu0 0.0
  %3804 = vmatpush2.msra.mxu0 0.0
  %3805 = vmatprep.mubr.f32.mxu0 0.0
  %v3806 = vand.u32 %v3519, 4294901760
  %3807 = vmatmul.mubr.f32.gmra.mxu0 %v3806
  %v3808 = vpop.f32.mrf.mxu0
  %v3809 = vadd.f32 %v3628, %v3808
  %v3810 = vpop.f32.mrf.mxu0
  %3811 = vmatprep.mubr.f32.mxu0 0.0
  %v3812 = vand.u32 %v3520, 4294901760
  %3813 = vmatmul.mubr.f32.gmra.mxu0 %v3812
  %v3814 = vpop.f32.mrf.mxu0
  %v3815 = vadd.f32 %v3638, %v3814
  %v3816 = vpop.f32.mrf.mxu0
  %3817 = vmatprep.mubr.f32.mxu0 0.0
  %v3818 = vand.u32 %v3521, 4294901760
  %3819 = vmatmul.mubr.f32.gmra.mxu0 %v3818
  %v3820 = vpop.f32.mrf.mxu0
  %v3821 = vadd.f32 %v3648, %v3820
  %v3822 = vpop.f32.mrf.mxu0
  %3823 = vmatprep.mubr.f32.mxu0 0.0
  %v3824 = vand.u32 %v3522, 4294901760
  %3825 = vmatmul.mubr.f32.gmra.mxu0 %v3824
  %v3826 = vpop.f32.mrf.mxu0
  %v3827 = vadd.f32 %v3658, %v3826
  %v3828 = vpop.f32.mrf.mxu0
  %3829 = vdwg.mxu0
  %3830 = vmatprep.subr.mxu0 0.0
  %v3831 = vand.u32 %v3539, 4294901760
  %v3832 = vsub.f32 %v3539, %v3831
  %3833 = vmatpush1.msra.mxu0 %v3832
  %3834 = vmatprep.subr.mxu0 0.0
  %v3835 = vand.u32 %v3538, 4294901760
  %v3836 = vsub.f32 %v3538, %v3835
  %3837 = vmatpush1.msra.mxu0 %v3836
  %3838 = vmatprep.subr.mxu0 0.0
  %v3839 = vand.u32 %v3537, 4294901760
  %v3840 = vsub.f32 %v3537, %v3839
  %3841 = vmatpush1.msra.mxu0 %v3840
  %3842 = vmatprep.subr.mxu0 0.0
  %v3843 = vand.u32 %v3536, 4294901760
  %v3844 = vsub.f32 %v3536, %v3843
  %3845 = vmatpush1.msra.mxu0 %v3844
  %3846 = vmatprep.subr.mxu0 0.0
  %v3847 = vand.u32 %v3535, 4294901760
  %v3848 = vsub.f32 %v3535, %v3847
  %3849 = vmatpush1.msra.mxu0 %v3848
  %3850 = vmatprep.subr.mxu0 0.0
  %v3851 = vand.u32 %v3534, 4294901760
  %v3852 = vsub.f32 %v3534, %v3851
  %3853 = vmatpush1.msra.mxu0 %v3852
  %3854 = vmatprep.subr.mxu0 0.0
  %v3855 = vand.u32 %v3533, 4294901760
  %v3856 = vsub.f32 %v3533, %v3855
  %3857 = vmatpush1.msra.mxu0 %v3856
  %3858 = vmatprep.subr.mxu0 0.0
  %v3859 = vand.u32 %v3532, 4294901760
  %v3860 = vsub.f32 %v3532, %v3859
  %3861 = vmatpush1.msra.mxu0 %v3860
  %3862 = vmatprep.subr.mxu0 0.0
  %v3863 = vand.u32 %v3531, 4294901760
  %v3864 = vsub.f32 %v3531, %v3863
  %3865 = vmatpush1.msra.mxu0 %v3864
  %3866 = vmatprep.subr.mxu0 0.0
  %v3867 = vand.u32 %v3530, 4294901760
  %v3868 = vsub.f32 %v3530, %v3867
  %3869 = vmatpush1.msra.mxu0 %v3868
  %3870 = vmatprep.subr.mxu0 0.0
  %v3871 = vand.u32 %v3529, 4294901760
  %v3872 = vsub.f32 %v3529, %v3871
  %3873 = vmatpush1.msra.mxu0 %v3872
  %3874 = vmatprep.subr.mxu0 0.0
  %v3875 = vand.u32 %v3528, 4294901760
  %v3876 = vsub.f32 %v3528, %v3875
  %3877 = vmatpush1.msra.mxu0 %v3876
  %3878 = vmatprep.subr.mxu0 0.0
  %v3879 = vand.u32 %v3527, 4294901760
  %v3880 = vsub.f32 %v3527, %v3879
  %3881 = vmatpush1.msra.mxu0 %v3880
  %3882 = vmatprep.subr.mxu0 0.0
  %v3883 = vand.u32 %v3526, 4294901760
  %v3884 = vsub.f32 %v3526, %v3883
  %3885 = vmatpush1.msra.mxu0 %v3884
  %3886 = vmatprep.subr.mxu0 0.0
  %v3887 = vand.u32 %v3525, 4294901760
  %v3888 = vsub.f32 %v3525, %v3887
  %3889 = vmatpush1.msra.mxu0 %v3888
  %3890 = vmatprep.subr.mxu0 0.0
  %v3891 = vand.u32 %v3524, 4294901760
  %v3892 = vsub.f32 %v3524, %v3891
  %3893 = vmatpush1.msra.mxu0 %v3892
  %3894 = vmatprep.subr.mxu0 0.0
  %3895 = vmatpush2.msra.mxu0 0.0
  %3896 = vmatprep.subr.mxu0 0.0
  %3897 = vmatpush2.msra.mxu0 0.0
  %3898 = vmatprep.subr.mxu0 0.0
  %3899 = vmatpush2.msra.mxu0 0.0
  %3900 = vmatprep.subr.mxu0 0.0
  %3901 = vmatpush2.msra.mxu0 0.0
  %3902 = vmatprep.subr.mxu0 0.0
  %3903 = vmatpush2.msra.mxu0 0.0
  %3904 = vmatprep.subr.mxu0 0.0
  %3905 = vmatpush2.msra.mxu0 0.0
  %3906 = vmatprep.subr.mxu0 0.0
  %3907 = vmatpush2.msra.mxu0 0.0
  %3908 = vmatprep.subr.mxu0 0.0
  %3909 = vmatpush2.msra.mxu0 0.0
  %3910 = vmatprep.subr.mxu0 0.0
  %3911 = vmatpush2.msra.mxu0 0.0
  %3912 = vmatprep.subr.mxu0 0.0
  %3913 = vmatpush2.msra.mxu0 0.0
  %3914 = vmatprep.subr.mxu0 0.0
  %3915 = vmatpush2.msra.mxu0 0.0
  %3916 = vmatprep.subr.mxu0 0.0
  %3917 = vmatpush2.msra.mxu0 0.0
  %3918 = vmatprep.subr.mxu0 0.0
  %3919 = vmatpush2.msra.mxu0 0.0
  %3920 = vmatprep.subr.mxu0 0.0
  %3921 = vmatpush2.msra.mxu0 0.0
  %3922 = vmatprep.subr.mxu0 0.0
  %3923 = vmatpush2.msra.mxu0 0.0
  %3924 = vmatprep.subr.mxu0 0.0
  %3925 = vmatpush2.msra.mxu0 0.0
  %3926 = vmatprep.mubr.f32.mxu0 0.0
  %v3927 = vand.u32 %v3519, 4294901760
  %v3928 = vsub.f32 %v3519, %v3927
  %3929 = vmatmul.mubr.f32.gmra.mxu0 %v3928
  %v3930 = vpop.f32.mrf.mxu0
  %v3931 = vadd.f32 %v3809, %v3930
  %v3932 = vpop.f32.mrf.mxu0
  %3933 = vmatprep.mubr.f32.mxu0 0.0
  %v3934 = vand.u32 %v3520, 4294901760
  %v3935 = vsub.f32 %v3520, %v3934
  %3936 = vmatmul.mubr.f32.gmra.mxu0 %v3935
  %v3937 = vpop.f32.mrf.mxu0
  %v3938 = vadd.f32 %v3815, %v3937
  %v3939 = vpop.f32.mrf.mxu0
  %3940 = vmatprep.mubr.f32.mxu0 0.0
  %v3941 = vand.u32 %v3521, 4294901760
  %v3942 = vsub.f32 %v3521, %v3941
  %3943 = vmatmul.mubr.f32.gmra.mxu0 %v3942
  %v3944 = vpop.f32.mrf.mxu0
  %v3945 = vadd.f32 %v3821, %v3944
  %v3946 = vpop.f32.mrf.mxu0
  %3947 = vmatprep.mubr.f32.mxu0 0.0
  %v3948 = vand.u32 %v3522, 4294901760
  %v3949 = vsub.f32 %v3522, %v3948
  %3950 = vmatmul.mubr.f32.gmra.mxu0 %v3949
  %v3951 = vpop.f32.mrf.mxu0
  %v3952 = vadd.f32 %v3827, %v3951
  %v3953 = vpop.f32.mrf.mxu0
  %3954 = vdwg.mxu0
  %3955 = vmatprep.subr.mxu0 0.0
  %v3956 = vand.u32 %v3539, 4294901760
  %3957 = vmatpush1.msra.mxu0 %v3956
  %3958 = vmatprep.subr.mxu0 0.0
  %v3959 = vand.u32 %v3538, 4294901760
  %3960 = vmatpush1.msra.mxu0 %v3959
  %3961 = vmatprep.subr.mxu0 0.0
  %v3962 = vand.u32 %v3537, 4294901760
  %3963 = vmatpush1.msra.mxu0 %v3962
  %3964 = vmatprep.subr.mxu0 0.0
  %v3965 = vand.u32 %v3536, 4294901760
  %3966 = vmatpush1.msra.mxu0 %v3965
  %3967 = vmatprep.subr.mxu0 0.0
  %v3968 = vand.u32 %v3535, 4294901760
  %3969 = vmatpush1.msra.mxu0 %v3968
  %3970 = vmatprep.subr.mxu0 0.0
  %v3971 = vand.u32 %v3534, 4294901760
  %3972 = vmatpush1.msra.mxu0 %v3971
  %3973 = vmatprep.subr.mxu0 0.0
  %v3974 = vand.u32 %v3533, 4294901760
  %3975 = vmatpush1.msra.mxu0 %v3974
  %3976 = vmatprep.subr.mxu0 0.0
  %v3977 = vand.u32 %v3532, 4294901760
  %3978 = vmatpush1.msra.mxu0 %v3977
  %3979 = vmatprep.subr.mxu0 0.0
  %v3980 = vand.u32 %v3531, 4294901760
  %3981 = vmatpush1.msra.mxu0 %v3980
  %3982 = vmatprep.subr.mxu0 0.0
  %v3983 = vand.u32 %v3530, 4294901760
  %3984 = vmatpush1.msra.mxu0 %v3983
  %3985 = vmatprep.subr.mxu0 0.0
  %v3986 = vand.u32 %v3529, 4294901760
  %3987 = vmatpush1.msra.mxu0 %v3986
  %3988 = vmatprep.subr.mxu0 0.0
  %v3989 = vand.u32 %v3528, 4294901760
  %3990 = vmatpush1.msra.mxu0 %v3989
  %3991 = vmatprep.subr.mxu0 0.0
  %v3992 = vand.u32 %v3527, 4294901760
  %3993 = vmatpush1.msra.mxu0 %v3992
  %3994 = vmatprep.subr.mxu0 0.0
  %v3995 = vand.u32 %v3526, 4294901760
  %3996 = vmatpush1.msra.mxu0 %v3995
  %3997 = vmatprep.subr.mxu0 0.0
  %v3998 = vand.u32 %v3525, 4294901760
  %3999 = vmatpush1.msra.mxu0 %v3998
  %4000 = vmatprep.subr.mxu0 0.0
  %v4001 = vand.u32 %v3524, 4294901760
  %4002 = vmatpush1.msra.mxu0 %v4001
  %4003 = vmatprep.subr.mxu0 0.0
  %4004 = vmatpush2.msra.mxu0 0.0
  %4005 = vmatprep.subr.mxu0 0.0
  %4006 = vmatpush2.msra.mxu0 0.0
  %4007 = vmatprep.subr.mxu0 0.0
  %4008 = vmatpush2.msra.mxu0 0.0
  %4009 = vmatprep.subr.mxu0 0.0
  %4010 = vmatpush2.msra.mxu0 0.0
  %4011 = vmatprep.subr.mxu0 0.0
  %4012 = vmatpush2.msra.mxu0 0.0
  %4013 = vmatprep.subr.mxu0 0.0
  %4014 = vmatpush2.msra.mxu0 0.0
  %4015 = vmatprep.subr.mxu0 0.0
  %4016 = vmatpush2.msra.mxu0 0.0
  %4017 = vmatprep.subr.mxu0 0.0
  %4018 = vmatpush2.msra.mxu0 0.0
  %4019 = vmatprep.subr.mxu0 0.0
  %4020 = vmatpush2.msra.mxu0 0.0
  %4021 = vmatprep.subr.mxu0 0.0
  %4022 = vmatpush2.msra.mxu0 0.0
  %4023 = vmatprep.subr.mxu0 0.0
  %4024 = vmatpush2.msra.mxu0 0.0
  %4025 = vmatprep.subr.mxu0 0.0
  %4026 = vmatpush2.msra.mxu0 0.0
  %4027 = vmatprep.subr.mxu0 0.0
  %4028 = vmatpush2.msra.mxu0 0.0
  %4029 = vmatprep.subr.mxu0 0.0
  %4030 = vmatpush2.msra.mxu0 0.0
  %4031 = vmatprep.subr.mxu0 0.0
  %4032 = vmatpush2.msra.mxu0 0.0
  %4033 = vmatprep.subr.mxu0 0.0
  %4034 = vmatpush2.msra.mxu0 0.0
  %4035 = vmatprep.mubr.f32.mxu0 0.0
  %v4036 = vand.u32 %v3519, 4294901760
  %v4037 = vsub.f32 %v3519, %v4036
  %v4038 = vand.u32 %v4037, 4294901760
  %4039 = vmatmul.mubr.f32.gmra.mxu0 %v4038
  %v4040 = vpop.f32.mrf.mxu0
  %v4041 = vadd.f32 %v3931, %v4040
  %v4042 = vpop.f32.mrf.mxu0
  %4043 = vmatprep.mubr.f32.mxu0 0.0
  %v4044 = vand.u32 %v3520, 4294901760
  %v4045 = vsub.f32 %v3520, %v4044
  %v4046 = vand.u32 %v4045, 4294901760
  %4047 = vmatmul.mubr.f32.gmra.mxu0 %v4046
  %v4048 = vpop.f32.mrf.mxu0
  %v4049 = vadd.f32 %v3938, %v4048
  %v4050 = vpop.f32.mrf.mxu0
  %4051 = vmatprep.mubr.f32.mxu0 0.0
  %v4052 = vand.u32 %v3521, 4294901760
  %v4053 = vsub.f32 %v3521, %v4052
  %v4054 = vand.u32 %v4053, 4294901760
  %4055 = vmatmul.mubr.f32.gmra.mxu0 %v4054
  %v4056 = vpop.f32.mrf.mxu0
  %v4057 = vadd.f32 %v3945, %v4056
  %v4058 = vpop.f32.mrf.mxu0
  %4059 = vmatprep.mubr.f32.mxu0 0.0
  %v4060 = vand.u32 %v3522, 4294901760
  %v4061 = vsub.f32 %v3522, %v4060
  %v4062 = vand.u32 %v4061, 4294901760
  %4063 = vmatmul.mubr.f32.gmra.mxu0 %v4062
  %v4064 = vpop.f32.mrf.mxu0
  %v4065 = vadd.f32 %v3952, %v4064
  %v4066 = vpop.f32.mrf.mxu0
  %4067 = vdwg.mxu0
  %4068 = vmatprep.subr.mxu0 0.0
  %v4069 = vand.u32 %v3539, 4294901760
  %v4070 = vsub.f32 %v3539, %v4069
  %v4071 = vand.u32 %v4070, 4294901760
  %4072 = vmatpush1.msra.mxu0 %v4071
  %4073 = vmatprep.subr.mxu0 0.0
  %v4074 = vand.u32 %v3538, 4294901760
  %v4075 = vsub.f32 %v3538, %v4074
  %v4076 = vand.u32 %v4075, 4294901760
  %4077 = vmatpush1.msra.mxu0 %v4076
  %4078 = vmatprep.subr.mxu0 0.0
  %v4079 = vand.u32 %v3537, 4294901760
  %v4080 = vsub.f32 %v3537, %v4079
  %v4081 = vand.u32 %v4080, 4294901760
  %4082 = vmatpush1.msra.mxu0 %v4081
  %4083 = vmatprep.subr.mxu0 0.0
  %v4084 = vand.u32 %v3536, 4294901760
  %v4085 = vsub.f32 %v3536, %v4084
  %v4086 = vand.u32 %v4085, 4294901760
  %4087 = vmatpush1.msra.mxu0 %v4086
  %4088 = vmatprep.subr.mxu0 0.0
  %v4089 = vand.u32 %v3535, 4294901760
  %v4090 = vsub.f32 %v3535, %v4089
  %v4091 = vand.u32 %v4090, 4294901760
  %4092 = vmatpush1.msra.mxu0 %v4091
  %4093 = vmatprep.subr.mxu0 0.0
  %v4094 = vand.u32 %v3534, 4294901760
  %v4095 = vsub.f32 %v3534, %v4094
  %v4096 = vand.u32 %v4095, 4294901760
  %4097 = vmatpush1.msra.mxu0 %v4096
  %4098 = vmatprep.subr.mxu0 0.0
  %v4099 = vand.u32 %v3533, 4294901760
  %v4100 = vsub.f32 %v3533, %v4099
  %v4101 = vand.u32 %v4100, 4294901760
  %4102 = vmatpush1.msra.mxu0 %v4101
  %4103 = vmatprep.subr.mxu0 0.0
  %v4104 = vand.u32 %v3532, 4294901760
  %v4105 = vsub.f32 %v3532, %v4104
  %v4106 = vand.u32 %v4105, 4294901760
  %4107 = vmatpush1.msra.mxu0 %v4106
  %4108 = vmatprep.subr.mxu0 0.0
  %v4109 = vand.u32 %v3531, 4294901760
  %v4110 = vsub.f32 %v3531, %v4109
  %v4111 = vand.u32 %v4110, 4294901760
  %4112 = vmatpush1.msra.mxu0 %v4111
  %4113 = vmatprep.subr.mxu0 0.0
  %v4114 = vand.u32 %v3530, 4294901760
  %v4115 = vsub.f32 %v3530, %v4114
  %v4116 = vand.u32 %v4115, 4294901760
  %4117 = vmatpush1.msra.mxu0 %v4116
  %4118 = vmatprep.subr.mxu0 0.0
  %v4119 = vand.u32 %v3529, 4294901760
  %v4120 = vsub.f32 %v3529, %v4119
  %v4121 = vand.u32 %v4120, 4294901760
  %4122 = vmatpush1.msra.mxu0 %v4121
  %4123 = vmatprep.subr.mxu0 0.0
  %v4124 = vand.u32 %v3528, 4294901760
  %v4125 = vsub.f32 %v3528, %v4124
  %v4126 = vand.u32 %v4125, 4294901760
  %4127 = vmatpush1.msra.mxu0 %v4126
  %4128 = vmatprep.subr.mxu0 0.0
  %v4129 = vand.u32 %v3527, 4294901760
  %v4130 = vsub.f32 %v3527, %v4129
  %v4131 = vand.u32 %v4130, 4294901760
  %4132 = vmatpush1.msra.mxu0 %v4131
  %4133 = vmatprep.subr.mxu0 0.0
  %v4134 = vand.u32 %v3526, 4294901760
  %v4135 = vsub.f32 %v3526, %v4134
  %v4136 = vand.u32 %v4135, 4294901760
  %4137 = vmatpush1.msra.mxu0 %v4136
  %4138 = vmatprep.subr.mxu0 0.0
  %v4139 = vand.u32 %v3525, 4294901760
  %v4140 = vsub.f32 %v3525, %v4139
  %v4141 = vand.u32 %v4140, 4294901760
  %4142 = vmatpush1.msra.mxu0 %v4141
  %4143 = vmatprep.subr.mxu0 0.0
  %v4144 = vand.u32 %v3524, 4294901760
  %v4145 = vsub.f32 %v3524, %v4144
  %v4146 = vand.u32 %v4145, 4294901760
  %4147 = vmatpush1.msra.mxu0 %v4146
  %4148 = vmatprep.subr.mxu0 0.0
  %4149 = vmatpush2.msra.mxu0 0.0
  %4150 = vmatprep.subr.mxu0 0.0
  %4151 = vmatpush2.msra.mxu0 0.0
  %4152 = vmatprep.subr.mxu0 0.0
  %4153 = vmatpush2.msra.mxu0 0.0
  %4154 = vmatprep.subr.mxu0 0.0
  %4155 = vmatpush2.msra.mxu0 0.0
  %4156 = vmatprep.subr.mxu0 0.0
  %4157 = vmatpush2.msra.mxu0 0.0
  %4158 = vmatprep.subr.mxu0 0.0
  %4159 = vmatpush2.msra.mxu0 0.0
  %4160 = vmatprep.subr.mxu0 0.0
  %4161 = vmatpush2.msra.mxu0 0.0
  %4162 = vmatprep.subr.mxu0 0.0
  %4163 = vmatpush2.msra.mxu0 0.0
  %4164 = vmatprep.subr.mxu0 0.0
  %4165 = vmatpush2.msra.mxu0 0.0
  %4166 = vmatprep.subr.mxu0 0.0
  %4167 = vmatpush2.msra.mxu0 0.0
  %4168 = vmatprep.subr.mxu0 0.0
  %4169 = vmatpush2.msra.mxu0 0.0
  %4170 = vmatprep.subr.mxu0 0.0
  %4171 = vmatpush2.msra.mxu0 0.0
  %4172 = vmatprep.subr.mxu0 0.0
  %4173 = vmatpush2.msra.mxu0 0.0
  %4174 = vmatprep.subr.mxu0 0.0
  %4175 = vmatpush2.msra.mxu0 0.0
  %4176 = vmatprep.subr.mxu0 0.0
  %4177 = vmatpush2.msra.mxu0 0.0
  %4178 = vmatprep.subr.mxu0 0.0
  %4179 = vmatpush2.msra.mxu0 0.0
  %4180 = vmatprep.mubr.f32.mxu0 0.0
  %v4181 = vand.u32 %v3519, 4294901760
  %4182 = vmatmul.mubr.f32.gmra.mxu0 %v4181
  %v4183 = vpop.f32.mrf.mxu0
  %v4184 = vadd.f32 %v4041, %v4183
  %v4185 = vpop.f32.mrf.mxu0
  %4186 = vmatprep.mubr.f32.mxu0 0.0
  %v4187 = vand.u32 %v3520, 4294901760
  %4188 = vmatmul.mubr.f32.gmra.mxu0 %v4187
  %v4189 = vpop.f32.mrf.mxu0
  %v4190 = vadd.f32 %v4049, %v4189
  %v4191 = vpop.f32.mrf.mxu0
  %4192 = vmatprep.mubr.f32.mxu0 0.0
  %v4193 = vand.u32 %v3521, 4294901760
  %4194 = vmatmul.mubr.f32.gmra.mxu0 %v4193
  %v4195 = vpop.f32.mrf.mxu0
  %v4196 = vadd.f32 %v4057, %v4195
  %v4197 = vpop.f32.mrf.mxu0
  %4198 = vmatprep.mubr.f32.mxu0 0.0
  %v4199 = vand.u32 %v3522, 4294901760
  %4200 = vmatmul.mubr.f32.gmra.mxu0 %v4199
  %v4201 = vpop.f32.mrf.mxu0
  %v4202 = vadd.f32 %v4065, %v4201
  %v4203 = vpop.f32.mrf.mxu0
  %4204 = vdwg.mxu0
  %4205 = vmatprep.subr.mxu0 0.0
  %v4206 = vand.u32 %v3539, 4294901760
  %4207 = vmatpush1.msra.mxu0 %v4206
  %4208 = vmatprep.subr.mxu0 0.0
  %v4209 = vand.u32 %v3538, 4294901760
  %4210 = vmatpush1.msra.mxu0 %v4209
  %4211 = vmatprep.subr.mxu0 0.0
  %v4212 = vand.u32 %v3537, 4294901760
  %4213 = vmatpush1.msra.mxu0 %v4212
  %4214 = vmatprep.subr.mxu0 0.0
  %v4215 = vand.u32 %v3536, 4294901760
  %4216 = vmatpush1.msra.mxu0 %v4215
  %4217 = vmatprep.subr.mxu0 0.0
  %v4218 = vand.u32 %v3535, 4294901760
  %4219 = vmatpush1.msra.mxu0 %v4218
  %4220 = vmatprep.subr.mxu0 0.0
  %v4221 = vand.u32 %v3534, 4294901760
  %4222 = vmatpush1.msra.mxu0 %v4221
  %4223 = vmatprep.subr.mxu0 0.0
  %v4224 = vand.u32 %v3533, 4294901760
  %4225 = vmatpush1.msra.mxu0 %v4224
  %4226 = vmatprep.subr.mxu0 0.0
  %v4227 = vand.u32 %v3532, 4294901760
  %4228 = vmatpush1.msra.mxu0 %v4227
  %4229 = vmatprep.subr.mxu0 0.0
  %v4230 = vand.u32 %v3531, 4294901760
  %4231 = vmatpush1.msra.mxu0 %v4230
  %4232 = vmatprep.subr.mxu0 0.0
  %v4233 = vand.u32 %v3530, 4294901760
  %4234 = vmatpush1.msra.mxu0 %v4233
  %4235 = vmatprep.subr.mxu0 0.0
  %v4236 = vand.u32 %v3529, 4294901760
  %4237 = vmatpush1.msra.mxu0 %v4236
  %4238 = vmatprep.subr.mxu0 0.0
  %v4239 = vand.u32 %v3528, 4294901760
  %4240 = vmatpush1.msra.mxu0 %v4239
  %4241 = vmatprep.subr.mxu0 0.0
  %v4242 = vand.u32 %v3527, 4294901760
  %4243 = vmatpush1.msra.mxu0 %v4242
  %4244 = vmatprep.subr.mxu0 0.0
  %v4245 = vand.u32 %v3526, 4294901760
  %4246 = vmatpush1.msra.mxu0 %v4245
  %4247 = vmatprep.subr.mxu0 0.0
  %v4248 = vand.u32 %v3525, 4294901760
  %4249 = vmatpush1.msra.mxu0 %v4248
  %4250 = vmatprep.subr.mxu0 0.0
  %v4251 = vand.u32 %v3524, 4294901760
  %4252 = vmatpush1.msra.mxu0 %v4251
  %4253 = vmatprep.subr.mxu0 0.0
  %4254 = vmatpush2.msra.mxu0 0.0
  %4255 = vmatprep.subr.mxu0 0.0
  %4256 = vmatpush2.msra.mxu0 0.0
  %4257 = vmatprep.subr.mxu0 0.0
  %4258 = vmatpush2.msra.mxu0 0.0
  %4259 = vmatprep.subr.mxu0 0.0
  %4260 = vmatpush2.msra.mxu0 0.0
  %4261 = vmatprep.subr.mxu0 0.0
  %4262 = vmatpush2.msra.mxu0 0.0
  %4263 = vmatprep.subr.mxu0 0.0
  %4264 = vmatpush2.msra.mxu0 0.0
  %4265 = vmatprep.subr.mxu0 0.0
  %4266 = vmatpush2.msra.mxu0 0.0
  %4267 = vmatprep.subr.mxu0 0.0
  %4268 = vmatpush2.msra.mxu0 0.0
  %4269 = vmatprep.subr.mxu0 0.0
  %4270 = vmatpush2.msra.mxu0 0.0
  %4271 = vmatprep.subr.mxu0 0.0
  %4272 = vmatpush2.msra.mxu0 0.0
  %4273 = vmatprep.subr.mxu0 0.0
  %4274 = vmatpush2.msra.mxu0 0.0
  %4275 = vmatprep.subr.mxu0 0.0
  %4276 = vmatpush2.msra.mxu0 0.0
  %4277 = vmatprep.subr.mxu0 0.0
  %4278 = vmatpush2.msra.mxu0 0.0
  %4279 = vmatprep.subr.mxu0 0.0
  %4280 = vmatpush2.msra.mxu0 0.0
  %4281 = vmatprep.subr.mxu0 0.0
  %4282 = vmatpush2.msra.mxu0 0.0
  %4283 = vmatprep.subr.mxu0 0.0
  %4284 = vmatpush2.msra.mxu0 0.0
  %4285 = vmatprep.mubr.f32.mxu0 0.0
  %v4286 = vand.u32 %v3519, 4294901760
  %4287 = vmatmul.mubr.f32.gmra.mxu0 %v4286
  %v4288 = vpop.f32.mrf.mxu0
  %v4289 = vadd.f32 %v4184, %v4288
  %v4290 = vpop.f32.mrf.mxu0
  %4291 = vmatprep.mubr.f32.mxu0 0.0
  %v4292 = vand.u32 %v3520, 4294901760
  %4293 = vmatmul.mubr.f32.gmra.mxu0 %v4292
  %v4294 = vpop.f32.mrf.mxu0
  %v4295 = vadd.f32 %v4190, %v4294
  %v4296 = vpop.f32.mrf.mxu0
  %4297 = vmatprep.mubr.f32.mxu0 0.0
  %v4298 = vand.u32 %v3521, 4294901760
  %4299 = vmatmul.mubr.f32.gmra.mxu0 %v4298
  %v4300 = vpop.f32.mrf.mxu0
  %v4301 = vadd.f32 %v4196, %v4300
  %v4302 = vpop.f32.mrf.mxu0
  %4303 = vmatprep.mubr.f32.mxu0 0.0
  %v4304 = vand.u32 %v3522, 4294901760
  %4305 = vmatmul.mubr.f32.gmra.mxu0 %v4304
  %v4306 = vpop.f32.mrf.mxu0
  %v4307 = vadd.f32 %v4202, %v4306
  %v4308 = vpop.f32.mrf.mxu0
  %4309 = vdwg.mxu0
  %4310 = vmatprep.subr.mxu0 0.0
  %v4311 = vand.u32 %v3518, 4294901760
  %4312 = vmatpush1.msra.mxu0 %v4311
  %4313 = vmatprep.subr.mxu0 0.0
  %v4314 = vand.u32 %v3517, 4294901760
  %4315 = vmatpush1.msra.mxu0 %v4314
  %4316 = vmatprep.subr.mxu0 0.0
  %v4317 = vand.u32 %v3516, 4294901760
  %4318 = vmatpush1.msra.mxu0 %v4317
  %4319 = vmatprep.subr.mxu0 0.0
  %v4320 = vand.u32 %v3515, 4294901760
  %4321 = vmatpush1.msra.mxu0 %v4320
  %4322 = vmatprep.subr.mxu0 0.0
  %v4323 = vand.u32 %v3514, 4294901760
  %4324 = vmatpush1.msra.mxu0 %v4323
  %4325 = vmatprep.subr.mxu0 0.0
  %v4326 = vand.u32 %v3513, 4294901760
  %4327 = vmatpush1.msra.mxu0 %v4326
  %4328 = vmatprep.subr.mxu0 0.0
  %v4329 = vand.u32 %v3512, 4294901760
  %4330 = vmatpush1.msra.mxu0 %v4329
  %4331 = vmatprep.subr.mxu0 0.0
  %v4332 = vand.u32 %v3511, 4294901760
  %4333 = vmatpush1.msra.mxu0 %v4332
  %4334 = vmatprep.subr.mxu0 0.0
  %v4335 = vand.u32 %v3510, 4294901760
  %4336 = vmatpush1.msra.mxu0 %v4335
  %4337 = vmatprep.subr.mxu0 0.0
  %v4338 = vand.u32 %v3509, 4294901760
  %4339 = vmatpush1.msra.mxu0 %v4338
  %4340 = vmatprep.subr.mxu0 0.0
  %v4341 = vand.u32 %v3508, 4294901760
  %4342 = vmatpush1.msra.mxu0 %v4341
  %4343 = vmatprep.subr.mxu0 0.0
  %v4344 = vand.u32 %v3507, 4294901760
  %4345 = vmatpush1.msra.mxu0 %v4344
  %4346 = vmatprep.subr.mxu0 0.0
  %v4347 = vand.u32 %v3506, 4294901760
  %4348 = vmatpush1.msra.mxu0 %v4347
  %4349 = vmatprep.subr.mxu0 0.0
  %v4350 = vand.u32 %v3505, 4294901760
  %4351 = vmatpush1.msra.mxu0 %v4350
  %4352 = vmatprep.subr.mxu0 0.0
  %v4353 = vand.u32 %v3504, 4294901760
  %4354 = vmatpush1.msra.mxu0 %v4353
  %4355 = vmatprep.subr.mxu0 0.0
  %v4356 = vand.u32 %v3503, 4294901760
  %4357 = vmatpush1.msra.mxu0 %v4356
  %4358 = vmatprep.subr.mxu0 0.0
  %4359 = vmatpush2.msra.mxu0 0.0
  %4360 = vmatprep.subr.mxu0 0.0
  %4361 = vmatpush2.msra.mxu0 0.0
  %4362 = vmatprep.subr.mxu0 0.0
  %4363 = vmatpush2.msra.mxu0 0.0
  %4364 = vmatprep.subr.mxu0 0.0
  %4365 = vmatpush2.msra.mxu0 0.0
  %4366 = vmatprep.subr.mxu0 0.0
  %4367 = vmatpush2.msra.mxu0 0.0
  %4368 = vmatprep.subr.mxu0 0.0
  %4369 = vmatpush2.msra.mxu0 0.0
  %4370 = vmatprep.subr.mxu0 0.0
  %4371 = vmatpush2.msra.mxu0 0.0
  %4372 = vmatprep.subr.mxu0 0.0
  %4373 = vmatpush2.msra.mxu0 0.0
  %4374 = vmatprep.subr.mxu0 0.0
  %4375 = vmatpush2.msra.mxu0 0.0
  %4376 = vmatprep.subr.mxu0 0.0
  %4377 = vmatpush2.msra.mxu0 0.0
  %4378 = vmatprep.subr.mxu0 0.0
  %4379 = vmatpush2.msra.mxu0 0.0
  %4380 = vmatprep.subr.mxu0 0.0
  %4381 = vmatpush2.msra.mxu0 0.0
  %4382 = vmatprep.subr.mxu0 0.0
  %4383 = vmatpush2.msra.mxu0 0.0
  %4384 = vmatprep.subr.mxu0 0.0
  %4385 = vmatpush2.msra.mxu0 0.0
  %4386 = vmatprep.subr.mxu0 0.0
  %4387 = vmatpush2.msra.mxu0 0.0
  %4388 = vmatprep.subr.mxu0 0.0
  %4389 = vmatpush2.msra.mxu0 0.0
  %4390 = vmatprep.mubr.f32.mxu0 0.0
  %v4391 = vand.u32 %v3499, 4294901760
  %v4392 = vsub.f32 %v3499, %v4391
  %v4393 = vand.u32 %v4392, 4294901760
  %v4394 = vsub.f32 %v4392, %v4393
  %v4395 = vand.u32 %v4394, 4294901760
  %4396 = vmatmul.mubr.f32.gmra.mxu0 %v4395
  %v4397 = vpop.f32.mrf.mxu0
  %v4398 = vadd.f32 %v4289, %v4397
  %v4399 = vpop.f32.mrf.mxu0
  %4400 = vmatprep.mubr.f32.mxu0 0.0
  %v4401 = vand.u32 %v3500, 4294901760
  %v4402 = vsub.f32 %v3500, %v4401
  %v4403 = vand.u32 %v4402, 4294901760
  %v4404 = vsub.f32 %v4402, %v4403
  %v4405 = vand.u32 %v4404, 4294901760
  %4406 = vmatmul.mubr.f32.gmra.mxu0 %v4405
  %v4407 = vpop.f32.mrf.mxu0
  %v4408 = vadd.f32 %v4295, %v4407
  %v4409 = vpop.f32.mrf.mxu0
  %4410 = vmatprep.mubr.f32.mxu0 0.0
  %v4411 = vand.u32 %v3501, 4294901760
  %v4412 = vsub.f32 %v3501, %v4411
  %v4413 = vand.u32 %v4412, 4294901760
  %v4414 = vsub.f32 %v4412, %v4413
  %v4415 = vand.u32 %v4414, 4294901760
  %4416 = vmatmul.mubr.f32.gmra.mxu0 %v4415
  %v4417 = vpop.f32.mrf.mxu0
  %v4418 = vadd.f32 %v4301, %v4417
  %v4419 = vpop.f32.mrf.mxu0
  %4420 = vmatprep.mubr.f32.mxu0 0.0
  %v4421 = vand.u32 %v3502, 4294901760
  %v4422 = vsub.f32 %v3502, %v4421
  %v4423 = vand.u32 %v4422, 4294901760
  %v4424 = vsub.f32 %v4422, %v4423
  %v4425 = vand.u32 %v4424, 4294901760
  %4426 = vmatmul.mubr.f32.gmra.mxu0 %v4425
  %v4427 = vpop.f32.mrf.mxu0
  %v4428 = vadd.f32 %v4307, %v4427
  %v4429 = vpop.f32.mrf.mxu0
  %4430 = vdwg.mxu0
  %4431 = vmatprep.subr.mxu0 0.0
  %v4432 = vand.u32 %v3518, 4294901760
  %v4433 = vsub.f32 %v3518, %v4432
  %v4434 = vand.u32 %v4433, 4294901760
  %v4435 = vsub.f32 %v4433, %v4434
  %v4436 = vand.u32 %v4435, 4294901760
  %4437 = vmatpush1.msra.mxu0 %v4436
  %4438 = vmatprep.subr.mxu0 0.0
  %v4439 = vand.u32 %v3517, 4294901760
  %v4440 = vsub.f32 %v3517, %v4439
  %v4441 = vand.u32 %v4440, 4294901760
  %v4442 = vsub.f32 %v4440, %v4441
  %v4443 = vand.u32 %v4442, 4294901760
  %4444 = vmatpush1.msra.mxu0 %v4443
  %4445 = vmatprep.subr.mxu0 0.0
  %v4446 = vand.u32 %v3516, 4294901760
  %v4447 = vsub.f32 %v3516, %v4446
  %v4448 = vand.u32 %v4447, 4294901760
  %v4449 = vsub.f32 %v4447, %v4448
  %v4450 = vand.u32 %v4449, 4294901760
  %4451 = vmatpush1.msra.mxu0 %v4450
  %4452 = vmatprep.subr.mxu0 0.0
  %v4453 = vand.u32 %v3515, 4294901760
  %v4454 = vsub.f32 %v3515, %v4453
  %v4455 = vand.u32 %v4454, 4294901760
  %v4456 = vsub.f32 %v4454, %v4455
  %v4457 = vand.u32 %v4456, 4294901760
  %4458 = vmatpush1.msra.mxu0 %v4457
  %4459 = vmatprep.subr.mxu0 0.0
  %v4460 = vand.u32 %v3514, 4294901760
  %v4461 = vsub.f32 %v3514, %v4460
  %v4462 = vand.u32 %v4461, 4294901760
  %v4463 = vsub.f32 %v4461, %v4462
  %v4464 = vand.u32 %v4463, 4294901760
  %4465 = vmatpush1.msra.mxu0 %v4464
  %4466 = vmatprep.subr.mxu0 0.0
  %v4467 = vand.u32 %v3513, 4294901760
  %v4468 = vsub.f32 %v3513, %v4467
  %v4469 = vand.u32 %v4468, 4294901760
  %v4470 = vsub.f32 %v4468, %v4469
  %v4471 = vand.u32 %v4470, 4294901760
  %4472 = vmatpush1.msra.mxu0 %v4471
  %4473 = vmatprep.subr.mxu0 0.0
  %v4474 = vand.u32 %v3512, 4294901760
  %v4475 = vsub.f32 %v3512, %v4474
  %v4476 = vand.u32 %v4475, 4294901760
  %v4477 = vsub.f32 %v4475, %v4476
  %v4478 = vand.u32 %v4477, 4294901760
  %4479 = vmatpush1.msra.mxu0 %v4478
  %4480 = vmatprep.subr.mxu0 0.0
  %v4481 = vand.u32 %v3511, 4294901760
  %v4482 = vsub.f32 %v3511, %v4481
  %v4483 = vand.u32 %v4482, 4294901760
  %v4484 = vsub.f32 %v4482, %v4483
  %v4485 = vand.u32 %v4484, 4294901760
  %4486 = vmatpush1.msra.mxu0 %v4485
  %4487 = vmatprep.subr.mxu0 0.0
  %v4488 = vand.u32 %v3510, 4294901760
  %v4489 = vsub.f32 %v3510, %v4488
  %v4490 = vand.u32 %v4489, 4294901760
  %v4491 = vsub.f32 %v4489, %v4490
  %v4492 = vand.u32 %v4491, 4294901760
  %4493 = vmatpush1.msra.mxu0 %v4492
  %4494 = vmatprep.subr.mxu0 0.0
  %v4495 = vand.u32 %v3509, 4294901760
  %v4496 = vsub.f32 %v3509, %v4495
  %v4497 = vand.u32 %v4496, 4294901760
  %v4498 = vsub.f32 %v4496, %v4497
  %v4499 = vand.u32 %v4498, 4294901760
  %4500 = vmatpush1.msra.mxu0 %v4499
  %4501 = vmatprep.subr.mxu0 0.0
  %v4502 = vand.u32 %v3508, 4294901760
  %v4503 = vsub.f32 %v3508, %v4502
  %v4504 = vand.u32 %v4503, 4294901760
  %v4505 = vsub.f32 %v4503, %v4504
  %v4506 = vand.u32 %v4505, 4294901760
  %4507 = vmatpush1.msra.mxu0 %v4506
  %4508 = vmatprep.subr.mxu0 0.0
  %v4509 = vand.u32 %v3507, 4294901760
  %v4510 = vsub.f32 %v3507, %v4509
  %v4511 = vand.u32 %v4510, 4294901760
  %v4512 = vsub.f32 %v4510, %v4511
  %v4513 = vand.u32 %v4512, 4294901760
  %4514 = vmatpush1.msra.mxu0 %v4513
  %4515 = vmatprep.subr.mxu0 0.0
  %v4516 = vand.u32 %v3506, 4294901760
  %v4517 = vsub.f32 %v3506, %v4516
  %v4518 = vand.u32 %v4517, 4294901760
  %v4519 = vsub.f32 %v4517, %v4518
  %v4520 = vand.u32 %v4519, 4294901760
  %4521 = vmatpush1.msra.mxu0 %v4520
  %4522 = vmatprep.subr.mxu0 0.0
  %v4523 = vand.u32 %v3505, 4294901760
  %v4524 = vsub.f32 %v3505, %v4523
  %v4525 = vand.u32 %v4524, 4294901760
  %v4526 = vsub.f32 %v4524, %v4525
  %v4527 = vand.u32 %v4526, 4294901760
  %4528 = vmatpush1.msra.mxu0 %v4527
  %4529 = vmatprep.subr.mxu0 0.0
  %v4530 = vand.u32 %v3504, 4294901760
  %v4531 = vsub.f32 %v3504, %v4530
  %v4532 = vand.u32 %v4531, 4294901760
  %v4533 = vsub.f32 %v4531, %v4532
  %v4534 = vand.u32 %v4533, 4294901760
  %4535 = vmatpush1.msra.mxu0 %v4534
  %4536 = vmatprep.subr.mxu0 0.0
  %v4537 = vand.u32 %v3503, 4294901760
  %v4538 = vsub.f32 %v3503, %v4537
  %v4539 = vand.u32 %v4538, 4294901760
  %v4540 = vsub.f32 %v4538, %v4539
  %v4541 = vand.u32 %v4540, 4294901760
  %4542 = vmatpush1.msra.mxu0 %v4541
  %4543 = vmatprep.subr.mxu0 0.0
  %4544 = vmatpush2.msra.mxu0 0.0
  %4545 = vmatprep.subr.mxu0 0.0
  %4546 = vmatpush2.msra.mxu0 0.0
  %4547 = vmatprep.subr.mxu0 0.0
  %4548 = vmatpush2.msra.mxu0 0.0
  %4549 = vmatprep.subr.mxu0 0.0
  %4550 = vmatpush2.msra.mxu0 0.0
  %4551 = vmatprep.subr.mxu0 0.0
  %4552 = vmatpush2.msra.mxu0 0.0
  %4553 = vmatprep.subr.mxu0 0.0
  %4554 = vmatpush2.msra.mxu0 0.0
  %4555 = vmatprep.subr.mxu0 0.0
  %4556 = vmatpush2.msra.mxu0 0.0
  %4557 = vmatprep.subr.mxu0 0.0
  %4558 = vmatpush2.msra.mxu0 0.0
  %4559 = vmatprep.subr.mxu0 0.0
  %4560 = vmatpush2.msra.mxu0 0.0
  %4561 = vmatprep.subr.mxu0 0.0
  %4562 = vmatpush2.msra.mxu0 0.0
  %4563 = vmatprep.subr.mxu0 0.0
  %4564 = vmatpush2.msra.mxu0 0.0
  %4565 = vmatprep.subr.mxu0 0.0
  %4566 = vmatpush2.msra.mxu0 0.0
  %4567 = vmatprep.subr.mxu0 0.0
  %4568 = vmatpush2.msra.mxu0 0.0
  %4569 = vmatprep.subr.mxu0 0.0
  %4570 = vmatpush2.msra.mxu0 0.0
  %4571 = vmatprep.subr.mxu0 0.0
  %4572 = vmatpush2.msra.mxu0 0.0
  %4573 = vmatprep.subr.mxu0 0.0
  %4574 = vmatpush2.msra.mxu0 0.0
  %4575 = vmatprep.mubr.f32.mxu0 0.0
  %v4576 = vand.u32 %v3499, 4294901760
  %4577 = vmatmul.mubr.f32.gmra.mxu0 %v4576
  %v4578 = vpop.f32.mrf.mxu0
  %v4579 = vadd.f32 %v4398, %v4578
  %v4580 = vpop.f32.mrf.mxu0
  %4581 = vmatprep.mubr.f32.mxu0 0.0
  %v4582 = vand.u32 %v3500, 4294901760
  %4583 = vmatmul.mubr.f32.gmra.mxu0 %v4582
  %v4584 = vpop.f32.mrf.mxu0
  %v4585 = vadd.f32 %v4408, %v4584
  %v4586 = vpop.f32.mrf.mxu0
  %4587 = vmatprep.mubr.f32.mxu0 0.0
  %v4588 = vand.u32 %v3501, 4294901760
  %4589 = vmatmul.mubr.f32.gmra.mxu0 %v4588
  %v4590 = vpop.f32.mrf.mxu0
  %v4591 = vadd.f32 %v4418, %v4590
  %v4592 = vpop.f32.mrf.mxu0
  %4593 = vmatprep.mubr.f32.mxu0 0.0
  %v4594 = vand.u32 %v3502, 4294901760
  %4595 = vmatmul.mubr.f32.gmra.mxu0 %v4594
  %v4596 = vpop.f32.mrf.mxu0
  %v4597 = vadd.f32 %v4428, %v4596
  %v4598 = vpop.f32.mrf.mxu0
  %4599 = vdwg.mxu0
  %4600 = vmatprep.subr.mxu0 0.0
  %v4601 = vand.u32 %v3518, 4294901760
  %v4602 = vsub.f32 %v3518, %v4601
  %4603 = vmatpush1.msra.mxu0 %v4602
  %4604 = vmatprep.subr.mxu0 0.0
  %v4605 = vand.u32 %v3517, 4294901760
  %v4606 = vsub.f32 %v3517, %v4605
  %4607 = vmatpush1.msra.mxu0 %v4606
  %4608 = vmatprep.subr.mxu0 0.0
  %v4609 = vand.u32 %v3516, 4294901760
  %v4610 = vsub.f32 %v3516, %v4609
  %4611 = vmatpush1.msra.mxu0 %v4610
  %4612 = vmatprep.subr.mxu0 0.0
  %v4613 = vand.u32 %v3515, 4294901760
  %v4614 = vsub.f32 %v3515, %v4613
  %4615 = vmatpush1.msra.mxu0 %v4614
  %4616 = vmatprep.subr.mxu0 0.0
  %v4617 = vand.u32 %v3514, 4294901760
  %v4618 = vsub.f32 %v3514, %v4617
  %4619 = vmatpush1.msra.mxu0 %v4618
  %4620 = vmatprep.subr.mxu0 0.0
  %v4621 = vand.u32 %v3513, 4294901760
  %v4622 = vsub.f32 %v3513, %v4621
  %4623 = vmatpush1.msra.mxu0 %v4622
  %4624 = vmatprep.subr.mxu0 0.0
  %v4625 = vand.u32 %v3512, 4294901760
  %v4626 = vsub.f32 %v3512, %v4625
  %4627 = vmatpush1.msra.mxu0 %v4626
  %4628 = vmatprep.subr.mxu0 0.0
  %v4629 = vand.u32 %v3511, 4294901760
  %v4630 = vsub.f32 %v3511, %v4629
  %4631 = vmatpush1.msra.mxu0 %v4630
  %4632 = vmatprep.subr.mxu0 0.0
  %v4633 = vand.u32 %v3510, 4294901760
  %v4634 = vsub.f32 %v3510, %v4633
  %4635 = vmatpush1.msra.mxu0 %v4634
  %4636 = vmatprep.subr.mxu0 0.0
  %v4637 = vand.u32 %v3509, 4294901760
  %v4638 = vsub.f32 %v3509, %v4637
  %4639 = vmatpush1.msra.mxu0 %v4638
  %4640 = vmatprep.subr.mxu0 0.0
  %v4641 = vand.u32 %v3508, 4294901760
  %v4642 = vsub.f32 %v3508, %v4641
  %4643 = vmatpush1.msra.mxu0 %v4642
  %4644 = vmatprep.subr.mxu0 0.0
  %v4645 = vand.u32 %v3507, 4294901760
  %v4646 = vsub.f32 %v3507, %v4645
  %4647 = vmatpush1.msra.mxu0 %v4646
  %4648 = vmatprep.subr.mxu0 0.0
  %v4649 = vand.u32 %v3506, 4294901760
  %v4650 = vsub.f32 %v3506, %v4649
  %4651 = vmatpush1.msra.mxu0 %v4650
  %4652 = vmatprep.subr.mxu0 0.0
  %v4653 = vand.u32 %v3505, 4294901760
  %v4654 = vsub.f32 %v3505, %v4653
  %4655 = vmatpush1.msra.mxu0 %v4654
  %4656 = vmatprep.subr.mxu0 0.0
  %v4657 = vand.u32 %v3504, 4294901760
  %v4658 = vsub.f32 %v3504, %v4657
  %4659 = vmatpush1.msra.mxu0 %v4658
  %4660 = vmatprep.subr.mxu0 0.0
  %v4661 = vand.u32 %v3503, 4294901760
  %v4662 = vsub.f32 %v3503, %v4661
  %4663 = vmatpush1.msra.mxu0 %v4662
  %4664 = vmatprep.subr.mxu0 0.0
  %4665 = vmatpush2.msra.mxu0 0.0
  %4666 = vmatprep.subr.mxu0 0.0
  %4667 = vmatpush2.msra.mxu0 0.0
  %4668 = vmatprep.subr.mxu0 0.0
  %4669 = vmatpush2.msra.mxu0 0.0
  %4670 = vmatprep.subr.mxu0 0.0
  %4671 = vmatpush2.msra.mxu0 0.0
  %4672 = vmatprep.subr.mxu0 0.0
  %4673 = vmatpush2.msra.mxu0 0.0
  %4674 = vmatprep.subr.mxu0 0.0
  %4675 = vmatpush2.msra.mxu0 0.0
  %4676 = vmatprep.subr.mxu0 0.0
  %4677 = vmatpush2.msra.mxu0 0.0
  %4678 = vmatprep.subr.mxu0 0.0
  %4679 = vmatpush2.msra.mxu0 0.0
  %4680 = vmatprep.subr.mxu0 0.0
  %4681 = vmatpush2.msra.mxu0 0.0
  %4682 = vmatprep.subr.mxu0 0.0
  %4683 = vmatpush2.msra.mxu0 0.0
  %4684 = vmatprep.subr.mxu0 0.0
  %4685 = vmatpush2.msra.mxu0 0.0
  %4686 = vmatprep.subr.mxu0 0.0
  %4687 = vmatpush2.msra.mxu0 0.0
  %4688 = vmatprep.subr.mxu0 0.0
  %4689 = vmatpush2.msra.mxu0 0.0
  %4690 = vmatprep.subr.mxu0 0.0
  %4691 = vmatpush2.msra.mxu0 0.0
  %4692 = vmatprep.subr.mxu0 0.0
  %4693 = vmatpush2.msra.mxu0 0.0
  %4694 = vmatprep.subr.mxu0 0.0
  %4695 = vmatpush2.msra.mxu0 0.0
  %4696 = vmatprep.mubr.f32.mxu0 0.0
  %v4697 = vand.u32 %v3499, 4294901760
  %v4698 = vsub.f32 %v3499, %v4697
  %4699 = vmatmul.mubr.f32.gmra.mxu0 %v4698
  %v4700 = vpop.f32.mrf.mxu0
  %v4701 = vadd.f32 %v4579, %v4700
  %v4702 = vpop.f32.mrf.mxu0
  %4703 = vmatprep.mubr.f32.mxu0 0.0
  %v4704 = vand.u32 %v3500, 4294901760
  %v4705 = vsub.f32 %v3500, %v4704
  %4706 = vmatmul.mubr.f32.gmra.mxu0 %v4705
  %v4707 = vpop.f32.mrf.mxu0
  %v4708 = vadd.f32 %v4585, %v4707
  %v4709 = vpop.f32.mrf.mxu0
  %4710 = vmatprep.mubr.f32.mxu0 0.0
  %v4711 = vand.u32 %v3501, 4294901760
  %v4712 = vsub.f32 %v3501, %v4711
  %4713 = vmatmul.mubr.f32.gmra.mxu0 %v4712
  %v4714 = vpop.f32.mrf.mxu0
  %v4715 = vadd.f32 %v4591, %v4714
  %v4716 = vpop.f32.mrf.mxu0
  %4717 = vmatprep.mubr.f32.mxu0 0.0
  %v4718 = vand.u32 %v3502, 4294901760
  %v4719 = vsub.f32 %v3502, %v4718
  %4720 = vmatmul.mubr.f32.gmra.mxu0 %v4719
  %v4721 = vpop.f32.mrf.mxu0
  %v4722 = vadd.f32 %v4597, %v4721
  %v4723 = vpop.f32.mrf.mxu0
  %4724 = vdwg.mxu0
  %4725 = vmatprep.subr.mxu0 0.0
  %v4726 = vand.u32 %v3518, 4294901760
  %4727 = vmatpush1.msra.mxu0 %v4726
  %4728 = vmatprep.subr.mxu0 0.0
  %v4729 = vand.u32 %v3517, 4294901760
  %4730 = vmatpush1.msra.mxu0 %v4729
  %4731 = vmatprep.subr.mxu0 0.0
  %v4732 = vand.u32 %v3516, 4294901760
  %4733 = vmatpush1.msra.mxu0 %v4732
  %4734 = vmatprep.subr.mxu0 0.0
  %v4735 = vand.u32 %v3515, 4294901760
  %4736 = vmatpush1.msra.mxu0 %v4735
  %4737 = vmatprep.subr.mxu0 0.0
  %v4738 = vand.u32 %v3514, 4294901760
  %4739 = vmatpush1.msra.mxu0 %v4738
  %4740 = vmatprep.subr.mxu0 0.0
  %v4741 = vand.u32 %v3513, 4294901760
  %4742 = vmatpush1.msra.mxu0 %v4741
  %4743 = vmatprep.subr.mxu0 0.0
  %v4744 = vand.u32 %v3512, 4294901760
  %4745 = vmatpush1.msra.mxu0 %v4744
  %4746 = vmatprep.subr.mxu0 0.0
  %v4747 = vand.u32 %v3511, 4294901760
  %4748 = vmatpush1.msra.mxu0 %v4747
  %4749 = vmatprep.subr.mxu0 0.0
  %v4750 = vand.u32 %v3510, 4294901760
  %4751 = vmatpush1.msra.mxu0 %v4750
  %4752 = vmatprep.subr.mxu0 0.0
  %v4753 = vand.u32 %v3509, 4294901760
  %4754 = vmatpush1.msra.mxu0 %v4753
  %4755 = vmatprep.subr.mxu0 0.0
  %v4756 = vand.u32 %v3508, 4294901760
  %4757 = vmatpush1.msra.mxu0 %v4756
  %4758 = vmatprep.subr.mxu0 0.0
  %v4759 = vand.u32 %v3507, 4294901760
  %4760 = vmatpush1.msra.mxu0 %v4759
  %4761 = vmatprep.subr.mxu0 0.0
  %v4762 = vand.u32 %v3506, 4294901760
  %4763 = vmatpush1.msra.mxu0 %v4762
  %4764 = vmatprep.subr.mxu0 0.0
  %v4765 = vand.u32 %v3505, 4294901760
  %4766 = vmatpush1.msra.mxu0 %v4765
  %4767 = vmatprep.subr.mxu0 0.0
  %v4768 = vand.u32 %v3504, 4294901760
  %4769 = vmatpush1.msra.mxu0 %v4768
  %4770 = vmatprep.subr.mxu0 0.0
  %v4771 = vand.u32 %v3503, 4294901760
  %4772 = vmatpush1.msra.mxu0 %v4771
  %4773 = vmatprep.subr.mxu0 0.0
  %4774 = vmatpush2.msra.mxu0 0.0
  %4775 = vmatprep.subr.mxu0 0.0
  %4776 = vmatpush2.msra.mxu0 0.0
  %4777 = vmatprep.subr.mxu0 0.0
  %4778 = vmatpush2.msra.mxu0 0.0
  %4779 = vmatprep.subr.mxu0 0.0
  %4780 = vmatpush2.msra.mxu0 0.0
  %4781 = vmatprep.subr.mxu0 0.0
  %4782 = vmatpush2.msra.mxu0 0.0
  %4783 = vmatprep.subr.mxu0 0.0
  %4784 = vmatpush2.msra.mxu0 0.0
  %4785 = vmatprep.subr.mxu0 0.0
  %4786 = vmatpush2.msra.mxu0 0.0
  %4787 = vmatprep.subr.mxu0 0.0
  %4788 = vmatpush2.msra.mxu0 0.0
  %4789 = vmatprep.subr.mxu0 0.0
  %4790 = vmatpush2.msra.mxu0 0.0
  %4791 = vmatprep.subr.mxu0 0.0
  %4792 = vmatpush2.msra.mxu0 0.0
  %4793 = vmatprep.subr.mxu0 0.0
  %4794 = vmatpush2.msra.mxu0 0.0
  %4795 = vmatprep.subr.mxu0 0.0
  %4796 = vmatpush2.msra.mxu0 0.0
  %4797 = vmatprep.subr.mxu0 0.0
  %4798 = vmatpush2.msra.mxu0 0.0
  %4799 = vmatprep.subr.mxu0 0.0
  %4800 = vmatpush2.msra.mxu0 0.0
  %4801 = vmatprep.subr.mxu0 0.0
  %4802 = vmatpush2.msra.mxu0 0.0
  %4803 = vmatprep.subr.mxu0 0.0
  %4804 = vmatpush2.msra.mxu0 0.0
  %4805 = vmatprep.mubr.f32.mxu0 0.0
  %v4806 = vand.u32 %v3499, 4294901760
  %v4807 = vsub.f32 %v3499, %v4806
  %v4808 = vand.u32 %v4807, 4294901760
  %4809 = vmatmul.mubr.f32.gmra.mxu0 %v4808
  %v4810 = vpop.f32.mrf.mxu0
  %v4811 = vadd.f32 %v4701, %v4810
  %v4812 = vpop.f32.mrf.mxu0
  %4813 = vmatprep.mubr.f32.mxu0 0.0
  %v4814 = vand.u32 %v3500, 4294901760
  %v4815 = vsub.f32 %v3500, %v4814
  %v4816 = vand.u32 %v4815, 4294901760
  %4817 = vmatmul.mubr.f32.gmra.mxu0 %v4816
  %v4818 = vpop.f32.mrf.mxu0
  %v4819 = vadd.f32 %v4708, %v4818
  %v4820 = vpop.f32.mrf.mxu0
  %4821 = vmatprep.mubr.f32.mxu0 0.0
  %v4822 = vand.u32 %v3501, 4294901760
  %v4823 = vsub.f32 %v3501, %v4822
  %v4824 = vand.u32 %v4823, 4294901760
  %4825 = vmatmul.mubr.f32.gmra.mxu0 %v4824
  %v4826 = vpop.f32.mrf.mxu0
  %v4827 = vadd.f32 %v4715, %v4826
  %v4828 = vpop.f32.mrf.mxu0
  %4829 = vmatprep.mubr.f32.mxu0 0.0
  %v4830 = vand.u32 %v3502, 4294901760
  %v4831 = vsub.f32 %v3502, %v4830
  %v4832 = vand.u32 %v4831, 4294901760
  %4833 = vmatmul.mubr.f32.gmra.mxu0 %v4832
  %v4834 = vpop.f32.mrf.mxu0
  %v4835 = vadd.f32 %v4722, %v4834
  %v4836 = vpop.f32.mrf.mxu0
  %4837 = vdwg.mxu0
  %4838 = vmatprep.subr.mxu0 0.0
  %v4839 = vand.u32 %v3518, 4294901760
  %v4840 = vsub.f32 %v3518, %v4839
  %v4841 = vand.u32 %v4840, 4294901760
  %4842 = vmatpush1.msra.mxu0 %v4841
  %4843 = vmatprep.subr.mxu0 0.0
  %v4844 = vand.u32 %v3517, 4294901760
  %v4845 = vsub.f32 %v3517, %v4844
  %v4846 = vand.u32 %v4845, 4294901760
  %4847 = vmatpush1.msra.mxu0 %v4846
  %4848 = vmatprep.subr.mxu0 0.0
  %v4849 = vand.u32 %v3516, 4294901760
  %v4850 = vsub.f32 %v3516, %v4849
  %v4851 = vand.u32 %v4850, 4294901760
  %4852 = vmatpush1.msra.mxu0 %v4851
  %4853 = vmatprep.subr.mxu0 0.0
  %v4854 = vand.u32 %v3515, 4294901760
  %v4855 = vsub.f32 %v3515, %v4854
  %v4856 = vand.u32 %v4855, 4294901760
  %4857 = vmatpush1.msra.mxu0 %v4856
  %4858 = vmatprep.subr.mxu0 0.0
  %v4859 = vand.u32 %v3514, 4294901760
  %v4860 = vsub.f32 %v3514, %v4859
  %v4861 = vand.u32 %v4860, 4294901760
  %4862 = vmatpush1.msra.mxu0 %v4861
  %4863 = vmatprep.subr.mxu0 0.0
  %v4864 = vand.u32 %v3513, 4294901760
  %v4865 = vsub.f32 %v3513, %v4864
  %v4866 = vand.u32 %v4865, 4294901760
  %4867 = vmatpush1.msra.mxu0 %v4866
  %4868 = vmatprep.subr.mxu0 0.0
  %v4869 = vand.u32 %v3512, 4294901760
  %v4870 = vsub.f32 %v3512, %v4869
  %v4871 = vand.u32 %v4870, 4294901760
  %4872 = vmatpush1.msra.mxu0 %v4871
  %4873 = vmatprep.subr.mxu0 0.0
  %v4874 = vand.u32 %v3511, 4294901760
  %v4875 = vsub.f32 %v3511, %v4874
  %v4876 = vand.u32 %v4875, 4294901760
  %4877 = vmatpush1.msra.mxu0 %v4876
  %4878 = vmatprep.subr.mxu0 0.0
  %v4879 = vand.u32 %v3510, 4294901760
  %v4880 = vsub.f32 %v3510, %v4879
  %v4881 = vand.u32 %v4880, 4294901760
  %4882 = vmatpush1.msra.mxu0 %v4881
  %4883 = vmatprep.subr.mxu0 0.0
  %v4884 = vand.u32 %v3509, 4294901760
  %v4885 = vsub.f32 %v3509, %v4884
  %v4886 = vand.u32 %v4885, 4294901760
  %4887 = vmatpush1.msra.mxu0 %v4886
  %4888 = vmatprep.subr.mxu0 0.0
  %v4889 = vand.u32 %v3508, 4294901760
  %v4890 = vsub.f32 %v3508, %v4889
  %v4891 = vand.u32 %v4890, 4294901760
  %4892 = vmatpush1.msra.mxu0 %v4891
  %4893 = vmatprep.subr.mxu0 0.0
  %v4894 = vand.u32 %v3507, 4294901760
  %v4895 = vsub.f32 %v3507, %v4894
  %v4896 = vand.u32 %v4895, 4294901760
  %4897 = vmatpush1.msra.mxu0 %v4896
  %4898 = vmatprep.subr.mxu0 0.0
  %v4899 = vand.u32 %v3506, 4294901760
  %v4900 = vsub.f32 %v3506, %v4899
  %v4901 = vand.u32 %v4900, 4294901760
  %4902 = vmatpush1.msra.mxu0 %v4901
  %4903 = vmatprep.subr.mxu0 0.0
  %v4904 = vand.u32 %v3505, 4294901760
  %v4905 = vsub.f32 %v3505, %v4904
  %v4906 = vand.u32 %v4905, 4294901760
  %4907 = vmatpush1.msra.mxu0 %v4906
  %4908 = vmatprep.subr.mxu0 0.0
  %v4909 = vand.u32 %v3504, 4294901760
  %v4910 = vsub.f32 %v3504, %v4909
  %v4911 = vand.u32 %v4910, 4294901760
  %4912 = vmatpush1.msra.mxu0 %v4911
  %4913 = vmatprep.subr.mxu0 0.0
  %v4914 = vand.u32 %v3503, 4294901760
  %v4915 = vsub.f32 %v3503, %v4914
  %v4916 = vand.u32 %v4915, 4294901760
  %4917 = vmatpush1.msra.mxu0 %v4916
  %4918 = vmatprep.subr.mxu0 0.0
  %4919 = vmatpush2.msra.mxu0 0.0
  %4920 = vmatprep.subr.mxu0 0.0
  %4921 = vmatpush2.msra.mxu0 0.0
  %4922 = vmatprep.subr.mxu0 0.0
  %4923 = vmatpush2.msra.mxu0 0.0
  %4924 = vmatprep.subr.mxu0 0.0
  %4925 = vmatpush2.msra.mxu0 0.0
  %4926 = vmatprep.subr.mxu0 0.0
  %4927 = vmatpush2.msra.mxu0 0.0
  %4928 = vmatprep.subr.mxu0 0.0
  %4929 = vmatpush2.msra.mxu0 0.0
  %4930 = vmatprep.subr.mxu0 0.0
  %4931 = vmatpush2.msra.mxu0 0.0
  %4932 = vmatprep.subr.mxu0 0.0
  %4933 = vmatpush2.msra.mxu0 0.0
  %4934 = vmatprep.subr.mxu0 0.0
  %4935 = vmatpush2.msra.mxu0 0.0
  %4936 = vmatprep.subr.mxu0 0.0
  %4937 = vmatpush2.msra.mxu0 0.0
  %4938 = vmatprep.subr.mxu0 0.0
  %4939 = vmatpush2.msra.mxu0 0.0
  %4940 = vmatprep.subr.mxu0 0.0
  %4941 = vmatpush2.msra.mxu0 0.0
  %4942 = vmatprep.subr.mxu0 0.0
  %4943 = vmatpush2.msra.mxu0 0.0
  %4944 = vmatprep.subr.mxu0 0.0
  %4945 = vmatpush2.msra.mxu0 0.0
  %4946 = vmatprep.subr.mxu0 0.0
  %4947 = vmatpush2.msra.mxu0 0.0
  %4948 = vmatprep.subr.mxu0 0.0
  %4949 = vmatpush2.msra.mxu0 0.0
  %4950 = vmatprep.mubr.f32.mxu0 0.0
  %v4951 = vand.u32 %v3499, 4294901760
  %4952 = vmatmul.mubr.f32.gmra.mxu0 %v4951
  %v4953 = vpop.f32.mrf.mxu0
  %v4954 = vadd.f32 %v4811, %v4953
  %v4955 = vpop.f32.mrf.mxu0
  %4956 = vmatprep.mubr.f32.mxu0 0.0
  %v4957 = vand.u32 %v3500, 4294901760
  %4958 = vmatmul.mubr.f32.gmra.mxu0 %v4957
  %v4959 = vpop.f32.mrf.mxu0
  %v4960 = vadd.f32 %v4819, %v4959
  %v4961 = vpop.f32.mrf.mxu0
  %4962 = vmatprep.mubr.f32.mxu0 0.0
  %v4963 = vand.u32 %v3501, 4294901760
  %4964 = vmatmul.mubr.f32.gmra.mxu0 %v4963
  %v4965 = vpop.f32.mrf.mxu0
  %v4966 = vadd.f32 %v4827, %v4965
  %v4967 = vpop.f32.mrf.mxu0
  %4968 = vmatprep.mubr.f32.mxu0 0.0
  %v4969 = vand.u32 %v3502, 4294901760
  %4970 = vmatmul.mubr.f32.gmra.mxu0 %v4969
  %v4971 = vpop.f32.mrf.mxu0
  %v4972 = vadd.f32 %v4835, %v4971
  %v4973 = vpop.f32.mrf.mxu0
  %4974 = vdwg.mxu0
  %4975 = vmatprep.subr.mxu0 0.0
  %v4976 = vand.u32 %v3518, 4294901760
  %4977 = vmatpush1.msra.mxu0 %v4976
  %4978 = vmatprep.subr.mxu0 0.0
  %v4979 = vand.u32 %v3517, 4294901760
  %4980 = vmatpush1.msra.mxu0 %v4979
  %4981 = vmatprep.subr.mxu0 0.0
  %v4982 = vand.u32 %v3516, 4294901760
  %4983 = vmatpush1.msra.mxu0 %v4982
  %4984 = vmatprep.subr.mxu0 0.0
  %v4985 = vand.u32 %v3515, 4294901760
  %4986 = vmatpush1.msra.mxu0 %v4985
  %4987 = vmatprep.subr.mxu0 0.0
  %v4988 = vand.u32 %v3514, 4294901760
  %4989 = vmatpush1.msra.mxu0 %v4988
  %4990 = vmatprep.subr.mxu0 0.0
  %v4991 = vand.u32 %v3513, 4294901760
  %4992 = vmatpush1.msra.mxu0 %v4991
  %4993 = vmatprep.subr.mxu0 0.0
  %v4994 = vand.u32 %v3512, 4294901760
  %4995 = vmatpush1.msra.mxu0 %v4994
  %4996 = vmatprep.subr.mxu0 0.0
  %v4997 = vand.u32 %v3511, 4294901760
  %4998 = vmatpush1.msra.mxu0 %v4997
  %4999 = vmatprep.subr.mxu0 0.0
  %v5000 = vand.u32 %v3510, 4294901760
  %5001 = vmatpush1.msra.mxu0 %v5000
  %5002 = vmatprep.subr.mxu0 0.0
  %v5003 = vand.u32 %v3509, 4294901760
  %5004 = vmatpush1.msra.mxu0 %v5003
  %5005 = vmatprep.subr.mxu0 0.0
  %v5006 = vand.u32 %v3508, 4294901760
  %5007 = vmatpush1.msra.mxu0 %v5006
  %5008 = vmatprep.subr.mxu0 0.0
  %v5009 = vand.u32 %v3507, 4294901760
  %5010 = vmatpush1.msra.mxu0 %v5009
  %5011 = vmatprep.subr.mxu0 0.0
  %v5012 = vand.u32 %v3506, 4294901760
  %5013 = vmatpush1.msra.mxu0 %v5012
  %5014 = vmatprep.subr.mxu0 0.0
  %v5015 = vand.u32 %v3505, 4294901760
  %5016 = vmatpush1.msra.mxu0 %v5015
  %5017 = vmatprep.subr.mxu0 0.0
  %v5018 = vand.u32 %v3504, 4294901760
  %5019 = vmatpush1.msra.mxu0 %v5018
  %5020 = vmatprep.subr.mxu0 0.0
  %v5021 = vand.u32 %v3503, 4294901760
  %5022 = vmatpush1.msra.mxu0 %v5021
  %5023 = vmatprep.subr.mxu0 0.0
  %5024 = vmatpush2.msra.mxu0 0.0
  %5025 = vmatprep.subr.mxu0 0.0
  %5026 = vmatpush2.msra.mxu0 0.0
  %5027 = vmatprep.subr.mxu0 0.0
  %5028 = vmatpush2.msra.mxu0 0.0
  %5029 = vmatprep.subr.mxu0 0.0
  %5030 = vmatpush2.msra.mxu0 0.0
  %5031 = vmatprep.subr.mxu0 0.0
  %5032 = vmatpush2.msra.mxu0 0.0
  %5033 = vmatprep.subr.mxu0 0.0
  %5034 = vmatpush2.msra.mxu0 0.0
  %5035 = vmatprep.subr.mxu0 0.0
  %5036 = vmatpush2.msra.mxu0 0.0
  %5037 = vmatprep.subr.mxu0 0.0
  %5038 = vmatpush2.msra.mxu0 0.0
  %5039 = vmatprep.subr.mxu0 0.0
  %5040 = vmatpush2.msra.mxu0 0.0
  %5041 = vmatprep.subr.mxu0 0.0
  %5042 = vmatpush2.msra.mxu0 0.0
  %5043 = vmatprep.subr.mxu0 0.0
  %5044 = vmatpush2.msra.mxu0 0.0
  %5045 = vmatprep.subr.mxu0 0.0
  %5046 = vmatpush2.msra.mxu0 0.0
  %5047 = vmatprep.subr.mxu0 0.0
  %5048 = vmatpush2.msra.mxu0 0.0
  %5049 = vmatprep.subr.mxu0 0.0
  %5050 = vmatpush2.msra.mxu0 0.0
  %5051 = vmatprep.subr.mxu0 0.0
  %5052 = vmatpush2.msra.mxu0 0.0
  %5053 = vmatprep.subr.mxu0 0.0
  %5054 = vmatpush2.msra.mxu0 0.0
  %5055 = vmatprep.mubr.f32.mxu0 0.0
  %v5056 = vand.u32 %v3499, 4294901760
  %5057 = vmatmul.mubr.f32.gmra.mxu0 %v5056
  %v5058 = vpop.f32.mrf.mxu0
  %v5059 = vadd.f32 %v4954, %v5058
  %v5060 = vpop.f32.mrf.mxu0
  %5061 = vmatprep.mubr.f32.mxu0 0.0
  %v5062 = vand.u32 %v3500, 4294901760
  %5063 = vmatmul.mubr.f32.gmra.mxu0 %v5062
  %v5064 = vpop.f32.mrf.mxu0
  %v5065 = vadd.f32 %v4960, %v5064
  %v5066 = vpop.f32.mrf.mxu0
  %5067 = vmatprep.mubr.f32.mxu0 0.0
  %v5068 = vand.u32 %v3501, 4294901760
  %5069 = vmatmul.mubr.f32.gmra.mxu0 %v5068
  %v5070 = vpop.f32.mrf.mxu0
  %v5071 = vadd.f32 %v4966, %v5070
  %v5072 = vpop.f32.mrf.mxu0
  %5073 = vmatprep.mubr.f32.mxu0 0.0
  %v5074 = vand.u32 %v3502, 4294901760
  %5075 = vmatmul.mubr.f32.gmra.mxu0 %v5074
  %v5076 = vpop.f32.mrf.mxu0
  %v5077 = vadd.f32 %v4972, %v5076
  %v5078 = vpop.f32.mrf.mxu0
  %5079 = vdwg.mxu0
  %v5080 = vld [vmem:[#allocation3 + $0x9] sm:$0xff]
  %v5081 = vld [vmem:[#allocation3 + $0x11] sm:$0xff]
  %v5082 = vld [vmem:[#allocation3 + $0x29] sm:$0xff]
  %v5083 = vld [vmem:[#allocation3 + $0x31] sm:$0xff]
  %s5084 = scalar_lea.vmem %s5, 256
  %v5085 = vld [vmem:[%s5084] sm:$0xff]
  %v5086 = vld [vmem:[%s5084 + $0x8] sm:$0xff]
  %v5087 = vld [vmem:[%s5084 + $0x10] sm:$0xff]
  %v5088 = vld [vmem:[%s5084 + $0x18] sm:$0xff]
  %v5089 = vld [vmem:[%s5084 + $0x20] sm:$0xff]
  %v5090 = vld [vmem:[%s5084 + $0x28] sm:$0xff]
  %v5091 = vld [vmem:[%s5084 + $0x30] sm:$0xff]
  %v5092 = vld [vmem:[%s5084 + $0x38] sm:$0xff]
  %v5093 = vld [vmem:[%s5084 + $0x40] sm:$0xff]
  %v5094 = vld [vmem:[%s5084 + $0x48] sm:$0xff]
  %v5095 = vld [vmem:[%s5084 + $0x50] sm:$0xff]
  %v5096 = vld [vmem:[%s5084 + $0x58] sm:$0xff]
  %v5097 = vld [vmem:[%s5084 + $0x60] sm:$0xff]
  %v5098 = vld [vmem:[%s5084 + $0x68] sm:$0xff]
  %v5099 = vld [vmem:[%s5084 + $0x70] sm:$0xff]
  %v5100 = vld [vmem:[%s5084 + $0x78] sm:$0xff]
  %5101 = vmatprep.subr.mxu0 0.0
  %v5102 = vand.u32 %v5100, 4294901760
  %5103 = vmatpush1.msra.mxu0 %v5102
  %5104 = vmatprep.subr.mxu0 0.0
  %v5105 = vand.u32 %v5099, 4294901760
  %5106 = vmatpush1.msra.mxu0 %v5105
  %5107 = vmatprep.subr.mxu0 0.0
  %v5108 = vand.u32 %v5098, 4294901760
  %5109 = vmatpush1.msra.mxu0 %v5108
  %5110 = vmatprep.subr.mxu0 0.0
  %v5111 = vand.u32 %v5097, 4294901760
  %5112 = vmatpush1.msra.mxu0 %v5111
  %5113 = vmatprep.subr.mxu0 0.0
  %v5114 = vand.u32 %v5096, 4294901760
  %5115 = vmatpush1.msra.mxu0 %v5114
  %5116 = vmatprep.subr.mxu0 0.0
  %v5117 = vand.u32 %v5095, 4294901760
  %5118 = vmatpush1.msra.mxu0 %v5117
  %5119 = vmatprep.subr.mxu0 0.0
  %v5120 = vand.u32 %v5094, 4294901760
  %5121 = vmatpush1.msra.mxu0 %v5120
  %5122 = vmatprep.subr.mxu0 0.0
  %v5123 = vand.u32 %v5093, 4294901760
  %5124 = vmatpush1.msra.mxu0 %v5123
  %5125 = vmatprep.subr.mxu0 0.0
  %v5126 = vand.u32 %v5092, 4294901760
  %5127 = vmatpush1.msra.mxu0 %v5126
  %5128 = vmatprep.subr.mxu0 0.0
  %v5129 = vand.u32 %v5091, 4294901760
  %5130 = vmatpush1.msra.mxu0 %v5129
  %5131 = vmatprep.subr.mxu0 0.0
  %v5132 = vand.u32 %v5090, 4294901760
  %5133 = vmatpush1.msra.mxu0 %v5132
  %5134 = vmatprep.subr.mxu0 0.0
  %v5135 = vand.u32 %v5089, 4294901760
  %5136 = vmatpush1.msra.mxu0 %v5135
  %5137 = vmatprep.subr.mxu0 0.0
  %v5138 = vand.u32 %v5088, 4294901760
  %5139 = vmatpush1.msra.mxu0 %v5138
  %5140 = vmatprep.subr.mxu0 0.0
  %v5141 = vand.u32 %v5087, 4294901760
  %5142 = vmatpush1.msra.mxu0 %v5141
  %5143 = vmatprep.subr.mxu0 0.0
  %v5144 = vand.u32 %v5086, 4294901760
  %5145 = vmatpush1.msra.mxu0 %v5144
  %5146 = vmatprep.subr.mxu0 0.0
  %v5147 = vand.u32 %v5085, 4294901760
  %5148 = vmatpush1.msra.mxu0 %v5147
  %5149 = vmatprep.subr.mxu0 0.0
  %5150 = vmatpush2.msra.mxu0 0.0
  %5151 = vmatprep.subr.mxu0 0.0
  %5152 = vmatpush2.msra.mxu0 0.0
  %5153 = vmatprep.subr.mxu0 0.0
  %5154 = vmatpush2.msra.mxu0 0.0
  %5155 = vmatprep.subr.mxu0 0.0
  %5156 = vmatpush2.msra.mxu0 0.0
  %5157 = vmatprep.subr.mxu0 0.0
  %5158 = vmatpush2.msra.mxu0 0.0
  %5159 = vmatprep.subr.mxu0 0.0
  %5160 = vmatpush2.msra.mxu0 0.0
  %5161 = vmatprep.subr.mxu0 0.0
  %5162 = vmatpush2.msra.mxu0 0.0
  %5163 = vmatprep.subr.mxu0 0.0
  %5164 = vmatpush2.msra.mxu0 0.0
  %5165 = vmatprep.subr.mxu0 0.0
  %5166 = vmatpush2.msra.mxu0 0.0
  %5167 = vmatprep.subr.mxu0 0.0
  %5168 = vmatpush2.msra.mxu0 0.0
  %5169 = vmatprep.subr.mxu0 0.0
  %5170 = vmatpush2.msra.mxu0 0.0
  %5171 = vmatprep.subr.mxu0 0.0
  %5172 = vmatpush2.msra.mxu0 0.0
  %5173 = vmatprep.subr.mxu0 0.0
  %5174 = vmatpush2.msra.mxu0 0.0
  %5175 = vmatprep.subr.mxu0 0.0
  %5176 = vmatpush2.msra.mxu0 0.0
  %5177 = vmatprep.subr.mxu0 0.0
  %5178 = vmatpush2.msra.mxu0 0.0
  %5179 = vmatprep.subr.mxu0 0.0
  %5180 = vmatpush2.msra.mxu0 0.0
  %5181 = vmatprep.mubr.f32.mxu0 0.0
  %v5182 = vand.u32 %v5080, 4294901760
  %v5183 = vsub.f32 %v5080, %v5182
  %v5184 = vand.u32 %v5183, 4294901760
  %v5185 = vsub.f32 %v5183, %v5184
  %v5186 = vand.u32 %v5185, 4294901760
  %5187 = vmatmul.mubr.f32.gmra.mxu0 %v5186
  %v5188 = vpop.f32.mrf.mxu0
  %v5189 = vadd.f32 0.0, %v5188
  %v5190 = vpop.f32.mrf.mxu0
  %5191 = vmatprep.mubr.f32.mxu0 0.0
  %v5192 = vand.u32 %v5081, 4294901760
  %v5193 = vsub.f32 %v5081, %v5192
  %v5194 = vand.u32 %v5193, 4294901760
  %v5195 = vsub.f32 %v5193, %v5194
  %v5196 = vand.u32 %v5195, 4294901760
  %5197 = vmatmul.mubr.f32.gmra.mxu0 %v5196
  %v5198 = vpop.f32.mrf.mxu0
  %v5199 = vadd.f32 0.0, %v5198
  %v5200 = vpop.f32.mrf.mxu0
  %5201 = vmatprep.mubr.f32.mxu0 0.0
  %v5202 = vand.u32 %v5082, 4294901760
  %v5203 = vsub.f32 %v5082, %v5202
  %v5204 = vand.u32 %v5203, 4294901760
  %v5205 = vsub.f32 %v5203, %v5204
  %v5206 = vand.u32 %v5205, 4294901760
  %5207 = vmatmul.mubr.f32.gmra.mxu0 %v5206
  %v5208 = vpop.f32.mrf.mxu0
  %v5209 = vadd.f32 0.0, %v5208
  %v5210 = vpop.f32.mrf.mxu0
  %5211 = vmatprep.mubr.f32.mxu0 0.0
  %v5212 = vand.u32 %v5083, 4294901760
  %v5213 = vsub.f32 %v5083, %v5212
  %v5214 = vand.u32 %v5213, 4294901760
  %v5215 = vsub.f32 %v5213, %v5214
  %v5216 = vand.u32 %v5215, 4294901760
  %5217 = vmatmul.mubr.f32.gmra.mxu0 %v5216
  %v5218 = vpop.f32.mrf.mxu0
  %v5219 = vadd.f32 0.0, %v5218
  %v5220 = vpop.f32.mrf.mxu0
  %5221 = vdwg.mxu0
  %5222 = vmatprep.subr.mxu0 0.0
  %v5223 = vand.u32 %v5100, 4294901760
  %v5224 = vsub.f32 %v5100, %v5223
  %v5225 = vand.u32 %v5224, 4294901760
  %v5226 = vsub.f32 %v5224, %v5225
  %v5227 = vand.u32 %v5226, 4294901760
  %5228 = vmatpush1.msra.mxu0 %v5227
  %5229 = vmatprep.subr.mxu0 0.0
  %v5230 = vand.u32 %v5099, 4294901760
  %v5231 = vsub.f32 %v5099, %v5230
  %v5232 = vand.u32 %v5231, 4294901760
  %v5233 = vsub.f32 %v5231, %v5232
  %v5234 = vand.u32 %v5233, 4294901760
  %5235 = vmatpush1.msra.mxu0 %v5234
  %5236 = vmatprep.subr.mxu0 0.0
  %v5237 = vand.u32 %v5098, 4294901760
  %v5238 = vsub.f32 %v5098, %v5237
  %v5239 = vand.u32 %v5238, 4294901760
  %v5240 = vsub.f32 %v5238, %v5239
  %v5241 = vand.u32 %v5240, 4294901760
  %5242 = vmatpush1.msra.mxu0 %v5241
  %5243 = vmatprep.subr.mxu0 0.0
  %v5244 = vand.u32 %v5097, 4294901760
  %v5245 = vsub.f32 %v5097, %v5244
  %v5246 = vand.u32 %v5245, 4294901760
  %v5247 = vsub.f32 %v5245, %v5246
  %v5248 = vand.u32 %v5247, 4294901760
  %5249 = vmatpush1.msra.mxu0 %v5248
  %5250 = vmatprep.subr.mxu0 0.0
  %v5251 = vand.u32 %v5096, 4294901760
  %v5252 = vsub.f32 %v5096, %v5251
  %v5253 = vand.u32 %v5252, 4294901760
  %v5254 = vsub.f32 %v5252, %v5253
  %v5255 = vand.u32 %v5254, 4294901760
  %5256 = vmatpush1.msra.mxu0 %v5255
  %5257 = vmatprep.subr.mxu0 0.0
  %v5258 = vand.u32 %v5095, 4294901760
  %v5259 = vsub.f32 %v5095, %v5258
  %v5260 = vand.u32 %v5259, 4294901760
  %v5261 = vsub.f32 %v5259, %v5260
  %v5262 = vand.u32 %v5261, 4294901760
  %5263 = vmatpush1.msra.mxu0 %v5262
  %5264 = vmatprep.subr.mxu0 0.0
  %v5265 = vand.u32 %v5094, 4294901760
  %v5266 = vsub.f32 %v5094, %v5265
  %v5267 = vand.u32 %v5266, 4294901760
  %v5268 = vsub.f32 %v5266, %v5267
  %v5269 = vand.u32 %v5268, 4294901760
  %5270 = vmatpush1.msra.mxu0 %v5269
  %5271 = vmatprep.subr.mxu0 0.0
  %v5272 = vand.u32 %v5093, 4294901760
  %v5273 = vsub.f32 %v5093, %v5272
  %v5274 = vand.u32 %v5273, 4294901760
  %v5275 = vsub.f32 %v5273, %v5274
  %v5276 = vand.u32 %v5275, 4294901760
  %5277 = vmatpush1.msra.mxu0 %v5276
  %5278 = vmatprep.subr.mxu0 0.0
  %v5279 = vand.u32 %v5092, 4294901760
  %v5280 = vsub.f32 %v5092, %v5279
  %v5281 = vand.u32 %v5280, 4294901760
  %v5282 = vsub.f32 %v5280, %v5281
  %v5283 = vand.u32 %v5282, 4294901760
  %5284 = vmatpush1.msra.mxu0 %v5283
  %5285 = vmatprep.subr.mxu0 0.0
  %v5286 = vand.u32 %v5091, 4294901760
  %v5287 = vsub.f32 %v5091, %v5286
  %v5288 = vand.u32 %v5287, 4294901760
  %v5289 = vsub.f32 %v5287, %v5288
  %v5290 = vand.u32 %v5289, 4294901760
  %5291 = vmatpush1.msra.mxu0 %v5290
  %5292 = vmatprep.subr.mxu0 0.0
  %v5293 = vand.u32 %v5090, 4294901760
  %v5294 = vsub.f32 %v5090, %v5293
  %v5295 = vand.u32 %v5294, 4294901760
  %v5296 = vsub.f32 %v5294, %v5295
  %v5297 = vand.u32 %v5296, 4294901760
  %5298 = vmatpush1.msra.mxu0 %v5297
  %5299 = vmatprep.subr.mxu0 0.0
  %v5300 = vand.u32 %v5089, 4294901760
  %v5301 = vsub.f32 %v5089, %v5300
  %v5302 = vand.u32 %v5301, 4294901760
  %v5303 = vsub.f32 %v5301, %v5302
  %v5304 = vand.u32 %v5303, 4294901760
  %5305 = vmatpush1.msra.mxu0 %v5304
  %5306 = vmatprep.subr.mxu0 0.0
  %v5307 = vand.u32 %v5088, 4294901760
  %v5308 = vsub.f32 %v5088, %v5307
  %v5309 = vand.u32 %v5308, 4294901760
  %v5310 = vsub.f32 %v5308, %v5309
  %v5311 = vand.u32 %v5310, 4294901760
  %5312 = vmatpush1.msra.mxu0 %v5311
  %5313 = vmatprep.subr.mxu0 0.0
  %v5314 = vand.u32 %v5087, 4294901760
  %v5315 = vsub.f32 %v5087, %v5314
  %v5316 = vand.u32 %v5315, 4294901760
  %v5317 = vsub.f32 %v5315, %v5316
  %v5318 = vand.u32 %v5317, 4294901760
  %5319 = vmatpush1.msra.mxu0 %v5318
  %5320 = vmatprep.subr.mxu0 0.0
  %v5321 = vand.u32 %v5086, 4294901760
  %v5322 = vsub.f32 %v5086, %v5321
  %v5323 = vand.u32 %v5322, 4294901760
  %v5324 = vsub.f32 %v5322, %v5323
  %v5325 = vand.u32 %v5324, 4294901760
  %5326 = vmatpush1.msra.mxu0 %v5325
  %5327 = vmatprep.subr.mxu0 0.0
  %v5328 = vand.u32 %v5085, 4294901760
  %v5329 = vsub.f32 %v5085, %v5328
  %v5330 = vand.u32 %v5329, 4294901760
  %v5331 = vsub.f32 %v5329, %v5330
  %v5332 = vand.u32 %v5331, 4294901760
  %5333 = vmatpush1.msra.mxu0 %v5332
  %5334 = vmatprep.subr.mxu0 0.0
  %5335 = vmatpush2.msra.mxu0 0.0
  %5336 = vmatprep.subr.mxu0 0.0
  %5337 = vmatpush2.msra.mxu0 0.0
  %5338 = vmatprep.subr.mxu0 0.0
  %5339 = vmatpush2.msra.mxu0 0.0
  %5340 = vmatprep.subr.mxu0 0.0
  %5341 = vmatpush2.msra.mxu0 0.0
  %5342 = vmatprep.subr.mxu0 0.0
  %5343 = vmatpush2.msra.mxu0 0.0
  %5344 = vmatprep.subr.mxu0 0.0
  %5345 = vmatpush2.msra.mxu0 0.0
  %5346 = vmatprep.subr.mxu0 0.0
  %5347 = vmatpush2.msra.mxu0 0.0
  %5348 = vmatprep.subr.mxu0 0.0
  %5349 = vmatpush2.msra.mxu0 0.0
  %5350 = vmatprep.subr.mxu0 0.0
  %5351 = vmatpush2.msra.mxu0 0.0
  %5352 = vmatprep.subr.mxu0 0.0
  %5353 = vmatpush2.msra.mxu0 0.0
  %5354 = vmatprep.subr.mxu0 0.0
  %5355 = vmatpush2.msra.mxu0 0.0
  %5356 = vmatprep.subr.mxu0 0.0
  %5357 = vmatpush2.msra.mxu0 0.0
  %5358 = vmatprep.subr.mxu0 0.0
  %5359 = vmatpush2.msra.mxu0 0.0
  %5360 = vmatprep.subr.mxu0 0.0
  %5361 = vmatpush2.msra.mxu0 0.0
  %5362 = vmatprep.subr.mxu0 0.0
  %5363 = vmatpush2.msra.mxu0 0.0
  %5364 = vmatprep.subr.mxu0 0.0
  %5365 = vmatpush2.msra.mxu0 0.0
  %5366 = vmatprep.mubr.f32.mxu0 0.0
  %v5367 = vand.u32 %v5080, 4294901760
  %5368 = vmatmul.mubr.f32.gmra.mxu0 %v5367
  %v5369 = vpop.f32.mrf.mxu0
  %v5370 = vadd.f32 %v5189, %v5369
  %v5371 = vpop.f32.mrf.mxu0
  %5372 = vmatprep.mubr.f32.mxu0 0.0
  %v5373 = vand.u32 %v5081, 4294901760
  %5374 = vmatmul.mubr.f32.gmra.mxu0 %v5373
  %v5375 = vpop.f32.mrf.mxu0
  %v5376 = vadd.f32 %v5199, %v5375
  %v5377 = vpop.f32.mrf.mxu0
  %5378 = vmatprep.mubr.f32.mxu0 0.0
  %v5379 = vand.u32 %v5082, 4294901760
  %5380 = vmatmul.mubr.f32.gmra.mxu0 %v5379
  %v5381 = vpop.f32.mrf.mxu0
  %v5382 = vadd.f32 %v5209, %v5381
  %v5383 = vpop.f32.mrf.mxu0
  %5384 = vmatprep.mubr.f32.mxu0 0.0
  %v5385 = vand.u32 %v5083, 4294901760
  %5386 = vmatmul.mubr.f32.gmra.mxu0 %v5385
  %v5387 = vpop.f32.mrf.mxu0
  %v5388 = vadd.f32 %v5219, %v5387
  %v5389 = vpop.f32.mrf.mxu0
  %5390 = vdwg.mxu0
  %5391 = vmatprep.subr.mxu0 0.0
  %v5392 = vand.u32 %v5100, 4294901760
  %v5393 = vsub.f32 %v5100, %v5392
  %5394 = vmatpush1.msra.mxu0 %v5393
  %5395 = vmatprep.subr.mxu0 0.0
  %v5396 = vand.u32 %v5099, 4294901760
  %v5397 = vsub.f32 %v5099, %v5396
  %5398 = vmatpush1.msra.mxu0 %v5397
  %5399 = vmatprep.subr.mxu0 0.0
  %v5400 = vand.u32 %v5098, 4294901760
  %v5401 = vsub.f32 %v5098, %v5400
  %5402 = vmatpush1.msra.mxu0 %v5401
  %5403 = vmatprep.subr.mxu0 0.0
  %v5404 = vand.u32 %v5097, 4294901760
  %v5405 = vsub.f32 %v5097, %v5404
  %5406 = vmatpush1.msra.mxu0 %v5405
  %5407 = vmatprep.subr.mxu0 0.0
  %v5408 = vand.u32 %v5096, 4294901760
  %v5409 = vsub.f32 %v5096, %v5408
  %5410 = vmatpush1.msra.mxu0 %v5409
  %5411 = vmatprep.subr.mxu0 0.0
  %v5412 = vand.u32 %v5095, 4294901760
  %v5413 = vsub.f32 %v5095, %v5412
  %5414 = vmatpush1.msra.mxu0 %v5413
  %5415 = vmatprep.subr.mxu0 0.0
  %v5416 = vand.u32 %v5094, 4294901760
  %v5417 = vsub.f32 %v5094, %v5416
  %5418 = vmatpush1.msra.mxu0 %v5417
  %5419 = vmatprep.subr.mxu0 0.0
  %v5420 = vand.u32 %v5093, 4294901760
  %v5421 = vsub.f32 %v5093, %v5420
  %5422 = vmatpush1.msra.mxu0 %v5421
  %5423 = vmatprep.subr.mxu0 0.0
  %v5424 = vand.u32 %v5092, 4294901760
  %v5425 = vsub.f32 %v5092, %v5424
  %5426 = vmatpush1.msra.mxu0 %v5425
  %5427 = vmatprep.subr.mxu0 0.0
  %v5428 = vand.u32 %v5091, 4294901760
  %v5429 = vsub.f32 %v5091, %v5428
  %5430 = vmatpush1.msra.mxu0 %v5429
  %5431 = vmatprep.subr.mxu0 0.0
  %v5432 = vand.u32 %v5090, 4294901760
  %v5433 = vsub.f32 %v5090, %v5432
  %5434 = vmatpush1.msra.mxu0 %v5433
  %5435 = vmatprep.subr.mxu0 0.0
  %v5436 = vand.u32 %v5089, 4294901760
  %v5437 = vsub.f32 %v5089, %v5436
  %5438 = vmatpush1.msra.mxu0 %v5437
  %5439 = vmatprep.subr.mxu0 0.0
  %v5440 = vand.u32 %v5088, 4294901760
  %v5441 = vsub.f32 %v5088, %v5440
  %5442 = vmatpush1.msra.mxu0 %v5441
  %5443 = vmatprep.subr.mxu0 0.0
  %v5444 = vand.u32 %v5087, 4294901760
  %v5445 = vsub.f32 %v5087, %v5444
  %5446 = vmatpush1.msra.mxu0 %v5445
  %5447 = vmatprep.subr.mxu0 0.0
  %v5448 = vand.u32 %v5086, 4294901760
  %v5449 = vsub.f32 %v5086, %v5448
  %5450 = vmatpush1.msra.mxu0 %v5449
  %5451 = vmatprep.subr.mxu0 0.0
  %v5452 = vand.u32 %v5085, 4294901760
  %v5453 = vsub.f32 %v5085, %v5452
  %5454 = vmatpush1.msra.mxu0 %v5453
  %5455 = vmatprep.subr.mxu0 0.0
  %5456 = vmatpush2.msra.mxu0 0.0
  %5457 = vmatprep.subr.mxu0 0.0
  %5458 = vmatpush2.msra.mxu0 0.0
  %5459 = vmatprep.subr.mxu0 0.0
  %5460 = vmatpush2.msra.mxu0 0.0
  %5461 = vmatprep.subr.mxu0 0.0
  %5462 = vmatpush2.msra.mxu0 0.0
  %5463 = vmatprep.subr.mxu0 0.0
  %5464 = vmatpush2.msra.mxu0 0.0
  %5465 = vmatprep.subr.mxu0 0.0
  %5466 = vmatpush2.msra.mxu0 0.0
  %5467 = vmatprep.subr.mxu0 0.0
  %5468 = vmatpush2.msra.mxu0 0.0
  %5469 = vmatprep.subr.mxu0 0.0
  %5470 = vmatpush2.msra.mxu0 0.0
  %5471 = vmatprep.subr.mxu0 0.0
  %5472 = vmatpush2.msra.mxu0 0.0
  %5473 = vmatprep.subr.mxu0 0.0
  %5474 = vmatpush2.msra.mxu0 0.0
  %5475 = vmatprep.subr.mxu0 0.0
  %5476 = vmatpush2.msra.mxu0 0.0
  %5477 = vmatprep.subr.mxu0 0.0
  %5478 = vmatpush2.msra.mxu0 0.0
  %5479 = vmatprep.subr.mxu0 0.0
  %5480 = vmatpush2.msra.mxu0 0.0
  %5481 = vmatprep.subr.mxu0 0.0
  %5482 = vmatpush2.msra.mxu0 0.0
  %5483 = vmatprep.subr.mxu0 0.0
  %5484 = vmatpush2.msra.mxu0 0.0
  %5485 = vmatprep.subr.mxu0 0.0
  %5486 = vmatpush2.msra.mxu0 0.0
  %5487 = vmatprep.mubr.f32.mxu0 0.0
  %v5488 = vand.u32 %v5080, 4294901760
  %v5489 = vsub.f32 %v5080, %v5488
  %5490 = vmatmul.mubr.f32.gmra.mxu0 %v5489
  %v5491 = vpop.f32.mrf.mxu0
  %v5492 = vadd.f32 %v5370, %v5491
  %v5493 = vpop.f32.mrf.mxu0
  %5494 = vmatprep.mubr.f32.mxu0 0.0
  %v5495 = vand.u32 %v5081, 4294901760
  %v5496 = vsub.f32 %v5081, %v5495
  %5497 = vmatmul.mubr.f32.gmra.mxu0 %v5496
  %v5498 = vpop.f32.mrf.mxu0
  %v5499 = vadd.f32 %v5376, %v5498
  %v5500 = vpop.f32.mrf.mxu0
  %5501 = vmatprep.mubr.f32.mxu0 0.0
  %v5502 = vand.u32 %v5082, 4294901760
  %v5503 = vsub.f32 %v5082, %v5502
  %5504 = vmatmul.mubr.f32.gmra.mxu0 %v5503
  %v5505 = vpop.f32.mrf.mxu0
  %v5506 = vadd.f32 %v5382, %v5505
  %v5507 = vpop.f32.mrf.mxu0
  %5508 = vmatprep.mubr.f32.mxu0 0.0
  %v5509 = vand.u32 %v5083, 4294901760
  %v5510 = vsub.f32 %v5083, %v5509
  %5511 = vmatmul.mubr.f32.gmra.mxu0 %v5510
  %v5512 = vpop.f32.mrf.mxu0
  %v5513 = vadd.f32 %v5388, %v5512
  %v5514 = vpop.f32.mrf.mxu0
  %5515 = vdwg.mxu0
  %5516 = vmatprep.subr.mxu0 0.0
  %v5517 = vand.u32 %v5100, 4294901760
  %5518 = vmatpush1.msra.mxu0 %v5517
  %5519 = vmatprep.subr.mxu0 0.0
  %v5520 = vand.u32 %v5099, 4294901760
  %5521 = vmatpush1.msra.mxu0 %v5520
  %5522 = vmatprep.subr.mxu0 0.0
  %v5523 = vand.u32 %v5098, 4294901760
  %5524 = vmatpush1.msra.mxu0 %v5523
  %5525 = vmatprep.subr.mxu0 0.0
  %v5526 = vand.u32 %v5097, 4294901760
  %5527 = vmatpush1.msra.mxu0 %v5526
  %5528 = vmatprep.subr.mxu0 0.0
  %v5529 = vand.u32 %v5096, 4294901760
  %5530 = vmatpush1.msra.mxu0 %v5529
  %5531 = vmatprep.subr.mxu0 0.0
  %v5532 = vand.u32 %v5095, 4294901760
  %5533 = vmatpush1.msra.mxu0 %v5532
  %5534 = vmatprep.subr.mxu0 0.0
  %v5535 = vand.u32 %v5094, 4294901760
  %5536 = vmatpush1.msra.mxu0 %v5535
  %5537 = vmatprep.subr.mxu0 0.0
  %v5538 = vand.u32 %v5093, 4294901760
  %5539 = vmatpush1.msra.mxu0 %v5538
  %5540 = vmatprep.subr.mxu0 0.0
  %v5541 = vand.u32 %v5092, 4294901760
  %5542 = vmatpush1.msra.mxu0 %v5541
  %5543 = vmatprep.subr.mxu0 0.0
  %v5544 = vand.u32 %v5091, 4294901760
  %5545 = vmatpush1.msra.mxu0 %v5544
  %5546 = vmatprep.subr.mxu0 0.0
  %v5547 = vand.u32 %v5090, 4294901760
  %5548 = vmatpush1.msra.mxu0 %v5547
  %5549 = vmatprep.subr.mxu0 0.0
  %v5550 = vand.u32 %v5089, 4294901760
  %5551 = vmatpush1.msra.mxu0 %v5550
  %5552 = vmatprep.subr.mxu0 0.0
  %v5553 = vand.u32 %v5088, 4294901760
  %5554 = vmatpush1.msra.mxu0 %v5553
  %5555 = vmatprep.subr.mxu0 0.0
  %v5556 = vand.u32 %v5087, 4294901760
  %5557 = vmatpush1.msra.mxu0 %v5556
  %5558 = vmatprep.subr.mxu0 0.0
  %v5559 = vand.u32 %v5086, 4294901760
  %5560 = vmatpush1.msra.mxu0 %v5559
  %5561 = vmatprep.subr.mxu0 0.0
  %v5562 = vand.u32 %v5085, 4294901760
  %5563 = vmatpush1.msra.mxu0 %v5562
  %5564 = vmatprep.subr.mxu0 0.0
  %5565 = vmatpush2.msra.mxu0 0.0
  %5566 = vmatprep.subr.mxu0 0.0
  %5567 = vmatpush2.msra.mxu0 0.0
  %5568 = vmatprep.subr.mxu0 0.0
  %5569 = vmatpush2.msra.mxu0 0.0
  %5570 = vmatprep.subr.mxu0 0.0
  %5571 = vmatpush2.msra.mxu0 0.0
  %5572 = vmatprep.subr.mxu0 0.0
  %5573 = vmatpush2.msra.mxu0 0.0
  %5574 = vmatprep.subr.mxu0 0.0
  %5575 = vmatpush2.msra.mxu0 0.0
  %5576 = vmatprep.subr.mxu0 0.0
  %5577 = vmatpush2.msra.mxu0 0.0
  %5578 = vmatprep.subr.mxu0 0.0
  %5579 = vmatpush2.msra.mxu0 0.0
  %5580 = vmatprep.subr.mxu0 0.0
  %5581 = vmatpush2.msra.mxu0 0.0
  %5582 = vmatprep.subr.mxu0 0.0
  %5583 = vmatpush2.msra.mxu0 0.0
  %5584 = vmatprep.subr.mxu0 0.0
  %5585 = vmatpush2.msra.mxu0 0.0
  %5586 = vmatprep.subr.mxu0 0.0
  %5587 = vmatpush2.msra.mxu0 0.0
  %5588 = vmatprep.subr.mxu0 0.0
  %5589 = vmatpush2.msra.mxu0 0.0
  %5590 = vmatprep.subr.mxu0 0.0
  %5591 = vmatpush2.msra.mxu0 0.0
  %5592 = vmatprep.subr.mxu0 0.0
  %5593 = vmatpush2.msra.mxu0 0.0
  %5594 = vmatprep.subr.mxu0 0.0
  %5595 = vmatpush2.msra.mxu0 0.0
  %5596 = vmatprep.mubr.f32.mxu0 0.0
  %v5597 = vand.u32 %v5080, 4294901760
  %v5598 = vsub.f32 %v5080, %v5597
  %v5599 = vand.u32 %v5598, 4294901760
  %5600 = vmatmul.mubr.f32.gmra.mxu0 %v5599
  %v5601 = vpop.f32.mrf.mxu0
  %v5602 = vadd.f32 %v5492, %v5601
  %v5603 = vpop.f32.mrf.mxu0
  %5604 = vmatprep.mubr.f32.mxu0 0.0
  %v5605 = vand.u32 %v5081, 4294901760
  %v5606 = vsub.f32 %v5081, %v5605
  %v5607 = vand.u32 %v5606, 4294901760
  %5608 = vmatmul.mubr.f32.gmra.mxu0 %v5607
  %v5609 = vpop.f32.mrf.mxu0
  %v5610 = vadd.f32 %v5499, %v5609
  %v5611 = vpop.f32.mrf.mxu0
  %5612 = vmatprep.mubr.f32.mxu0 0.0
  %v5613 = vand.u32 %v5082, 4294901760
  %v5614 = vsub.f32 %v5082, %v5613
  %v5615 = vand.u32 %v5614, 4294901760
  %5616 = vmatmul.mubr.f32.gmra.mxu0 %v5615
  %v5617 = vpop.f32.mrf.mxu0
  %v5618 = vadd.f32 %v5506, %v5617
  %v5619 = vpop.f32.mrf.mxu0
  %5620 = vmatprep.mubr.f32.mxu0 0.0
  %v5621 = vand.u32 %v5083, 4294901760
  %v5622 = vsub.f32 %v5083, %v5621
  %v5623 = vand.u32 %v5622, 4294901760
  %5624 = vmatmul.mubr.f32.gmra.mxu0 %v5623
  %v5625 = vpop.f32.mrf.mxu0
  %v5626 = vadd.f32 %v5513, %v5625
  %v5627 = vpop.f32.mrf.mxu0
  %5628 = vdwg.mxu0
  %5629 = vmatprep.subr.mxu0 0.0
  %v5630 = vand.u32 %v5100, 4294901760
  %v5631 = vsub.f32 %v5100, %v5630
  %v5632 = vand.u32 %v5631, 4294901760
  %5633 = vmatpush1.msra.mxu0 %v5632
  %5634 = vmatprep.subr.mxu0 0.0
  %v5635 = vand.u32 %v5099, 4294901760
  %v5636 = vsub.f32 %v5099, %v5635
  %v5637 = vand.u32 %v5636, 4294901760
  %5638 = vmatpush1.msra.mxu0 %v5637
  %5639 = vmatprep.subr.mxu0 0.0
  %v5640 = vand.u32 %v5098, 4294901760
  %v5641 = vsub.f32 %v5098, %v5640
  %v5642 = vand.u32 %v5641, 4294901760
  %5643 = vmatpush1.msra.mxu0 %v5642
  %5644 = vmatprep.subr.mxu0 0.0
  %v5645 = vand.u32 %v5097, 4294901760
  %v5646 = vsub.f32 %v5097, %v5645
  %v5647 = vand.u32 %v5646, 4294901760
  %5648 = vmatpush1.msra.mxu0 %v5647
  %5649 = vmatprep.subr.mxu0 0.0
  %v5650 = vand.u32 %v5096, 4294901760
  %v5651 = vsub.f32 %v5096, %v5650
  %v5652 = vand.u32 %v5651, 4294901760
  %5653 = vmatpush1.msra.mxu0 %v5652
  %5654 = vmatprep.subr.mxu0 0.0
  %v5655 = vand.u32 %v5095, 4294901760
  %v5656 = vsub.f32 %v5095, %v5655
  %v5657 = vand.u32 %v5656, 4294901760
  %5658 = vmatpush1.msra.mxu0 %v5657
  %5659 = vmatprep.subr.mxu0 0.0
  %v5660 = vand.u32 %v5094, 4294901760
  %v5661 = vsub.f32 %v5094, %v5660
  %v5662 = vand.u32 %v5661, 4294901760
  %5663 = vmatpush1.msra.mxu0 %v5662
  %5664 = vmatprep.subr.mxu0 0.0
  %v5665 = vand.u32 %v5093, 4294901760
  %v5666 = vsub.f32 %v5093, %v5665
  %v5667 = vand.u32 %v5666, 4294901760
  %5668 = vmatpush1.msra.mxu0 %v5667
  %5669 = vmatprep.subr.mxu0 0.0
  %v5670 = vand.u32 %v5092, 4294901760
  %v5671 = vsub.f32 %v5092, %v5670
  %v5672 = vand.u32 %v5671, 4294901760
  %5673 = vmatpush1.msra.mxu0 %v5672
  %5674 = vmatprep.subr.mxu0 0.0
  %v5675 = vand.u32 %v5091, 4294901760
  %v5676 = vsub.f32 %v5091, %v5675
  %v5677 = vand.u32 %v5676, 4294901760
  %5678 = vmatpush1.msra.mxu0 %v5677
  %5679 = vmatprep.subr.mxu0 0.0
  %v5680 = vand.u32 %v5090, 4294901760
  %v5681 = vsub.f32 %v5090, %v5680
  %v5682 = vand.u32 %v5681, 4294901760
  %5683 = vmatpush1.msra.mxu0 %v5682
  %5684 = vmatprep.subr.mxu0 0.0
  %v5685 = vand.u32 %v5089, 4294901760
  %v5686 = vsub.f32 %v5089, %v5685
  %v5687 = vand.u32 %v5686, 4294901760
  %5688 = vmatpush1.msra.mxu0 %v5687
  %5689 = vmatprep.subr.mxu0 0.0
  %v5690 = vand.u32 %v5088, 4294901760
  %v5691 = vsub.f32 %v5088, %v5690
  %v5692 = vand.u32 %v5691, 4294901760
  %5693 = vmatpush1.msra.mxu0 %v5692
  %5694 = vmatprep.subr.mxu0 0.0
  %v5695 = vand.u32 %v5087, 4294901760
  %v5696 = vsub.f32 %v5087, %v5695
  %v5697 = vand.u32 %v5696, 4294901760
  %5698 = vmatpush1.msra.mxu0 %v5697
  %5699 = vmatprep.subr.mxu0 0.0
  %v5700 = vand.u32 %v5086, 4294901760
  %v5701 = vsub.f32 %v5086, %v5700
  %v5702 = vand.u32 %v5701, 4294901760
  %5703 = vmatpush1.msra.mxu0 %v5702
  %5704 = vmatprep.subr.mxu0 0.0
  %v5705 = vand.u32 %v5085, 4294901760
  %v5706 = vsub.f32 %v5085, %v5705
  %v5707 = vand.u32 %v5706, 4294901760
  %5708 = vmatpush1.msra.mxu0 %v5707
  %5709 = vmatprep.subr.mxu0 0.0
  %5710 = vmatpush2.msra.mxu0 0.0
  %5711 = vmatprep.subr.mxu0 0.0
  %5712 = vmatpush2.msra.mxu0 0.0
  %5713 = vmatprep.subr.mxu0 0.0
  %5714 = vmatpush2.msra.mxu0 0.0
  %5715 = vmatprep.subr.mxu0 0.0
  %5716 = vmatpush2.msra.mxu0 0.0
  %5717 = vmatprep.subr.mxu0 0.0
  %5718 = vmatpush2.msra.mxu0 0.0
  %5719 = vmatprep.subr.mxu0 0.0
  %5720 = vmatpush2.msra.mxu0 0.0
  %5721 = vmatprep.subr.mxu0 0.0
  %5722 = vmatpush2.msra.mxu0 0.0
  %5723 = vmatprep.subr.mxu0 0.0
  %5724 = vmatpush2.msra.mxu0 0.0
  %5725 = vmatprep.subr.mxu0 0.0
  %5726 = vmatpush2.msra.mxu0 0.0
  %5727 = vmatprep.subr.mxu0 0.0
  %5728 = vmatpush2.msra.mxu0 0.0
  %5729 = vmatprep.subr.mxu0 0.0
  %5730 = vmatpush2.msra.mxu0 0.0
  %5731 = vmatprep.subr.mxu0 0.0
  %5732 = vmatpush2.msra.mxu0 0.0
  %5733 = vmatprep.subr.mxu0 0.0
  %5734 = vmatpush2.msra.mxu0 0.0
  %5735 = vmatprep.subr.mxu0 0.0
  %5736 = vmatpush2.msra.mxu0 0.0
  %5737 = vmatprep.subr.mxu0 0.0
  %5738 = vmatpush2.msra.mxu0 0.0
  %5739 = vmatprep.subr.mxu0 0.0
  %5740 = vmatpush2.msra.mxu0 0.0
  %5741 = vmatprep.mubr.f32.mxu0 0.0
  %v5742 = vand.u32 %v5080, 4294901760
  %5743 = vmatmul.mubr.f32.gmra.mxu0 %v5742
  %v5744 = vpop.f32.mrf.mxu0
  %v5745 = vadd.f32 %v5602, %v5744
  %v5746 = vpop.f32.mrf.mxu0
  %5747 = vmatprep.mubr.f32.mxu0 0.0
  %v5748 = vand.u32 %v5081, 4294901760
  %5749 = vmatmul.mubr.f32.gmra.mxu0 %v5748
  %v5750 = vpop.f32.mrf.mxu0
  %v5751 = vadd.f32 %v5610, %v5750
  %v5752 = vpop.f32.mrf.mxu0
  %5753 = vmatprep.mubr.f32.mxu0 0.0
  %v5754 = vand.u32 %v5082, 4294901760
  %5755 = vmatmul.mubr.f32.gmra.mxu0 %v5754
  %v5756 = vpop.f32.mrf.mxu0
  %v5757 = vadd.f32 %v5618, %v5756
  %v5758 = vpop.f32.mrf.mxu0
  %5759 = vmatprep.mubr.f32.mxu0 0.0
  %v5760 = vand.u32 %v5083, 4294901760
  %5761 = vmatmul.mubr.f32.gmra.mxu0 %v5760
  %v5762 = vpop.f32.mrf.mxu0
  %v5763 = vadd.f32 %v5626, %v5762
  %v5764 = vpop.f32.mrf.mxu0
  %5765 = vdwg.mxu0
  %5766 = vmatprep.subr.mxu0 0.0
  %v5767 = vand.u32 %v5100, 4294901760
  %5768 = vmatpush1.msra.mxu0 %v5767
  %5769 = vmatprep.subr.mxu0 0.0
  %v5770 = vand.u32 %v5099, 4294901760
  %5771 = vmatpush1.msra.mxu0 %v5770
  %5772 = vmatprep.subr.mxu0 0.0
  %v5773 = vand.u32 %v5098, 4294901760
  %5774 = vmatpush1.msra.mxu0 %v5773
  %5775 = vmatprep.subr.mxu0 0.0
  %v5776 = vand.u32 %v5097, 4294901760
  %5777 = vmatpush1.msra.mxu0 %v5776
  %5778 = vmatprep.subr.mxu0 0.0
  %v5779 = vand.u32 %v5096, 4294901760
  %5780 = vmatpush1.msra.mxu0 %v5779
  %5781 = vmatprep.subr.mxu0 0.0
  %v5782 = vand.u32 %v5095, 4294901760
  %5783 = vmatpush1.msra.mxu0 %v5782
  %5784 = vmatprep.subr.mxu0 0.0
  %v5785 = vand.u32 %v5094, 4294901760
  %5786 = vmatpush1.msra.mxu0 %v5785
  %5787 = vmatprep.subr.mxu0 0.0
  %v5788 = vand.u32 %v5093, 4294901760
  %5789 = vmatpush1.msra.mxu0 %v5788
  %5790 = vmatprep.subr.mxu0 0.0
  %v5791 = vand.u32 %v5092, 4294901760
  %5792 = vmatpush1.msra.mxu0 %v5791
  %5793 = vmatprep.subr.mxu0 0.0
  %v5794 = vand.u32 %v5091, 4294901760
  %5795 = vmatpush1.msra.mxu0 %v5794
  %5796 = vmatprep.subr.mxu0 0.0
  %v5797 = vand.u32 %v5090, 4294901760
  %5798 = vmatpush1.msra.mxu0 %v5797
  %5799 = vmatprep.subr.mxu0 0.0
  %v5800 = vand.u32 %v5089, 4294901760
  %5801 = vmatpush1.msra.mxu0 %v5800
  %5802 = vmatprep.subr.mxu0 0.0
  %v5803 = vand.u32 %v5088, 4294901760
  %5804 = vmatpush1.msra.mxu0 %v5803
  %5805 = vmatprep.subr.mxu0 0.0
  %v5806 = vand.u32 %v5087, 4294901760
  %5807 = vmatpush1.msra.mxu0 %v5806
  %5808 = vmatprep.subr.mxu0 0.0
  %v5809 = vand.u32 %v5086, 4294901760
  %5810 = vmatpush1.msra.mxu0 %v5809
  %5811 = vmatprep.subr.mxu0 0.0
  %v5812 = vand.u32 %v5085, 4294901760
  %5813 = vmatpush1.msra.mxu0 %v5812
  %5814 = vmatprep.subr.mxu0 0.0
  %5815 = vmatpush2.msra.mxu0 0.0
  %5816 = vmatprep.subr.mxu0 0.0
  %5817 = vmatpush2.msra.mxu0 0.0
  %5818 = vmatprep.subr.mxu0 0.0
  %5819 = vmatpush2.msra.mxu0 0.0
  %5820 = vmatprep.subr.mxu0 0.0
  %5821 = vmatpush2.msra.mxu0 0.0
  %5822 = vmatprep.subr.mxu0 0.0
  %5823 = vmatpush2.msra.mxu0 0.0
  %5824 = vmatprep.subr.mxu0 0.0
  %5825 = vmatpush2.msra.mxu0 0.0
  %5826 = vmatprep.subr.mxu0 0.0
  %5827 = vmatpush2.msra.mxu0 0.0
  %5828 = vmatprep.subr.mxu0 0.0
  %5829 = vmatpush2.msra.mxu0 0.0
  %5830 = vmatprep.subr.mxu0 0.0
  %5831 = vmatpush2.msra.mxu0 0.0
  %5832 = vmatprep.subr.mxu0 0.0
  %5833 = vmatpush2.msra.mxu0 0.0
  %5834 = vmatprep.subr.mxu0 0.0
  %5835 = vmatpush2.msra.mxu0 0.0
  %5836 = vmatprep.subr.mxu0 0.0
  %5837 = vmatpush2.msra.mxu0 0.0
  %5838 = vmatprep.subr.mxu0 0.0
  %5839 = vmatpush2.msra.mxu0 0.0
  %5840 = vmatprep.subr.mxu0 0.0
  %5841 = vmatpush2.msra.mxu0 0.0
  %5842 = vmatprep.subr.mxu0 0.0
  %5843 = vmatpush2.msra.mxu0 0.0
  %5844 = vmatprep.subr.mxu0 0.0
  %5845 = vmatpush2.msra.mxu0 0.0
  %5846 = vmatprep.mubr.f32.mxu0 0.0
  %v5847 = vand.u32 %v5080, 4294901760
  %5848 = vmatmul.mubr.f32.gmra.mxu0 %v5847
  %v5849 = vpop.f32.mrf.mxu0
  %v5850 = vadd.f32 %v5745, %v5849
  %v5851 = vpop.f32.mrf.mxu0
  %5852 = vmatprep.mubr.f32.mxu0 0.0
  %v5853 = vand.u32 %v5081, 4294901760
  %5854 = vmatmul.mubr.f32.gmra.mxu0 %v5853
  %v5855 = vpop.f32.mrf.mxu0
  %v5856 = vadd.f32 %v5751, %v5855
  %v5857 = vpop.f32.mrf.mxu0
  %5858 = vmatprep.mubr.f32.mxu0 0.0
  %v5859 = vand.u32 %v5082, 4294901760
  %5860 = vmatmul.mubr.f32.gmra.mxu0 %v5859
  %v5861 = vpop.f32.mrf.mxu0
  %v5862 = vadd.f32 %v5757, %v5861
  %v5863 = vpop.f32.mrf.mxu0
  %5864 = vmatprep.mubr.f32.mxu0 0.0
  %v5865 = vand.u32 %v5083, 4294901760
  %5866 = vmatmul.mubr.f32.gmra.mxu0 %v5865
  %v5867 = vpop.f32.mrf.mxu0
  %v5868 = vadd.f32 %v5763, %v5867
  %v5869 = vpop.f32.mrf.mxu0
  %5870 = vdwg.mxu0
  %v5871 = vadd.f32 %v5059, %v5850
  %v5872 = vadd.f32 %v5065, %v5856
  %v5873 = vadd.f32 %v5071, %v5862
  %v5874 = vadd.f32 %v5077, %v5868
  %v5875 = vadd.f32 %v5871, %v5872
  %v5876 = vadd.f32 %v5875, %v5873
  %v5877 = vadd.f32 %v5876, %v5874
  %v5878 = vrot.slane %v5877, 4
  %v5879 = vadd.f32 %v5877, %v5878
  %v5880 = vrot.slane %v5879, 2
  %v5881 = vadd.f32 %v5879, %v5880
  %v5882 = vrot.slane %v5881, 1
  %v5883 = vadd.f32 %v5881, %v5882
  %5884 = vmatprep.subr.mxu0 0.0
  %v5885 = vand.u32 %v50, 4294901760
  %5886 = vmatpush1.msra.mxu0 %v5885
  %5887 = vmatprep.subr.mxu0 0.0
  %v5888 = vand.u32 %v49, 4294901760
  %5889 = vmatpush1.msra.mxu0 %v5888
  %5890 = vmatprep.subr.mxu0 0.0
  %v5891 = vand.u32 %v48, 4294901760
  %5892 = vmatpush1.msra.mxu0 %v5891
  %5893 = vmatprep.subr.mxu0 0.0
  %v5894 = vand.u32 %v47, 4294901760
  %5895 = vmatpush1.msra.mxu0 %v5894
  %5896 = vmatprep.subr.mxu0 0.0
  %v5897 = vand.u32 %v46, 4294901760
  %5898 = vmatpush1.msra.mxu0 %v5897
  %5899 = vmatprep.subr.mxu0 0.0
  %v5900 = vand.u32 %v45, 4294901760
  %5901 = vmatpush1.msra.mxu0 %v5900
  %5902 = vmatprep.subr.mxu0 0.0
  %v5903 = vand.u32 %v44, 4294901760
  %5904 = vmatpush1.msra.mxu0 %v5903
  %5905 = vmatprep.subr.mxu0 0.0
  %v5906 = vand.u32 %v43, 4294901760
  %5907 = vmatpush1.msra.mxu0 %v5906
  %5908 = vmatprep.subr.mxu0 0.0
  %v5909 = vand.u32 %v42, 4294901760
  %5910 = vmatpush1.msra.mxu0 %v5909
  %5911 = vmatprep.subr.mxu0 0.0
  %v5912 = vand.u32 %v41, 4294901760
  %5913 = vmatpush1.msra.mxu0 %v5912
  %5914 = vmatprep.subr.mxu0 0.0
  %v5915 = vand.u32 %v40, 4294901760
  %5916 = vmatpush1.msra.mxu0 %v5915
  %5917 = vmatprep.subr.mxu0 0.0
  %v5918 = vand.u32 %v39, 4294901760
  %5919 = vmatpush1.msra.mxu0 %v5918
  %5920 = vmatprep.subr.mxu0 0.0
  %v5921 = vand.u32 %v38, 4294901760
  %5922 = vmatpush1.msra.mxu0 %v5921
  %5923 = vmatprep.subr.mxu0 0.0
  %v5924 = vand.u32 %v37, 4294901760
  %5925 = vmatpush1.msra.mxu0 %v5924
  %5926 = vmatprep.subr.mxu0 0.0
  %v5927 = vand.u32 %v36, 4294901760
  %5928 = vmatpush1.msra.mxu0 %v5927
  %5929 = vmatprep.subr.mxu0 0.0
  %v5930 = vand.u32 %v35, 4294901760
  %5931 = vmatpush1.msra.mxu0 %v5930
  %5932 = vmatprep.subr.mxu0 0.0
  %5933 = vmatpush2.msra.mxu0 0.0
  %5934 = vmatprep.subr.mxu0 0.0
  %5935 = vmatpush2.msra.mxu0 0.0
  %5936 = vmatprep.subr.mxu0 0.0
  %5937 = vmatpush2.msra.mxu0 0.0
  %5938 = vmatprep.subr.mxu0 0.0
  %5939 = vmatpush2.msra.mxu0 0.0
  %5940 = vmatprep.subr.mxu0 0.0
  %5941 = vmatpush2.msra.mxu0 0.0
  %5942 = vmatprep.subr.mxu0 0.0
  %5943 = vmatpush2.msra.mxu0 0.0
  %5944 = vmatprep.subr.mxu0 0.0
  %5945 = vmatpush2.msra.mxu0 0.0
  %5946 = vmatprep.subr.mxu0 0.0
  %5947 = vmatpush2.msra.mxu0 0.0
  %5948 = vmatprep.subr.mxu0 0.0
  %5949 = vmatpush2.msra.mxu0 0.0
  %5950 = vmatprep.subr.mxu0 0.0
  %5951 = vmatpush2.msra.mxu0 0.0
  %5952 = vmatprep.subr.mxu0 0.0
  %5953 = vmatpush2.msra.mxu0 0.0
  %5954 = vmatprep.subr.mxu0 0.0
  %5955 = vmatpush2.msra.mxu0 0.0
  %5956 = vmatprep.subr.mxu0 0.0
  %5957 = vmatpush2.msra.mxu0 0.0
  %5958 = vmatprep.subr.mxu0 0.0
  %5959 = vmatpush2.msra.mxu0 0.0
  %5960 = vmatprep.subr.mxu0 0.0
  %5961 = vmatpush2.msra.mxu0 0.0
  %5962 = vmatprep.subr.mxu0 0.0
  %5963 = vmatpush2.msra.mxu0 0.0
  %5964 = vmatprep.mubr.f32.mxu0 0.0
  %v5965 = vand.u32 %v5883, 4294901760
  %v5966 = vsub.f32 %v5883, %v5965
  %v5967 = vand.u32 %v5966, 4294901760
  %v5968 = vsub.f32 %v5966, %v5967
  %v5969 = vand.u32 %v5968, 4294901760
  %5970 = vmatmul.mubr.f32.gmra.mxu0 %v5969
  %v5971 = vpop.f32.mrf.mxu0
  %v5972 = vadd.f32 0.0, %v5971
  %v5973 = vpop.f32.mrf.mxu0
  %5974 = vdwg.mxu0
  %5975 = vmatprep.subr.mxu0 0.0
  %v5976 = vand.u32 %v50, 4294901760
  %v5977 = vsub.f32 %v50, %v5976
  %v5978 = vand.u32 %v5977, 4294901760
  %v5979 = vsub.f32 %v5977, %v5978
  %v5980 = vand.u32 %v5979, 4294901760
  %5981 = vmatpush1.msra.mxu0 %v5980
  %5982 = vmatprep.subr.mxu0 0.0
  %v5983 = vand.u32 %v49, 4294901760
  %v5984 = vsub.f32 %v49, %v5983
  %v5985 = vand.u32 %v5984, 4294901760
  %v5986 = vsub.f32 %v5984, %v5985
  %v5987 = vand.u32 %v5986, 4294901760
  %5988 = vmatpush1.msra.mxu0 %v5987
  %5989 = vmatprep.subr.mxu0 0.0
  %v5990 = vand.u32 %v48, 4294901760
  %v5991 = vsub.f32 %v48, %v5990
  %v5992 = vand.u32 %v5991, 4294901760
  %v5993 = vsub.f32 %v5991, %v5992
  %v5994 = vand.u32 %v5993, 4294901760
  %5995 = vmatpush1.msra.mxu0 %v5994
  %5996 = vmatprep.subr.mxu0 0.0
  %v5997 = vand.u32 %v47, 4294901760
  %v5998 = vsub.f32 %v47, %v5997
  %v5999 = vand.u32 %v5998, 4294901760
  %v6000 = vsub.f32 %v5998, %v5999
  %v6001 = vand.u32 %v6000, 4294901760
  %6002 = vmatpush1.msra.mxu0 %v6001
  %6003 = vmatprep.subr.mxu0 0.0
  %v6004 = vand.u32 %v46, 4294901760
  %v6005 = vsub.f32 %v46, %v6004
  %v6006 = vand.u32 %v6005, 4294901760
  %v6007 = vsub.f32 %v6005, %v6006
  %v6008 = vand.u32 %v6007, 4294901760
  %6009 = vmatpush1.msra.mxu0 %v6008
  %6010 = vmatprep.subr.mxu0 0.0
  %v6011 = vand.u32 %v45, 4294901760
  %v6012 = vsub.f32 %v45, %v6011
  %v6013 = vand.u32 %v6012, 4294901760
  %v6014 = vsub.f32 %v6012, %v6013
  %v6015 = vand.u32 %v6014, 4294901760
  %6016 = vmatpush1.msra.mxu0 %v6015
  %6017 = vmatprep.subr.mxu0 0.0
  %v6018 = vand.u32 %v44, 4294901760
  %v6019 = vsub.f32 %v44, %v6018
  %v6020 = vand.u32 %v6019, 4294901760
  %v6021 = vsub.f32 %v6019, %v6020
  %v6022 = vand.u32 %v6021, 4294901760
  %6023 = vmatpush1.msra.mxu0 %v6022
  %6024 = vmatprep.subr.mxu0 0.0
  %v6025 = vand.u32 %v43, 4294901760
  %v6026 = vsub.f32 %v43, %v6025
  %v6027 = vand.u32 %v6026, 4294901760
  %v6028 = vsub.f32 %v6026, %v6027
  %v6029 = vand.u32 %v6028, 4294901760
  %6030 = vmatpush1.msra.mxu0 %v6029
  %6031 = vmatprep.subr.mxu0 0.0
  %v6032 = vand.u32 %v42, 4294901760
  %v6033 = vsub.f32 %v42, %v6032
  %v6034 = vand.u32 %v6033, 4294901760
  %v6035 = vsub.f32 %v6033, %v6034
  %v6036 = vand.u32 %v6035, 4294901760
  %6037 = vmatpush1.msra.mxu0 %v6036
  %6038 = vmatprep.subr.mxu0 0.0
  %v6039 = vand.u32 %v41, 4294901760
  %v6040 = vsub.f32 %v41, %v6039
  %v6041 = vand.u32 %v6040, 4294901760
  %v6042 = vsub.f32 %v6040, %v6041
  %v6043 = vand.u32 %v6042, 4294901760
  %6044 = vmatpush1.msra.mxu0 %v6043
  %6045 = vmatprep.subr.mxu0 0.0
  %v6046 = vand.u32 %v40, 4294901760
  %v6047 = vsub.f32 %v40, %v6046
  %v6048 = vand.u32 %v6047, 4294901760
  %v6049 = vsub.f32 %v6047, %v6048
  %v6050 = vand.u32 %v6049, 4294901760
  %6051 = vmatpush1.msra.mxu0 %v6050
  %6052 = vmatprep.subr.mxu0 0.0
  %v6053 = vand.u32 %v39, 4294901760
  %v6054 = vsub.f32 %v39, %v6053
  %v6055 = vand.u32 %v6054, 4294901760
  %v6056 = vsub.f32 %v6054, %v6055
  %v6057 = vand.u32 %v6056, 4294901760
  %6058 = vmatpush1.msra.mxu0 %v6057
  %6059 = vmatprep.subr.mxu0 0.0
  %v6060 = vand.u32 %v38, 4294901760
  %v6061 = vsub.f32 %v38, %v6060
  %v6062 = vand.u32 %v6061, 4294901760
  %v6063 = vsub.f32 %v6061, %v6062
  %v6064 = vand.u32 %v6063, 4294901760
  %6065 = vmatpush1.msra.mxu0 %v6064
  %6066 = vmatprep.subr.mxu0 0.0
  %v6067 = vand.u32 %v37, 4294901760
  %v6068 = vsub.f32 %v37, %v6067
  %v6069 = vand.u32 %v6068, 4294901760
  %v6070 = vsub.f32 %v6068, %v6069
  %v6071 = vand.u32 %v6070, 4294901760
  %6072 = vmatpush1.msra.mxu0 %v6071
  %6073 = vmatprep.subr.mxu0 0.0
  %v6074 = vand.u32 %v36, 4294901760
  %v6075 = vsub.f32 %v36, %v6074
  %v6076 = vand.u32 %v6075, 4294901760
  %v6077 = vsub.f32 %v6075, %v6076
  %v6078 = vand.u32 %v6077, 4294901760
  %6079 = vmatpush1.msra.mxu0 %v6078
  %6080 = vmatprep.subr.mxu0 0.0
  %v6081 = vand.u32 %v35, 4294901760
  %v6082 = vsub.f32 %v35, %v6081
  %v6083 = vand.u32 %v6082, 4294901760
  %v6084 = vsub.f32 %v6082, %v6083
  %v6085 = vand.u32 %v6084, 4294901760
  %6086 = vmatpush1.msra.mxu0 %v6085
  %6087 = vmatprep.subr.mxu0 0.0
  %6088 = vmatpush2.msra.mxu0 0.0
  %6089 = vmatprep.subr.mxu0 0.0
  %6090 = vmatpush2.msra.mxu0 0.0
  %6091 = vmatprep.subr.mxu0 0.0
  %6092 = vmatpush2.msra.mxu0 0.0
  %6093 = vmatprep.subr.mxu0 0.0
  %6094 = vmatpush2.msra.mxu0 0.0
  %6095 = vmatprep.subr.mxu0 0.0
  %6096 = vmatpush2.msra.mxu0 0.0
  %6097 = vmatprep.subr.mxu0 0.0
  %6098 = vmatpush2.msra.mxu0 0.0
  %6099 = vmatprep.subr.mxu0 0.0
  %6100 = vmatpush2.msra.mxu0 0.0
  %6101 = vmatprep.subr.mxu0 0.0
  %6102 = vmatpush2.msra.mxu0 0.0
  %6103 = vmatprep.subr.mxu0 0.0
  %6104 = vmatpush2.msra.mxu0 0.0
  %6105 = vmatprep.subr.mxu0 0.0
  %6106 = vmatpush2.msra.mxu0 0.0
  %6107 = vmatprep.subr.mxu0 0.0
  %6108 = vmatpush2.msra.mxu0 0.0
  %6109 = vmatprep.subr.mxu0 0.0
  %6110 = vmatpush2.msra.mxu0 0.0
  %6111 = vmatprep.subr.mxu0 0.0
  %6112 = vmatpush2.msra.mxu0 0.0
  %6113 = vmatprep.subr.mxu0 0.0
  %6114 = vmatpush2.msra.mxu0 0.0
  %6115 = vmatprep.subr.mxu0 0.0
  %6116 = vmatpush2.msra.mxu0 0.0
  %6117 = vmatprep.subr.mxu0 0.0
  %6118 = vmatpush2.msra.mxu0 0.0
  %6119 = vmatprep.mubr.f32.mxu0 0.0
  %v6120 = vand.u32 %v5883, 4294901760
  %6121 = vmatmul.mubr.f32.gmra.mxu0 %v6120
  %v6122 = vpop.f32.mrf.mxu0
  %v6123 = vadd.f32 %v5972, %v6122
  %v6124 = vpop.f32.mrf.mxu0
  %6125 = vdwg.mxu0
  %6126 = vmatprep.subr.mxu0 0.0
  %v6127 = vand.u32 %v50, 4294901760
  %v6128 = vsub.f32 %v50, %v6127
  %6129 = vmatpush1.msra.mxu0 %v6128
  %6130 = vmatprep.subr.mxu0 0.0
  %v6131 = vand.u32 %v49, 4294901760
  %v6132 = vsub.f32 %v49, %v6131
  %6133 = vmatpush1.msra.mxu0 %v6132
  %6134 = vmatprep.subr.mxu0 0.0
  %v6135 = vand.u32 %v48, 4294901760
  %v6136 = vsub.f32 %v48, %v6135
  %6137 = vmatpush1.msra.mxu0 %v6136
  %6138 = vmatprep.subr.mxu0 0.0
  %v6139 = vand.u32 %v47, 4294901760
  %v6140 = vsub.f32 %v47, %v6139
  %6141 = vmatpush1.msra.mxu0 %v6140
  %6142 = vmatprep.subr.mxu0 0.0
  %v6143 = vand.u32 %v46, 4294901760
  %v6144 = vsub.f32 %v46, %v6143
  %6145 = vmatpush1.msra.mxu0 %v6144
  %6146 = vmatprep.subr.mxu0 0.0
  %v6147 = vand.u32 %v45, 4294901760
  %v6148 = vsub.f32 %v45, %v6147
  %6149 = vmatpush1.msra.mxu0 %v6148
  %6150 = vmatprep.subr.mxu0 0.0
  %v6151 = vand.u32 %v44, 4294901760
  %v6152 = vsub.f32 %v44, %v6151
  %6153 = vmatpush1.msra.mxu0 %v6152
  %6154 = vmatprep.subr.mxu0 0.0
  %v6155 = vand.u32 %v43, 4294901760
  %v6156 = vsub.f32 %v43, %v6155
  %6157 = vmatpush1.msra.mxu0 %v6156
  %6158 = vmatprep.subr.mxu0 0.0
  %v6159 = vand.u32 %v42, 4294901760
  %v6160 = vsub.f32 %v42, %v6159
  %6161 = vmatpush1.msra.mxu0 %v6160
  %6162 = vmatprep.subr.mxu0 0.0
  %v6163 = vand.u32 %v41, 4294901760
  %v6164 = vsub.f32 %v41, %v6163
  %6165 = vmatpush1.msra.mxu0 %v6164
  %6166 = vmatprep.subr.mxu0 0.0
  %v6167 = vand.u32 %v40, 4294901760
  %v6168 = vsub.f32 %v40, %v6167
  %6169 = vmatpush1.msra.mxu0 %v6168
  %6170 = vmatprep.subr.mxu0 0.0
  %v6171 = vand.u32 %v39, 4294901760
  %v6172 = vsub.f32 %v39, %v6171
  %6173 = vmatpush1.msra.mxu0 %v6172
  %6174 = vmatprep.subr.mxu0 0.0
  %v6175 = vand.u32 %v38, 4294901760
  %v6176 = vsub.f32 %v38, %v6175
  %6177 = vmatpush1.msra.mxu0 %v6176
  %6178 = vmatprep.subr.mxu0 0.0
  %v6179 = vand.u32 %v37, 4294901760
  %v6180 = vsub.f32 %v37, %v6179
  %6181 = vmatpush1.msra.mxu0 %v6180
  %6182 = vmatprep.subr.mxu0 0.0
  %v6183 = vand.u32 %v36, 4294901760
  %v6184 = vsub.f32 %v36, %v6183
  %6185 = vmatpush1.msra.mxu0 %v6184
  %6186 = vmatprep.subr.mxu0 0.0
  %v6187 = vand.u32 %v35, 4294901760
  %v6188 = vsub.f32 %v35, %v6187
  %6189 = vmatpush1.msra.mxu0 %v6188
  %6190 = vmatprep.subr.mxu0 0.0
  %6191 = vmatpush2.msra.mxu0 0.0
  %6192 = vmatprep.subr.mxu0 0.0
  %6193 = vmatpush2.msra.mxu0 0.0
  %6194 = vmatprep.subr.mxu0 0.0
  %6195 = vmatpush2.msra.mxu0 0.0
  %6196 = vmatprep.subr.mxu0 0.0
  %6197 = vmatpush2.msra.mxu0 0.0
  %6198 = vmatprep.subr.mxu0 0.0
  %6199 = vmatpush2.msra.mxu0 0.0
  %6200 = vmatprep.subr.mxu0 0.0
  %6201 = vmatpush2.msra.mxu0 0.0
  %6202 = vmatprep.subr.mxu0 0.0
  %6203 = vmatpush2.msra.mxu0 0.0
  %6204 = vmatprep.subr.mxu0 0.0
  %6205 = vmatpush2.msra.mxu0 0.0
  %6206 = vmatprep.subr.mxu0 0.0
  %6207 = vmatpush2.msra.mxu0 0.0
  %6208 = vmatprep.subr.mxu0 0.0
  %6209 = vmatpush2.msra.mxu0 0.0
  %6210 = vmatprep.subr.mxu0 0.0
  %6211 = vmatpush2.msra.mxu0 0.0
  %6212 = vmatprep.subr.mxu0 0.0
  %6213 = vmatpush2.msra.mxu0 0.0
  %6214 = vmatprep.subr.mxu0 0.0
  %6215 = vmatpush2.msra.mxu0 0.0
  %6216 = vmatprep.subr.mxu0 0.0
  %6217 = vmatpush2.msra.mxu0 0.0
  %6218 = vmatprep.subr.mxu0 0.0
  %6219 = vmatpush2.msra.mxu0 0.0
  %6220 = vmatprep.subr.mxu0 0.0
  %6221 = vmatpush2.msra.mxu0 0.0
  %6222 = vmatprep.mubr.f32.mxu0 0.0
  %v6223 = vand.u32 %v5883, 4294901760
  %v6224 = vsub.f32 %v5883, %v6223
  %6225 = vmatmul.mubr.f32.gmra.mxu0 %v6224
  %v6226 = vpop.f32.mrf.mxu0
  %v6227 = vadd.f32 %v6123, %v6226
  %v6228 = vpop.f32.mrf.mxu0
  %6229 = vdwg.mxu0
  %6230 = vmatprep.subr.mxu0 0.0
  %v6231 = vand.u32 %v50, 4294901760
  %6232 = vmatpush1.msra.mxu0 %v6231
  %6233 = vmatprep.subr.mxu0 0.0
  %v6234 = vand.u32 %v49, 4294901760
  %6235 = vmatpush1.msra.mxu0 %v6234
  %6236 = vmatprep.subr.mxu0 0.0
  %v6237 = vand.u32 %v48, 4294901760
  %6238 = vmatpush1.msra.mxu0 %v6237
  %6239 = vmatprep.subr.mxu0 0.0
  %v6240 = vand.u32 %v47, 4294901760
  %6241 = vmatpush1.msra.mxu0 %v6240
  %6242 = vmatprep.subr.mxu0 0.0
  %v6243 = vand.u32 %v46, 4294901760
  %6244 = vmatpush1.msra.mxu0 %v6243
  %6245 = vmatprep.subr.mxu0 0.0
  %v6246 = vand.u32 %v45, 4294901760
  %6247 = vmatpush1.msra.mxu0 %v6246
  %6248 = vmatprep.subr.mxu0 0.0
  %v6249 = vand.u32 %v44, 4294901760
  %6250 = vmatpush1.msra.mxu0 %v6249
  %6251 = vmatprep.subr.mxu0 0.0
  %v6252 = vand.u32 %v43, 4294901760
  %6253 = vmatpush1.msra.mxu0 %v6252
  %6254 = vmatprep.subr.mxu0 0.0
  %v6255 = vand.u32 %v42, 4294901760
  %6256 = vmatpush1.msra.mxu0 %v6255
  %6257 = vmatprep.subr.mxu0 0.0
  %v6258 = vand.u32 %v41, 4294901760
  %6259 = vmatpush1.msra.mxu0 %v6258
  %6260 = vmatprep.subr.mxu0 0.0
  %v6261 = vand.u32 %v40, 4294901760
  %6262 = vmatpush1.msra.mxu0 %v6261
  %6263 = vmatprep.subr.mxu0 0.0
  %v6264 = vand.u32 %v39, 4294901760
  %6265 = vmatpush1.msra.mxu0 %v6264
  %6266 = vmatprep.subr.mxu0 0.0
  %v6267 = vand.u32 %v38, 4294901760
  %6268 = vmatpush1.msra.mxu0 %v6267
  %6269 = vmatprep.subr.mxu0 0.0
  %v6270 = vand.u32 %v37, 4294901760
  %6271 = vmatpush1.msra.mxu0 %v6270
  %6272 = vmatprep.subr.mxu0 0.0
  %v6273 = vand.u32 %v36, 4294901760
  %6274 = vmatpush1.msra.mxu0 %v6273
  %6275 = vmatprep.subr.mxu0 0.0
  %v6276 = vand.u32 %v35, 4294901760
  %6277 = vmatpush1.msra.mxu0 %v6276
  %6278 = vmatprep.subr.mxu0 0.0
  %6279 = vmatpush2.msra.mxu0 0.0
  %6280 = vmatprep.subr.mxu0 0.0
  %6281 = vmatpush2.msra.mxu0 0.0
  %6282 = vmatprep.subr.mxu0 0.0
  %6283 = vmatpush2.msra.mxu0 0.0
  %6284 = vmatprep.subr.mxu0 0.0
  %6285 = vmatpush2.msra.mxu0 0.0
  %6286 = vmatprep.subr.mxu0 0.0
  %6287 = vmatpush2.msra.mxu0 0.0
  %6288 = vmatprep.subr.mxu0 0.0
  %6289 = vmatpush2.msra.mxu0 0.0
  %6290 = vmatprep.subr.mxu0 0.0
  %6291 = vmatpush2.msra.mxu0 0.0
  %6292 = vmatprep.subr.mxu0 0.0
  %6293 = vmatpush2.msra.mxu0 0.0
  %6294 = vmatprep.subr.mxu0 0.0
  %6295 = vmatpush2.msra.mxu0 0.0
  %6296 = vmatprep.subr.mxu0 0.0
  %6297 = vmatpush2.msra.mxu0 0.0
  %6298 = vmatprep.subr.mxu0 0.0
  %6299 = vmatpush2.msra.mxu0 0.0
  %6300 = vmatprep.subr.mxu0 0.0
  %6301 = vmatpush2.msra.mxu0 0.0
  %6302 = vmatprep.subr.mxu0 0.0
  %6303 = vmatpush2.msra.mxu0 0.0
  %6304 = vmatprep.subr.mxu0 0.0
  %6305 = vmatpush2.msra.mxu0 0.0
  %6306 = vmatprep.subr.mxu0 0.0
  %6307 = vmatpush2.msra.mxu0 0.0
  %6308 = vmatprep.subr.mxu0 0.0
  %6309 = vmatpush2.msra.mxu0 0.0
  %6310 = vmatprep.mubr.f32.mxu0 0.0
  %v6311 = vand.u32 %v5883, 4294901760
  %v6312 = vsub.f32 %v5883, %v6311
  %v6313 = vand.u32 %v6312, 4294901760
  %6314 = vmatmul.mubr.f32.gmra.mxu0 %v6313
  %v6315 = vpop.f32.mrf.mxu0
  %v6316 = vadd.f32 %v6227, %v6315
  %v6317 = vpop.f32.mrf.mxu0
  %6318 = vdwg.mxu0
  %6319 = vmatprep.subr.mxu0 0.0
  %v6320 = vand.u32 %v50, 4294901760
  %v6321 = vsub.f32 %v50, %v6320
  %v6322 = vand.u32 %v6321, 4294901760
  %6323 = vmatpush1.msra.mxu0 %v6322
  %6324 = vmatprep.subr.mxu0 0.0
  %v6325 = vand.u32 %v49, 4294901760
  %v6326 = vsub.f32 %v49, %v6325
  %v6327 = vand.u32 %v6326, 4294901760
  %6328 = vmatpush1.msra.mxu0 %v6327
  %6329 = vmatprep.subr.mxu0 0.0
  %v6330 = vand.u32 %v48, 4294901760
  %v6331 = vsub.f32 %v48, %v6330
  %v6332 = vand.u32 %v6331, 4294901760
  %6333 = vmatpush1.msra.mxu0 %v6332
  %6334 = vmatprep.subr.mxu0 0.0
  %v6335 = vand.u32 %v47, 4294901760
  %v6336 = vsub.f32 %v47, %v6335
  %v6337 = vand.u32 %v6336, 4294901760
  %6338 = vmatpush1.msra.mxu0 %v6337
  %6339 = vmatprep.subr.mxu0 0.0
  %v6340 = vand.u32 %v46, 4294901760
  %v6341 = vsub.f32 %v46, %v6340
  %v6342 = vand.u32 %v6341, 4294901760
  %6343 = vmatpush1.msra.mxu0 %v6342
  %6344 = vmatprep.subr.mxu0 0.0
  %v6345 = vand.u32 %v45, 4294901760
  %v6346 = vsub.f32 %v45, %v6345
  %v6347 = vand.u32 %v6346, 4294901760
  %6348 = vmatpush1.msra.mxu0 %v6347
  %6349 = vmatprep.subr.mxu0 0.0
  %v6350 = vand.u32 %v44, 4294901760
  %v6351 = vsub.f32 %v44, %v6350
  %v6352 = vand.u32 %v6351, 4294901760
  %6353 = vmatpush1.msra.mxu0 %v6352
  %6354 = vmatprep.subr.mxu0 0.0
  %v6355 = vand.u32 %v43, 4294901760
  %v6356 = vsub.f32 %v43, %v6355
  %v6357 = vand.u32 %v6356, 4294901760
  %6358 = vmatpush1.msra.mxu0 %v6357
  %6359 = vmatprep.subr.mxu0 0.0
  %v6360 = vand.u32 %v42, 4294901760
  %v6361 = vsub.f32 %v42, %v6360
  %v6362 = vand.u32 %v6361, 4294901760
  %6363 = vmatpush1.msra.mxu0 %v6362
  %6364 = vmatprep.subr.mxu0 0.0
  %v6365 = vand.u32 %v41, 4294901760
  %v6366 = vsub.f32 %v41, %v6365
  %v6367 = vand.u32 %v6366, 4294901760
  %6368 = vmatpush1.msra.mxu0 %v6367
  %6369 = vmatprep.subr.mxu0 0.0
  %v6370 = vand.u32 %v40, 4294901760
  %v6371 = vsub.f32 %v40, %v6370
  %v6372 = vand.u32 %v6371, 4294901760
  %6373 = vmatpush1.msra.mxu0 %v6372
  %6374 = vmatprep.subr.mxu0 0.0
  %v6375 = vand.u32 %v39, 4294901760
  %v6376 = vsub.f32 %v39, %v6375
  %v6377 = vand.u32 %v6376, 4294901760
  %6378 = vmatpush1.msra.mxu0 %v6377
  %6379 = vmatprep.subr.mxu0 0.0
  %v6380 = vand.u32 %v38, 4294901760
  %v6381 = vsub.f32 %v38, %v6380
  %v6382 = vand.u32 %v6381, 4294901760
  %6383 = vmatpush1.msra.mxu0 %v6382
  %6384 = vmatprep.subr.mxu0 0.0
  %v6385 = vand.u32 %v37, 4294901760
  %v6386 = vsub.f32 %v37, %v6385
  %v6387 = vand.u32 %v6386, 4294901760
  %6388 = vmatpush1.msra.mxu0 %v6387
  %6389 = vmatprep.subr.mxu0 0.0
  %v6390 = vand.u32 %v36, 4294901760
  %v6391 = vsub.f32 %v36, %v6390
  %v6392 = vand.u32 %v6391, 4294901760
  %6393 = vmatpush1.msra.mxu0 %v6392
  %6394 = vmatprep.subr.mxu0 0.0
  %v6395 = vand.u32 %v35, 4294901760
  %v6396 = vsub.f32 %v35, %v6395
  %v6397 = vand.u32 %v6396, 4294901760
  %6398 = vmatpush1.msra.mxu0 %v6397
  %6399 = vmatprep.subr.mxu0 0.0
  %6400 = vmatpush2.msra.mxu0 0.0
  %6401 = vmatprep.subr.mxu0 0.0
  %6402 = vmatpush2.msra.mxu0 0.0
  %6403 = vmatprep.subr.mxu0 0.0
  %6404 = vmatpush2.msra.mxu0 0.0
  %6405 = vmatprep.subr.mxu0 0.0
  %6406 = vmatpush2.msra.mxu0 0.0
  %6407 = vmatprep.subr.mxu0 0.0
  %6408 = vmatpush2.msra.mxu0 0.0
  %6409 = vmatprep.subr.mxu0 0.0
  %6410 = vmatpush2.msra.mxu0 0.0
  %6411 = vmatprep.subr.mxu0 0.0
  %6412 = vmatpush2.msra.mxu0 0.0
  %6413 = vmatprep.subr.mxu0 0.0
  %6414 = vmatpush2.msra.mxu0 0.0
  %6415 = vmatprep.subr.mxu0 0.0
  %6416 = vmatpush2.msra.mxu0 0.0
  %6417 = vmatprep.subr.mxu0 0.0
  %6418 = vmatpush2.msra.mxu0 0.0
  %6419 = vmatprep.subr.mxu0 0.0
  %6420 = vmatpush2.msra.mxu0 0.0
  %6421 = vmatprep.subr.mxu0 0.0
  %6422 = vmatpush2.msra.mxu0 0.0
  %6423 = vmatprep.subr.mxu0 0.0
  %6424 = vmatpush2.msra.mxu0 0.0
  %6425 = vmatprep.subr.mxu0 0.0
  %6426 = vmatpush2.msra.mxu0 0.0
  %6427 = vmatprep.subr.mxu0 0.0
  %6428 = vmatpush2.msra.mxu0 0.0
  %6429 = vmatprep.subr.mxu0 0.0
  %6430 = vmatpush2.msra.mxu0 0.0
  %6431 = vmatprep.mubr.f32.mxu0 0.0
  %v6432 = vand.u32 %v5883, 4294901760
  %6433 = vmatmul.mubr.f32.gmra.mxu0 %v6432
  %v6434 = vpop.f32.mrf.mxu0
  %v6435 = vadd.f32 %v6316, %v6434
  %v6436 = vpop.f32.mrf.mxu0
  %6437 = vdwg.mxu0
  %6438 = vmatprep.subr.mxu0 0.0
  %v6439 = vand.u32 %v50, 4294901760
  %6440 = vmatpush1.msra.mxu0 %v6439
  %6441 = vmatprep.subr.mxu0 0.0
  %v6442 = vand.u32 %v49, 4294901760
  %6443 = vmatpush1.msra.mxu0 %v6442
  %6444 = vmatprep.subr.mxu0 0.0
  %v6445 = vand.u32 %v48, 4294901760
  %6446 = vmatpush1.msra.mxu0 %v6445
  %6447 = vmatprep.subr.mxu0 0.0
  %v6448 = vand.u32 %v47, 4294901760
  %6449 = vmatpush1.msra.mxu0 %v6448
  %6450 = vmatprep.subr.mxu0 0.0
  %v6451 = vand.u32 %v46, 4294901760
  %6452 = vmatpush1.msra.mxu0 %v6451
  %6453 = vmatprep.subr.mxu0 0.0
  %v6454 = vand.u32 %v45, 4294901760
  %6455 = vmatpush1.msra.mxu0 %v6454
  %6456 = vmatprep.subr.mxu0 0.0
  %v6457 = vand.u32 %v44, 4294901760
  %6458 = vmatpush1.msra.mxu0 %v6457
  %6459 = vmatprep.subr.mxu0 0.0
  %v6460 = vand.u32 %v43, 4294901760
  %6461 = vmatpush1.msra.mxu0 %v6460
  %6462 = vmatprep.subr.mxu0 0.0
  %v6463 = vand.u32 %v42, 4294901760
  %6464 = vmatpush1.msra.mxu0 %v6463
  %6465 = vmatprep.subr.mxu0 0.0
  %v6466 = vand.u32 %v41, 4294901760
  %6467 = vmatpush1.msra.mxu0 %v6466
  %6468 = vmatprep.subr.mxu0 0.0
  %v6469 = vand.u32 %v40, 4294901760
  %6470 = vmatpush1.msra.mxu0 %v6469
  %6471 = vmatprep.subr.mxu0 0.0
  %v6472 = vand.u32 %v39, 4294901760
  %6473 = vmatpush1.msra.mxu0 %v6472
  %6474 = vmatprep.subr.mxu0 0.0
  %v6475 = vand.u32 %v38, 4294901760
  %6476 = vmatpush1.msra.mxu0 %v6475
  %6477 = vmatprep.subr.mxu0 0.0
  %v6478 = vand.u32 %v37, 4294901760
  %6479 = vmatpush1.msra.mxu0 %v6478
  %6480 = vmatprep.subr.mxu0 0.0
  %v6481 = vand.u32 %v36, 4294901760
  %6482 = vmatpush1.msra.mxu0 %v6481
  %6483 = vmatprep.subr.mxu0 0.0
  %v6484 = vand.u32 %v35, 4294901760
  %6485 = vmatpush1.msra.mxu0 %v6484
  %6486 = vmatprep.subr.mxu0 0.0
  %6487 = vmatpush2.msra.mxu0 0.0
  %6488 = vmatprep.subr.mxu0 0.0
  %6489 = vmatpush2.msra.mxu0 0.0
  %6490 = vmatprep.subr.mxu0 0.0
  %6491 = vmatpush2.msra.mxu0 0.0
  %6492 = vmatprep.subr.mxu0 0.0
  %6493 = vmatpush2.msra.mxu0 0.0
  %6494 = vmatprep.subr.mxu0 0.0
  %6495 = vmatpush2.msra.mxu0 0.0
  %6496 = vmatprep.subr.mxu0 0.0
  %6497 = vmatpush2.msra.mxu0 0.0
  %6498 = vmatprep.subr.mxu0 0.0
  %6499 = vmatpush2.msra.mxu0 0.0
  %6500 = vmatprep.subr.mxu0 0.0
  %6501 = vmatpush2.msra.mxu0 0.0
  %6502 = vmatprep.subr.mxu0 0.0
  %6503 = vmatpush2.msra.mxu0 0.0
  %6504 = vmatprep.subr.mxu0 0.0
  %6505 = vmatpush2.msra.mxu0 0.0
  %6506 = vmatprep.subr.mxu0 0.0
  %6507 = vmatpush2.msra.mxu0 0.0
  %6508 = vmatprep.subr.mxu0 0.0
  %6509 = vmatpush2.msra.mxu0 0.0
  %6510 = vmatprep.subr.mxu0 0.0
  %6511 = vmatpush2.msra.mxu0 0.0
  %6512 = vmatprep.subr.mxu0 0.0
  %6513 = vmatpush2.msra.mxu0 0.0
  %6514 = vmatprep.subr.mxu0 0.0
  %6515 = vmatpush2.msra.mxu0 0.0
  %6516 = vmatprep.subr.mxu0 0.0
  %6517 = vmatpush2.msra.mxu0 0.0
  %6518 = vmatprep.mubr.f32.mxu0 0.0
  %v6519 = vand.u32 %v5883, 4294901760
  %6520 = vmatmul.mubr.f32.gmra.mxu0 %v6519
  %v6521 = vpop.f32.mrf.mxu0
  %v6522 = vadd.f32 %v6435, %v6521
  %v6523 = vpop.f32.mrf.mxu0
  %6524 = vdwg.mxu0
  %v6525 = vmul.f32 %v6522, 0.001953125
  %v6526 = vlaneseq
  %v6527 = vshrl.u32 %v6526, 7
  %v6528 = vsub.s32 0, %v6527
  %v6529 = vrot.slane %v6525, %v6528
  %v6530 = vsub.f32 %v5871, %v6529
  %v6531 = vsub.f32 %v5872, %v6529
  %v6532 = vsub.f32 %v5873, %v6529
  %v6533 = vsub.f32 %v5874, %v6529
  %v6534 = vmul.f32 %v6530, %v6530
  %v6535 = vmul.f32 %v6531, %v6531
  %v6536 = vmul.f32 %v6532, %v6532
  %v6537 = vmul.f32 %v6533, %v6533
  %v6538 = vadd.f32 %v6534, %v6535
  %v6539 = vadd.f32 %v6538, %v6536
  %v6540 = vadd.f32 %v6539, %v6537
  %v6541 = vrot.slane %v6540, 4
  %v6542 = vadd.f32 %v6540, %v6541
  %v6543 = vrot.slane %v6542, 2
  %v6544 = vadd.f32 %v6542, %v6543
  %v6545 = vrot.slane %v6544, 1
  %v6546 = vadd.f32 %v6544, %v6545
  %6547 = vmatprep.subr.mxu0 0.0
  %v6548 = vand.u32 %v50, 4294901760
  %6549 = vmatpush1.msra.mxu0 %v6548
  %6550 = vmatprep.subr.mxu0 0.0
  %v6551 = vand.u32 %v49, 4294901760
  %6552 = vmatpush1.msra.mxu0 %v6551
  %6553 = vmatprep.subr.mxu0 0.0
  %v6554 = vand.u32 %v48, 4294901760
  %6555 = vmatpush1.msra.mxu0 %v6554
  %6556 = vmatprep.subr.mxu0 0.0
  %v6557 = vand.u32 %v47, 4294901760
  %6558 = vmatpush1.msra.mxu0 %v6557
  %6559 = vmatprep.subr.mxu0 0.0
  %v6560 = vand.u32 %v46, 4294901760
  %6561 = vmatpush1.msra.mxu0 %v6560
  %6562 = vmatprep.subr.mxu0 0.0
  %v6563 = vand.u32 %v45, 4294901760
  %6564 = vmatpush1.msra.mxu0 %v6563
  %6565 = vmatprep.subr.mxu0 0.0
  %v6566 = vand.u32 %v44, 4294901760
  %6567 = vmatpush1.msra.mxu0 %v6566
  %6568 = vmatprep.subr.mxu0 0.0
  %v6569 = vand.u32 %v43, 4294901760
  %6570 = vmatpush1.msra.mxu0 %v6569
  %6571 = vmatprep.subr.mxu0 0.0
  %v6572 = vand.u32 %v42, 4294901760
  %6573 = vmatpush1.msra.mxu0 %v6572
  %6574 = vmatprep.subr.mxu0 0.0
  %v6575 = vand.u32 %v41, 4294901760
  %6576 = vmatpush1.msra.mxu0 %v6575
  %6577 = vmatprep.subr.mxu0 0.0
  %v6578 = vand.u32 %v40, 4294901760
  %6579 = vmatpush1.msra.mxu0 %v6578
  %6580 = vmatprep.subr.mxu0 0.0
  %v6581 = vand.u32 %v39, 4294901760
  %6582 = vmatpush1.msra.mxu0 %v6581
  %6583 = vmatprep.subr.mxu0 0.0
  %v6584 = vand.u32 %v38, 4294901760
  %6585 = vmatpush1.msra.mxu0 %v6584
  %6586 = vmatprep.subr.mxu0 0.0
  %v6587 = vand.u32 %v37, 4294901760
  %6588 = vmatpush1.msra.mxu0 %v6587
  %6589 = vmatprep.subr.mxu0 0.0
  %v6590 = vand.u32 %v36, 4294901760
  %6591 = vmatpush1.msra.mxu0 %v6590
  %6592 = vmatprep.subr.mxu0 0.0
  %v6593 = vand.u32 %v35, 4294901760
  %6594 = vmatpush1.msra.mxu0 %v6593
  %6595 = vmatprep.subr.mxu0 0.0
  %6596 = vmatpush2.msra.mxu0 0.0
  %6597 = vmatprep.subr.mxu0 0.0
  %6598 = vmatpush2.msra.mxu0 0.0
  %6599 = vmatprep.subr.mxu0 0.0
  %6600 = vmatpush2.msra.mxu0 0.0
  %6601 = vmatprep.subr.mxu0 0.0
  %6602 = vmatpush2.msra.mxu0 0.0
  %6603 = vmatprep.subr.mxu0 0.0
  %6604 = vmatpush2.msra.mxu0 0.0
  %6605 = vmatprep.subr.mxu0 0.0
  %6606 = vmatpush2.msra.mxu0 0.0
  %6607 = vmatprep.subr.mxu0 0.0
  %6608 = vmatpush2.msra.mxu0 0.0
  %6609 = vmatprep.subr.mxu0 0.0
  %6610 = vmatpush2.msra.mxu0 0.0
  %6611 = vmatprep.subr.mxu0 0.0
  %6612 = vmatpush2.msra.mxu0 0.0
  %6613 = vmatprep.subr.mxu0 0.0
  %6614 = vmatpush2.msra.mxu0 0.0
  %6615 = vmatprep.subr.mxu0 0.0
  %6616 = vmatpush2.msra.mxu0 0.0
  %6617 = vmatprep.subr.mxu0 0.0
  %6618 = vmatpush2.msra.mxu0 0.0
  %6619 = vmatprep.subr.mxu0 0.0
  %6620 = vmatpush2.msra.mxu0 0.0
  %6621 = vmatprep.subr.mxu0 0.0
  %6622 = vmatpush2.msra.mxu0 0.0
  %6623 = vmatprep.subr.mxu0 0.0
  %6624 = vmatpush2.msra.mxu0 0.0
  %6625 = vmatprep.subr.mxu0 0.0
  %6626 = vmatpush2.msra.mxu0 0.0
  %6627 = vmatprep.mubr.f32.mxu0 0.0
  %v6628 = vand.u32 %v6546, 4294901760
  %v6629 = vsub.f32 %v6546, %v6628
  %v6630 = vand.u32 %v6629, 4294901760
  %v6631 = vsub.f32 %v6629, %v6630
  %v6632 = vand.u32 %v6631, 4294901760
  %6633 = vmatmul.mubr.f32.gmra.mxu0 %v6632
  %v6634 = vpop.f32.mrf.mxu0
  %v6635 = vadd.f32 0.0, %v6634
  %v6636 = vpop.f32.mrf.mxu0
  %6637 = vdwg.mxu0
  %6638 = vmatprep.subr.mxu0 0.0
  %v6639 = vand.u32 %v50, 4294901760
  %v6640 = vsub.f32 %v50, %v6639
  %v6641 = vand.u32 %v6640, 4294901760
  %v6642 = vsub.f32 %v6640, %v6641
  %v6643 = vand.u32 %v6642, 4294901760
  %6644 = vmatpush1.msra.mxu0 %v6643
  %6645 = vmatprep.subr.mxu0 0.0
  %v6646 = vand.u32 %v49, 4294901760
  %v6647 = vsub.f32 %v49, %v6646
  %v6648 = vand.u32 %v6647, 4294901760
  %v6649 = vsub.f32 %v6647, %v6648
  %v6650 = vand.u32 %v6649, 4294901760
  %6651 = vmatpush1.msra.mxu0 %v6650
  %6652 = vmatprep.subr.mxu0 0.0
  %v6653 = vand.u32 %v48, 4294901760
  %v6654 = vsub.f32 %v48, %v6653
  %v6655 = vand.u32 %v6654, 4294901760
  %v6656 = vsub.f32 %v6654, %v6655
  %v6657 = vand.u32 %v6656, 4294901760
  %6658 = vmatpush1.msra.mxu0 %v6657
  %6659 = vmatprep.subr.mxu0 0.0
  %v6660 = vand.u32 %v47, 4294901760
  %v6661 = vsub.f32 %v47, %v6660
  %v6662 = vand.u32 %v6661, 4294901760
  %v6663 = vsub.f32 %v6661, %v6662
  %v6664 = vand.u32 %v6663, 4294901760
  %6665 = vmatpush1.msra.mxu0 %v6664
  %6666 = vmatprep.subr.mxu0 0.0
  %v6667 = vand.u32 %v46, 4294901760
  %v6668 = vsub.f32 %v46, %v6667
  %v6669 = vand.u32 %v6668, 4294901760
  %v6670 = vsub.f32 %v6668, %v6669
  %v6671 = vand.u32 %v6670, 4294901760
  %6672 = vmatpush1.msra.mxu0 %v6671
  %6673 = vmatprep.subr.mxu0 0.0
  %v6674 = vand.u32 %v45, 4294901760
  %v6675 = vsub.f32 %v45, %v6674
  %v6676 = vand.u32 %v6675, 4294901760
  %v6677 = vsub.f32 %v6675, %v6676
  %v6678 = vand.u32 %v6677, 4294901760
  %6679 = vmatpush1.msra.mxu0 %v6678
  %6680 = vmatprep.subr.mxu0 0.0
  %v6681 = vand.u32 %v44, 4294901760
  %v6682 = vsub.f32 %v44, %v6681
  %v6683 = vand.u32 %v6682, 4294901760
  %v6684 = vsub.f32 %v6682, %v6683
  %v6685 = vand.u32 %v6684, 4294901760
  %6686 = vmatpush1.msra.mxu0 %v6685
  %6687 = vmatprep.subr.mxu0 0.0
  %v6688 = vand.u32 %v43, 4294901760
  %v6689 = vsub.f32 %v43, %v6688
  %v6690 = vand.u32 %v6689, 4294901760
  %v6691 = vsub.f32 %v6689, %v6690
  %v6692 = vand.u32 %v6691, 4294901760
  %6693 = vmatpush1.msra.mxu0 %v6692
  %6694 = vmatprep.subr.mxu0 0.0
  %v6695 = vand.u32 %v42, 4294901760
  %v6696 = vsub.f32 %v42, %v6695
  %v6697 = vand.u32 %v6696, 4294901760
  %v6698 = vsub.f32 %v6696, %v6697
  %v6699 = vand.u32 %v6698, 4294901760
  %6700 = vmatpush1.msra.mxu0 %v6699
  %6701 = vmatprep.subr.mxu0 0.0
  %v6702 = vand.u32 %v41, 4294901760
  %v6703 = vsub.f32 %v41, %v6702
  %v6704 = vand.u32 %v6703, 4294901760
  %v6705 = vsub.f32 %v6703, %v6704
  %v6706 = vand.u32 %v6705, 4294901760
  %6707 = vmatpush1.msra.mxu0 %v6706
  %6708 = vmatprep.subr.mxu0 0.0
  %v6709 = vand.u32 %v40, 4294901760
  %v6710 = vsub.f32 %v40, %v6709
  %v6711 = vand.u32 %v6710, 4294901760
  %v6712 = vsub.f32 %v6710, %v6711
  %v6713 = vand.u32 %v6712, 4294901760
  %6714 = vmatpush1.msra.mxu0 %v6713
  %6715 = vmatprep.subr.mxu0 0.0
  %v6716 = vand.u32 %v39, 4294901760
  %v6717 = vsub.f32 %v39, %v6716
  %v6718 = vand.u32 %v6717, 4294901760
  %v6719 = vsub.f32 %v6717, %v6718
  %v6720 = vand.u32 %v6719, 4294901760
  %6721 = vmatpush1.msra.mxu0 %v6720
  %6722 = vmatprep.subr.mxu0 0.0
  %v6723 = vand.u32 %v38, 4294901760
  %v6724 = vsub.f32 %v38, %v6723
  %v6725 = vand.u32 %v6724, 4294901760
  %v6726 = vsub.f32 %v6724, %v6725
  %v6727 = vand.u32 %v6726, 4294901760
  %6728 = vmatpush1.msra.mxu0 %v6727
  %6729 = vmatprep.subr.mxu0 0.0
  %v6730 = vand.u32 %v37, 4294901760
  %v6731 = vsub.f32 %v37, %v6730
  %v6732 = vand.u32 %v6731, 4294901760
  %v6733 = vsub.f32 %v6731, %v6732
  %v6734 = vand.u32 %v6733, 4294901760
  %6735 = vmatpush1.msra.mxu0 %v6734
  %6736 = vmatprep.subr.mxu0 0.0
  %v6737 = vand.u32 %v36, 4294901760
  %v6738 = vsub.f32 %v36, %v6737
  %v6739 = vand.u32 %v6738, 4294901760
  %v6740 = vsub.f32 %v6738, %v6739
  %v6741 = vand.u32 %v6740, 4294901760
  %6742 = vmatpush1.msra.mxu0 %v6741
  %6743 = vmatprep.subr.mxu0 0.0
  %v6744 = vand.u32 %v35, 4294901760
  %v6745 = vsub.f32 %v35, %v6744
  %v6746 = vand.u32 %v6745, 4294901760
  %v6747 = vsub.f32 %v6745, %v6746
  %v6748 = vand.u32 %v6747, 4294901760
  %6749 = vmatpush1.msra.mxu0 %v6748
  %6750 = vmatprep.subr.mxu0 0.0
  %6751 = vmatpush2.msra.mxu0 0.0
  %6752 = vmatprep.subr.mxu0 0.0
  %6753 = vmatpush2.msra.mxu0 0.0
  %6754 = vmatprep.subr.mxu0 0.0
  %6755 = vmatpush2.msra.mxu0 0.0
  %6756 = vmatprep.subr.mxu0 0.0
  %6757 = vmatpush2.msra.mxu0 0.0
  %6758 = vmatprep.subr.mxu0 0.0
  %6759 = vmatpush2.msra.mxu0 0.0
  %6760 = vmatprep.subr.mxu0 0.0
  %6761 = vmatpush2.msra.mxu0 0.0
  %6762 = vmatprep.subr.mxu0 0.0
  %6763 = vmatpush2.msra.mxu0 0.0
  %6764 = vmatprep.subr.mxu0 0.0
  %6765 = vmatpush2.msra.mxu0 0.0
  %6766 = vmatprep.subr.mxu0 0.0
  %6767 = vmatpush2.msra.mxu0 0.0
  %6768 = vmatprep.subr.mxu0 0.0
  %6769 = vmatpush2.msra.mxu0 0.0
  %6770 = vmatprep.subr.mxu0 0.0
  %6771 = vmatpush2.msra.mxu0 0.0
  %6772 = vmatprep.subr.mxu0 0.0
  %6773 = vmatpush2.msra.mxu0 0.0
  %6774 = vmatprep.subr.mxu0 0.0
  %6775 = vmatpush2.msra.mxu0 0.0
  %6776 = vmatprep.subr.mxu0 0.0
  %6777 = vmatpush2.msra.mxu0 0.0
  %6778 = vmatprep.subr.mxu0 0.0
  %6779 = vmatpush2.msra.mxu0 0.0
  %6780 = vmatprep.subr.mxu0 0.0
  %6781 = vmatpush2.msra.mxu0 0.0
  %6782 = vmatprep.mubr.f32.mxu0 0.0
  %v6783 = vand.u32 %v6546, 4294901760
  %6784 = vmatmul.mubr.f32.gmra.mxu0 %v6783
  %v6785 = vpop.f32.mrf.mxu0
  %v6786 = vadd.f32 %v6635, %v6785
  %v6787 = vpop.f32.mrf.mxu0
  %6788 = vdwg.mxu0
  %6789 = vmatprep.subr.mxu0 0.0
  %v6790 = vand.u32 %v50, 4294901760
  %v6791 = vsub.f32 %v50, %v6790
  %6792 = vmatpush1.msra.mxu0 %v6791
  %6793 = vmatprep.subr.mxu0 0.0
  %v6794 = vand.u32 %v49, 4294901760
  %v6795 = vsub.f32 %v49, %v6794
  %6796 = vmatpush1.msra.mxu0 %v6795
  %6797 = vmatprep.subr.mxu0 0.0
  %v6798 = vand.u32 %v48, 4294901760
  %v6799 = vsub.f32 %v48, %v6798
  %6800 = vmatpush1.msra.mxu0 %v6799
  %6801 = vmatprep.subr.mxu0 0.0
  %v6802 = vand.u32 %v47, 4294901760
  %v6803 = vsub.f32 %v47, %v6802
  %6804 = vmatpush1.msra.mxu0 %v6803
  %6805 = vmatprep.subr.mxu0 0.0
  %v6806 = vand.u32 %v46, 4294901760
  %v6807 = vsub.f32 %v46, %v6806
  %6808 = vmatpush1.msra.mxu0 %v6807
  %6809 = vmatprep.subr.mxu0 0.0
  %v6810 = vand.u32 %v45, 4294901760
  %v6811 = vsub.f32 %v45, %v6810
  %6812 = vmatpush1.msra.mxu0 %v6811
  %6813 = vmatprep.subr.mxu0 0.0
  %v6814 = vand.u32 %v44, 4294901760
  %v6815 = vsub.f32 %v44, %v6814
  %6816 = vmatpush1.msra.mxu0 %v6815
  %6817 = vmatprep.subr.mxu0 0.0
  %v6818 = vand.u32 %v43, 4294901760
  %v6819 = vsub.f32 %v43, %v6818
  %6820 = vmatpush1.msra.mxu0 %v6819
  %6821 = vmatprep.subr.mxu0 0.0
  %v6822 = vand.u32 %v42, 4294901760
  %v6823 = vsub.f32 %v42, %v6822
  %6824 = vmatpush1.msra.mxu0 %v6823
  %6825 = vmatprep.subr.mxu0 0.0
  %v6826 = vand.u32 %v41, 4294901760
  %v6827 = vsub.f32 %v41, %v6826
  %6828 = vmatpush1.msra.mxu0 %v6827
  %6829 = vmatprep.subr.mxu0 0.0
  %v6830 = vand.u32 %v40, 4294901760
  %v6831 = vsub.f32 %v40, %v6830
  %6832 = vmatpush1.msra.mxu0 %v6831
  %6833 = vmatprep.subr.mxu0 0.0
  %v6834 = vand.u32 %v39, 4294901760
  %v6835 = vsub.f32 %v39, %v6834
  %6836 = vmatpush1.msra.mxu0 %v6835
  %6837 = vmatprep.subr.mxu0 0.0
  %v6838 = vand.u32 %v38, 4294901760
  %v6839 = vsub.f32 %v38, %v6838
  %6840 = vmatpush1.msra.mxu0 %v6839
  %6841 = vmatprep.subr.mxu0 0.0
  %v6842 = vand.u32 %v37, 4294901760
  %v6843 = vsub.f32 %v37, %v6842
  %6844 = vmatpush1.msra.mxu0 %v6843
  %6845 = vmatprep.subr.mxu0 0.0
  %v6846 = vand.u32 %v36, 4294901760
  %v6847 = vsub.f32 %v36, %v6846
  %6848 = vmatpush1.msra.mxu0 %v6847
  %6849 = vmatprep.subr.mxu0 0.0
  %v6850 = vand.u32 %v35, 4294901760
  %v6851 = vsub.f32 %v35, %v6850
  %6852 = vmatpush1.msra.mxu0 %v6851
  %6853 = vmatprep.subr.mxu0 0.0
  %6854 = vmatpush2.msra.mxu0 0.0
  %6855 = vmatprep.subr.mxu0 0.0
  %6856 = vmatpush2.msra.mxu0 0.0
  %6857 = vmatprep.subr.mxu0 0.0
  %6858 = vmatpush2.msra.mxu0 0.0
  %6859 = vmatprep.subr.mxu0 0.0
  %6860 = vmatpush2.msra.mxu0 0.0
  %6861 = vmatprep.subr.mxu0 0.0
  %6862 = vmatpush2.msra.mxu0 0.0
  %6863 = vmatprep.subr.mxu0 0.0
  %6864 = vmatpush2.msra.mxu0 0.0
  %6865 = vmatprep.subr.mxu0 0.0
  %6866 = vmatpush2.msra.mxu0 0.0
  %6867 = vmatprep.subr.mxu0 0.0
  %6868 = vmatpush2.msra.mxu0 0.0
  %6869 = vmatprep.subr.mxu0 0.0
  %6870 = vmatpush2.msra.mxu0 0.0
  %6871 = vmatprep.subr.mxu0 0.0
  %6872 = vmatpush2.msra.mxu0 0.0
  %6873 = vmatprep.subr.mxu0 0.0
  %6874 = vmatpush2.msra.mxu0 0.0
  %6875 = vmatprep.subr.mxu0 0.0
  %6876 = vmatpush2.msra.mxu0 0.0
  %6877 = vmatprep.subr.mxu0 0.0
  %6878 = vmatpush2.msra.mxu0 0.0
  %6879 = vmatprep.subr.mxu0 0.0
  %6880 = vmatpush2.msra.mxu0 0.0
  %6881 = vmatprep.subr.mxu0 0.0
  %6882 = vmatpush2.msra.mxu0 0.0
  %6883 = vmatprep.subr.mxu0 0.0
  %6884 = vmatpush2.msra.mxu0 0.0
  %6885 = vmatprep.mubr.f32.mxu0 0.0
  %v6886 = vand.u32 %v6546, 4294901760
  %v6887 = vsub.f32 %v6546, %v6886
  %6888 = vmatmul.mubr.f32.gmra.mxu0 %v6887
  %v6889 = vpop.f32.mrf.mxu0
  %v6890 = vadd.f32 %v6786, %v6889
  %v6891 = vpop.f32.mrf.mxu0
  %6892 = vdwg.mxu0
  %6893 = vmatprep.subr.mxu0 0.0
  %v6894 = vand.u32 %v50, 4294901760
  %6895 = vmatpush1.msra.mxu0 %v6894
  %6896 = vmatprep.subr.mxu0 0.0
  %v6897 = vand.u32 %v49, 4294901760
  %6898 = vmatpush1.msra.mxu0 %v6897
  %6899 = vmatprep.subr.mxu0 0.0
  %v6900 = vand.u32 %v48, 4294901760
  %6901 = vmatpush1.msra.mxu0 %v6900
  %6902 = vmatprep.subr.mxu0 0.0
  %v6903 = vand.u32 %v47, 4294901760
  %6904 = vmatpush1.msra.mxu0 %v6903
  %6905 = vmatprep.subr.mxu0 0.0
  %v6906 = vand.u32 %v46, 4294901760
  %6907 = vmatpush1.msra.mxu0 %v6906
  %6908 = vmatprep.subr.mxu0 0.0
  %v6909 = vand.u32 %v45, 4294901760
  %6910 = vmatpush1.msra.mxu0 %v6909
  %6911 = vmatprep.subr.mxu0 0.0
  %v6912 = vand.u32 %v44, 4294901760
  %6913 = vmatpush1.msra.mxu0 %v6912
  %6914 = vmatprep.subr.mxu0 0.0
  %v6915 = vand.u32 %v43, 4294901760
  %6916 = vmatpush1.msra.mxu0 %v6915
  %6917 = vmatprep.subr.mxu0 0.0
  %v6918 = vand.u32 %v42, 4294901760
  %6919 = vmatpush1.msra.mxu0 %v6918
  %6920 = vmatprep.subr.mxu0 0.0
  %v6921 = vand.u32 %v41, 4294901760
  %6922 = vmatpush1.msra.mxu0 %v6921
  %6923 = vmatprep.subr.mxu0 0.0
  %v6924 = vand.u32 %v40, 4294901760
  %6925 = vmatpush1.msra.mxu0 %v6924
  %6926 = vmatprep.subr.mxu0 0.0
  %v6927 = vand.u32 %v39, 4294901760
  %6928 = vmatpush1.msra.mxu0 %v6927
  %6929 = vmatprep.subr.mxu0 0.0
  %v6930 = vand.u32 %v38, 4294901760
  %6931 = vmatpush1.msra.mxu0 %v6930
  %6932 = vmatprep.subr.mxu0 0.0
  %v6933 = vand.u32 %v37, 4294901760
  %6934 = vmatpush1.msra.mxu0 %v6933
  %6935 = vmatprep.subr.mxu0 0.0
  %v6936 = vand.u32 %v36, 4294901760
  %6937 = vmatpush1.msra.mxu0 %v6936
  %6938 = vmatprep.subr.mxu0 0.0
  %v6939 = vand.u32 %v35, 4294901760
  %6940 = vmatpush1.msra.mxu0 %v6939
  %6941 = vmatprep.subr.mxu0 0.0
  %6942 = vmatpush2.msra.mxu0 0.0
  %6943 = vmatprep.subr.mxu0 0.0
  %6944 = vmatpush2.msra.mxu0 0.0
  %6945 = vmatprep.subr.mxu0 0.0
  %6946 = vmatpush2.msra.mxu0 0.0
  %6947 = vmatprep.subr.mxu0 0.0
  %6948 = vmatpush2.msra.mxu0 0.0
  %6949 = vmatprep.subr.mxu0 0.0
  %6950 = vmatpush2.msra.mxu0 0.0
  %6951 = vmatprep.subr.mxu0 0.0
  %6952 = vmatpush2.msra.mxu0 0.0
  %6953 = vmatprep.subr.mxu0 0.0
  %6954 = vmatpush2.msra.mxu0 0.0
  %6955 = vmatprep.subr.mxu0 0.0
  %6956 = vmatpush2.msra.mxu0 0.0
  %6957 = vmatprep.subr.mxu0 0.0
  %6958 = vmatpush2.msra.mxu0 0.0
  %6959 = vmatprep.subr.mxu0 0.0
  %6960 = vmatpush2.msra.mxu0 0.0
  %6961 = vmatprep.subr.mxu0 0.0
  %6962 = vmatpush2.msra.mxu0 0.0
  %6963 = vmatprep.subr.mxu0 0.0
  %6964 = vmatpush2.msra.mxu0 0.0
  %6965 = vmatprep.subr.mxu0 0.0
  %6966 = vmatpush2.msra.mxu0 0.0
  %6967 = vmatprep.subr.mxu0 0.0
  %6968 = vmatpush2.msra.mxu0 0.0
  %6969 = vmatprep.subr.mxu0 0.0
  %6970 = vmatpush2.msra.mxu0 0.0
  %6971 = vmatprep.subr.mxu0 0.0
  %6972 = vmatpush2.msra.mxu0 0.0
  %6973 = vmatprep.mubr.f32.mxu0 0.0
  %v6974 = vand.u32 %v6546, 4294901760
  %v6975 = vsub.f32 %v6546, %v6974
  %v6976 = vand.u32 %v6975, 4294901760
  %6977 = vmatmul.mubr.f32.gmra.mxu0 %v6976
  %v6978 = vpop.f32.mrf.mxu0
  %v6979 = vadd.f32 %v6890, %v6978
  %v6980 = vpop.f32.mrf.mxu0
  %6981 = vdwg.mxu0
  %6982 = vmatprep.subr.mxu0 0.0
  %v6983 = vand.u32 %v50, 4294901760
  %v6984 = vsub.f32 %v50, %v6983
  %v6985 = vand.u32 %v6984, 4294901760
  %6986 = vmatpush1.msra.mxu0 %v6985
  %6987 = vmatprep.subr.mxu0 0.0
  %v6988 = vand.u32 %v49, 4294901760
  %v6989 = vsub.f32 %v49, %v6988
  %v6990 = vand.u32 %v6989, 4294901760
  %6991 = vmatpush1.msra.mxu0 %v6990
  %6992 = vmatprep.subr.mxu0 0.0
  %v6993 = vand.u32 %v48, 4294901760
  %v6994 = vsub.f32 %v48, %v6993
  %v6995 = vand.u32 %v6994, 4294901760
  %6996 = vmatpush1.msra.mxu0 %v6995
  %6997 = vmatprep.subr.mxu0 0.0
  %v6998 = vand.u32 %v47, 4294901760
  %v6999 = vsub.f32 %v47, %v6998
  %v7000 = vand.u32 %v6999, 4294901760
  %7001 = vmatpush1.msra.mxu0 %v7000
  %7002 = vmatprep.subr.mxu0 0.0
  %v7003 = vand.u32 %v46, 4294901760
  %v7004 = vsub.f32 %v46, %v7003
  %v7005 = vand.u32 %v7004, 4294901760
  %7006 = vmatpush1.msra.mxu0 %v7005
  %7007 = vmatprep.subr.mxu0 0.0
  %v7008 = vand.u32 %v45, 4294901760
  %v7009 = vsub.f32 %v45, %v7008
  %v7010 = vand.u32 %v7009, 4294901760
  %7011 = vmatpush1.msra.mxu0 %v7010
  %7012 = vmatprep.subr.mxu0 0.0
  %v7013 = vand.u32 %v44, 4294901760
  %v7014 = vsub.f32 %v44, %v7013
  %v7015 = vand.u32 %v7014, 4294901760
  %7016 = vmatpush1.msra.mxu0 %v7015
  %7017 = vmatprep.subr.mxu0 0.0
  %v7018 = vand.u32 %v43, 4294901760
  %v7019 = vsub.f32 %v43, %v7018
  %v7020 = vand.u32 %v7019, 4294901760
  %7021 = vmatpush1.msra.mxu0 %v7020
  %7022 = vmatprep.subr.mxu0 0.0
  %v7023 = vand.u32 %v42, 4294901760
  %v7024 = vsub.f32 %v42, %v7023
  %v7025 = vand.u32 %v7024, 4294901760
  %7026 = vmatpush1.msra.mxu0 %v7025
  %7027 = vmatprep.subr.mxu0 0.0
  %v7028 = vand.u32 %v41, 4294901760
  %v7029 = vsub.f32 %v41, %v7028
  %v7030 = vand.u32 %v7029, 4294901760
  %7031 = vmatpush1.msra.mxu0 %v7030
  %7032 = vmatprep.subr.mxu0 0.0
  %v7033 = vand.u32 %v40, 4294901760
  %v7034 = vsub.f32 %v40, %v7033
  %v7035 = vand.u32 %v7034, 4294901760
  %7036 = vmatpush1.msra.mxu0 %v7035
  %7037 = vmatprep.subr.mxu0 0.0
  %v7038 = vand.u32 %v39, 4294901760
  %v7039 = vsub.f32 %v39, %v7038
  %v7040 = vand.u32 %v7039, 4294901760
  %7041 = vmatpush1.msra.mxu0 %v7040
  %7042 = vmatprep.subr.mxu0 0.0
  %v7043 = vand.u32 %v38, 4294901760
  %v7044 = vsub.f32 %v38, %v7043
  %v7045 = vand.u32 %v7044, 4294901760
  %7046 = vmatpush1.msra.mxu0 %v7045
  %7047 = vmatprep.subr.mxu0 0.0
  %v7048 = vand.u32 %v37, 4294901760
  %v7049 = vsub.f32 %v37, %v7048
  %v7050 = vand.u32 %v7049, 4294901760
  %7051 = vmatpush1.msra.mxu0 %v7050
  %7052 = vmatprep.subr.mxu0 0.0
  %v7053 = vand.u32 %v36, 4294901760
  %v7054 = vsub.f32 %v36, %v7053
  %v7055 = vand.u32 %v7054, 4294901760
  %7056 = vmatpush1.msra.mxu0 %v7055
  %7057 = vmatprep.subr.mxu0 0.0
  %v7058 = vand.u32 %v35, 4294901760
  %v7059 = vsub.f32 %v35, %v7058
  %v7060 = vand.u32 %v7059, 4294901760
  %7061 = vmatpush1.msra.mxu0 %v7060
  %7062 = vmatprep.subr.mxu0 0.0
  %7063 = vmatpush2.msra.mxu0 0.0
  %7064 = vmatprep.subr.mxu0 0.0
  %7065 = vmatpush2.msra.mxu0 0.0
  %7066 = vmatprep.subr.mxu0 0.0
  %7067 = vmatpush2.msra.mxu0 0.0
  %7068 = vmatprep.subr.mxu0 0.0
  %7069 = vmatpush2.msra.mxu0 0.0
  %7070 = vmatprep.subr.mxu0 0.0
  %7071 = vmatpush2.msra.mxu0 0.0
  %7072 = vmatprep.subr.mxu0 0.0
  %7073 = vmatpush2.msra.mxu0 0.0
  %7074 = vmatprep.subr.mxu0 0.0
  %7075 = vmatpush2.msra.mxu0 0.0
  %7076 = vmatprep.subr.mxu0 0.0
  %7077 = vmatpush2.msra.mxu0 0.0
  %7078 = vmatprep.subr.mxu0 0.0
  %7079 = vmatpush2.msra.mxu0 0.0
  %7080 = vmatprep.subr.mxu0 0.0
  %7081 = vmatpush2.msra.mxu0 0.0
  %7082 = vmatprep.subr.mxu0 0.0
  %7083 = vmatpush2.msra.mxu0 0.0
  %7084 = vmatprep.subr.mxu0 0.0
  %7085 = vmatpush2.msra.mxu0 0.0
  %7086 = vmatprep.subr.mxu0 0.0
  %7087 = vmatpush2.msra.mxu0 0.0
  %7088 = vmatprep.subr.mxu0 0.0
  %7089 = vmatpush2.msra.mxu0 0.0
  %7090 = vmatprep.subr.mxu0 0.0
  %7091 = vmatpush2.msra.mxu0 0.0
  %7092 = vmatprep.subr.mxu0 0.0
  %7093 = vmatpush2.msra.mxu0 0.0
  %7094 = vmatprep.mubr.f32.mxu0 0.0
  %v7095 = vand.u32 %v6546, 4294901760
  %7096 = vmatmul.mubr.f32.gmra.mxu0 %v7095
  %v7097 = vpop.f32.mrf.mxu0
  %v7098 = vadd.f32 %v6979, %v7097
  %v7099 = vpop.f32.mrf.mxu0
  %7100 = vdwg.mxu0
  %7101 = vmatprep.subr.mxu0 0.0
  %v7102 = vand.u32 %v50, 4294901760
  %7103 = vmatpush1.msra.mxu0 %v7102
  %7104 = vmatprep.subr.mxu0 0.0
  %v7105 = vand.u32 %v49, 4294901760
  %7106 = vmatpush1.msra.mxu0 %v7105
  %7107 = vmatprep.subr.mxu0 0.0
  %v7108 = vand.u32 %v48, 4294901760
  %7109 = vmatpush1.msra.mxu0 %v7108
  %7110 = vmatprep.subr.mxu0 0.0
  %v7111 = vand.u32 %v47, 4294901760
  %7112 = vmatpush1.msra.mxu0 %v7111
  %7113 = vmatprep.subr.mxu0 0.0
  %v7114 = vand.u32 %v46, 4294901760
  %7115 = vmatpush1.msra.mxu0 %v7114
  %7116 = vmatprep.subr.mxu0 0.0
  %v7117 = vand.u32 %v45, 4294901760
  %7118 = vmatpush1.msra.mxu0 %v7117
  %7119 = vmatprep.subr.mxu0 0.0
  %v7120 = vand.u32 %v44, 4294901760
  %7121 = vmatpush1.msra.mxu0 %v7120
  %7122 = vmatprep.subr.mxu0 0.0
  %v7123 = vand.u32 %v43, 4294901760
  %7124 = vmatpush1.msra.mxu0 %v7123
  %7125 = vmatprep.subr.mxu0 0.0
  %v7126 = vand.u32 %v42, 4294901760
  %7127 = vmatpush1.msra.mxu0 %v7126
  %7128 = vmatprep.subr.mxu0 0.0
  %v7129 = vand.u32 %v41, 4294901760
  %7130 = vmatpush1.msra.mxu0 %v7129
  %7131 = vmatprep.subr.mxu0 0.0
  %v7132 = vand.u32 %v40, 4294901760
  %7133 = vmatpush1.msra.mxu0 %v7132
  %7134 = vmatprep.subr.mxu0 0.0
  %v7135 = vand.u32 %v39, 4294901760
  %7136 = vmatpush1.msra.mxu0 %v7135
  %7137 = vmatprep.subr.mxu0 0.0
  %v7138 = vand.u32 %v38, 4294901760
  %7139 = vmatpush1.msra.mxu0 %v7138
  %7140 = vmatprep.subr.mxu0 0.0
  %v7141 = vand.u32 %v37, 4294901760
  %7142 = vmatpush1.msra.mxu0 %v7141
  %7143 = vmatprep.subr.mxu0 0.0
  %v7144 = vand.u32 %v36, 4294901760
  %7145 = vmatpush1.msra.mxu0 %v7144
  %7146 = vmatprep.subr.mxu0 0.0
  %v7147 = vand.u32 %v35, 4294901760
  %7148 = vmatpush1.msra.mxu0 %v7147
  %7149 = vmatprep.subr.mxu0 0.0
  %7150 = vmatpush2.msra.mxu0 0.0
  %7151 = vmatprep.subr.mxu0 0.0
  %7152 = vmatpush2.msra.mxu0 0.0
  %7153 = vmatprep.subr.mxu0 0.0
  %7154 = vmatpush2.msra.mxu0 0.0
  %7155 = vmatprep.subr.mxu0 0.0
  %7156 = vmatpush2.msra.mxu0 0.0
  %7157 = vmatprep.subr.mxu0 0.0
  %7158 = vmatpush2.msra.mxu0 0.0
  %7159 = vmatprep.subr.mxu0 0.0
  %7160 = vmatpush2.msra.mxu0 0.0
  %7161 = vmatprep.subr.mxu0 0.0
  %7162 = vmatpush2.msra.mxu0 0.0
  %7163 = vmatprep.subr.mxu0 0.0
  %7164 = vmatpush2.msra.mxu0 0.0
  %7165 = vmatprep.subr.mxu0 0.0
  %7166 = vmatpush2.msra.mxu0 0.0
  %7167 = vmatprep.subr.mxu0 0.0
  %7168 = vmatpush2.msra.mxu0 0.0
  %7169 = vmatprep.subr.mxu0 0.0
  %7170 = vmatpush2.msra.mxu0 0.0
  %7171 = vmatprep.subr.mxu0 0.0
  %7172 = vmatpush2.msra.mxu0 0.0
  %7173 = vmatprep.subr.mxu0 0.0
  %7174 = vmatpush2.msra.mxu0 0.0
  %7175 = vmatprep.subr.mxu0 0.0
  %7176 = vmatpush2.msra.mxu0 0.0
  %7177 = vmatprep.subr.mxu0 0.0
  %7178 = vmatpush2.msra.mxu0 0.0
  %7179 = vmatprep.subr.mxu0 0.0
  %7180 = vmatpush2.msra.mxu0 0.0
  %7181 = vmatprep.mubr.f32.mxu0 0.0
  %v7182 = vand.u32 %v6546, 4294901760
  %7183 = vmatmul.mubr.f32.gmra.mxu0 %v7182
  %v7184 = vpop.f32.mrf.mxu0
  %v7185 = vadd.f32 %v7098, %v7184
  %v7186 = vpop.f32.mrf.mxu0
  %7187 = vdwg.mxu0
  %v7188 = vmul.f32 %v7185, 0.001953125
  %v7189 = vadd.f32 %v7188, 1e-05
  %v7190 = vrsqrt.pop %v7189
  %v7191 = vlaneseq
  %v7192 = vshrl.u32 %v7191, 7
  %v7193 = vsub.s32 0, %v7192
  %v7194 = vrot.slane %v7190, %v7193
  %v7195 = vmul.f32 %v6530, %v7194
  %v7196 = vmul.f32 %v6531, %v7194
  %v7197 = vmul.f32 %v6532, %v7194
  %v7198 = vmul.f32 %v6533, %v7194
  %v7199 = vld [vmem:[%s6] sm:$0x1]
  %v7201 = vlaneseq
  %v7202 = vshrl.u32 %v7201, 7
  %v7203 = vsub.s32 0, %v7202
  %v7204 = vrot.slane %v7199, %v7203
  %v7206 = vmul.f32 %v7195, %v7204
  %v7207 = vmul.f32 %v7196, %v7204
  %v7208 = vmul.f32 %v7197, %v7204
  %v7209 = vmul.f32 %v7198, %v7204
  %v7210 = vld [vmem:[%s7] sm:$0x1]
  %v7212 = vlaneseq
  %v7213 = vshrl.u32 %v7212, 7
  %v7214 = vsub.s32 0, %v7213
  %v7215 = vrot.slane %v7210, %v7214
  %v7217 = vadd.f32 %v7206, %v7215
  %v7218 = vadd.f32 %v7207, %v7215
  %v7219 = vadd.f32 %v7208, %v7215
  %v7220 = vadd.f32 %v7209, %v7215
  %v7221 = vmax.f32 %v7217, 0.0
  %v7222 = vmax.f32 %v7218, 0.0
  %v7223 = vmax.f32 %v7219, 0.0
  %v7224 = vmax.f32 %v7220, 0.0
  %v7225 = vld [vmem:[%s8] sm:$0xff]
  %v7226 = vld [vmem:[%s8 + $0x8] sm:$0xff]
  %v7227 = vld [vmem:[%s8 + $0x10] sm:$0xff]
  %v7228 = vld [vmem:[%s8 + $0x18] sm:$0xff]
  %v7229 = vld [vmem:[%s8 + $0x20] sm:$0xff]
  %v7230 = vld [vmem:[%s8 + $0x28] sm:$0xff]
  %v7231 = vld [vmem:[%s8 + $0x30] sm:$0xff]
  %v7232 = vld [vmem:[%s8 + $0x38] sm:$0xff]
  %v7233 = vld [vmem:[%s8 + $0x40] sm:$0xff]
  %v7234 = vld [vmem:[%s8 + $0x48] sm:$0xff]
  %v7235 = vld [vmem:[%s8 + $0x50] sm:$0xff]
  %v7236 = vld [vmem:[%s8 + $0x58] sm:$0xff]
  %v7237 = vld [vmem:[%s8 + $0x60] sm:$0xff]
  %v7238 = vld [vmem:[%s8 + $0x68] sm:$0xff]
  %v7239 = vld [vmem:[%s8 + $0x70] sm:$0xff]
  %v7240 = vld [vmem:[%s8 + $0x78] sm:$0xff]
  %v7241 = vld [vmem:[%s8 + $0x80] sm:$0xff]
  %v7242 = vld [vmem:[%s8 + $0x88] sm:$0xff]
  %v7243 = vld [vmem:[%s8 + $0x90] sm:$0xff]
  %v7244 = vld [vmem:[%s8 + $0x98] sm:$0xff]
  %v7245 = vld [vmem:[%s8 + $0xa0] sm:$0xff]
  %v7246 = vld [vmem:[%s8 + $0xa8] sm:$0xff]
  %v7247 = vld [vmem:[%s8 + $0xb0] sm:$0xff]
  %v7248 = vld [vmem:[%s8 + $0xb8] sm:$0xff]
  %v7249 = vld [vmem:[%s8 + $0xc0] sm:$0xff]
  %v7250 = vld [vmem:[%s8 + $0xc8] sm:$0xff]
  %v7251 = vld [vmem:[%s8 + $0xd0] sm:$0xff]
  %v7252 = vld [vmem:[%s8 + $0xd8] sm:$0xff]
  %v7253 = vld [vmem:[%s8 + $0xe0] sm:$0xff]
  %v7254 = vld [vmem:[%s8 + $0xe8] sm:$0xff]
  %v7255 = vld [vmem:[%s8 + $0xf0] sm:$0xff]
  %v7256 = vld [vmem:[%s8 + $0xf8] sm:$0xff]
  %v7257 = vld [vmem:[%s8 + $0x100] sm:$0xff]
  %v7258 = vld [vmem:[%s8 + $0x108] sm:$0xff]
  %v7259 = vld [vmem:[%s8 + $0x110] sm:$0xff]
  %v7260 = vld [vmem:[%s8 + $0x118] sm:$0xff]
  %v7261 = vld [vmem:[%s8 + $0x120] sm:$0xff]
  %v7262 = vld [vmem:[%s8 + $0x128] sm:$0xff]
  %v7263 = vld [vmem:[%s8 + $0x130] sm:$0xff]
  %v7264 = vld [vmem:[%s8 + $0x138] sm:$0xff]
  %v7265 = vld [vmem:[%s8 + $0x140] sm:$0xff]
  %v7266 = vld [vmem:[%s8 + $0x148] sm:$0xff]
  %v7267 = vld [vmem:[%s8 + $0x150] sm:$0xff]
  %v7268 = vld [vmem:[%s8 + $0x158] sm:$0xff]
  %v7269 = vld [vmem:[%s8 + $0x160] sm:$0xff]
  %v7270 = vld [vmem:[%s8 + $0x168] sm:$0xff]
  %v7271 = vld [vmem:[%s8 + $0x170] sm:$0xff]
  %v7272 = vld [vmem:[%s8 + $0x178] sm:$0xff]
  %v7273 = vld [vmem:[%s8 + $0x180] sm:$0xff]
  %v7274 = vld [vmem:[%s8 + $0x188] sm:$0xff]
  %v7275 = vld [vmem:[%s8 + $0x190] sm:$0xff]
  %v7276 = vld [vmem:[%s8 + $0x198] sm:$0xff]
  %v7277 = vld [vmem:[%s8 + $0x1a0] sm:$0xff]
  %v7278 = vld [vmem:[%s8 + $0x1a8] sm:$0xff]
  %v7279 = vld [vmem:[%s8 + $0x1b0] sm:$0xff]
  %v7280 = vld [vmem:[%s8 + $0x1b8] sm:$0xff]
  %v7281 = vld [vmem:[%s8 + $0x1c0] sm:$0xff]
  %v7282 = vld [vmem:[%s8 + $0x1c8] sm:$0xff]
  %v7283 = vld [vmem:[%s8 + $0x1d0] sm:$0xff]
  %v7284 = vld [vmem:[%s8 + $0x1d8] sm:$0xff]
  %v7285 = vld [vmem:[%s8 + $0x1e0] sm:$0xff]
  %v7286 = vld [vmem:[%s8 + $0x1e8] sm:$0xff]
  %v7287 = vld [vmem:[%s8 + $0x1f0] sm:$0xff]
  %v7288 = vld [vmem:[%s8 + $0x1f8] sm:$0xff]
  %v7289 = vld [vmem:[%s9] sm:$0xf]
  %v7291 = vlaneseq
  %v7292 = vshrl.u32 %v7291, 7
  %v7293 = vsub.s32 0, %v7292
  %v7294 = vrot.slane %v7289, %v7293
  %v7295 = vlaneseq
  %v7296 = vshrl.u32 %v7295, 7
  %v7297 = vsub.s32 1, %v7296
  %v7298 = vrot.slane %v7289, %v7297
  %v7299 = vlaneseq
  %v7300 = vshrl.u32 %v7299, 7
  %v7301 = vsub.s32 2, %v7300
  %v7302 = vrot.slane %v7289, %v7301
  %v7303 = vlaneseq
  %v7304 = vshrl.u32 %v7303, 7
  %v7305 = vsub.s32 3, %v7304
  %v7306 = vrot.slane %v7289, %v7305
  %v7311 = vand.u32 %v7286, 4294901760
  %7312 = vmatprep.subr.mxu0 %v7311
  %v7313 = vand.u32 %v7285, 4294901760
  %7314 = vmatpush1.msra.mxu0 %v7313
  %v7315 = vand.u32 %v7282, 4294901760
  %7316 = vmatprep.subr.mxu0 %v7315
  %v7317 = vand.u32 %v7281, 4294901760
  %7318 = vmatpush1.msra.mxu0 %v7317
  %v7319 = vand.u32 %v7278, 4294901760
  %7320 = vmatprep.subr.mxu0 %v7319
  %v7321 = vand.u32 %v7277, 4294901760
  %7322 = vmatpush1.msra.mxu0 %v7321
  %v7323 = vand.u32 %v7274, 4294901760
  %7324 = vmatprep.subr.mxu0 %v7323
  %v7325 = vand.u32 %v7273, 4294901760
  %7326 = vmatpush1.msra.mxu0 %v7325
  %v7327 = vand.u32 %v7270, 4294901760
  %7328 = vmatprep.subr.mxu0 %v7327
  %v7329 = vand.u32 %v7269, 4294901760
  %7330 = vmatpush1.msra.mxu0 %v7329
  %v7331 = vand.u32 %v7266, 4294901760
  %7332 = vmatprep.subr.mxu0 %v7331
  %v7333 = vand.u32 %v7265, 4294901760
  %7334 = vmatpush1.msra.mxu0 %v7333
  %v7335 = vand.u32 %v7262, 4294901760
  %7336 = vmatprep.subr.mxu0 %v7335
  %v7337 = vand.u32 %v7261, 4294901760
  %7338 = vmatpush1.msra.mxu0 %v7337
  %v7339 = vand.u32 %v7258, 4294901760
  %7340 = vmatprep.subr.mxu0 %v7339
  %v7341 = vand.u32 %v7257, 4294901760
  %7342 = vmatpush1.msra.mxu0 %v7341
  %v7343 = vand.u32 %v7254, 4294901760
  %7344 = vmatprep.subr.mxu0 %v7343
  %v7345 = vand.u32 %v7253, 4294901760
  %7346 = vmatpush1.msra.mxu0 %v7345
  %v7347 = vand.u32 %v7250, 4294901760
  %7348 = vmatprep.subr.mxu0 %v7347
  %v7349 = vand.u32 %v7249, 4294901760
  %7350 = vmatpush1.msra.mxu0 %v7349
  %v7351 = vand.u32 %v7246, 4294901760
  %7352 = vmatprep.subr.mxu0 %v7351
  %v7353 = vand.u32 %v7245, 4294901760
  %7354 = vmatpush1.msra.mxu0 %v7353
  %v7355 = vand.u32 %v7242, 4294901760
  %7356 = vmatprep.subr.mxu0 %v7355
  %v7357 = vand.u32 %v7241, 4294901760
  %7358 = vmatpush1.msra.mxu0 %v7357
  %v7359 = vand.u32 %v7238, 4294901760
  %7360 = vmatprep.subr.mxu0 %v7359
  %v7361 = vand.u32 %v7237, 4294901760
  %7362 = vmatpush1.msra.mxu0 %v7361
  %v7363 = vand.u32 %v7234, 4294901760
  %7364 = vmatprep.subr.mxu0 %v7363
  %v7365 = vand.u32 %v7233, 4294901760
  %7366 = vmatpush1.msra.mxu0 %v7365
  %v7367 = vand.u32 %v7230, 4294901760
  %7368 = vmatprep.subr.mxu0 %v7367
  %v7369 = vand.u32 %v7229, 4294901760
  %7370 = vmatpush1.msra.mxu0 %v7369
  %v7371 = vand.u32 %v7226, 4294901760
  %7372 = vmatprep.subr.mxu0 %v7371
  %v7373 = vand.u32 %v7225, 4294901760
  %7374 = vmatpush1.msra.mxu0 %v7373
  %7375 = vmatprep.subr.mxu0 0.0
  %7376 = vmatpush2.msra.mxu0 0.0
  %7377 = vmatprep.subr.mxu0 0.0
  %7378 = vmatpush2.msra.mxu0 0.0
  %7379 = vmatprep.subr.mxu0 0.0
  %7380 = vmatpush2.msra.mxu0 0.0
  %7381 = vmatprep.subr.mxu0 0.0
  %7382 = vmatpush2.msra.mxu0 0.0
  %7383 = vmatprep.subr.mxu0 0.0
  %7384 = vmatpush2.msra.mxu0 0.0
  %7385 = vmatprep.subr.mxu0 0.0
  %7386 = vmatpush2.msra.mxu0 0.0
  %7387 = vmatprep.subr.mxu0 0.0
  %7388 = vmatpush2.msra.mxu0 0.0
  %7389 = vmatprep.subr.mxu0 0.0
  %7390 = vmatpush2.msra.mxu0 0.0
  %7391 = vmatprep.subr.mxu0 0.0
  %7392 = vmatpush2.msra.mxu0 0.0
  %7393 = vmatprep.subr.mxu0 0.0
  %7394 = vmatpush2.msra.mxu0 0.0
  %7395 = vmatprep.subr.mxu0 0.0
  %7396 = vmatpush2.msra.mxu0 0.0
  %7397 = vmatprep.subr.mxu0 0.0
  %7398 = vmatpush2.msra.mxu0 0.0
  %7399 = vmatprep.subr.mxu0 0.0
  %7400 = vmatpush2.msra.mxu0 0.0
  %7401 = vmatprep.subr.mxu0 0.0
  %7402 = vmatpush2.msra.mxu0 0.0
  %7403 = vmatprep.subr.mxu0 0.0
  %7404 = vmatpush2.msra.mxu0 0.0
  %7405 = vmatprep.subr.mxu0 0.0
  %7406 = vmatpush2.msra.mxu0 0.0
  %7407 = vmatprep.mubr.f32.mxu0 0.0
  %v7408 = vand.u32 %v7221, 4294901760
  %v7409 = vsub.f32 %v7221, %v7408
  %v7410 = vand.u32 %v7409, 4294901760
  %v7411 = vsub.f32 %v7409, %v7410
  %v7412 = vand.u32 %v7411, 4294901760
  %7413 = vmatmul.mubr.f32.gmra.mxu0 %v7412
  %v7414 = vpop.f32.mrf.mxu0
  %v7415 = vadd.f32 %v7294, %v7414
  %v7416 = vpop.f32.mrf.mxu0
  %v7417 = vadd.f32 %v7298, %v7416
  %7418 = vmatprep.mubr.f32.mxu0 0.0
  %v7419 = vand.u32 %v7222, 4294901760
  %v7420 = vsub.f32 %v7222, %v7419
  %v7421 = vand.u32 %v7420, 4294901760
  %v7422 = vsub.f32 %v7420, %v7421
  %v7423 = vand.u32 %v7422, 4294901760
  %7424 = vmatmul.mubr.f32.gmra.mxu0 %v7423
  %v7425 = vpop.f32.mrf.mxu0
  %v7426 = vadd.f32 %v7294, %v7425
  %v7427 = vpop.f32.mrf.mxu0
  %v7428 = vadd.f32 %v7298, %v7427
  %7429 = vmatprep.mubr.f32.mxu0 0.0
  %v7430 = vand.u32 %v7223, 4294901760
  %v7431 = vsub.f32 %v7223, %v7430
  %v7432 = vand.u32 %v7431, 4294901760
  %v7433 = vsub.f32 %v7431, %v7432
  %v7434 = vand.u32 %v7433, 4294901760
  %7435 = vmatmul.mubr.f32.gmra.mxu0 %v7434
  %v7436 = vpop.f32.mrf.mxu0
  %v7437 = vadd.f32 %v7294, %v7436
  %v7438 = vpop.f32.mrf.mxu0
  %v7439 = vadd.f32 %v7298, %v7438
  %7440 = vmatprep.mubr.f32.mxu0 0.0
  %v7441 = vand.u32 %v7224, 4294901760
  %v7442 = vsub.f32 %v7224, %v7441
  %v7443 = vand.u32 %v7442, 4294901760
  %v7444 = vsub.f32 %v7442, %v7443
  %v7445 = vand.u32 %v7444, 4294901760
  %7446 = vmatmul.mubr.f32.gmra.mxu0 %v7445
  %v7447 = vpop.f32.mrf.mxu0
  %v7448 = vadd.f32 %v7294, %v7447
  %v7449 = vpop.f32.mrf.mxu0
  %v7450 = vadd.f32 %v7298, %v7449
  %7451 = vdwg.mxu0
  %v7452 = vand.u32 %v7286, 4294901760
  %v7453 = vsub.f32 %v7286, %v7452
  %v7454 = vand.u32 %v7453, 4294901760
  %v7455 = vsub.f32 %v7453, %v7454
  %v7456 = vand.u32 %v7455, 4294901760
  %7457 = vmatprep.subr.mxu0 %v7456
  %v7458 = vand.u32 %v7285, 4294901760
  %v7459 = vsub.f32 %v7285, %v7458
  %v7460 = vand.u32 %v7459, 4294901760
  %v7461 = vsub.f32 %v7459, %v7460
  %v7462 = vand.u32 %v7461, 4294901760
  %7463 = vmatpush1.msra.mxu0 %v7462
  %v7464 = vand.u32 %v7282, 4294901760
  %v7465 = vsub.f32 %v7282, %v7464
  %v7466 = vand.u32 %v7465, 4294901760
  %v7467 = vsub.f32 %v7465, %v7466
  %v7468 = vand.u32 %v7467, 4294901760
  %7469 = vmatprep.subr.mxu0 %v7468
  %v7470 = vand.u32 %v7281, 4294901760
  %v7471 = vsub.f32 %v7281, %v7470
  %v7472 = vand.u32 %v7471, 4294901760
  %v7473 = vsub.f32 %v7471, %v7472
  %v7474 = vand.u32 %v7473, 4294901760
  %7475 = vmatpush1.msra.mxu0 %v7474
  %v7476 = vand.u32 %v7278, 4294901760
  %v7477 = vsub.f32 %v7278, %v7476
  %v7478 = vand.u32 %v7477, 4294901760
  %v7479 = vsub.f32 %v7477, %v7478
  %v7480 = vand.u32 %v7479, 4294901760
  %7481 = vmatprep.subr.mxu0 %v7480
  %v7482 = vand.u32 %v7277, 4294901760
  %v7483 = vsub.f32 %v7277, %v7482
  %v7484 = vand.u32 %v7483, 4294901760
  %v7485 = vsub.f32 %v7483, %v7484
  %v7486 = vand.u32 %v7485, 4294901760
  %7487 = vmatpush1.msra.mxu0 %v7486
  %v7488 = vand.u32 %v7274, 4294901760
  %v7489 = vsub.f32 %v7274, %v7488
  %v7490 = vand.u32 %v7489, 4294901760
  %v7491 = vsub.f32 %v7489, %v7490
  %v7492 = vand.u32 %v7491, 4294901760
  %7493 = vmatprep.subr.mxu0 %v7492
  %v7494 = vand.u32 %v7273, 4294901760
  %v7495 = vsub.f32 %v7273, %v7494
  %v7496 = vand.u32 %v7495, 4294901760
  %v7497 = vsub.f32 %v7495, %v7496
  %v7498 = vand.u32 %v7497, 4294901760
  %7499 = vmatpush1.msra.mxu0 %v7498
  %v7500 = vand.u32 %v7270, 4294901760
  %v7501 = vsub.f32 %v7270, %v7500
  %v7502 = vand.u32 %v7501, 4294901760
  %v7503 = vsub.f32 %v7501, %v7502
  %v7504 = vand.u32 %v7503, 4294901760
  %7505 = vmatprep.subr.mxu0 %v7504
  %v7506 = vand.u32 %v7269, 4294901760
  %v7507 = vsub.f32 %v7269, %v7506
  %v7508 = vand.u32 %v7507, 4294901760
  %v7509 = vsub.f32 %v7507, %v7508
  %v7510 = vand.u32 %v7509, 4294901760
  %7511 = vmatpush1.msra.mxu0 %v7510
  %v7512 = vand.u32 %v7266, 4294901760
  %v7513 = vsub.f32 %v7266, %v7512
  %v7514 = vand.u32 %v7513, 4294901760
  %v7515 = vsub.f32 %v7513, %v7514
  %v7516 = vand.u32 %v7515, 4294901760
  %7517 = vmatprep.subr.mxu0 %v7516
  %v7518 = vand.u32 %v7265, 4294901760
  %v7519 = vsub.f32 %v7265, %v7518
  %v7520 = vand.u32 %v7519, 4294901760
  %v7521 = vsub.f32 %v7519, %v7520
  %v7522 = vand.u32 %v7521, 4294901760
  %7523 = vmatpush1.msra.mxu0 %v7522
  %v7524 = vand.u32 %v7262, 4294901760
  %v7525 = vsub.f32 %v7262, %v7524
  %v7526 = vand.u32 %v7525, 4294901760
  %v7527 = vsub.f32 %v7525, %v7526
  %v7528 = vand.u32 %v7527, 4294901760
  %7529 = vmatprep.subr.mxu0 %v7528
  %v7530 = vand.u32 %v7261, 4294901760
  %v7531 = vsub.f32 %v7261, %v7530
  %v7532 = vand.u32 %v7531, 4294901760
  %v7533 = vsub.f32 %v7531, %v7532
  %v7534 = vand.u32 %v7533, 4294901760
  %7535 = vmatpush1.msra.mxu0 %v7534
  %v7536 = vand.u32 %v7258, 4294901760
  %v7537 = vsub.f32 %v7258, %v7536
  %v7538 = vand.u32 %v7537, 4294901760
  %v7539 = vsub.f32 %v7537, %v7538
  %v7540 = vand.u32 %v7539, 4294901760
  %7541 = vmatprep.subr.mxu0 %v7540
  %v7542 = vand.u32 %v7257, 4294901760
  %v7543 = vsub.f32 %v7257, %v7542
  %v7544 = vand.u32 %v7543, 4294901760
  %v7545 = vsub.f32 %v7543, %v7544
  %v7546 = vand.u32 %v7545, 4294901760
  %7547 = vmatpush1.msra.mxu0 %v7546
  %v7548 = vand.u32 %v7254, 4294901760
  %v7549 = vsub.f32 %v7254, %v7548
  %v7550 = vand.u32 %v7549, 4294901760
  %v7551 = vsub.f32 %v7549, %v7550
  %v7552 = vand.u32 %v7551, 4294901760
  %7553 = vmatprep.subr.mxu0 %v7552
  %v7554 = vand.u32 %v7253, 4294901760
  %v7555 = vsub.f32 %v7253, %v7554
  %v7556 = vand.u32 %v7555, 4294901760
  %v7557 = vsub.f32 %v7555, %v7556
  %v7558 = vand.u32 %v7557, 4294901760
  %7559 = vmatpush1.msra.mxu0 %v7558
  %v7560 = vand.u32 %v7250, 4294901760
  %v7561 = vsub.f32 %v7250, %v7560
  %v7562 = vand.u32 %v7561, 4294901760
  %v7563 = vsub.f32 %v7561, %v7562
  %v7564 = vand.u32 %v7563, 4294901760
  %7565 = vmatprep.subr.mxu0 %v7564
  %v7566 = vand.u32 %v7249, 4294901760
  %v7567 = vsub.f32 %v7249, %v7566
  %v7568 = vand.u32 %v7567, 4294901760
  %v7569 = vsub.f32 %v7567, %v7568
  %v7570 = vand.u32 %v7569, 4294901760
  %7571 = vmatpush1.msra.mxu0 %v7570
  %v7572 = vand.u32 %v7246, 4294901760
  %v7573 = vsub.f32 %v7246, %v7572
  %v7574 = vand.u32 %v7573, 4294901760
  %v7575 = vsub.f32 %v7573, %v7574
  %v7576 = vand.u32 %v7575, 4294901760
  %7577 = vmatprep.subr.mxu0 %v7576
  %v7578 = vand.u32 %v7245, 4294901760
  %v7579 = vsub.f32 %v7245, %v7578
  %v7580 = vand.u32 %v7579, 4294901760
  %v7581 = vsub.f32 %v7579, %v7580
  %v7582 = vand.u32 %v7581, 4294901760
  %7583 = vmatpush1.msra.mxu0 %v7582
  %v7584 = vand.u32 %v7242, 4294901760
  %v7585 = vsub.f32 %v7242, %v7584
  %v7586 = vand.u32 %v7585, 4294901760
  %v7587 = vsub.f32 %v7585, %v7586
  %v7588 = vand.u32 %v7587, 4294901760
  %7589 = vmatprep.subr.mxu0 %v7588
  %v7590 = vand.u32 %v7241, 4294901760
  %v7591 = vsub.f32 %v7241, %v7590
  %v7592 = vand.u32 %v7591, 4294901760
  %v7593 = vsub.f32 %v7591, %v7592
  %v7594 = vand.u32 %v7593, 4294901760
  %7595 = vmatpush1.msra.mxu0 %v7594
  %v7596 = vand.u32 %v7238, 4294901760
  %v7597 = vsub.f32 %v7238, %v7596
  %v7598 = vand.u32 %v7597, 4294901760
  %v7599 = vsub.f32 %v7597, %v7598
  %v7600 = vand.u32 %v7599, 4294901760
  %7601 = vmatprep.subr.mxu0 %v7600
  %v7602 = vand.u32 %v7237, 4294901760
  %v7603 = vsub.f32 %v7237, %v7602
  %v7604 = vand.u32 %v7603, 4294901760
  %v7605 = vsub.f32 %v7603, %v7604
  %v7606 = vand.u32 %v7605, 4294901760
  %7607 = vmatpush1.msra.mxu0 %v7606
  %v7608 = vand.u32 %v7234, 4294901760
  %v7609 = vsub.f32 %v7234, %v7608
  %v7610 = vand.u32 %v7609, 4294901760
  %v7611 = vsub.f32 %v7609, %v7610
  %v7612 = vand.u32 %v7611, 4294901760
  %7613 = vmatprep.subr.mxu0 %v7612
  %v7614 = vand.u32 %v7233, 4294901760
  %v7615 = vsub.f32 %v7233, %v7614
  %v7616 = vand.u32 %v7615, 4294901760
  %v7617 = vsub.f32 %v7615, %v7616
  %v7618 = vand.u32 %v7617, 4294901760
  %7619 = vmatpush1.msra.mxu0 %v7618
  %v7620 = vand.u32 %v7230, 4294901760
  %v7621 = vsub.f32 %v7230, %v7620
  %v7622 = vand.u32 %v7621, 4294901760
  %v7623 = vsub.f32 %v7621, %v7622
  %v7624 = vand.u32 %v7623, 4294901760
  %7625 = vmatprep.subr.mxu0 %v7624
  %v7626 = vand.u32 %v7229, 4294901760
  %v7627 = vsub.f32 %v7229, %v7626
  %v7628 = vand.u32 %v7627, 4294901760
  %v7629 = vsub.f32 %v7627, %v7628
  %v7630 = vand.u32 %v7629, 4294901760
  %7631 = vmatpush1.msra.mxu0 %v7630
  %v7632 = vand.u32 %v7226, 4294901760
  %v7633 = vsub.f32 %v7226, %v7632
  %v7634 = vand.u32 %v7633, 4294901760
  %v7635 = vsub.f32 %v7633, %v7634
  %v7636 = vand.u32 %v7635, 4294901760
  %7637 = vmatprep.subr.mxu0 %v7636
  %v7638 = vand.u32 %v7225, 4294901760
  %v7639 = vsub.f32 %v7225, %v7638
  %v7640 = vand.u32 %v7639, 4294901760
  %v7641 = vsub.f32 %v7639, %v7640
  %v7642 = vand.u32 %v7641, 4294901760
  %7643 = vmatpush1.msra.mxu0 %v7642
  %7644 = vmatprep.subr.mxu0 0.0
  %7645 = vmatpush2.msra.mxu0 0.0
  %7646 = vmatprep.subr.mxu0 0.0
  %7647 = vmatpush2.msra.mxu0 0.0
  %7648 = vmatprep.subr.mxu0 0.0
  %7649 = vmatpush2.msra.mxu0 0.0
  %7650 = vmatprep.subr.mxu0 0.0
  %7651 = vmatpush2.msra.mxu0 0.0
  %7652 = vmatprep.subr.mxu0 0.0
  %7653 = vmatpush2.msra.mxu0 0.0
  %7654 = vmatprep.subr.mxu0 0.0
  %7655 = vmatpush2.msra.mxu0 0.0
  %7656 = vmatprep.subr.mxu0 0.0
  %7657 = vmatpush2.msra.mxu0 0.0
  %7658 = vmatprep.subr.mxu0 0.0
  %7659 = vmatpush2.msra.mxu0 0.0
  %7660 = vmatprep.subr.mxu0 0.0
  %7661 = vmatpush2.msra.mxu0 0.0
  %7662 = vmatprep.subr.mxu0 0.0
  %7663 = vmatpush2.msra.mxu0 0.0
  %7664 = vmatprep.subr.mxu0 0.0
  %7665 = vmatpush2.msra.mxu0 0.0
  %7666 = vmatprep.subr.mxu0 0.0
  %7667 = vmatpush2.msra.mxu0 0.0
  %7668 = vmatprep.subr.mxu0 0.0
  %7669 = vmatpush2.msra.mxu0 0.0
  %7670 = vmatprep.subr.mxu0 0.0
  %7671 = vmatpush2.msra.mxu0 0.0
  %7672 = vmatprep.subr.mxu0 0.0
  %7673 = vmatpush2.msra.mxu0 0.0
  %7674 = vmatprep.subr.mxu0 0.0
  %7675 = vmatpush2.msra.mxu0 0.0
  %7676 = vmatprep.mubr.f32.mxu0 0.0
  %v7677 = vand.u32 %v7221, 4294901760
  %7678 = vmatmul.mubr.f32.gmra.mxu0 %v7677
  %v7679 = vpop.f32.mrf.mxu0
  %v7680 = vadd.f32 %v7415, %v7679
  %v7681 = vpop.f32.mrf.mxu0
  %v7682 = vadd.f32 %v7417, %v7681
  %7683 = vmatprep.mubr.f32.mxu0 0.0
  %v7684 = vand.u32 %v7222, 4294901760
  %7685 = vmatmul.mubr.f32.gmra.mxu0 %v7684
  %v7686 = vpop.f32.mrf.mxu0
  %v7687 = vadd.f32 %v7426, %v7686
  %v7688 = vpop.f32.mrf.mxu0
  %v7689 = vadd.f32 %v7428, %v7688
  %7690 = vmatprep.mubr.f32.mxu0 0.0
  %v7691 = vand.u32 %v7223, 4294901760
  %7692 = vmatmul.mubr.f32.gmra.mxu0 %v7691
  %v7693 = vpop.f32.mrf.mxu0
  %v7694 = vadd.f32 %v7437, %v7693
  %v7695 = vpop.f32.mrf.mxu0
  %v7696 = vadd.f32 %v7439, %v7695
  %7697 = vmatprep.mubr.f32.mxu0 0.0
  %v7698 = vand.u32 %v7224, 4294901760
  %7699 = vmatmul.mubr.f32.gmra.mxu0 %v7698
  %v7700 = vpop.f32.mrf.mxu0
  %v7701 = vadd.f32 %v7448, %v7700
  %v7702 = vpop.f32.mrf.mxu0
  %v7703 = vadd.f32 %v7450, %v7702
  %7704 = vdwg.mxu0
  %v7705 = vand.u32 %v7286, 4294901760
  %v7706 = vsub.f32 %v7286, %v7705
  %7707 = vmatprep.subr.mxu0 %v7706
  %v7708 = vand.u32 %v7285, 4294901760
  %v7709 = vsub.f32 %v7285, %v7708
  %7710 = vmatpush1.msra.mxu0 %v7709
  %v7711 = vand.u32 %v7282, 4294901760
  %v7712 = vsub.f32 %v7282, %v7711
  %7713 = vmatprep.subr.mxu0 %v7712
  %v7714 = vand.u32 %v7281, 4294901760
  %v7715 = vsub.f32 %v7281, %v7714
  %7716 = vmatpush1.msra.mxu0 %v7715
  %v7717 = vand.u32 %v7278, 4294901760
  %v7718 = vsub.f32 %v7278, %v7717
  %7719 = vmatprep.subr.mxu0 %v7718
  %v7720 = vand.u32 %v7277, 4294901760
  %v7721 = vsub.f32 %v7277, %v7720
  %7722 = vmatpush1.msra.mxu0 %v7721
  %v7723 = vand.u32 %v7274, 4294901760
  %v7724 = vsub.f32 %v7274, %v7723
  %7725 = vmatprep.subr.mxu0 %v7724
  %v7726 = vand.u32 %v7273, 4294901760
  %v7727 = vsub.f32 %v7273, %v7726
  %7728 = vmatpush1.msra.mxu0 %v7727
  %v7729 = vand.u32 %v7270, 4294901760
  %v7730 = vsub.f32 %v7270, %v7729
  %7731 = vmatprep.subr.mxu0 %v7730
  %v7732 = vand.u32 %v7269, 4294901760
  %v7733 = vsub.f32 %v7269, %v7732
  %7734 = vmatpush1.msra.mxu0 %v7733
  %v7735 = vand.u32 %v7266, 4294901760
  %v7736 = vsub.f32 %v7266, %v7735
  %7737 = vmatprep.subr.mxu0 %v7736
  %v7738 = vand.u32 %v7265, 4294901760
  %v7739 = vsub.f32 %v7265, %v7738
  %7740 = vmatpush1.msra.mxu0 %v7739
  %v7741 = vand.u32 %v7262, 4294901760
  %v7742 = vsub.f32 %v7262, %v7741
  %7743 = vmatprep.subr.mxu0 %v7742
  %v7744 = vand.u32 %v7261, 4294901760
  %v7745 = vsub.f32 %v7261, %v7744
  %7746 = vmatpush1.msra.mxu0 %v7745
  %v7747 = vand.u32 %v7258, 4294901760
  %v7748 = vsub.f32 %v7258, %v7747
  %7749 = vmatprep.subr.mxu0 %v7748
  %v7750 = vand.u32 %v7257, 4294901760
  %v7751 = vsub.f32 %v7257, %v7750
  %7752 = vmatpush1.msra.mxu0 %v7751
  %v7753 = vand.u32 %v7254, 4294901760
  %v7754 = vsub.f32 %v7254, %v7753
  %7755 = vmatprep.subr.mxu0 %v7754
  %v7756 = vand.u32 %v7253, 4294901760
  %v7757 = vsub.f32 %v7253, %v7756
  %7758 = vmatpush1.msra.mxu0 %v7757
  %v7759 = vand.u32 %v7250, 4294901760
  %v7760 = vsub.f32 %v7250, %v7759
  %7761 = vmatprep.subr.mxu0 %v7760
  %v7762 = vand.u32 %v7249, 4294901760
  %v7763 = vsub.f32 %v7249, %v7762
  %7764 = vmatpush1.msra.mxu0 %v7763
  %v7765 = vand.u32 %v7246, 4294901760
  %v7766 = vsub.f32 %v7246, %v7765
  %7767 = vmatprep.subr.mxu0 %v7766
  %v7768 = vand.u32 %v7245, 4294901760
  %v7769 = vsub.f32 %v7245, %v7768
  %7770 = vmatpush1.msra.mxu0 %v7769
  %v7771 = vand.u32 %v7242, 4294901760
  %v7772 = vsub.f32 %v7242, %v7771
  %7773 = vmatprep.subr.mxu0 %v7772
  %v7774 = vand.u32 %v7241, 4294901760
  %v7775 = vsub.f32 %v7241, %v7774
  %7776 = vmatpush1.msra.mxu0 %v7775
  %v7777 = vand.u32 %v7238, 4294901760
  %v7778 = vsub.f32 %v7238, %v7777
  %7779 = vmatprep.subr.mxu0 %v7778
  %v7780 = vand.u32 %v7237, 4294901760
  %v7781 = vsub.f32 %v7237, %v7780
  %7782 = vmatpush1.msra.mxu0 %v7781
  %v7783 = vand.u32 %v7234, 4294901760
  %v7784 = vsub.f32 %v7234, %v7783
  %7785 = vmatprep.subr.mxu0 %v7784
  %v7786 = vand.u32 %v7233, 4294901760
  %v7787 = vsub.f32 %v7233, %v7786
  %7788 = vmatpush1.msra.mxu0 %v7787
  %v7789 = vand.u32 %v7230, 4294901760
  %v7790 = vsub.f32 %v7230, %v7789
  %7791 = vmatprep.subr.mxu0 %v7790
  %v7792 = vand.u32 %v7229, 4294901760
  %v7793 = vsub.f32 %v7229, %v7792
  %7794 = vmatpush1.msra.mxu0 %v7793
  %v7795 = vand.u32 %v7226, 4294901760
  %v7796 = vsub.f32 %v7226, %v7795
  %7797 = vmatprep.subr.mxu0 %v7796
  %v7798 = vand.u32 %v7225, 4294901760
  %v7799 = vsub.f32 %v7225, %v7798
  %7800 = vmatpush1.msra.mxu0 %v7799
  %7801 = vmatprep.subr.mxu0 0.0
  %7802 = vmatpush2.msra.mxu0 0.0
  %7803 = vmatprep.subr.mxu0 0.0
  %7804 = vmatpush2.msra.mxu0 0.0
  %7805 = vmatprep.subr.mxu0 0.0
  %7806 = vmatpush2.msra.mxu0 0.0
  %7807 = vmatprep.subr.mxu0 0.0
  %7808 = vmatpush2.msra.mxu0 0.0
  %7809 = vmatprep.subr.mxu0 0.0
  %7810 = vmatpush2.msra.mxu0 0.0
  %7811 = vmatprep.subr.mxu0 0.0
  %7812 = vmatpush2.msra.mxu0 0.0
  %7813 = vmatprep.subr.mxu0 0.0
  %7814 = vmatpush2.msra.mxu0 0.0
  %7815 = vmatprep.subr.mxu0 0.0
  %7816 = vmatpush2.msra.mxu0 0.0
  %7817 = vmatprep.subr.mxu0 0.0
  %7818 = vmatpush2.msra.mxu0 0.0
  %7819 = vmatprep.subr.mxu0 0.0
  %7820 = vmatpush2.msra.mxu0 0.0
  %7821 = vmatprep.subr.mxu0 0.0
  %7822 = vmatpush2.msra.mxu0 0.0
  %7823 = vmatprep.subr.mxu0 0.0
  %7824 = vmatpush2.msra.mxu0 0.0
  %7825 = vmatprep.subr.mxu0 0.0
  %7826 = vmatpush2.msra.mxu0 0.0
  %7827 = vmatprep.subr.mxu0 0.0
  %7828 = vmatpush2.msra.mxu0 0.0
  %7829 = vmatprep.subr.mxu0 0.0
  %7830 = vmatpush2.msra.mxu0 0.0
  %7831 = vmatprep.subr.mxu0 0.0
  %7832 = vmatpush2.msra.mxu0 0.0
  %7833 = vmatprep.mubr.f32.mxu0 0.0
  %v7834 = vand.u32 %v7221, 4294901760
  %v7835 = vsub.f32 %v7221, %v7834
  %7836 = vmatmul.mubr.f32.gmra.mxu0 %v7835
  %v7837 = vpop.f32.mrf.mxu0
  %v7838 = vadd.f32 %v7680, %v7837
  %v7839 = vpop.f32.mrf.mxu0
  %v7840 = vadd.f32 %v7682, %v7839
  %7841 = vmatprep.mubr.f32.mxu0 0.0
  %v7842 = vand.u32 %v7222, 4294901760
  %v7843 = vsub.f32 %v7222, %v7842
  %7844 = vmatmul.mubr.f32.gmra.mxu0 %v7843
  %v7845 = vpop.f32.mrf.mxu0
  %v7846 = vadd.f32 %v7687, %v7845
  %v7847 = vpop.f32.mrf.mxu0
  %v7848 = vadd.f32 %v7689, %v7847
  %7849 = vmatprep.mubr.f32.mxu0 0.0
  %v7850 = vand.u32 %v7223, 4294901760
  %v7851 = vsub.f32 %v7223, %v7850
  %7852 = vmatmul.mubr.f32.gmra.mxu0 %v7851
  %v7853 = vpop.f32.mrf.mxu0
  %v7854 = vadd.f32 %v7694, %v7853
  %v7855 = vpop.f32.mrf.mxu0
  %v7856 = vadd.f32 %v7696, %v7855
  %7857 = vmatprep.mubr.f32.mxu0 0.0
  %v7858 = vand.u32 %v7224, 4294901760
  %v7859 = vsub.f32 %v7224, %v7858
  %7860 = vmatmul.mubr.f32.gmra.mxu0 %v7859
  %v7861 = vpop.f32.mrf.mxu0
  %v7862 = vadd.f32 %v7701, %v7861
  %v7863 = vpop.f32.mrf.mxu0
  %v7864 = vadd.f32 %v7703, %v7863
  %7865 = vdwg.mxu0
  %v7866 = vand.u32 %v7286, 4294901760
  %7867 = vmatprep.subr.mxu0 %v7866
  %v7868 = vand.u32 %v7285, 4294901760
  %7869 = vmatpush1.msra.mxu0 %v7868
  %v7870 = vand.u32 %v7282, 4294901760
  %7871 = vmatprep.subr.mxu0 %v7870
  %v7872 = vand.u32 %v7281, 4294901760
  %7873 = vmatpush1.msra.mxu0 %v7872
  %v7874 = vand.u32 %v7278, 4294901760
  %7875 = vmatprep.subr.mxu0 %v7874
  %v7876 = vand.u32 %v7277, 4294901760
  %7877 = vmatpush1.msra.mxu0 %v7876
  %v7878 = vand.u32 %v7274, 4294901760
  %7879 = vmatprep.subr.mxu0 %v7878
  %v7880 = vand.u32 %v7273, 4294901760
  %7881 = vmatpush1.msra.mxu0 %v7880
  %v7882 = vand.u32 %v7270, 4294901760
  %7883 = vmatprep.subr.mxu0 %v7882
  %v7884 = vand.u32 %v7269, 4294901760
  %7885 = vmatpush1.msra.mxu0 %v7884
  %v7886 = vand.u32 %v7266, 4294901760
  %7887 = vmatprep.subr.mxu0 %v7886
  %v7888 = vand.u32 %v7265, 4294901760
  %7889 = vmatpush1.msra.mxu0 %v7888
  %v7890 = vand.u32 %v7262, 4294901760
  %7891 = vmatprep.subr.mxu0 %v7890
  %v7892 = vand.u32 %v7261, 4294901760
  %7893 = vmatpush1.msra.mxu0 %v7892
  %v7894 = vand.u32 %v7258, 4294901760
  %7895 = vmatprep.subr.mxu0 %v7894
  %v7896 = vand.u32 %v7257, 4294901760
  %7897 = vmatpush1.msra.mxu0 %v7896
  %v7898 = vand.u32 %v7254, 4294901760
  %7899 = vmatprep.subr.mxu0 %v7898
  %v7900 = vand.u32 %v7253, 4294901760
  %7901 = vmatpush1.msra.mxu0 %v7900
  %v7902 = vand.u32 %v7250, 4294901760
  %7903 = vmatprep.subr.mxu0 %v7902
  %v7904 = vand.u32 %v7249, 4294901760
  %7905 = vmatpush1.msra.mxu0 %v7904
  %v7906 = vand.u32 %v7246, 4294901760
  %7907 = vmatprep.subr.mxu0 %v7906
  %v7908 = vand.u32 %v7245, 4294901760
  %7909 = vmatpush1.msra.mxu0 %v7908
  %v7910 = vand.u32 %v7242, 4294901760
  %7911 = vmatprep.subr.mxu0 %v7910
  %v7912 = vand.u32 %v7241, 4294901760
  %7913 = vmatpush1.msra.mxu0 %v7912
  %v7914 = vand.u32 %v7238, 4294901760
  %7915 = vmatprep.subr.mxu0 %v7914
  %v7916 = vand.u32 %v7237, 4294901760
  %7917 = vmatpush1.msra.mxu0 %v7916
  %v7918 = vand.u32 %v7234, 4294901760
  %7919 = vmatprep.subr.mxu0 %v7918
  %v7920 = vand.u32 %v7233, 4294901760
  %7921 = vmatpush1.msra.mxu0 %v7920
  %v7922 = vand.u32 %v7230, 4294901760
  %7923 = vmatprep.subr.mxu0 %v7922
  %v7924 = vand.u32 %v7229, 4294901760
  %7925 = vmatpush1.msra.mxu0 %v7924
  %v7926 = vand.u32 %v7226, 4294901760
  %7927 = vmatprep.subr.mxu0 %v7926
  %v7928 = vand.u32 %v7225, 4294901760
  %7929 = vmatpush1.msra.mxu0 %v7928
  %7930 = vmatprep.subr.mxu0 0.0
  %7931 = vmatpush2.msra.mxu0 0.0
  %7932 = vmatprep.subr.mxu0 0.0
  %7933 = vmatpush2.msra.mxu0 0.0
  %7934 = vmatprep.subr.mxu0 0.0
  %7935 = vmatpush2.msra.mxu0 0.0
  %7936 = vmatprep.subr.mxu0 0.0
  %7937 = vmatpush2.msra.mxu0 0.0
  %7938 = vmatprep.subr.mxu0 0.0
  %7939 = vmatpush2.msra.mxu0 0.0
  %7940 = vmatprep.subr.mxu0 0.0
  %7941 = vmatpush2.msra.mxu0 0.0
  %7942 = vmatprep.subr.mxu0 0.0
  %7943 = vmatpush2.msra.mxu0 0.0
  %7944 = vmatprep.subr.mxu0 0.0
  %7945 = vmatpush2.msra.mxu0 0.0
  %7946 = vmatprep.subr.mxu0 0.0
  %7947 = vmatpush2.msra.mxu0 0.0
  %7948 = vmatprep.subr.mxu0 0.0
  %7949 = vmatpush2.msra.mxu0 0.0
  %7950 = vmatprep.subr.mxu0 0.0
  %7951 = vmatpush2.msra.mxu0 0.0
  %7952 = vmatprep.subr.mxu0 0.0
  %7953 = vmatpush2.msra.mxu0 0.0
  %7954 = vmatprep.subr.mxu0 0.0
  %7955 = vmatpush2.msra.mxu0 0.0
  %7956 = vmatprep.subr.mxu0 0.0
  %7957 = vmatpush2.msra.mxu0 0.0
  %7958 = vmatprep.subr.mxu0 0.0
  %7959 = vmatpush2.msra.mxu0 0.0
  %7960 = vmatprep.subr.mxu0 0.0
  %7961 = vmatpush2.msra.mxu0 0.0
  %7962 = vmatprep.mubr.f32.mxu0 0.0
  %v7963 = vand.u32 %v7221, 4294901760
  %v7964 = vsub.f32 %v7221, %v7963
  %v7965 = vand.u32 %v7964, 4294901760
  %7966 = vmatmul.mubr.f32.gmra.mxu0 %v7965
  %v7967 = vpop.f32.mrf.mxu0
  %v7968 = vadd.f32 %v7838, %v7967
  %v7969 = vpop.f32.mrf.mxu0
  %v7970 = vadd.f32 %v7840, %v7969
  %7971 = vmatprep.mubr.f32.mxu0 0.0
  %v7972 = vand.u32 %v7222, 4294901760
  %v7973 = vsub.f32 %v7222, %v7972
  %v7974 = vand.u32 %v7973, 4294901760
  %7975 = vmatmul.mubr.f32.gmra.mxu0 %v7974
  %v7976 = vpop.f32.mrf.mxu0
  %v7977 = vadd.f32 %v7846, %v7976
  %v7978 = vpop.f32.mrf.mxu0
  %v7979 = vadd.f32 %v7848, %v7978
  %7980 = vmatprep.mubr.f32.mxu0 0.0
  %v7981 = vand.u32 %v7223, 4294901760
  %v7982 = vsub.f32 %v7223, %v7981
  %v7983 = vand.u32 %v7982, 4294901760
  %7984 = vmatmul.mubr.f32.gmra.mxu0 %v7983
  %v7985 = vpop.f32.mrf.mxu0
  %v7986 = vadd.f32 %v7854, %v7985
  %v7987 = vpop.f32.mrf.mxu0
  %v7988 = vadd.f32 %v7856, %v7987
  %7989 = vmatprep.mubr.f32.mxu0 0.0
  %v7990 = vand.u32 %v7224, 4294901760
  %v7991 = vsub.f32 %v7224, %v7990
  %v7992 = vand.u32 %v7991, 4294901760
  %7993 = vmatmul.mubr.f32.gmra.mxu0 %v7992
  %v7994 = vpop.f32.mrf.mxu0
  %v7995 = vadd.f32 %v7862, %v7994
  %v7996 = vpop.f32.mrf.mxu0
  %v7997 = vadd.f32 %v7864, %v7996
  %7998 = vdwg.mxu0
  %v7999 = vand.u32 %v7286, 4294901760
  %v8000 = vsub.f32 %v7286, %v7999
  %v8001 = vand.u32 %v8000, 4294901760
  %8002 = vmatprep.subr.mxu0 %v8001
  %v8003 = vand.u32 %v7285, 4294901760
  %v8004 = vsub.f32 %v7285, %v8003
  %v8005 = vand.u32 %v8004, 4294901760
  %8006 = vmatpush1.msra.mxu0 %v8005
  %v8007 = vand.u32 %v7282, 4294901760
  %v8008 = vsub.f32 %v7282, %v8007
  %v8009 = vand.u32 %v8008, 4294901760
  %8010 = vmatprep.subr.mxu0 %v8009
  %v8011 = vand.u32 %v7281, 4294901760
  %v8012 = vsub.f32 %v7281, %v8011
  %v8013 = vand.u32 %v8012, 4294901760
  %8014 = vmatpush1.msra.mxu0 %v8013
  %v8015 = vand.u32 %v7278, 4294901760
  %v8016 = vsub.f32 %v7278, %v8015
  %v8017 = vand.u32 %v8016, 4294901760
  %8018 = vmatprep.subr.mxu0 %v8017
  %v8019 = vand.u32 %v7277, 4294901760
  %v8020 = vsub.f32 %v7277, %v8019
  %v8021 = vand.u32 %v8020, 4294901760
  %8022 = vmatpush1.msra.mxu0 %v8021
  %v8023 = vand.u32 %v7274, 4294901760
  %v8024 = vsub.f32 %v7274, %v8023
  %v8025 = vand.u32 %v8024, 4294901760
  %8026 = vmatprep.subr.mxu0 %v8025
  %v8027 = vand.u32 %v7273, 4294901760
  %v8028 = vsub.f32 %v7273, %v8027
  %v8029 = vand.u32 %v8028, 4294901760
  %8030 = vmatpush1.msra.mxu0 %v8029
  %v8031 = vand.u32 %v7270, 4294901760
  %v8032 = vsub.f32 %v7270, %v8031
  %v8033 = vand.u32 %v8032, 4294901760
  %8034 = vmatprep.subr.mxu0 %v8033
  %v8035 = vand.u32 %v7269, 4294901760
  %v8036 = vsub.f32 %v7269, %v8035
  %v8037 = vand.u32 %v8036, 4294901760
  %8038 = vmatpush1.msra.mxu0 %v8037
  %v8039 = vand.u32 %v7266, 4294901760
  %v8040 = vsub.f32 %v7266, %v8039
  %v8041 = vand.u32 %v8040, 4294901760
  %8042 = vmatprep.subr.mxu0 %v8041
  %v8043 = vand.u32 %v7265, 4294901760
  %v8044 = vsub.f32 %v7265, %v8043
  %v8045 = vand.u32 %v8044, 4294901760
  %8046 = vmatpush1.msra.mxu0 %v8045
  %v8047 = vand.u32 %v7262, 4294901760
  %v8048 = vsub.f32 %v7262, %v8047
  %v8049 = vand.u32 %v8048, 4294901760
  %8050 = vmatprep.subr.mxu0 %v8049
  %v8051 = vand.u32 %v7261, 4294901760
  %v8052 = vsub.f32 %v7261, %v8051
  %v8053 = vand.u32 %v8052, 4294901760
  %8054 = vmatpush1.msra.mxu0 %v8053
  %v8055 = vand.u32 %v7258, 4294901760
  %v8056 = vsub.f32 %v7258, %v8055
  %v8057 = vand.u32 %v8056, 4294901760
  %8058 = vmatprep.subr.mxu0 %v8057
  %v8059 = vand.u32 %v7257, 4294901760
  %v8060 = vsub.f32 %v7257, %v8059
  %v8061 = vand.u32 %v8060, 4294901760
  %8062 = vmatpush1.msra.mxu0 %v8061
  %v8063 = vand.u32 %v7254, 4294901760
  %v8064 = vsub.f32 %v7254, %v8063
  %v8065 = vand.u32 %v8064, 4294901760
  %8066 = vmatprep.subr.mxu0 %v8065
  %v8067 = vand.u32 %v7253, 4294901760
  %v8068 = vsub.f32 %v7253, %v8067
  %v8069 = vand.u32 %v8068, 4294901760
  %8070 = vmatpush1.msra.mxu0 %v8069
  %v8071 = vand.u32 %v7250, 4294901760
  %v8072 = vsub.f32 %v7250, %v8071
  %v8073 = vand.u32 %v8072, 4294901760
  %8074 = vmatprep.subr.mxu0 %v8073
  %v8075 = vand.u32 %v7249, 4294901760
  %v8076 = vsub.f32 %v7249, %v8075
  %v8077 = vand.u32 %v8076, 4294901760
  %8078 = vmatpush1.msra.mxu0 %v8077
  %v8079 = vand.u32 %v7246, 4294901760
  %v8080 = vsub.f32 %v7246, %v8079
  %v8081 = vand.u32 %v8080, 4294901760
  %8082 = vmatprep.subr.mxu0 %v8081
  %v8083 = vand.u32 %v7245, 4294901760
  %v8084 = vsub.f32 %v7245, %v8083
  %v8085 = vand.u32 %v8084, 4294901760
  %8086 = vmatpush1.msra.mxu0 %v8085
  %v8087 = vand.u32 %v7242, 4294901760
  %v8088 = vsub.f32 %v7242, %v8087
  %v8089 = vand.u32 %v8088, 4294901760
  %8090 = vmatprep.subr.mxu0 %v8089
  %v8091 = vand.u32 %v7241, 4294901760
  %v8092 = vsub.f32 %v7241, %v8091
  %v8093 = vand.u32 %v8092, 4294901760
  %8094 = vmatpush1.msra.mxu0 %v8093
  %v8095 = vand.u32 %v7238, 4294901760
  %v8096 = vsub.f32 %v7238, %v8095
  %v8097 = vand.u32 %v8096, 4294901760
  %8098 = vmatprep.subr.mxu0 %v8097
  %v8099 = vand.u32 %v7237, 4294901760
  %v8100 = vsub.f32 %v7237, %v8099
  %v8101 = vand.u32 %v8100, 4294901760
  %8102 = vmatpush1.msra.mxu0 %v8101
  %v8103 = vand.u32 %v7234, 4294901760
  %v8104 = vsub.f32 %v7234, %v8103
  %v8105 = vand.u32 %v8104, 4294901760
  %8106 = vmatprep.subr.mxu0 %v8105
  %v8107 = vand.u32 %v7233, 4294901760
  %v8108 = vsub.f32 %v7233, %v8107
  %v8109 = vand.u32 %v8108, 4294901760
  %8110 = vmatpush1.msra.mxu0 %v8109
  %v8111 = vand.u32 %v7230, 4294901760
  %v8112 = vsub.f32 %v7230, %v8111
  %v8113 = vand.u32 %v8112, 4294901760
  %8114 = vmatprep.subr.mxu0 %v8113
  %v8115 = vand.u32 %v7229, 4294901760
  %v8116 = vsub.f32 %v7229, %v8115
  %v8117 = vand.u32 %v8116, 4294901760
  %8118 = vmatpush1.msra.mxu0 %v8117
  %v8119 = vand.u32 %v7226, 4294901760
  %v8120 = vsub.f32 %v7226, %v8119
  %v8121 = vand.u32 %v8120, 4294901760
  %8122 = vmatprep.subr.mxu0 %v8121
  %v8123 = vand.u32 %v7225, 4294901760
  %v8124 = vsub.f32 %v7225, %v8123
  %v8125 = vand.u32 %v8124, 4294901760
  %8126 = vmatpush1.msra.mxu0 %v8125
  %8127 = vmatprep.subr.mxu0 0.0
  %8128 = vmatpush2.msra.mxu0 0.0
  %8129 = vmatprep.subr.mxu0 0.0
  %8130 = vmatpush2.msra.mxu0 0.0
  %8131 = vmatprep.subr.mxu0 0.0
  %8132 = vmatpush2.msra.mxu0 0.0
  %8133 = vmatprep.subr.mxu0 0.0
  %8134 = vmatpush2.msra.mxu0 0.0
  %8135 = vmatprep.subr.mxu0 0.0
  %8136 = vmatpush2.msra.mxu0 0.0
  %8137 = vmatprep.subr.mxu0 0.0
  %8138 = vmatpush2.msra.mxu0 0.0
  %8139 = vmatprep.subr.mxu0 0.0
  %8140 = vmatpush2.msra.mxu0 0.0
  %8141 = vmatprep.subr.mxu0 0.0
  %8142 = vmatpush2.msra.mxu0 0.0
  %8143 = vmatprep.subr.mxu0 0.0
  %8144 = vmatpush2.msra.mxu0 0.0
  %8145 = vmatprep.subr.mxu0 0.0
  %8146 = vmatpush2.msra.mxu0 0.0
  %8147 = vmatprep.subr.mxu0 0.0
  %8148 = vmatpush2.msra.mxu0 0.0
  %8149 = vmatprep.subr.mxu0 0.0
  %8150 = vmatpush2.msra.mxu0 0.0
  %8151 = vmatprep.subr.mxu0 0.0
  %8152 = vmatpush2.msra.mxu0 0.0
  %8153 = vmatprep.subr.mxu0 0.0
  %8154 = vmatpush2.msra.mxu0 0.0
  %8155 = vmatprep.subr.mxu0 0.0
  %8156 = vmatpush2.msra.mxu0 0.0
  %8157 = vmatprep.subr.mxu0 0.0
  %8158 = vmatpush2.msra.mxu0 0.0
  %8159 = vmatprep.mubr.f32.mxu0 0.0
  %v8160 = vand.u32 %v7221, 4294901760
  %8161 = vmatmul.mubr.f32.gmra.mxu0 %v8160
  %v8162 = vpop.f32.mrf.mxu0
  %v8163 = vadd.f32 %v7968, %v8162
  %v8164 = vpop.f32.mrf.mxu0
  %v8165 = vadd.f32 %v7970, %v8164
  %8166 = vmatprep.mubr.f32.mxu0 0.0
  %v8167 = vand.u32 %v7222, 4294901760
  %8168 = vmatmul.mubr.f32.gmra.mxu0 %v8167
  %v8169 = vpop.f32.mrf.mxu0
  %v8170 = vadd.f32 %v7977, %v8169
  %v8171 = vpop.f32.mrf.mxu0
  %v8172 = vadd.f32 %v7979, %v8171
  %8173 = vmatprep.mubr.f32.mxu0 0.0
  %v8174 = vand.u32 %v7223, 4294901760
  %8175 = vmatmul.mubr.f32.gmra.mxu0 %v8174
  %v8176 = vpop.f32.mrf.mxu0
  %v8177 = vadd.f32 %v7986, %v8176
  %v8178 = vpop.f32.mrf.mxu0
  %v8179 = vadd.f32 %v7988, %v8178
  %8180 = vmatprep.mubr.f32.mxu0 0.0
  %v8181 = vand.u32 %v7224, 4294901760
  %8182 = vmatmul.mubr.f32.gmra.mxu0 %v8181
  %v8183 = vpop.f32.mrf.mxu0
  %v8184 = vadd.f32 %v7995, %v8183
  %v8185 = vpop.f32.mrf.mxu0
  %v8186 = vadd.f32 %v7997, %v8185
  %8187 = vdwg.mxu0
  %v8188 = vand.u32 %v7286, 4294901760
  %8189 = vmatprep.subr.mxu0 %v8188
  %v8190 = vand.u32 %v7285, 4294901760
  %8191 = vmatpush1.msra.mxu0 %v8190
  %v8192 = vand.u32 %v7282, 4294901760
  %8193 = vmatprep.subr.mxu0 %v8192
  %v8194 = vand.u32 %v7281, 4294901760
  %8195 = vmatpush1.msra.mxu0 %v8194
  %v8196 = vand.u32 %v7278, 4294901760
  %8197 = vmatprep.subr.mxu0 %v8196
  %v8198 = vand.u32 %v7277, 4294901760
  %8199 = vmatpush1.msra.mxu0 %v8198
  %v8200 = vand.u32 %v7274, 4294901760
  %8201 = vmatprep.subr.mxu0 %v8200
  %v8202 = vand.u32 %v7273, 4294901760
  %8203 = vmatpush1.msra.mxu0 %v8202
  %v8204 = vand.u32 %v7270, 4294901760
  %8205 = vmatprep.subr.mxu0 %v8204
  %v8206 = vand.u32 %v7269, 4294901760
  %8207 = vmatpush1.msra.mxu0 %v8206
  %v8208 = vand.u32 %v7266, 4294901760
  %8209 = vmatprep.subr.mxu0 %v8208
  %v8210 = vand.u32 %v7265, 4294901760
  %8211 = vmatpush1.msra.mxu0 %v8210
  %v8212 = vand.u32 %v7262, 4294901760
  %8213 = vmatprep.subr.mxu0 %v8212
  %v8214 = vand.u32 %v7261, 4294901760
  %8215 = vmatpush1.msra.mxu0 %v8214
  %v8216 = vand.u32 %v7258, 4294901760
  %8217 = vmatprep.subr.mxu0 %v8216
  %v8218 = vand.u32 %v7257, 4294901760
  %8219 = vmatpush1.msra.mxu0 %v8218
  %v8220 = vand.u32 %v7254, 4294901760
  %8221 = vmatprep.subr.mxu0 %v8220
  %v8222 = vand.u32 %v7253, 4294901760
  %8223 = vmatpush1.msra.mxu0 %v8222
  %v8224 = vand.u32 %v7250, 4294901760
  %8225 = vmatprep.subr.mxu0 %v8224
  %v8226 = vand.u32 %v7249, 4294901760
  %8227 = vmatpush1.msra.mxu0 %v8226
  %v8228 = vand.u32 %v7246, 4294901760
  %8229 = vmatprep.subr.mxu0 %v8228
  %v8230 = vand.u32 %v7245, 4294901760
  %8231 = vmatpush1.msra.mxu0 %v8230
  %v8232 = vand.u32 %v7242, 4294901760
  %8233 = vmatprep.subr.mxu0 %v8232
  %v8234 = vand.u32 %v7241, 4294901760
  %8235 = vmatpush1.msra.mxu0 %v8234
  %v8236 = vand.u32 %v7238, 4294901760
  %8237 = vmatprep.subr.mxu0 %v8236
  %v8238 = vand.u32 %v7237, 4294901760
  %8239 = vmatpush1.msra.mxu0 %v8238
  %v8240 = vand.u32 %v7234, 4294901760
  %8241 = vmatprep.subr.mxu0 %v8240
  %v8242 = vand.u32 %v7233, 4294901760
  %8243 = vmatpush1.msra.mxu0 %v8242
  %v8244 = vand.u32 %v7230, 4294901760
  %8245 = vmatprep.subr.mxu0 %v8244
  %v8246 = vand.u32 %v7229, 4294901760
  %8247 = vmatpush1.msra.mxu0 %v8246
  %v8248 = vand.u32 %v7226, 4294901760
  %8249 = vmatprep.subr.mxu0 %v8248
  %v8250 = vand.u32 %v7225, 4294901760
  %8251 = vmatpush1.msra.mxu0 %v8250
  %8252 = vmatprep.subr.mxu0 0.0
  %8253 = vmatpush2.msra.mxu0 0.0
  %8254 = vmatprep.subr.mxu0 0.0
  %8255 = vmatpush2.msra.mxu0 0.0
  %8256 = vmatprep.subr.mxu0 0.0
  %8257 = vmatpush2.msra.mxu0 0.0
  %8258 = vmatprep.subr.mxu0 0.0
  %8259 = vmatpush2.msra.mxu0 0.0
  %8260 = vmatprep.subr.mxu0 0.0
  %8261 = vmatpush2.msra.mxu0 0.0
  %8262 = vmatprep.subr.mxu0 0.0
  %8263 = vmatpush2.msra.mxu0 0.0
  %8264 = vmatprep.subr.mxu0 0.0
  %8265 = vmatpush2.msra.mxu0 0.0
  %8266 = vmatprep.subr.mxu0 0.0
  %8267 = vmatpush2.msra.mxu0 0.0
  %8268 = vmatprep.subr.mxu0 0.0
  %8269 = vmatpush2.msra.mxu0 0.0
  %8270 = vmatprep.subr.mxu0 0.0
  %8271 = vmatpush2.msra.mxu0 0.0
  %8272 = vmatprep.subr.mxu0 0.0
  %8273 = vmatpush2.msra.mxu0 0.0
  %8274 = vmatprep.subr.mxu0 0.0
  %8275 = vmatpush2.msra.mxu0 0.0
  %8276 = vmatprep.subr.mxu0 0.0
  %8277 = vmatpush2.msra.mxu0 0.0
  %8278 = vmatprep.subr.mxu0 0.0
  %8279 = vmatpush2.msra.mxu0 0.0
  %8280 = vmatprep.subr.mxu0 0.0
  %8281 = vmatpush2.msra.mxu0 0.0
  %8282 = vmatprep.subr.mxu0 0.0
  %8283 = vmatpush2.msra.mxu0 0.0
  %8284 = vmatprep.mubr.f32.mxu0 0.0
  %v8285 = vand.u32 %v7221, 4294901760
  %8286 = vmatmul.mubr.f32.gmra.mxu0 %v8285
  %v8287 = vpop.f32.mrf.mxu0
  %v8288 = vadd.f32 %v8163, %v8287
  %v8289 = vpop.f32.mrf.mxu0
  %v8290 = vadd.f32 %v8165, %v8289
  %8291 = vmatprep.mubr.f32.mxu0 0.0
  %v8292 = vand.u32 %v7222, 4294901760
  %8293 = vmatmul.mubr.f32.gmra.mxu0 %v8292
  %v8294 = vpop.f32.mrf.mxu0
  %v8295 = vadd.f32 %v8170, %v8294
  %v8296 = vpop.f32.mrf.mxu0
  %v8297 = vadd.f32 %v8172, %v8296
  %8298 = vmatprep.mubr.f32.mxu0 0.0
  %v8299 = vand.u32 %v7223, 4294901760
  %8300 = vmatmul.mubr.f32.gmra.mxu0 %v8299
  %v8301 = vpop.f32.mrf.mxu0
  %v8302 = vadd.f32 %v8177, %v8301
  %v8303 = vpop.f32.mrf.mxu0
  %v8304 = vadd.f32 %v8179, %v8303
  %8305 = vmatprep.mubr.f32.mxu0 0.0
  %v8306 = vand.u32 %v7224, 4294901760
  %8307 = vmatmul.mubr.f32.gmra.mxu0 %v8306
  %v8308 = vpop.f32.mrf.mxu0
  %v8309 = vadd.f32 %v8184, %v8308
  %v8310 = vpop.f32.mrf.mxu0
  %v8311 = vadd.f32 %v8186, %v8310
  %8312 = vdwg.mxu0
  %v8313 = vand.u32 %v7288, 4294901760
  %8314 = vmatprep.subr.mxu0 %v8313
  %v8315 = vand.u32 %v7287, 4294901760
  %8316 = vmatpush1.msra.mxu0 %v8315
  %v8317 = vand.u32 %v7284, 4294901760
  %8318 = vmatprep.subr.mxu0 %v8317
  %v8319 = vand.u32 %v7283, 4294901760
  %8320 = vmatpush1.msra.mxu0 %v8319
  %v8321 = vand.u32 %v7280, 4294901760
  %8322 = vmatprep.subr.mxu0 %v8321
  %v8323 = vand.u32 %v7279, 4294901760
  %8324 = vmatpush1.msra.mxu0 %v8323
  %v8325 = vand.u32 %v7276, 4294901760
  %8326 = vmatprep.subr.mxu0 %v8325
  %v8327 = vand.u32 %v7275, 4294901760
  %8328 = vmatpush1.msra.mxu0 %v8327
  %v8329 = vand.u32 %v7272, 4294901760
  %8330 = vmatprep.subr.mxu0 %v8329
  %v8331 = vand.u32 %v7271, 4294901760
  %8332 = vmatpush1.msra.mxu0 %v8331
  %v8333 = vand.u32 %v7268, 4294901760
  %8334 = vmatprep.subr.mxu0 %v8333
  %v8335 = vand.u32 %v7267, 4294901760
  %8336 = vmatpush1.msra.mxu0 %v8335
  %v8337 = vand.u32 %v7264, 4294901760
  %8338 = vmatprep.subr.mxu0 %v8337
  %v8339 = vand.u32 %v7263, 4294901760
  %8340 = vmatpush1.msra.mxu0 %v8339
  %v8341 = vand.u32 %v7260, 4294901760
  %8342 = vmatprep.subr.mxu0 %v8341
  %v8343 = vand.u32 %v7259, 4294901760
  %8344 = vmatpush1.msra.mxu0 %v8343
  %v8345 = vand.u32 %v7256, 4294901760
  %8346 = vmatprep.subr.mxu0 %v8345
  %v8347 = vand.u32 %v7255, 4294901760
  %8348 = vmatpush1.msra.mxu0 %v8347
  %v8349 = vand.u32 %v7252, 4294901760
  %8350 = vmatprep.subr.mxu0 %v8349
  %v8351 = vand.u32 %v7251, 4294901760
  %8352 = vmatpush1.msra.mxu0 %v8351
  %v8353 = vand.u32 %v7248, 4294901760
  %8354 = vmatprep.subr.mxu0 %v8353
  %v8355 = vand.u32 %v7247, 4294901760
  %8356 = vmatpush1.msra.mxu0 %v8355
  %v8357 = vand.u32 %v7244, 4294901760
  %8358 = vmatprep.subr.mxu0 %v8357
  %v8359 = vand.u32 %v7243, 4294901760
  %8360 = vmatpush1.msra.mxu0 %v8359
  %v8361 = vand.u32 %v7240, 4294901760
  %8362 = vmatprep.subr.mxu0 %v8361
  %v8363 = vand.u32 %v7239, 4294901760
  %8364 = vmatpush1.msra.mxu0 %v8363
  %v8365 = vand.u32 %v7236, 4294901760
  %8366 = vmatprep.subr.mxu0 %v8365
  %v8367 = vand.u32 %v7235, 4294901760
  %8368 = vmatpush1.msra.mxu0 %v8367
  %v8369 = vand.u32 %v7232, 4294901760
  %8370 = vmatprep.subr.mxu0 %v8369
  %v8371 = vand.u32 %v7231, 4294901760
  %8372 = vmatpush1.msra.mxu0 %v8371
  %v8373 = vand.u32 %v7228, 4294901760
  %8374 = vmatprep.subr.mxu0 %v8373
  %v8375 = vand.u32 %v7227, 4294901760
  %8376 = vmatpush1.msra.mxu0 %v8375
  %8377 = vmatprep.subr.mxu0 0.0
  %8378 = vmatpush2.msra.mxu0 0.0
  %8379 = vmatprep.subr.mxu0 0.0
  %8380 = vmatpush2.msra.mxu0 0.0
  %8381 = vmatprep.subr.mxu0 0.0
  %8382 = vmatpush2.msra.mxu0 0.0
  %8383 = vmatprep.subr.mxu0 0.0
  %8384 = vmatpush2.msra.mxu0 0.0
  %8385 = vmatprep.subr.mxu0 0.0
  %8386 = vmatpush2.msra.mxu0 0.0
  %8387 = vmatprep.subr.mxu0 0.0
  %8388 = vmatpush2.msra.mxu0 0.0
  %8389 = vmatprep.subr.mxu0 0.0
  %8390 = vmatpush2.msra.mxu0 0.0
  %8391 = vmatprep.subr.mxu0 0.0
  %8392 = vmatpush2.msra.mxu0 0.0
  %8393 = vmatprep.subr.mxu0 0.0
  %8394 = vmatpush2.msra.mxu0 0.0
  %8395 = vmatprep.subr.mxu0 0.0
  %8396 = vmatpush2.msra.mxu0 0.0
  %8397 = vmatprep.subr.mxu0 0.0
  %8398 = vmatpush2.msra.mxu0 0.0
  %8399 = vmatprep.subr.mxu0 0.0
  %8400 = vmatpush2.msra.mxu0 0.0
  %8401 = vmatprep.subr.mxu0 0.0
  %8402 = vmatpush2.msra.mxu0 0.0
  %8403 = vmatprep.subr.mxu0 0.0
  %8404 = vmatpush2.msra.mxu0 0.0
  %8405 = vmatprep.subr.mxu0 0.0
  %8406 = vmatpush2.msra.mxu0 0.0
  %8407 = vmatprep.subr.mxu0 0.0
  %8408 = vmatpush2.msra.mxu0 0.0
  %8409 = vmatprep.mubr.f32.mxu0 0.0
  %v8410 = vand.u32 %v7221, 4294901760
  %v8411 = vsub.f32 %v7221, %v8410
  %v8412 = vand.u32 %v8411, 4294901760
  %v8413 = vsub.f32 %v8411, %v8412
  %v8414 = vand.u32 %v8413, 4294901760
  %8415 = vmatmul.mubr.f32.gmra.mxu0 %v8414
  %v8416 = vpop.f32.mrf.mxu0
  %v8417 = vadd.f32 %v7302, %v8416
  %v8418 = vpop.f32.mrf.mxu0
  %v8419 = vadd.f32 %v7306, %v8418
  %8420 = vmatprep.mubr.f32.mxu0 0.0
  %v8421 = vand.u32 %v7222, 4294901760
  %v8422 = vsub.f32 %v7222, %v8421
  %v8423 = vand.u32 %v8422, 4294901760
  %v8424 = vsub.f32 %v8422, %v8423
  %v8425 = vand.u32 %v8424, 4294901760
  %8426 = vmatmul.mubr.f32.gmra.mxu0 %v8425
  %v8427 = vpop.f32.mrf.mxu0
  %v8428 = vadd.f32 %v7302, %v8427
  %v8429 = vpop.f32.mrf.mxu0
  %v8430 = vadd.f32 %v7306, %v8429
  %8431 = vmatprep.mubr.f32.mxu0 0.0
  %v8432 = vand.u32 %v7223, 4294901760
  %v8433 = vsub.f32 %v7223, %v8432
  %v8434 = vand.u32 %v8433, 4294901760
  %v8435 = vsub.f32 %v8433, %v8434
  %v8436 = vand.u32 %v8435, 4294901760
  %8437 = vmatmul.mubr.f32.gmra.mxu0 %v8436
  %v8438 = vpop.f32.mrf.mxu0
  %v8439 = vadd.f32 %v7302, %v8438
  %v8440 = vpop.f32.mrf.mxu0
  %v8441 = vadd.f32 %v7306, %v8440
  %8442 = vmatprep.mubr.f32.mxu0 0.0
  %v8443 = vand.u32 %v7224, 4294901760
  %v8444 = vsub.f32 %v7224, %v8443
  %v8445 = vand.u32 %v8444, 4294901760
  %v8446 = vsub.f32 %v8444, %v8445
  %v8447 = vand.u32 %v8446, 4294901760
  %8448 = vmatmul.mubr.f32.gmra.mxu0 %v8447
  %v8449 = vpop.f32.mrf.mxu0
  %v8450 = vadd.f32 %v7302, %v8449
  %v8451 = vpop.f32.mrf.mxu0
  %v8452 = vadd.f32 %v7306, %v8451
  %8453 = vdwg.mxu0
  %v8454 = vand.u32 %v7288, 4294901760
  %v8455 = vsub.f32 %v7288, %v8454
  %v8456 = vand.u32 %v8455, 4294901760
  %v8457 = vsub.f32 %v8455, %v8456
  %v8458 = vand.u32 %v8457, 4294901760
  %8459 = vmatprep.subr.mxu0 %v8458
  %v8460 = vand.u32 %v7287, 4294901760
  %v8461 = vsub.f32 %v7287, %v8460
  %v8462 = vand.u32 %v8461, 4294901760
  %v8463 = vsub.f32 %v8461, %v8462
  %v8464 = vand.u32 %v8463, 4294901760
  %8465 = vmatpush1.msra.mxu0 %v8464
  %v8466 = vand.u32 %v7284, 4294901760
  %v8467 = vsub.f32 %v7284, %v8466
  %v8468 = vand.u32 %v8467, 4294901760
  %v8469 = vsub.f32 %v8467, %v8468
  %v8470 = vand.u32 %v8469, 4294901760
  %8471 = vmatprep.subr.mxu0 %v8470
  %v8472 = vand.u32 %v7283, 4294901760
  %v8473 = vsub.f32 %v7283, %v8472
  %v8474 = vand.u32 %v8473, 4294901760
  %v8475 = vsub.f32 %v8473, %v8474
  %v8476 = vand.u32 %v8475, 4294901760
  %8477 = vmatpush1.msra.mxu0 %v8476
  %v8478 = vand.u32 %v7280, 4294901760
  %v8479 = vsub.f32 %v7280, %v8478
  %v8480 = vand.u32 %v8479, 4294901760
  %v8481 = vsub.f32 %v8479, %v8480
  %v8482 = vand.u32 %v8481, 4294901760
  %8483 = vmatprep.subr.mxu0 %v8482
  %v8484 = vand.u32 %v7279, 4294901760
  %v8485 = vsub.f32 %v7279, %v8484
  %v8486 = vand.u32 %v8485, 4294901760
  %v8487 = vsub.f32 %v8485, %v8486
  %v8488 = vand.u32 %v8487, 4294901760
  %8489 = vmatpush1.msra.mxu0 %v8488
  %v8490 = vand.u32 %v7276, 4294901760
  %v8491 = vsub.f32 %v7276, %v8490
  %v8492 = vand.u32 %v8491, 4294901760
  %v8493 = vsub.f32 %v8491, %v8492
  %v8494 = vand.u32 %v8493, 4294901760
  %8495 = vmatprep.subr.mxu0 %v8494
  %v8496 = vand.u32 %v7275, 4294901760
  %v8497 = vsub.f32 %v7275, %v8496
  %v8498 = vand.u32 %v8497, 4294901760
  %v8499 = vsub.f32 %v8497, %v8498
  %v8500 = vand.u32 %v8499, 4294901760
  %8501 = vmatpush1.msra.mxu0 %v8500
  %v8502 = vand.u32 %v7272, 4294901760
  %v8503 = vsub.f32 %v7272, %v8502
  %v8504 = vand.u32 %v8503, 4294901760
  %v8505 = vsub.f32 %v8503, %v8504
  %v8506 = vand.u32 %v8505, 4294901760
  %8507 = vmatprep.subr.mxu0 %v8506
  %v8508 = vand.u32 %v7271, 4294901760
  %v8509 = vsub.f32 %v7271, %v8508
  %v8510 = vand.u32 %v8509, 4294901760
  %v8511 = vsub.f32 %v8509, %v8510
  %v8512 = vand.u32 %v8511, 4294901760
  %8513 = vmatpush1.msra.mxu0 %v8512
  %v8514 = vand.u32 %v7268, 4294901760
  %v8515 = vsub.f32 %v7268, %v8514
  %v8516 = vand.u32 %v8515, 4294901760
  %v8517 = vsub.f32 %v8515, %v8516
  %v8518 = vand.u32 %v8517, 4294901760
  %8519 = vmatprep.subr.mxu0 %v8518
  %v8520 = vand.u32 %v7267, 4294901760
  %v8521 = vsub.f32 %v7267, %v8520
  %v8522 = vand.u32 %v8521, 4294901760
  %v8523 = vsub.f32 %v8521, %v8522
  %v8524 = vand.u32 %v8523, 4294901760
  %8525 = vmatpush1.msra.mxu0 %v8524
  %v8526 = vand.u32 %v7264, 4294901760
  %v8527 = vsub.f32 %v7264, %v8526
  %v8528 = vand.u32 %v8527, 4294901760
  %v8529 = vsub.f32 %v8527, %v8528
  %v8530 = vand.u32 %v8529, 4294901760
  %8531 = vmatprep.subr.mxu0 %v8530
  %v8532 = vand.u32 %v7263, 4294901760
  %v8533 = vsub.f32 %v7263, %v8532
  %v8534 = vand.u32 %v8533, 4294901760
  %v8535 = vsub.f32 %v8533, %v8534
  %v8536 = vand.u32 %v8535, 4294901760
  %8537 = vmatpush1.msra.mxu0 %v8536
  %v8538 = vand.u32 %v7260, 4294901760
  %v8539 = vsub.f32 %v7260, %v8538
  %v8540 = vand.u32 %v8539, 4294901760
  %v8541 = vsub.f32 %v8539, %v8540
  %v8542 = vand.u32 %v8541, 4294901760
  %8543 = vmatprep.subr.mxu0 %v8542
  %v8544 = vand.u32 %v7259, 4294901760
  %v8545 = vsub.f32 %v7259, %v8544
  %v8546 = vand.u32 %v8545, 4294901760
  %v8547 = vsub.f32 %v8545, %v8546
  %v8548 = vand.u32 %v8547, 4294901760
  %8549 = vmatpush1.msra.mxu0 %v8548
  %v8550 = vand.u32 %v7256, 4294901760
  %v8551 = vsub.f32 %v7256, %v8550
  %v8552 = vand.u32 %v8551, 4294901760
  %v8553 = vsub.f32 %v8551, %v8552
  %v8554 = vand.u32 %v8553, 4294901760
  %8555 = vmatprep.subr.mxu0 %v8554
  %v8556 = vand.u32 %v7255, 4294901760
  %v8557 = vsub.f32 %v7255, %v8556
  %v8558 = vand.u32 %v8557, 4294901760
  %v8559 = vsub.f32 %v8557, %v8558
  %v8560 = vand.u32 %v8559, 4294901760
  %8561 = vmatpush1.msra.mxu0 %v8560
  %v8562 = vand.u32 %v7252, 4294901760
  %v8563 = vsub.f32 %v7252, %v8562
  %v8564 = vand.u32 %v8563, 4294901760
  %v8565 = vsub.f32 %v8563, %v8564
  %v8566 = vand.u32 %v8565, 4294901760
  %8567 = vmatprep.subr.mxu0 %v8566
  %v8568 = vand.u32 %v7251, 4294901760
  %v8569 = vsub.f32 %v7251, %v8568
  %v8570 = vand.u32 %v8569, 4294901760
  %v8571 = vsub.f32 %v8569, %v8570
  %v8572 = vand.u32 %v8571, 4294901760
  %8573 = vmatpush1.msra.mxu0 %v8572
  %v8574 = vand.u32 %v7248, 4294901760
  %v8575 = vsub.f32 %v7248, %v8574
  %v8576 = vand.u32 %v8575, 4294901760
  %v8577 = vsub.f32 %v8575, %v8576
  %v8578 = vand.u32 %v8577, 4294901760
  %8579 = vmatprep.subr.mxu0 %v8578
  %v8580 = vand.u32 %v7247, 4294901760
  %v8581 = vsub.f32 %v7247, %v8580
  %v8582 = vand.u32 %v8581, 4294901760
  %v8583 = vsub.f32 %v8581, %v8582
  %v8584 = vand.u32 %v8583, 4294901760
  %8585 = vmatpush1.msra.mxu0 %v8584
  %v8586 = vand.u32 %v7244, 4294901760
  %v8587 = vsub.f32 %v7244, %v8586
  %v8588 = vand.u32 %v8587, 4294901760
  %v8589 = vsub.f32 %v8587, %v8588
  %v8590 = vand.u32 %v8589, 4294901760
  %8591 = vmatprep.subr.mxu0 %v8590
  %v8592 = vand.u32 %v7243, 4294901760
  %v8593 = vsub.f32 %v7243, %v8592
  %v8594 = vand.u32 %v8593, 4294901760
  %v8595 = vsub.f32 %v8593, %v8594
  %v8596 = vand.u32 %v8595, 4294901760
  %8597 = vmatpush1.msra.mxu0 %v8596
  %v8598 = vand.u32 %v7240, 4294901760
  %v8599 = vsub.f32 %v7240, %v8598
  %v8600 = vand.u32 %v8599, 4294901760
  %v8601 = vsub.f32 %v8599, %v8600
  %v8602 = vand.u32 %v8601, 4294901760
  %8603 = vmatprep.subr.mxu0 %v8602
  %v8604 = vand.u32 %v7239, 4294901760
  %v8605 = vsub.f32 %v7239, %v8604
  %v8606 = vand.u32 %v8605, 4294901760
  %v8607 = vsub.f32 %v8605, %v8606
  %v8608 = vand.u32 %v8607, 4294901760
  %8609 = vmatpush1.msra.mxu0 %v8608
  %v8610 = vand.u32 %v7236, 4294901760
  %v8611 = vsub.f32 %v7236, %v8610
  %v8612 = vand.u32 %v8611, 4294901760
  %v8613 = vsub.f32 %v8611, %v8612
  %v8614 = vand.u32 %v8613, 4294901760
  %8615 = vmatprep.subr.mxu0 %v8614
  %v8616 = vand.u32 %v7235, 4294901760
  %v8617 = vsub.f32 %v7235, %v8616
  %v8618 = vand.u32 %v8617, 4294901760
  %v8619 = vsub.f32 %v8617, %v8618
  %v8620 = vand.u32 %v8619, 4294901760
  %8621 = vmatpush1.msra.mxu0 %v8620
  %v8622 = vand.u32 %v7232, 4294901760
  %v8623 = vsub.f32 %v7232, %v8622
  %v8624 = vand.u32 %v8623, 4294901760
  %v8625 = vsub.f32 %v8623, %v8624
  %v8626 = vand.u32 %v8625, 4294901760
  %8627 = vmatprep.subr.mxu0 %v8626
  %v8628 = vand.u32 %v7231, 4294901760
  %v8629 = vsub.f32 %v7231, %v8628
  %v8630 = vand.u32 %v8629, 4294901760
  %v8631 = vsub.f32 %v8629, %v8630
  %v8632 = vand.u32 %v8631, 4294901760
  %8633 = vmatpush1.msra.mxu0 %v8632
  %v8634 = vand.u32 %v7228, 4294901760
  %v8635 = vsub.f32 %v7228, %v8634
  %v8636 = vand.u32 %v8635, 4294901760
  %v8637 = vsub.f32 %v8635, %v8636
  %v8638 = vand.u32 %v8637, 4294901760
  %8639 = vmatprep.subr.mxu0 %v8638
  %v8640 = vand.u32 %v7227, 4294901760
  %v8641 = vsub.f32 %v7227, %v8640
  %v8642 = vand.u32 %v8641, 4294901760
  %v8643 = vsub.f32 %v8641, %v8642
  %v8644 = vand.u32 %v8643, 4294901760
  %8645 = vmatpush1.msra.mxu0 %v8644
  %8646 = vmatprep.subr.mxu0 0.0
  %8647 = vmatpush2.msra.mxu0 0.0
  %8648 = vmatprep.subr.mxu0 0.0
  %8649 = vmatpush2.msra.mxu0 0.0
  %8650 = vmatprep.subr.mxu0 0.0
  %8651 = vmatpush2.msra.mxu0 0.0
  %8652 = vmatprep.subr.mxu0 0.0
  %8653 = vmatpush2.msra.mxu0 0.0
  %8654 = vmatprep.subr.mxu0 0.0
  %8655 = vmatpush2.msra.mxu0 0.0
  %8656 = vmatprep.subr.mxu0 0.0
  %8657 = vmatpush2.msra.mxu0 0.0
  %8658 = vmatprep.subr.mxu0 0.0
  %8659 = vmatpush2.msra.mxu0 0.0
  %8660 = vmatprep.subr.mxu0 0.0
  %8661 = vmatpush2.msra.mxu0 0.0
  %8662 = vmatprep.subr.mxu0 0.0
  %8663 = vmatpush2.msra.mxu0 0.0
  %8664 = vmatprep.subr.mxu0 0.0
  %8665 = vmatpush2.msra.mxu0 0.0
  %8666 = vmatprep.subr.mxu0 0.0
  %8667 = vmatpush2.msra.mxu0 0.0
  %8668 = vmatprep.subr.mxu0 0.0
  %8669 = vmatpush2.msra.mxu0 0.0
  %8670 = vmatprep.subr.mxu0 0.0
  %8671 = vmatpush2.msra.mxu0 0.0
  %8672 = vmatprep.subr.mxu0 0.0
  %8673 = vmatpush2.msra.mxu0 0.0
  %8674 = vmatprep.subr.mxu0 0.0
  %8675 = vmatpush2.msra.mxu0 0.0
  %8676 = vmatprep.subr.mxu0 0.0
  %8677 = vmatpush2.msra.mxu0 0.0
  %8678 = vmatprep.mubr.f32.mxu0 0.0
  %v8679 = vand.u32 %v7221, 4294901760
  %8680 = vmatmul.mubr.f32.gmra.mxu0 %v8679
  %v8681 = vpop.f32.mrf.mxu0
  %v8682 = vadd.f32 %v8417, %v8681
  %v8683 = vpop.f32.mrf.mxu0
  %v8684 = vadd.f32 %v8419, %v8683
  %8685 = vmatprep.mubr.f32.mxu0 0.0
  %v8686 = vand.u32 %v7222, 4294901760
  %8687 = vmatmul.mubr.f32.gmra.mxu0 %v8686
  %v8688 = vpop.f32.mrf.mxu0
  %v8689 = vadd.f32 %v8428, %v8688
  %v8690 = vpop.f32.mrf.mxu0
  %v8691 = vadd.f32 %v8430, %v8690
  %8692 = vmatprep.mubr.f32.mxu0 0.0
  %v8693 = vand.u32 %v7223, 4294901760
  %8694 = vmatmul.mubr.f32.gmra.mxu0 %v8693
  %v8695 = vpop.f32.mrf.mxu0
  %v8696 = vadd.f32 %v8439, %v8695
  %v8697 = vpop.f32.mrf.mxu0
  %v8698 = vadd.f32 %v8441, %v8697
  %8699 = vmatprep.mubr.f32.mxu0 0.0
  %v8700 = vand.u32 %v7224, 4294901760
  %8701 = vmatmul.mubr.f32.gmra.mxu0 %v8700
  %v8702 = vpop.f32.mrf.mxu0
  %v8703 = vadd.f32 %v8450, %v8702
  %v8704 = vpop.f32.mrf.mxu0
  %v8705 = vadd.f32 %v8452, %v8704
  %8706 = vdwg.mxu0
  %v8707 = vand.u32 %v7288, 4294901760
  %v8708 = vsub.f32 %v7288, %v8707
  %8709 = vmatprep.subr.mxu0 %v8708
  %v8710 = vand.u32 %v7287, 4294901760
  %v8711 = vsub.f32 %v7287, %v8710
  %8712 = vmatpush1.msra.mxu0 %v8711
  %v8713 = vand.u32 %v7284, 4294901760
  %v8714 = vsub.f32 %v7284, %v8713
  %8715 = vmatprep.subr.mxu0 %v8714
  %v8716 = vand.u32 %v7283, 4294901760
  %v8717 = vsub.f32 %v7283, %v8716
  %8718 = vmatpush1.msra.mxu0 %v8717
  %v8719 = vand.u32 %v7280, 4294901760
  %v8720 = vsub.f32 %v7280, %v8719
  %8721 = vmatprep.subr.mxu0 %v8720
  %v8722 = vand.u32 %v7279, 4294901760
  %v8723 = vsub.f32 %v7279, %v8722
  %8724 = vmatpush1.msra.mxu0 %v8723
  %v8725 = vand.u32 %v7276, 4294901760
  %v8726 = vsub.f32 %v7276, %v8725
  %8727 = vmatprep.subr.mxu0 %v8726
  %v8728 = vand.u32 %v7275, 4294901760
  %v8729 = vsub.f32 %v7275, %v8728
  %8730 = vmatpush1.msra.mxu0 %v8729
  %v8731 = vand.u32 %v7272, 4294901760
  %v8732 = vsub.f32 %v7272, %v8731
  %8733 = vmatprep.subr.mxu0 %v8732
  %v8734 = vand.u32 %v7271, 4294901760
  %v8735 = vsub.f32 %v7271, %v8734
  %8736 = vmatpush1.msra.mxu0 %v8735
  %v8737 = vand.u32 %v7268, 4294901760
  %v8738 = vsub.f32 %v7268, %v8737
  %8739 = vmatprep.subr.mxu0 %v8738
  %v8740 = vand.u32 %v7267, 4294901760
  %v8741 = vsub.f32 %v7267, %v8740
  %8742 = vmatpush1.msra.mxu0 %v8741
  %v8743 = vand.u32 %v7264, 4294901760
  %v8744 = vsub.f32 %v7264, %v8743
  %8745 = vmatprep.subr.mxu0 %v8744
  %v8746 = vand.u32 %v7263, 4294901760
  %v8747 = vsub.f32 %v7263, %v8746
  %8748 = vmatpush1.msra.mxu0 %v8747
  %v8749 = vand.u32 %v7260, 4294901760
  %v8750 = vsub.f32 %v7260, %v8749
  %8751 = vmatprep.subr.mxu0 %v8750
  %v8752 = vand.u32 %v7259, 4294901760
  %v8753 = vsub.f32 %v7259, %v8752
  %8754 = vmatpush1.msra.mxu0 %v8753
  %v8755 = vand.u32 %v7256, 4294901760
  %v8756 = vsub.f32 %v7256, %v8755
  %8757 = vmatprep.subr.mxu0 %v8756
  %v8758 = vand.u32 %v7255, 4294901760
  %v8759 = vsub.f32 %v7255, %v8758
  %8760 = vmatpush1.msra.mxu0 %v8759
  %v8761 = vand.u32 %v7252, 4294901760
  %v8762 = vsub.f32 %v7252, %v8761
  %8763 = vmatprep.subr.mxu0 %v8762
  %v8764 = vand.u32 %v7251, 4294901760
  %v8765 = vsub.f32 %v7251, %v8764
  %8766 = vmatpush1.msra.mxu0 %v8765
  %v8767 = vand.u32 %v7248, 4294901760
  %v8768 = vsub.f32 %v7248, %v8767
  %8769 = vmatprep.subr.mxu0 %v8768
  %v8770 = vand.u32 %v7247, 4294901760
  %v8771 = vsub.f32 %v7247, %v8770
  %8772 = vmatpush1.msra.mxu0 %v8771
  %v8773 = vand.u32 %v7244, 4294901760
  %v8774 = vsub.f32 %v7244, %v8773
  %8775 = vmatprep.subr.mxu0 %v8774
  %v8776 = vand.u32 %v7243, 4294901760
  %v8777 = vsub.f32 %v7243, %v8776
  %8778 = vmatpush1.msra.mxu0 %v8777
  %v8779 = vand.u32 %v7240, 4294901760
  %v8780 = vsub.f32 %v7240, %v8779
  %8781 = vmatprep.subr.mxu0 %v8780
  %v8782 = vand.u32 %v7239, 4294901760
  %v8783 = vsub.f32 %v7239, %v8782
  %8784 = vmatpush1.msra.mxu0 %v8783
  %v8785 = vand.u32 %v7236, 4294901760
  %v8786 = vsub.f32 %v7236, %v8785
  %8787 = vmatprep.subr.mxu0 %v8786
  %v8788 = vand.u32 %v7235, 4294901760
  %v8789 = vsub.f32 %v7235, %v8788
  %8790 = vmatpush1.msra.mxu0 %v8789
  %v8791 = vand.u32 %v7232, 4294901760
  %v8792 = vsub.f32 %v7232, %v8791
  %8793 = vmatprep.subr.mxu0 %v8792
  %v8794 = vand.u32 %v7231, 4294901760
  %v8795 = vsub.f32 %v7231, %v8794
  %8796 = vmatpush1.msra.mxu0 %v8795
  %v8797 = vand.u32 %v7228, 4294901760
  %v8798 = vsub.f32 %v7228, %v8797
  %8799 = vmatprep.subr.mxu0 %v8798
  %v8800 = vand.u32 %v7227, 4294901760
  %v8801 = vsub.f32 %v7227, %v8800
  %8802 = vmatpush1.msra.mxu0 %v8801
  %8803 = vmatprep.subr.mxu0 0.0
  %8804 = vmatpush2.msra.mxu0 0.0
  %8805 = vmatprep.subr.mxu0 0.0
  %8806 = vmatpush2.msra.mxu0 0.0
  %8807 = vmatprep.subr.mxu0 0.0
  %8808 = vmatpush2.msra.mxu0 0.0
  %8809 = vmatprep.subr.mxu0 0.0
  %8810 = vmatpush2.msra.mxu0 0.0
  %8811 = vmatprep.subr.mxu0 0.0
  %8812 = vmatpush2.msra.mxu0 0.0
  %8813 = vmatprep.subr.mxu0 0.0
  %8814 = vmatpush2.msra.mxu0 0.0
  %8815 = vmatprep.subr.mxu0 0.0
  %8816 = vmatpush2.msra.mxu0 0.0
  %8817 = vmatprep.subr.mxu0 0.0
  %8818 = vmatpush2.msra.mxu0 0.0
  %8819 = vmatprep.subr.mxu0 0.0
  %8820 = vmatpush2.msra.mxu0 0.0
  %8821 = vmatprep.subr.mxu0 0.0
  %8822 = vmatpush2.msra.mxu0 0.0
  %8823 = vmatprep.subr.mxu0 0.0
  %8824 = vmatpush2.msra.mxu0 0.0
  %8825 = vmatprep.subr.mxu0 0.0
  %8826 = vmatpush2.msra.mxu0 0.0
  %8827 = vmatprep.subr.mxu0 0.0
  %8828 = vmatpush2.msra.mxu0 0.0
  %8829 = vmatprep.subr.mxu0 0.0
  %8830 = vmatpush2.msra.mxu0 0.0
  %8831 = vmatprep.subr.mxu0 0.0
  %8832 = vmatpush2.msra.mxu0 0.0
  %8833 = vmatprep.subr.mxu0 0.0
  %8834 = vmatpush2.msra.mxu0 0.0
  %8835 = vmatprep.mubr.f32.mxu0 0.0
  %v8836 = vand.u32 %v7221, 4294901760
  %v8837 = vsub.f32 %v7221, %v8836
  %8838 = vmatmul.mubr.f32.gmra.mxu0 %v8837
  %v8839 = vpop.f32.mrf.mxu0
  %v8840 = vadd.f32 %v8682, %v8839
  %v8841 = vpop.f32.mrf.mxu0
  %v8842 = vadd.f32 %v8684, %v8841
  %8843 = vmatprep.mubr.f32.mxu0 0.0
  %v8844 = vand.u32 %v7222, 4294901760
  %v8845 = vsub.f32 %v7222, %v8844
  %8846 = vmatmul.mubr.f32.gmra.mxu0 %v8845
  %v8847 = vpop.f32.mrf.mxu0
  %v8848 = vadd.f32 %v8689, %v8847
  %v8849 = vpop.f32.mrf.mxu0
  %v8850 = vadd.f32 %v8691, %v8849
  %8851 = vmatprep.mubr.f32.mxu0 0.0
  %v8852 = vand.u32 %v7223, 4294901760
  %v8853 = vsub.f32 %v7223, %v8852
  %8854 = vmatmul.mubr.f32.gmra.mxu0 %v8853
  %v8855 = vpop.f32.mrf.mxu0
  %v8856 = vadd.f32 %v8696, %v8855
  %v8857 = vpop.f32.mrf.mxu0
  %v8858 = vadd.f32 %v8698, %v8857
  %8859 = vmatprep.mubr.f32.mxu0 0.0
  %v8860 = vand.u32 %v7224, 4294901760
  %v8861 = vsub.f32 %v7224, %v8860
  %8862 = vmatmul.mubr.f32.gmra.mxu0 %v8861
  %v8863 = vpop.f32.mrf.mxu0
  %v8864 = vadd.f32 %v8703, %v8863
  %v8865 = vpop.f32.mrf.mxu0
  %v8866 = vadd.f32 %v8705, %v8865
  %8867 = vdwg.mxu0
  %v8868 = vand.u32 %v7288, 4294901760
  %8869 = vmatprep.subr.mxu0 %v8868
  %v8870 = vand.u32 %v7287, 4294901760
  %8871 = vmatpush1.msra.mxu0 %v8870
  %v8872 = vand.u32 %v7284, 4294901760
  %8873 = vmatprep.subr.mxu0 %v8872
  %v8874 = vand.u32 %v7283, 4294901760
  %8875 = vmatpush1.msra.mxu0 %v8874
  %v8876 = vand.u32 %v7280, 4294901760
  %8877 = vmatprep.subr.mxu0 %v8876
  %v8878 = vand.u32 %v7279, 4294901760
  %8879 = vmatpush1.msra.mxu0 %v8878
  %v8880 = vand.u32 %v7276, 4294901760
  %8881 = vmatprep.subr.mxu0 %v8880
  %v8882 = vand.u32 %v7275, 4294901760
  %8883 = vmatpush1.msra.mxu0 %v8882
  %v8884 = vand.u32 %v7272, 4294901760
  %8885 = vmatprep.subr.mxu0 %v8884
  %v8886 = vand.u32 %v7271, 4294901760
  %8887 = vmatpush1.msra.mxu0 %v8886
  %v8888 = vand.u32 %v7268, 4294901760
  %8889 = vmatprep.subr.mxu0 %v8888
  %v8890 = vand.u32 %v7267, 4294901760
  %8891 = vmatpush1.msra.mxu0 %v8890
  %v8892 = vand.u32 %v7264, 4294901760
  %8893 = vmatprep.subr.mxu0 %v8892
  %v8894 = vand.u32 %v7263, 4294901760
  %8895 = vmatpush1.msra.mxu0 %v8894
  %v8896 = vand.u32 %v7260, 4294901760
  %8897 = vmatprep.subr.mxu0 %v8896
  %v8898 = vand.u32 %v7259, 4294901760
  %8899 = vmatpush1.msra.mxu0 %v8898
  %v8900 = vand.u32 %v7256, 4294901760
  %8901 = vmatprep.subr.mxu0 %v8900
  %v8902 = vand.u32 %v7255, 4294901760
  %8903 = vmatpush1.msra.mxu0 %v8902
  %v8904 = vand.u32 %v7252, 4294901760
  %8905 = vmatprep.subr.mxu0 %v8904
  %v8906 = vand.u32 %v7251, 4294901760
  %8907 = vmatpush1.msra.mxu0 %v8906
  %v8908 = vand.u32 %v7248, 4294901760
  %8909 = vmatprep.subr.mxu0 %v8908
  %v8910 = vand.u32 %v7247, 4294901760
  %8911 = vmatpush1.msra.mxu0 %v8910
  %v8912 = vand.u32 %v7244, 4294901760
  %8913 = vmatprep.subr.mxu0 %v8912
  %v8914 = vand.u32 %v7243, 4294901760
  %8915 = vmatpush1.msra.mxu0 %v8914
  %v8916 = vand.u32 %v7240, 4294901760
  %8917 = vmatprep.subr.mxu0 %v8916
  %v8918 = vand.u32 %v7239, 4294901760
  %8919 = vmatpush1.msra.mxu0 %v8918
  %v8920 = vand.u32 %v7236, 4294901760
  %8921 = vmatprep.subr.mxu0 %v8920
  %v8922 = vand.u32 %v7235, 4294901760
  %8923 = vmatpush1.msra.mxu0 %v8922
  %v8924 = vand.u32 %v7232, 4294901760
  %8925 = vmatprep.subr.mxu0 %v8924
  %v8926 = vand.u32 %v7231, 4294901760
  %8927 = vmatpush1.msra.mxu0 %v8926
  %v8928 = vand.u32 %v7228, 4294901760
  %8929 = vmatprep.subr.mxu0 %v8928
  %v8930 = vand.u32 %v7227, 4294901760
  %8931 = vmatpush1.msra.mxu0 %v8930
  %8932 = vmatprep.subr.mxu0 0.0
  %8933 = vmatpush2.msra.mxu0 0.0
  %8934 = vmatprep.subr.mxu0 0.0
  %8935 = vmatpush2.msra.mxu0 0.0
  %8936 = vmatprep.subr.mxu0 0.0
  %8937 = vmatpush2.msra.mxu0 0.0
  %8938 = vmatprep.subr.mxu0 0.0
  %8939 = vmatpush2.msra.mxu0 0.0
  %8940 = vmatprep.subr.mxu0 0.0
  %8941 = vmatpush2.msra.mxu0 0.0
  %8942 = vmatprep.subr.mxu0 0.0
  %8943 = vmatpush2.msra.mxu0 0.0
  %8944 = vmatprep.subr.mxu0 0.0
  %8945 = vmatpush2.msra.mxu0 0.0
  %8946 = vmatprep.subr.mxu0 0.0
  %8947 = vmatpush2.msra.mxu0 0.0
  %8948 = vmatprep.subr.mxu0 0.0
  %8949 = vmatpush2.msra.mxu0 0.0
  %8950 = vmatprep.subr.mxu0 0.0
  %8951 = vmatpush2.msra.mxu0 0.0
  %8952 = vmatprep.subr.mxu0 0.0
  %8953 = vmatpush2.msra.mxu0 0.0
  %8954 = vmatprep.subr.mxu0 0.0
  %8955 = vmatpush2.msra.mxu0 0.0
  %8956 = vmatprep.subr.mxu0 0.0
  %8957 = vmatpush2.msra.mxu0 0.0
  %8958 = vmatprep.subr.mxu0 0.0
  %8959 = vmatpush2.msra.mxu0 0.0
  %8960 = vmatprep.subr.mxu0 0.0
  %8961 = vmatpush2.msra.mxu0 0.0
  %8962 = vmatprep.subr.mxu0 0.0
  %8963 = vmatpush2.msra.mxu0 0.0
  %8964 = vmatprep.mubr.f32.mxu0 0.0
  %v8965 = vand.u32 %v7221, 4294901760
  %v8966 = vsub.f32 %v7221, %v8965
  %v8967 = vand.u32 %v8966, 4294901760
  %8968 = vmatmul.mubr.f32.gmra.mxu0 %v8967
  %v8969 = vpop.f32.mrf.mxu0
  %v8970 = vadd.f32 %v8840, %v8969
  %v8971 = vpop.f32.mrf.mxu0
  %v8972 = vadd.f32 %v8842, %v8971
  %8973 = vmatprep.mubr.f32.mxu0 0.0
  %v8974 = vand.u32 %v7222, 4294901760
  %v8975 = vsub.f32 %v7222, %v8974
  %v8976 = vand.u32 %v8975, 4294901760
  %8977 = vmatmul.mubr.f32.gmra.mxu0 %v8976
  %v8978 = vpop.f32.mrf.mxu0
  %v8979 = vadd.f32 %v8848, %v8978
  %v8980 = vpop.f32.mrf.mxu0
  %v8981 = vadd.f32 %v8850, %v8980
  %8982 = vmatprep.mubr.f32.mxu0 0.0
  %v8983 = vand.u32 %v7223, 4294901760
  %v8984 = vsub.f32 %v7223, %v8983
  %v8985 = vand.u32 %v8984, 4294901760
  %8986 = vmatmul.mubr.f32.gmra.mxu0 %v8985
  %v8987 = vpop.f32.mrf.mxu0
  %v8988 = vadd.f32 %v8856, %v8987
  %v8989 = vpop.f32.mrf.mxu0
  %v8990 = vadd.f32 %v8858, %v8989
  %8991 = vmatprep.mubr.f32.mxu0 0.0
  %v8992 = vand.u32 %v7224, 4294901760
  %v8993 = vsub.f32 %v7224, %v8992
  %v8994 = vand.u32 %v8993, 4294901760
  %8995 = vmatmul.mubr.f32.gmra.mxu0 %v8994
  %v8996 = vpop.f32.mrf.mxu0
  %v8997 = vadd.f32 %v8864, %v8996
  %v8998 = vpop.f32.mrf.mxu0
  %v8999 = vadd.f32 %v8866, %v8998
  %9000 = vdwg.mxu0
  %v9001 = vand.u32 %v7288, 4294901760
  %v9002 = vsub.f32 %v7288, %v9001
  %v9003 = vand.u32 %v9002, 4294901760
  %9004 = vmatprep.subr.mxu0 %v9003
  %v9005 = vand.u32 %v7287, 4294901760
  %v9006 = vsub.f32 %v7287, %v9005
  %v9007 = vand.u32 %v9006, 4294901760
  %9008 = vmatpush1.msra.mxu0 %v9007
  %v9009 = vand.u32 %v7284, 4294901760
  %v9010 = vsub.f32 %v7284, %v9009
  %v9011 = vand.u32 %v9010, 4294901760
  %9012 = vmatprep.subr.mxu0 %v9011
  %v9013 = vand.u32 %v7283, 4294901760
  %v9014 = vsub.f32 %v7283, %v9013
  %v9015 = vand.u32 %v9014, 4294901760
  %9016 = vmatpush1.msra.mxu0 %v9015
  %v9017 = vand.u32 %v7280, 4294901760
  %v9018 = vsub.f32 %v7280, %v9017
  %v9019 = vand.u32 %v9018, 4294901760
  %9020 = vmatprep.subr.mxu0 %v9019
  %v9021 = vand.u32 %v7279, 4294901760
  %v9022 = vsub.f32 %v7279, %v9021
  %v9023 = vand.u32 %v9022, 4294901760
  %9024 = vmatpush1.msra.mxu0 %v9023
  %v9025 = vand.u32 %v7276, 4294901760
  %v9026 = vsub.f32 %v7276, %v9025
  %v9027 = vand.u32 %v9026, 4294901760
  %9028 = vmatprep.subr.mxu0 %v9027
  %v9029 = vand.u32 %v7275, 4294901760
  %v9030 = vsub.f32 %v7275, %v9029
  %v9031 = vand.u32 %v9030, 4294901760
  %9032 = vmatpush1.msra.mxu0 %v9031
  %v9033 = vand.u32 %v7272, 4294901760
  %v9034 = vsub.f32 %v7272, %v9033
  %v9035 = vand.u32 %v9034, 4294901760
  %9036 = vmatprep.subr.mxu0 %v9035
  %v9037 = vand.u32 %v7271, 4294901760
  %v9038 = vsub.f32 %v7271, %v9037
  %v9039 = vand.u32 %v9038, 4294901760
  %9040 = vmatpush1.msra.mxu0 %v9039
  %v9041 = vand.u32 %v7268, 4294901760
  %v9042 = vsub.f32 %v7268, %v9041
  %v9043 = vand.u32 %v9042, 4294901760
  %9044 = vmatprep.subr.mxu0 %v9043
  %v9045 = vand.u32 %v7267, 4294901760
  %v9046 = vsub.f32 %v7267, %v9045
  %v9047 = vand.u32 %v9046, 4294901760
  %9048 = vmatpush1.msra.mxu0 %v9047
  %v9049 = vand.u32 %v7264, 4294901760
  %v9050 = vsub.f32 %v7264, %v9049
  %v9051 = vand.u32 %v9050, 4294901760
  %9052 = vmatprep.subr.mxu0 %v9051
  %v9053 = vand.u32 %v7263, 4294901760
  %v9054 = vsub.f32 %v7263, %v9053
  %v9055 = vand.u32 %v9054, 4294901760
  %9056 = vmatpush1.msra.mxu0 %v9055
  %v9057 = vand.u32 %v7260, 4294901760
  %v9058 = vsub.f32 %v7260, %v9057
  %v9059 = vand.u32 %v9058, 4294901760
  %9060 = vmatprep.subr.mxu0 %v9059
  %v9061 = vand.u32 %v7259, 4294901760
  %v9062 = vsub.f32 %v7259, %v9061
  %v9063 = vand.u32 %v9062, 4294901760
  %9064 = vmatpush1.msra.mxu0 %v9063
  %v9065 = vand.u32 %v7256, 4294901760
  %v9066 = vsub.f32 %v7256, %v9065
  %v9067 = vand.u32 %v9066, 4294901760
  %9068 = vmatprep.subr.mxu0 %v9067
  %v9069 = vand.u32 %v7255, 4294901760
  %v9070 = vsub.f32 %v7255, %v9069
  %v9071 = vand.u32 %v9070, 4294901760
  %9072 = vmatpush1.msra.mxu0 %v9071
  %v9073 = vand.u32 %v7252, 4294901760
  %v9074 = vsub.f32 %v7252, %v9073
  %v9075 = vand.u32 %v9074, 4294901760
  %9076 = vmatprep.subr.mxu0 %v9075
  %v9077 = vand.u32 %v7251, 4294901760
  %v9078 = vsub.f32 %v7251, %v9077
  %v9079 = vand.u32 %v9078, 4294901760
  %9080 = vmatpush1.msra.mxu0 %v9079
  %v9081 = vand.u32 %v7248, 4294901760
  %v9082 = vsub.f32 %v7248, %v9081
  %v9083 = vand.u32 %v9082, 4294901760
  %9084 = vmatprep.subr.mxu0 %v9083
  %v9085 = vand.u32 %v7247, 4294901760
  %v9086 = vsub.f32 %v7247, %v9085
  %v9087 = vand.u32 %v9086, 4294901760
  %9088 = vmatpush1.msra.mxu0 %v9087
  %v9089 = vand.u32 %v7244, 4294901760
  %v9090 = vsub.f32 %v7244, %v9089
  %v9091 = vand.u32 %v9090, 4294901760
  %9092 = vmatprep.subr.mxu0 %v9091
  %v9093 = vand.u32 %v7243, 4294901760
  %v9094 = vsub.f32 %v7243, %v9093
  %v9095 = vand.u32 %v9094, 4294901760
  %9096 = vmatpush1.msra.mxu0 %v9095
  %v9097 = vand.u32 %v7240, 4294901760
  %v9098 = vsub.f32 %v7240, %v9097
  %v9099 = vand.u32 %v9098, 4294901760
  %9100 = vmatprep.subr.mxu0 %v9099
  %v9101 = vand.u32 %v7239, 4294901760
  %v9102 = vsub.f32 %v7239, %v9101
  %v9103 = vand.u32 %v9102, 4294901760
  %9104 = vmatpush1.msra.mxu0 %v9103
  %v9105 = vand.u32 %v7236, 4294901760
  %v9106 = vsub.f32 %v7236, %v9105
  %v9107 = vand.u32 %v9106, 4294901760
  %9108 = vmatprep.subr.mxu0 %v9107
  %v9109 = vand.u32 %v7235, 4294901760
  %v9110 = vsub.f32 %v7235, %v9109
  %v9111 = vand.u32 %v9110, 4294901760
  %9112 = vmatpush1.msra.mxu0 %v9111
  %v9113 = vand.u32 %v7232, 4294901760
  %v9114 = vsub.f32 %v7232, %v9113
  %v9115 = vand.u32 %v9114, 4294901760
  %9116 = vmatprep.subr.mxu0 %v9115
  %v9117 = vand.u32 %v7231, 4294901760
  %v9118 = vsub.f32 %v7231, %v9117
  %v9119 = vand.u32 %v9118, 4294901760
  %9120 = vmatpush1.msra.mxu0 %v9119
  %v9121 = vand.u32 %v7228, 4294901760
  %v9122 = vsub.f32 %v7228, %v9121
  %v9123 = vand.u32 %v9122, 4294901760
  %9124 = vmatprep.subr.mxu0 %v9123
  %v9125 = vand.u32 %v7227, 4294901760
  %v9126 = vsub.f32 %v7227, %v9125
  %v9127 = vand.u32 %v9126, 4294901760
  %9128 = vmatpush1.msra.mxu0 %v9127
  %9129 = vmatprep.subr.mxu0 0.0
  %9130 = vmatpush2.msra.mxu0 0.0
  %9131 = vmatprep.subr.mxu0 0.0
  %9132 = vmatpush2.msra.mxu0 0.0
  %9133 = vmatprep.subr.mxu0 0.0
  %9134 = vmatpush2.msra.mxu0 0.0
  %9135 = vmatprep.subr.mxu0 0.0
  %9136 = vmatpush2.msra.mxu0 0.0
  %9137 = vmatprep.subr.mxu0 0.0
  %9138 = vmatpush2.msra.mxu0 0.0
  %9139 = vmatprep.subr.mxu0 0.0
  %9140 = vmatpush2.msra.mxu0 0.0
  %9141 = vmatprep.subr.mxu0 0.0
  %9142 = vmatpush2.msra.mxu0 0.0
  %9143 = vmatprep.subr.mxu0 0.0
  %9144 = vmatpush2.msra.mxu0 0.0
  %9145 = vmatprep.subr.mxu0 0.0
  %9146 = vmatpush2.msra.mxu0 0.0
  %9147 = vmatprep.subr.mxu0 0.0
  %9148 = vmatpush2.msra.mxu0 0.0
  %9149 = vmatprep.subr.mxu0 0.0
  %9150 = vmatpush2.msra.mxu0 0.0
  %9151 = vmatprep.subr.mxu0 0.0
  %9152 = vmatpush2.msra.mxu0 0.0
  %9153 = vmatprep.subr.mxu0 0.0
  %9154 = vmatpush2.msra.mxu0 0.0
  %9155 = vmatprep.subr.mxu0 0.0
  %9156 = vmatpush2.msra.mxu0 0.0
  %9157 = vmatprep.subr.mxu0 0.0
  %9158 = vmatpush2.msra.mxu0 0.0
  %9159 = vmatprep.subr.mxu0 0.0
  %9160 = vmatpush2.msra.mxu0 0.0
  %9161 = vmatprep.mubr.f32.mxu0 0.0
  %v9162 = vand.u32 %v7221, 4294901760
  %9163 = vmatmul.mubr.f32.gmra.mxu0 %v9162
  %v9164 = vpop.f32.mrf.mxu0
  %v9165 = vadd.f32 %v8970, %v9164
  %v9166 = vpop.f32.mrf.mxu0
  %v9167 = vadd.f32 %v8972, %v9166
  %9168 = vmatprep.mubr.f32.mxu0 0.0
  %v9169 = vand.u32 %v7222, 4294901760
  %9170 = vmatmul.mubr.f32.gmra.mxu0 %v9169
  %v9171 = vpop.f32.mrf.mxu0
  %v9172 = vadd.f32 %v8979, %v9171
  %v9173 = vpop.f32.mrf.mxu0
  %v9174 = vadd.f32 %v8981, %v9173
  %9175 = vmatprep.mubr.f32.mxu0 0.0
  %v9176 = vand.u32 %v7223, 4294901760
  %9177 = vmatmul.mubr.f32.gmra.mxu0 %v9176
  %v9178 = vpop.f32.mrf.mxu0
  %v9179 = vadd.f32 %v8988, %v9178
  %v9180 = vpop.f32.mrf.mxu0
  %v9181 = vadd.f32 %v8990, %v9180
  %9182 = vmatprep.mubr.f32.mxu0 0.0
  %v9183 = vand.u32 %v7224, 4294901760
  %9184 = vmatmul.mubr.f32.gmra.mxu0 %v9183
  %v9185 = vpop.f32.mrf.mxu0
  %v9186 = vadd.f32 %v8997, %v9185
  %v9187 = vpop.f32.mrf.mxu0
  %v9188 = vadd.f32 %v8999, %v9187
  %9189 = vdwg.mxu0
  %v9190 = vand.u32 %v7288, 4294901760
  %9191 = vmatprep.subr.mxu0 %v9190
  %v9192 = vand.u32 %v7287, 4294901760
  %9193 = vmatpush1.msra.mxu0 %v9192
  %v9194 = vand.u32 %v7284, 4294901760
  %9195 = vmatprep.subr.mxu0 %v9194
  %v9196 = vand.u32 %v7283, 4294901760
  %9197 = vmatpush1.msra.mxu0 %v9196
  %v9198 = vand.u32 %v7280, 4294901760
  %9199 = vmatprep.subr.mxu0 %v9198
  %v9200 = vand.u32 %v7279, 4294901760
  %9201 = vmatpush1.msra.mxu0 %v9200
  %v9202 = vand.u32 %v7276, 4294901760
  %9203 = vmatprep.subr.mxu0 %v9202
  %v9204 = vand.u32 %v7275, 4294901760
  %9205 = vmatpush1.msra.mxu0 %v9204
  %v9206 = vand.u32 %v7272, 4294901760
  %9207 = vmatprep.subr.mxu0 %v9206
  %v9208 = vand.u32 %v7271, 4294901760
  %9209 = vmatpush1.msra.mxu0 %v9208
  %v9210 = vand.u32 %v7268, 4294901760
  %9211 = vmatprep.subr.mxu0 %v9210
  %v9212 = vand.u32 %v7267, 4294901760
  %9213 = vmatpush1.msra.mxu0 %v9212
  %v9214 = vand.u32 %v7264, 4294901760
  %9215 = vmatprep.subr.mxu0 %v9214
  %v9216 = vand.u32 %v7263, 4294901760
  %9217 = vmatpush1.msra.mxu0 %v9216
  %v9218 = vand.u32 %v7260, 4294901760
  %9219 = vmatprep.subr.mxu0 %v9218
  %v9220 = vand.u32 %v7259, 4294901760
  %9221 = vmatpush1.msra.mxu0 %v9220
  %v9222 = vand.u32 %v7256, 4294901760
  %9223 = vmatprep.subr.mxu0 %v9222
  %v9224 = vand.u32 %v7255, 4294901760
  %9225 = vmatpush1.msra.mxu0 %v9224
  %v9226 = vand.u32 %v7252, 4294901760
  %9227 = vmatprep.subr.mxu0 %v9226
  %v9228 = vand.u32 %v7251, 4294901760
  %9229 = vmatpush1.msra.mxu0 %v9228
  %v9230 = vand.u32 %v7248, 4294901760
  %9231 = vmatprep.subr.mxu0 %v9230
  %v9232 = vand.u32 %v7247, 4294901760
  %9233 = vmatpush1.msra.mxu0 %v9232
  %v9234 = vand.u32 %v7244, 4294901760
  %9235 = vmatprep.subr.mxu0 %v9234
  %v9236 = vand.u32 %v7243, 4294901760
  %9237 = vmatpush1.msra.mxu0 %v9236
  %v9238 = vand.u32 %v7240, 4294901760
  %9239 = vmatprep.subr.mxu0 %v9238
  %v9240 = vand.u32 %v7239, 4294901760
  %9241 = vmatpush1.msra.mxu0 %v9240
  %v9242 = vand.u32 %v7236, 4294901760
  %9243 = vmatprep.subr.mxu0 %v9242
  %v9244 = vand.u32 %v7235, 4294901760
  %9245 = vmatpush1.msra.mxu0 %v9244
  %v9246 = vand.u32 %v7232, 4294901760
  %9247 = vmatprep.subr.mxu0 %v9246
  %v9248 = vand.u32 %v7231, 4294901760
  %9249 = vmatpush1.msra.mxu0 %v9248
  %v9250 = vand.u32 %v7228, 4294901760
  %9251 = vmatprep.subr.mxu0 %v9250
  %v9252 = vand.u32 %v7227, 4294901760
  %9253 = vmatpush1.msra.mxu0 %v9252
  %9254 = vmatprep.subr.mxu0 0.0
  %9255 = vmatpush2.msra.mxu0 0.0
  %9256 = vmatprep.subr.mxu0 0.0
  %9257 = vmatpush2.msra.mxu0 0.0
  %9258 = vmatprep.subr.mxu0 0.0
  %9259 = vmatpush2.msra.mxu0 0.0
  %9260 = vmatprep.subr.mxu0 0.0
  %9261 = vmatpush2.msra.mxu0 0.0
  %9262 = vmatprep.subr.mxu0 0.0
  %9263 = vmatpush2.msra.mxu0 0.0
  %9264 = vmatprep.subr.mxu0 0.0
  %9265 = vmatpush2.msra.mxu0 0.0
  %9266 = vmatprep.subr.mxu0 0.0
  %9267 = vmatpush2.msra.mxu0 0.0
  %9268 = vmatprep.subr.mxu0 0.0
  %9269 = vmatpush2.msra.mxu0 0.0
  %9270 = vmatprep.subr.mxu0 0.0
  %9271 = vmatpush2.msra.mxu0 0.0
  %9272 = vmatprep.subr.mxu0 0.0
  %9273 = vmatpush2.msra.mxu0 0.0
  %9274 = vmatprep.subr.mxu0 0.0
  %9275 = vmatpush2.msra.mxu0 0.0
  %9276 = vmatprep.subr.mxu0 0.0
  %9277 = vmatpush2.msra.mxu0 0.0
  %9278 = vmatprep.subr.mxu0 0.0
  %9279 = vmatpush2.msra.mxu0 0.0
  %9280 = vmatprep.subr.mxu0 0.0
  %9281 = vmatpush2.msra.mxu0 0.0
  %9282 = vmatprep.subr.mxu0 0.0
  %9283 = vmatpush2.msra.mxu0 0.0
  %9284 = vmatprep.subr.mxu0 0.0
  %9285 = vmatpush2.msra.mxu0 0.0
  %9286 = vmatprep.mubr.f32.mxu0 0.0
  %v9287 = vand.u32 %v7221, 4294901760
  %9288 = vmatmul.mubr.f32.gmra.mxu0 %v9287
  %v9289 = vpop.f32.mrf.mxu0
  %v9290 = vadd.f32 %v9165, %v9289
  %v9291 = vpop.f32.mrf.mxu0
  %v9292 = vadd.f32 %v9167, %v9291
  %9293 = vmatprep.mubr.f32.mxu0 0.0
  %v9294 = vand.u32 %v7222, 4294901760
  %9295 = vmatmul.mubr.f32.gmra.mxu0 %v9294
  %v9296 = vpop.f32.mrf.mxu0
  %v9297 = vadd.f32 %v9172, %v9296
  %v9298 = vpop.f32.mrf.mxu0
  %v9299 = vadd.f32 %v9174, %v9298
  %9300 = vmatprep.mubr.f32.mxu0 0.0
  %v9301 = vand.u32 %v7223, 4294901760
  %9302 = vmatmul.mubr.f32.gmra.mxu0 %v9301
  %v9303 = vpop.f32.mrf.mxu0
  %v9304 = vadd.f32 %v9179, %v9303
  %v9305 = vpop.f32.mrf.mxu0
  %v9306 = vadd.f32 %v9181, %v9305
  %9307 = vmatprep.mubr.f32.mxu0 0.0
  %v9308 = vand.u32 %v7224, 4294901760
  %9309 = vmatmul.mubr.f32.gmra.mxu0 %v9308
  %v9310 = vpop.f32.mrf.mxu0
  %v9311 = vadd.f32 %v9186, %v9310
  %v9312 = vpop.f32.mrf.mxu0
  %v9313 = vadd.f32 %v9188, %v9312
  %9314 = vdwg.mxu0
  %9315 = vst [vmem:[%s10] sm:$0xff] %v8288
  %9316 = vst [vmem:[%s10 + $0x8] sm:$0xff] %v8290
  %9317 = vst [vmem:[%s10 + $0x10] sm:$0xff] %v9290
  %9318 = vst [vmem:[%s10 + $0x18] sm:$0xff] %v9292
  %9319 = vst [vmem:[%s10 + $0x20] sm:$0xff] %v8295
  %9320 = vst [vmem:[%s10 + $0x28] sm:$0xff] %v8297
  %9321 = vst [vmem:[%s10 + $0x30] sm:$0xff] %v9297
  %9322 = vst [vmem:[%s10 + $0x38] sm:$0xff] %v9299
  %9323 = vst [vmem:[%s10 + $0x40] sm:$0xff] %v8302
  %9324 = vst [vmem:[%s10 + $0x48] sm:$0xff] %v8304
  %9325 = vst [vmem:[%s10 + $0x50] sm:$0xff] %v9304
  %9326 = vst [vmem:[%s10 + $0x58] sm:$0xff] %v9306
  %9327 = vst [vmem:[%s10 + $0x60] sm:$0xff] %v8309
  %9328 = vst [vmem:[%s10 + $0x68] sm:$0xff] %v8311
  %9329 = vst [vmem:[%s10 + $0x70] sm:$0xff] %v9311
  %9330 = vst [vmem:[%s10 + $0x78] sm:$0xff] %v9313
  // Predicated region
  $region42: #{encoder_decoder_block.1} parent=0 // pred_check
    _
  $region43: #{encoder_decoder_block.1} parent=0 // pred_check_branch
    %9332 = sbr.rel (0) target = $region45
  $region44: #{encoder_decoder_block.1} parent=0 // pred_region
    _
  $region45: #{encoder_decoder_block.1} parent=0 // pred_fallthru
    _
  // Predicated region
  $region46: #{encoder_decoder_block.1} parent=0 // pred_check
    _
  $region47: #{encoder_decoder_block.1} parent=0 // pred_check_branch
    %9334 = sbr.rel (0) target = $region49
  $region48: #{encoder_decoder_block.1} parent=0 // pred_region
    _
  $region49: #{encoder_decoder_block.1} parent=0 // pred_fallthru
    _

</llo_original>
